<compile_context>
chip_gen: v7x
topology: tpu7x:2x2x1
jax: 0.10.0
libtpu: 0.0.40
codegen_flags: <defaults>
</compile_context>

<pallas_src>
import functools

import jax
import jax.numpy as jnp
from jax.experimental import pallas as pl
from jax.experimental.pallas import tpu as pltpu

LANES = 128  # channel dims are zero-padded to one full vreg lane width


# ----------------------------------------------------------------------------
# Fused Pallas kernel: one grid step == one batch sample, fully VMEM-resident
# ----------------------------------------------------------------------------
def _fused_forward_kernel(x_ref, w1_ref, b1_ref, w2_ref, b2_ref, sel_ref,
                          fcw_ref, fcb_ref, o_ref, xpad_scr, h1pad_scr, *,
                          mid_ch, gem_p, eps):
    """conv1(3x3,s1,p1)+ReLU -> conv2(3x3,s2,p1)+ReLU -> GeM(p=3) -> FC -> L2.

    Both convs are lowered to 9 shifted-window GEMM accumulations (im2col in
    VMEM). conv2's stride 2 is realized by evaluating the conv on the dense
    stride-1 grid and folding the stride-2 subsample + spatial mean into a
    constant selection matvec (robust, no strided slicing; the extra MXU work
    is a few MFLOP and free at these sizes).
    """
    H, W = x_ref.shape[1], x_ref.shape[2]
    cin = x_ref.shape[3]
    hw = H * W
    f32 = jnp.float32

    # ---- zero-pad input image into VMEM scratch (conv padding = 1) ----
    xpad_scr[...] = jnp.zeros((H + 2, W + 2, cin), f32)
    xpad_scr[1:H + 1, 1:W + 1, :] = x_ref[0].astype(f32)

    # ---- conv1: 9 shifted windows, bf16 MXU inputs, f32 accumulation ----
    acc1 = jnp.zeros((hw, LANES), f32)
    for idx in range(9):
        dy, dx = idx // 3, idx % 3
        patch = xpad_scr[dy:dy + H, dx:dx + W, :]                  # (H, W, cin)
        pf = patch.reshape(hw, cin).astype(jnp.bfloat16)
        acc1 = acc1 + jnp.dot(pf, w1_ref[idx], preferred_element_type=f32)
    h1 = jnp.maximum(acc1 + b1_ref[...], 0.0)                      # (hw, LANES)

    # ---- zero-pad conv1 activations (real channels only) for conv2 ----
    h1pad_scr[...] = jnp.zeros((H + 2, W + 2, mid_ch), f32)
    h1pad_scr[1:H + 1, 1:W + 1, :] = h1[:, :mid_ch].reshape(H, W, mid_ch)

    # ---- conv2 evaluated on the dense stride-1 grid ----
    acc2 = jnp.zeros((hw, LANES), f32)
    for idx in range(9):
        dy, dx = idx // 3, idx % 3
        patch = h1pad_scr[dy:dy + H, dx:dx + W, :]                 # (H, W, mid)
        pf = patch.reshape(hw, mid_ch).astype(jnp.bfloat16)
        acc2 = acc2 + jnp.dot(pf, w2_ref[idx], preferred_element_type=f32)
    h2 = jnp.maximum(acc2 + b2_ref[...], 0.0)                      # conv2+ReLU

    # ---- GeM pool (p=3): clamp, cube (VPU), stride-2 subsample + mean ----
    xc = jnp.maximum(h2, eps)                                      # GeM clamp
    cubed = xc * xc * xc                                           # x**p, p=3
    m = jnp.dot(sel_ref[...], cubed, preferred_element_type=f32)   # (1, LANES)
    g = jnp.exp(jnp.log(m) * (1.0 / gem_p))                        # m**(1/p), m>0

    # ---- FC + L2 normalize (padded output cols of y are exactly 0) ----
    y = jnp.dot(g, fcw_ref[...], preferred_element_type=f32) + fcb_ref[...]
    inv = jax.lax.rsqrt(jnp.sum(y * y, axis=-1, keepdims=True) + 1e-12)
    o_ref[...] = (y * inv).reshape(1, 1, LANES).astype(o_ref.dtype)


def _fused_forward(xh, w1, b1, w2, b2, sel, fcw, fcb, *, mid_ch, gem_p, eps):
    B, H, W, cin = xh.shape
    hw = H * W
    kernel = functools.partial(_fused_forward_kernel, mid_ch=mid_ch,
                               gem_p=gem_p, eps=eps)

    flops = int(B * (2 * hw * 9 * (cin + mid_ch) * LANES     # conv GEMMs
                     + 2 * hw * LANES                        # GeM matvec
                     + 2 * LANES * LANES                     # FC
                     + 8 * hw * LANES))                      # elementwise
    transcendentals = int(B * 2 * LANES)
    nbytes = lambda a: int(a.size) * jnp.dtype(a.dtype).itemsize
    bytes_accessed = int(sum(nbytes(a) for a in
                             (xh, w1, b1, w2, b2, sel, fcw, fcb))
                         + B * LANES * 4)

    return pl.pallas_call(
        kernel,
        out_shape=jax.ShapeDtypeStruct((B, 1, LANES), jnp.float32),
        grid=(B,),
        in_specs=[
            pl.BlockSpec((1, H, W, cin), lambda b: (b, 0, 0, 0)),
            pl.BlockSpec(w1.shape, lambda b: (0, 0, 0)),
            pl.BlockSpec(b1.shape, lambda b: (0, 0)),
            pl.BlockSpec(w2.shape, lambda b: (0, 0, 0)),
            pl.BlockSpec(b2.shape, lambda b: (0, 0)),
            pl.BlockSpec(sel.shape, lambda b: (0, 0)),
            pl.BlockSpec(fcw.shape, lambda b: (0, 0)),
            pl.BlockSpec(fcb.shape, lambda b: (0, 0)),
        ],
        out_specs=pl.BlockSpec((1, 1, LANES), lambda b: (b, 0, 0)),
        scratch_shapes=[
            pltpu.VMEM((H + 2, W + 2, cin), jnp.float32),     # padded image
            pltpu.VMEM((H + 2, W + 2, mid_ch), jnp.float32),  # padded conv1 act
        ],
        compiler_params=pltpu.CompilerParams(
            dimension_semantics=("parallel",),    # shards batch over v7x's 2 TCs
            vmem_limit_bytes=32 * 1024 * 1024),
        cost_estimate=pl.CostEstimate(flops=flops,
                                      transcendentals=transcendentals,
                                      bytes_accessed=bytes_accessed),
    )(xh, w1, b1, w2, b2, sel, fcw, fcb)


@functools.partial(jax.jit, static_argnames=("mid_ch", "out_dim", "gem_p", "eps"))
def _forward_impl(images_nchw, w1, b1, w2, b2, sel, fcw, fcb, *,
                  mid_ch, out_dim, gem_p, eps):
    # Single NCHW -> NHWC layout conversion at the module boundary.
    xh = jnp.transpose(images_nchw, (0, 2, 3, 1)).astype(jnp.float32)
    emb_pad = _fused_forward(xh, w1, b1, w2, b2, sel, fcw, fcb,
                             mid_ch=mid_ch, gem_p=gem_p, eps=eps)
    return emb_pad[:, 0, :out_dim]       # drop lane padding -> (B, out_dim)


# ----------------------------------------------------------------------------
# Module
# ----------------------------------------------------------------------------
class ImageNetPallas:
    """JAX/Pallas re-implementation of ImageNet (Res18 backbone + GeM aggregator)."""

    def __init__(self, key, in_ch=4, mid_ch=16, feat_ch=32, out_dim=32,
                 height=16, width=16):
        k1, k2, k3, k4 = jax.random.split(key, 4)
        s = 0.05
        self.in_ch, self.mid_ch, self.feat_ch = in_ch, mid_ch, feat_ch
        self.out_dim = out_dim
        self.gem_p, self.gem_eps = 3.0, 1e-6       # kernel cube path assumes p == 3
        self.out_layer = 1
        self.aggregate_type = "GeM"

        # raw parameters (PyTorch layouts)
        conv1_w = jax.random.normal(k1, (mid_ch, in_ch, 3, 3), jnp.float32) * s
        conv1_b = jnp.zeros((mid_ch,), jnp.float32)
        conv2_w = jax.random.normal(k2, (feat_ch, mid_ch, 3, 3), jnp.float32) * s
        conv2_b = jnp.zeros((feat_ch,), jnp.float32)
        fc_w = jax.random.normal(k3, (out_dim, feat_ch), jnp.float32) * s
        fc_b = jax.random.normal(k4, (out_dim,), jnp.float32) * s

        # ---- precompute kernel-side layouts ONCE (lane-padded to 128) ----
        # conv weights -> (tap = kh*3+kw, cin, cout_padded), bf16 MXU operands
        w1 = jnp.transpose(conv1_w, (2, 3, 1, 0)).reshape(9, in_ch, mid_ch)
        self.w1 = jnp.pad(w1, ((0, 0), (0, 0), (0, LANES - mid_ch))).astype(jnp.bfloat16)
        w2 = jnp.transpose(conv2_w, (2, 3, 1, 0)).reshape(9, mid_ch, feat_ch)
        self.w2 = jnp.pad(w2, ((0, 0), (0, 0), (0, LANES - feat_ch))).astype(jnp.bfloat16)
        self.b1 = jnp.pad(conv1_b, (0, LANES - mid_ch)).reshape(1, LANES)
        self.b2 = jnp.pad(conv2_b, (0, LANES - feat_ch)).reshape(1, LANES)
        # FC: y = pooled @ fc_w.T + fc_b ; padded rows/cols are zero so the
        # eps-valued padded GeM channels contribute nothing and padded outputs
        # stay exactly zero (L2 norm unaffected).
        self.fcw = jnp.pad(fc_w.T, ((0, LANES - feat_ch), (0, LANES - out_dim)))
        self.fcb = jnp.pad(fc_b, (0, LANES - out_dim)).reshape(1, LANES)
        # stride-2 subsample + spatial mean folded into one (1, H*W) row
        ho, wo = height // 2, width // 2
        sel2d = jnp.zeros((height, width), jnp.float32).at[::2, ::2].set(1.0 / (ho * wo))
        self.sel = sel2d.reshape(1, height * width)

    def forward(self, x):
        emb = _forward_impl(x["images"], self.w1, self.b1, self.w2, self.b2,
                            self.sel, self.fcw, self.fcb,
                            mid_ch=self.mid_ch, out_dim=self.out_dim,
                            gem_p=self.gem_p, eps=self.gem_eps)
        return {"embeddings": emb}


# ----------------------------------------------------------------------------
if __name__ == "__main__":
    key = jax.random.PRNGKey(0)
    pkey, xkey = jax.random.split(key)

    out_dim = 32
    model = ImageNetPallas(pkey, in_ch=4, mid_ch=16, feat_ch=32,
                           out_dim=out_dim, height=16, width=16)

    images = jax.random.normal(xkey, (2, 4, 16, 16), jnp.float32)  # NCHW
    out = model.forward({"images": images})
    emb = jax.block_until_ready(out["embeddings"])

    assert emb.shape == (2, out_dim), emb.shape
    assert bool(jnp.all(jnp.isfinite(emb)))
    # L2-normalized embeddings -> unit norm
    norms = jnp.sqrt(jnp.sum(emb * emb, axis=-1))
    assert bool(jnp.all(jnp.abs(norms - 1.0) < 1e-3)), norms
    print("KERNEL_OK")
</pallas_src>

<mosaic_0001>
module attributes {stable_mosaic.version = 11 : i64} {
  func.func @_fused_forward_kernel(%arg0: i32, %arg1: memref<1x16x16x4xf32, #tpu.memory_space<vmem>>, %arg2: memref<9x4x128xbf16, #tpu.memory_space<vmem>>, %arg3: memref<1x128xf32, #tpu.memory_space<vmem>>, %arg4: memref<9x16x128xbf16, #tpu.memory_space<vmem>>, %arg5: memref<1x128xf32, #tpu.memory_space<vmem>>, %arg6: memref<1x256xf32, #tpu.memory_space<vmem>>, %arg7: memref<128x128xf32, #tpu.memory_space<vmem>>, %arg8: memref<1x128xf32, #tpu.memory_space<vmem>>, %arg9: memref<1x1x128xf32, #tpu.memory_space<vmem>>, %arg10: memref<18x18x4xf32, #tpu.memory_space<vmem>>, %arg11: memref<18x18x16xf32, #tpu.memory_space<vmem>>) attributes {dimension_semantics = [#tpu.dimension_semantics<parallel>], iteration_bounds = array<i64: 2>, scalar_prefetch = 0 : i64, scratch_operands = 2 : i64, tpu.core_type = #tpu.core_type<tc>, window_params = [{transform_indices = @transform_0, window_bounds = array<i64: 1, 16, 16, 4>}, {pipeline_mode = #tpu.pipeline_mode<synchronous>, transform_indices = @transform_1, window_bounds = array<i64: 9, 4, 128>}, {pipeline_mode = #tpu.pipeline_mode<synchronous>, transform_indices = @transform_2, window_bounds = array<i64: 1, 128>}, {pipeline_mode = #tpu.pipeline_mode<synchronous>, transform_indices = @transform_3, window_bounds = array<i64: 9, 16, 128>}, {pipeline_mode = #tpu.pipeline_mode<synchronous>, transform_indices = @transform_4, window_bounds = array<i64: 1, 128>}, {pipeline_mode = #tpu.pipeline_mode<synchronous>, transform_indices = @transform_5, window_bounds = array<i64: 1, 256>}, {pipeline_mode = #tpu.pipeline_mode<synchronous>, transform_indices = @transform_6, window_bounds = array<i64: 128, 128>}, {pipeline_mode = #tpu.pipeline_mode<synchronous>, transform_indices = @transform_7, window_bounds = array<i64: 1, 128>}, {transform_indices = @transform_8, window_bounds = array<i64: 1, 1, 128>}]} {
    %cst = arith.constant 0.000000e+00 : f32
    %0 = vector.broadcast %cst : f32 to vector<18x18x4xf32>
    %c0 = arith.constant 0 : index
    %c0_0 = arith.constant 0 : index
    %c0_1 = arith.constant 0 : index
    %1 = vector.load %arg10[%c0, %c0_0, %c0_1] : memref<18x18x4xf32, #tpu.memory_space<vmem>>, vector<18x18x4xf32>
    tpu.vector_store %arg10[%c0, %c0_0, %c0_1], %0 {strides = array<i32>} : memref<18x18x4xf32, #tpu.memory_space<vmem>>, vector<18x18x4xf32>,
    %c0_2 = arith.constant 0 : index
    %c0_3 = arith.constant 0 : index
    %c0_4 = arith.constant 0 : index
    %c0_5 = arith.constant 0 : index
    %2 = vector.load %arg1[%c0_2, %c0_3, %c0_4, %c0_5] : memref<1x16x16x4xf32, #tpu.memory_space<vmem>>, vector<1x16x16x4xf32>
    %3 = vector.shape_cast %2 : vector<1x16x16x4xf32> to vector<16x16x4xf32>
    %c1 = arith.constant 1 : index
    %c1_6 = arith.constant 1 : index
    %c0_7 = arith.constant 0 : index
    %4 = vector.load %arg10[%c1, %c1_6, %c0_7] : memref<18x18x4xf32, #tpu.memory_space<vmem>>, vector<16x16x4xf32>
    tpu.vector_store %arg10[%c1, %c1_6, %c0_7], %3 {strides = array<i32>} : memref<18x18x4xf32, #tpu.memory_space<vmem>>, vector<16x16x4xf32>,
    %cst_8 = arith.constant 0.000000e+00 : f32
    %5 = vector.broadcast %cst_8 : f32 to vector<256x128xf32>
    %c0_9 = arith.constant 0 : index
    %c0_10 = arith.constant 0 : index
    %c0_11 = arith.constant 0 : index
    %6 = vector.load %arg10[%c0_9, %c0_10, %c0_11] : memref<18x18x4xf32, #tpu.memory_space<vmem>>, vector<16x16x4xf32>
    %7 = vector.shape_cast %6 : vector<16x16x4xf32> to vector<256x4xf32>
    %8 = arith.truncf %7 : vector<256x4xf32> to vector<256x4xbf16>
    %c0_12 = arith.constant 0 : index
    %c0_13 = arith.constant 0 : index
    %c0_14 = arith.constant 0 : index
    %9 = vector.load %arg2[%c0_12, %c0_13, %c0_14] : memref<9x4x128xbf16, #tpu.memory_space<vmem>>, vector<1x4x128xbf16>
    %10 = vector.shape_cast %9 : vector<1x4x128xbf16> to vector<4x128xbf16>
    %cst_15 = arith.constant dense<0.000000e+00> : vector<256x128xf32>
    %11 = tpu.matmul %8, %10, %cst_15 {dimension_numbers = #tpu.dot_dimension_numbers<[1], [0], [0], [1], [0, 0, 1, 1], [], []>} : vector<256x4xbf16>, vector<4x128xbf16>, vector<256x128xf32> -> vector<256x128xf32>
    %12 = arith.addf %5, %11 : vector<256x128xf32>
    %c0_16 = arith.constant 0 : index
    %c1_17 = arith.constant 1 : index
    %c0_18 = arith.constant 0 : index
    %13 = vector.load %arg10[%c0_16, %c1_17, %c0_18] : memref<18x18x4xf32, #tpu.memory_space<vmem>>, vector<16x16x4xf32>
    %14 = vector.shape_cast %13 : vector<16x16x4xf32> to vector<256x4xf32>
    %15 = arith.truncf %14 : vector<256x4xf32> to vector<256x4xbf16>
    %c1_19 = arith.constant 1 : index
    %c0_20 = arith.constant 0 : index
    %c0_21 = arith.constant 0 : index
    %16 = vector.load %arg2[%c1_19, %c0_20, %c0_21] : memref<9x4x128xbf16, #tpu.memory_space<vmem>>, vector<1x4x128xbf16>
    %17 = vector.shape_cast %16 : vector<1x4x128xbf16> to vector<4x128xbf16>
    %cst_22 = arith.constant dense<0.000000e+00> : vector<256x128xf32>
    %18 = tpu.matmul %15, %17, %cst_22 {dimension_numbers = #tpu.dot_dimension_numbers<[1], [0], [0], [1], [0, 0, 1, 1], [], []>} : vector<256x4xbf16>, vector<4x128xbf16>, vector<256x128xf32> -> vector<256x128xf32>
    %19 = arith.addf %12, %18 : vector<256x128xf32>
    %c0_23 = arith.constant 0 : index
    %c2 = arith.constant 2 : index
    %c0_24 = arith.constant 0 : index
    %20 = vector.load %arg10[%c0_23, %c2, %c0_24] : memref<18x18x4xf32, #tpu.memory_space<vmem>>, vector<16x16x4xf32>
    %21 = vector.shape_cast %20 : vector<16x16x4xf32> to vector<256x4xf32>
    %22 = arith.truncf %21 : vector<256x4xf32> to vector<256x4xbf16>
    %c2_25 = arith.constant 2 : index
    %c0_26 = arith.constant 0 : index
    %c0_27 = arith.constant 0 : index
    %23 = vector.load %arg2[%c2_25, %c0_26, %c0_27] : memref<9x4x128xbf16, #tpu.memory_space<vmem>>, vector<1x4x128xbf16>
    %24 = vector.shape_cast %23 : vector<1x4x128xbf16> to vector<4x128xbf16>
    %cst_28 = arith.constant dense<0.000000e+00> : vector<256x128xf32>
    %25 = tpu.matmul %22, %24, %cst_28 {dimension_numbers = #tpu.dot_dimension_numbers<[1], [0], [0], [1], [0, 0, 1, 1], [], []>} : vector<256x4xbf16>, vector<4x128xbf16>, vector<256x128xf32> -> vector<256x128xf32>
    %26 = arith.addf %19, %25 : vector<256x128xf32>
    %c1_29 = arith.constant 1 : index
    %c0_30 = arith.constant 0 : index
    %c0_31 = arith.constant 0 : index
    %27 = vector.load %arg10[%c1_29, %c0_30, %c0_31] : memref<18x18x4xf32, #tpu.memory_space<vmem>>, vector<16x16x4xf32>
    %28 = vector.shape_cast %27 : vector<16x16x4xf32> to vector<256x4xf32>
    %29 = arith.truncf %28 : vector<256x4xf32> to vector<256x4xbf16>
    %c3 = arith.constant 3 : index
    %c0_32 = arith.constant 0 : index
    %c0_33 = arith.constant 0 : index
    %30 = vector.load %arg2[%c3, %c0_32, %c0_33] : memref<9x4x128xbf16, #tpu.memory_space<vmem>>, vector<1x4x128xbf16>
    %31 = vector.shape_cast %30 : vector<1x4x128xbf16> to vector<4x128xbf16>
    %cst_34 = arith.constant dense<0.000000e+00> : vector<256x128xf32>
    %32 = tpu.matmul %29, %31, %cst_34 {dimension_numbers = #tpu.dot_dimension_numbers<[1], [0], [0], [1], [0, 0, 1, 1], [], []>} : vector<256x4xbf16>, vector<4x128xbf16>, vector<256x128xf32> -> vector<256x128xf32>
    %33 = arith.addf %26, %32 : vector<256x128xf32>
    %c1_35 = arith.constant 1 : index
    %c1_36 = arith.constant 1 : index
    %c0_37 = arith.constant 0 : index
    %34 = vector.load %arg10[%c1_35, %c1_36, %c0_37] : memref<18x18x4xf32, #tpu.memory_space<vmem>>, vector<16x16x4xf32>
    %35 = vector.shape_cast %34 : vector<16x16x4xf32> to vector<256x4xf32>
    %36 = arith.truncf %35 : vector<256x4xf32> to vector<256x4xbf16>
    %c4 = arith.constant 4 : index
    %c0_38 = arith.constant 0 : index
    %c0_39 = arith.constant 0 : index
    %37 = vector.load %arg2[%c4, %c0_38, %c0_39] : memref<9x4x128xbf16, #tpu.memory_space<vmem>>, vector<1x4x128xbf16>
    %38 = vector.shape_cast %37 : vector<1x4x128xbf16> to vector<4x128xbf16>
    %cst_40 = arith.constant dense<0.000000e+00> : vector<256x128xf32>
    %39 = tpu.matmul %36, %38, %cst_40 {dimension_numbers = #tpu.dot_dimension_numbers<[1], [0], [0], [1], [0, 0, 1, 1], [], []>} : vector<256x4xbf16>, vector<4x128xbf16>, vector<256x128xf32> -> vector<256x128xf32>
    %40 = arith.addf %33, %39 : vector<256x128xf32>
    %c1_41 = arith.constant 1 : index
    %c2_42 = arith.constant 2 : index
    %c0_43 = arith.constant 0 : index
    %41 = vector.load %arg10[%c1_41, %c2_42, %c0_43] : memref<18x18x4xf32, #tpu.memory_space<vmem>>, vector<16x16x4xf32>
    %42 = vector.shape_cast %41 : vector<16x16x4xf32> to vector<256x4xf32>
    %43 = arith.truncf %42 : vector<256x4xf32> to vector<256x4xbf16>
    %c5 = arith.constant 5 : index
    %c0_44 = arith.constant 0 : index
    %c0_45 = arith.constant 0 : index
    %44 = vector.load %arg2[%c5, %c0_44, %c0_45] : memref<9x4x128xbf16, #tpu.memory_space<vmem>>, vector<1x4x128xbf16>
    %45 = vector.shape_cast %44 : vector<1x4x128xbf16> to vector<4x128xbf16>
    %cst_46 = arith.constant dense<0.000000e+00> : vector<256x128xf32>
    %46 = tpu.matmul %43, %45, %cst_46 {dimension_numbers = #tpu.dot_dimension_numbers<[1], [0], [0], [1], [0, 0, 1, 1], [], []>} : vector<256x4xbf16>, vector<4x128xbf16>, vector<256x128xf32> -> vector<256x128xf32>
    %47 = arith.addf %40, %46 : vector<256x128xf32>
    %c2_47 = arith.constant 2 : index
    %c0_48 = arith.constant 0 : index
    %c0_49 = arith.constant 0 : index
    %48 = vector.load %arg10[%c2_47, %c0_48, %c0_49] : memref<18x18x4xf32, #tpu.memory_space<vmem>>, vector<16x16x4xf32>
    %49 = vector.shape_cast %48 : vector<16x16x4xf32> to vector<256x4xf32>
    %50 = arith.truncf %49 : vector<256x4xf32> to vector<256x4xbf16>
    %c6 = arith.constant 6 : index
    %c0_50 = arith.constant 0 : index
    %c0_51 = arith.constant 0 : index
    %51 = vector.load %arg2[%c6, %c0_50, %c0_51] : memref<9x4x128xbf16, #tpu.memory_space<vmem>>, vector<1x4x128xbf16>
    %52 = vector.shape_cast %51 : vector<1x4x128xbf16> to vector<4x128xbf16>
    %cst_52 = arith.constant dense<0.000000e+00> : vector<256x128xf32>
    %53 = tpu.matmul %50, %52, %cst_52 {dimension_numbers = #tpu.dot_dimension_numbers<[1], [0], [0], [1], [0, 0, 1, 1], [], []>} : vector<256x4xbf16>, vector<4x128xbf16>, vector<256x128xf32> -> vector<256x128xf32>
    %54 = arith.addf %47, %53 : vector<256x128xf32>
    %c2_53 = arith.constant 2 : index
    %c1_54 = arith.constant 1 : index
    %c0_55 = arith.constant 0 : index
    %55 = vector.load %arg10[%c2_53, %c1_54, %c0_55] : memref<18x18x4xf32, #tpu.memory_space<vmem>>, vector<16x16x4xf32>
    %56 = vector.shape_cast %55 : vector<16x16x4xf32> to vector<256x4xf32>
    %57 = arith.truncf %56 : vector<256x4xf32> to vector<256x4xbf16>
    %c7 = arith.constant 7 : index
    %c0_56 = arith.constant 0 : index
    %c0_57 = arith.constant 0 : index
    %58 = vector.load %arg2[%c7, %c0_56, %c0_57] : memref<9x4x128xbf16, #tpu.memory_space<vmem>>, vector<1x4x128xbf16>
    %59 = vector.shape_cast %58 : vector<1x4x128xbf16> to vector<4x128xbf16>
    %cst_58 = arith.constant dense<0.000000e+00> : vector<256x128xf32>
    %60 = tpu.matmul %57, %59, %cst_58 {dimension_numbers = #tpu.dot_dimension_numbers<[1], [0], [0], [1], [0, 0, 1, 1], [], []>} : vector<256x4xbf16>, vector<4x128xbf16>, vector<256x128xf32> -> vector<256x128xf32>
    %61 = arith.addf %54, %60 : vector<256x128xf32>
    %c2_59 = arith.constant 2 : index
    %c2_60 = arith.constant 2 : index
    %c0_61 = arith.constant 0 : index
    %62 = vector.load %arg10[%c2_59, %c2_60, %c0_61] : memref<18x18x4xf32, #tpu.memory_space<vmem>>, vector<16x16x4xf32>
    %63 = vector.shape_cast %62 : vector<16x16x4xf32> to vector<256x4xf32>
    %64 = arith.truncf %63 : vector<256x4xf32> to vector<256x4xbf16>
    %c8 = arith.constant 8 : index
    %c0_62 = arith.constant 0 : index
    %c0_63 = arith.constant 0 : index
    %65 = vector.load %arg2[%c8, %c0_62, %c0_63] : memref<9x4x128xbf16, #tpu.memory_space<vmem>>, vector<1x4x128xbf16>
    %66 = vector.shape_cast %65 : vector<1x4x128xbf16> to vector<4x128xbf16>
    %cst_64 = arith.constant dense<0.000000e+00> : vector<256x128xf32>
    %67 = tpu.matmul %64, %66, %cst_64 {dimension_numbers = #tpu.dot_dimension_numbers<[1], [0], [0], [1], [0, 0, 1, 1], [], []>} : vector<256x4xbf16>, vector<4x128xbf16>, vector<256x128xf32> -> vector<256x128xf32>
    %68 = arith.addf %61, %67 : vector<256x128xf32>
    %c0_65 = arith.constant 0 : index
    %c0_66 = arith.constant 0 : index
    %69 = vector.load %arg3[%c0_65, %c0_66] : memref<1x128xf32, #tpu.memory_space<vmem>>, vector<1x128xf32>
    %70 = vector.broadcast %69 : vector<1x128xf32> to vector<256x128xf32>
    %71 = arith.addf %68, %70 : vector<256x128xf32>
    %cst_67 = arith.constant 0.000000e+00 : f32
    %72 = vector.broadcast %cst_67 : f32 to vector<256x128xf32>
    %73 = arith.maximumf %71, %72 : vector<256x128xf32>
    %cst_68 = arith.constant 0.000000e+00 : f32
    %74 = vector.broadcast %cst_68 : f32 to vector<18x18x16xf32>
    %c0_69 = arith.constant 0 : index
    %c0_70 = arith.constant 0 : index
    %c0_71 = arith.constant 0 : index
    %75 = vector.load %arg11[%c0_69, %c0_70, %c0_71] : memref<18x18x16xf32, #tpu.memory_space<vmem>>, vector<18x18x16xf32>
    tpu.vector_store %arg11[%c0_69, %c0_70, %c0_71], %74 {strides = array<i32>} : memref<18x18x16xf32, #tpu.memory_space<vmem>>, vector<18x18x16xf32>,
    %76 = vector.extract_strided_slice %73 {offsets = [0, 0], sizes = [256, 16], strides = [1, 1]} : vector<256x128xf32> to vector<256x16xf32>
    %77 = vector.shape_cast %76 : vector<256x16xf32> to vector<16x16x16xf32>
    %c1_72 = arith.constant 1 : index
    %c1_73 = arith.constant 1 : index
    %c0_74 = arith.constant 0 : index
    %78 = vector.load %arg11[%c1_72, %c1_73, %c0_74] : memref<18x18x16xf32, #tpu.memory_space<vmem>>, vector<16x16x16xf32>
    tpu.vector_store %arg11[%c1_72, %c1_73, %c0_74], %77 {strides = array<i32>} : memref<18x18x16xf32, #tpu.memory_space<vmem>>, vector<16x16x16xf32>,
    %cst_75 = arith.constant 0.000000e+00 : f32
    %79 = vector.broadcast %cst_75 : f32 to vector<256x128xf32>
    %c0_76 = arith.constant 0 : index
    %c0_77 = arith.constant 0 : index
    %c0_78 = arith.constant 0 : index
    %80 = vector.load %arg11[%c0_76, %c0_77, %c0_78] : memref<18x18x16xf32, #tpu.memory_space<vmem>>, vector<16x16x16xf32>
    %81 = vector.shape_cast %80 : vector<16x16x16xf32> to vector<256x16xf32>
    %82 = arith.truncf %81 : vector<256x16xf32> to vector<256x16xbf16>
    %c0_79 = arith.constant 0 : index
    %c0_80 = arith.constant 0 : index
    %c0_81 = arith.constant 0 : index
    %83 = vector.load %arg4[%c0_79, %c0_80, %c0_81] : memref<9x16x128xbf16, #tpu.memory_space<vmem>>, vector<1x16x128xbf16>
    %84 = vector.shape_cast %83 : vector<1x16x128xbf16> to vector<16x128xbf16>
    %cst_82 = arith.constant dense<0.000000e+00> : vector<256x128xf32>
    %85 = tpu.matmul %82, %84, %cst_82 {dimension_numbers = #tpu.dot_dimension_numbers<[1], [0], [0], [1], [0, 0, 1, 1], [], []>} : vector<256x16xbf16>, vector<16x128xbf16>, vector<256x128xf32> -> vector<256x128xf32>
    %86 = arith.addf %79, %85 : vector<256x128xf32>
    %c0_83 = arith.constant 0 : index
    %c1_84 = arith.constant 1 : index
    %c0_85 = arith.constant 0 : index
    %87 = vector.load %arg11[%c0_83, %c1_84, %c0_85] : memref<18x18x16xf32, #tpu.memory_space<vmem>>, vector<16x16x16xf32>
    %88 = vector.shape_cast %87 : vector<16x16x16xf32> to vector<256x16xf32>
    %89 = arith.truncf %88 : vector<256x16xf32> to vector<256x16xbf16>
    %c1_86 = arith.constant 1 : index
    %c0_87 = arith.constant 0 : index
    %c0_88 = arith.constant 0 : index
    %90 = vector.load %arg4[%c1_86, %c0_87, %c0_88] : memref<9x16x128xbf16, #tpu.memory_space<vmem>>, vector<1x16x128xbf16>
    %91 = vector.shape_cast %90 : vector<1x16x128xbf16> to vector<16x128xbf16>
    %cst_89 = arith.constant dense<0.000000e+00> : vector<256x128xf32>
    %92 = tpu.matmul %89, %91, %cst_89 {dimension_numbers = #tpu.dot_dimension_numbers<[1], [0], [0], [1], [0, 0, 1, 1], [], []>} : vector<256x16xbf16>, vector<16x128xbf16>, vector<256x128xf32> -> vector<256x128xf32>
    %93 = arith.addf %86, %92 : vector<256x128xf32>
    %c0_90 = arith.constant 0 : index
    %c2_91 = arith.constant 2 : index
    %c0_92 = arith.constant 0 : index
    %94 = vector.load %arg11[%c0_90, %c2_91, %c0_92] : memref<18x18x16xf32, #tpu.memory_space<vmem>>, vector<16x16x16xf32>
    %95 = vector.shape_cast %94 : vector<16x16x16xf32> to vector<256x16xf32>
    %96 = arith.truncf %95 : vector<256x16xf32> to vector<256x16xbf16>
    %c2_93 = arith.constant 2 : index
    %c0_94 = arith.constant 0 : index
    %c0_95 = arith.constant 0 : index
    %97 = vector.load %arg4[%c2_93, %c0_94, %c0_95] : memref<9x16x128xbf16, #tpu.memory_space<vmem>>, vector<1x16x128xbf16>
    %98 = vector.shape_cast %97 : vector<1x16x128xbf16> to vector<16x128xbf16>
    %cst_96 = arith.constant dense<0.000000e+00> : vector<256x128xf32>
    %99 = tpu.matmul %96, %98, %cst_96 {dimension_numbers = #tpu.dot_dimension_numbers<[1], [0], [0], [1], [0, 0, 1, 1], [], []>} : vector<256x16xbf16>, vector<16x128xbf16>, vector<256x128xf32> -> vector<256x128xf32>
    %100 = arith.addf %93, %99 : vector<256x128xf32>
    %c1_97 = arith.constant 1 : index
    %c0_98 = arith.constant 0 : index
    %c0_99 = arith.constant 0 : index
    %101 = vector.load %arg11[%c1_97, %c0_98, %c0_99] : memref<18x18x16xf32, #tpu.memory_space<vmem>>, vector<16x16x16xf32>
    %102 = vector.shape_cast %101 : vector<16x16x16xf32> to vector<256x16xf32>
    %103 = arith.truncf %102 : vector<256x16xf32> to vector<256x16xbf16>
    %c3_100 = arith.constant 3 : index
    %c0_101 = arith.constant 0 : index
    %c0_102 = arith.constant 0 : index
    %104 = vector.load %arg4[%c3_100, %c0_101, %c0_102] : memref<9x16x128xbf16, #tpu.memory_space<vmem>>, vector<1x16x128xbf16>
    %105 = vector.shape_cast %104 : vector<1x16x128xbf16> to vector<16x128xbf16>
    %cst_103 = arith.constant dense<0.000000e+00> : vector<256x128xf32>
    %106 = tpu.matmul %103, %105, %cst_103 {dimension_numbers = #tpu.dot_dimension_numbers<[1], [0], [0], [1], [0, 0, 1, 1], [], []>} : vector<256x16xbf16>, vector<16x128xbf16>, vector<256x128xf32> -> vector<256x128xf32>
    %107 = arith.addf %100, %106 : vector<256x128xf32>
    %c1_104 = arith.constant 1 : index
    %c1_105 = arith.constant 1 : index
    %c0_106 = arith.constant 0 : index
    %108 = vector.load %arg11[%c1_104, %c1_105, %c0_106] : memref<18x18x16xf32, #tpu.memory_space<vmem>>, vector<16x16x16xf32>
    %109 = vector.shape_cast %108 : vector<16x16x16xf32> to vector<256x16xf32>
    %110 = arith.truncf %109 : vector<256x16xf32> to vector<256x16xbf16>
    %c4_107 = arith.constant 4 : index
    %c0_108 = arith.constant 0 : index
    %c0_109 = arith.constant 0 : index
    %111 = vector.load %arg4[%c4_107, %c0_108, %c0_109] : memref<9x16x128xbf16, #tpu.memory_space<vmem>>, vector<1x16x128xbf16>
    %112 = vector.shape_cast %111 : vector<1x16x128xbf16> to vector<16x128xbf16>
    %cst_110 = arith.constant dense<0.000000e+00> : vector<256x128xf32>
    %113 = tpu.matmul %110, %112, %cst_110 {dimension_numbers = #tpu.dot_dimension_numbers<[1], [0], [0], [1], [0, 0, 1, 1], [], []>} : vector<256x16xbf16>, vector<16x128xbf16>, vector<256x128xf32> -> vector<256x128xf32>
    %114 = arith.addf %107, %113 : vector<256x128xf32>
    %c1_111 = arith.constant 1 : index
    %c2_112 = arith.constant 2 : index
    %c0_113 = arith.constant 0 : index
    %115 = vector.load %arg11[%c1_111, %c2_112, %c0_113] : memref<18x18x16xf32, #tpu.memory_space<vmem>>, vector<16x16x16xf32>
    %116 = vector.shape_cast %115 : vector<16x16x16xf32> to vector<256x16xf32>
    %117 = arith.truncf %116 : vector<256x16xf32> to vector<256x16xbf16>
    %c5_114 = arith.constant 5 : index
    %c0_115 = arith.constant 0 : index
    %c0_116 = arith.constant 0 : index
    %118 = vector.load %arg4[%c5_114, %c0_115, %c0_116] : memref<9x16x128xbf16, #tpu.memory_space<vmem>>, vector<1x16x128xbf16>
    %119 = vector.shape_cast %118 : vector<1x16x128xbf16> to vector<16x128xbf16>
    %cst_117 = arith.constant dense<0.000000e+00> : vector<256x128xf32>
    %120 = tpu.matmul %117, %119, %cst_117 {dimension_numbers = #tpu.dot_dimension_numbers<[1], [0], [0], [1], [0, 0, 1, 1], [], []>} : vector<256x16xbf16>, vector<16x128xbf16>, vector<256x128xf32> -> vector<256x128xf32>
    %121 = arith.addf %114, %120 : vector<256x128xf32>
    %c2_118 = arith.constant 2 : index
    %c0_119 = arith.constant 0 : index
    %c0_120 = arith.constant 0 : index
    %122 = vector.load %arg11[%c2_118, %c0_119, %c0_120] : memref<18x18x16xf32, #tpu.memory_space<vmem>>, vector<16x16x16xf32>
    %123 = vector.shape_cast %122 : vector<16x16x16xf32> to vector<256x16xf32>
    %124 = arith.truncf %123 : vector<256x16xf32> to vector<256x16xbf16>
    %c6_121 = arith.constant 6 : index
    %c0_122 = arith.constant 0 : index
    %c0_123 = arith.constant 0 : index
    %125 = vector.load %arg4[%c6_121, %c0_122, %c0_123] : memref<9x16x128xbf16, #tpu.memory_space<vmem>>, vector<1x16x128xbf16>
    %126 = vector.shape_cast %125 : vector<1x16x128xbf16> to vector<16x128xbf16>
    %cst_124 = arith.constant dense<0.000000e+00> : vector<256x128xf32>
    %127 = tpu.matmul %124, %126, %cst_124 {dimension_numbers = #tpu.dot_dimension_numbers<[1], [0], [0], [1], [0, 0, 1, 1], [], []>} : vector<256x16xbf16>, vector<16x128xbf16>, vector<256x128xf32> -> vector<256x128xf32>
    %128 = arith.addf %121, %127 : vector<256x128xf32>
    %c2_125 = arith.constant 2 : index
    %c1_126 = arith.constant 1 : index
    %c0_127 = arith.constant 0 : index
    %129 = vector.load %arg11[%c2_125, %c1_126, %c0_127] : memref<18x18x16xf32, #tpu.memory_space<vmem>>, vector<16x16x16xf32>
    %130 = vector.shape_cast %129 : vector<16x16x16xf32> to vector<256x16xf32>
    %131 = arith.truncf %130 : vector<256x16xf32> to vector<256x16xbf16>
    %c7_128 = arith.constant 7 : index
    %c0_129 = arith.constant 0 : index
    %c0_130 = arith.constant 0 : index
    %132 = vector.load %arg4[%c7_128, %c0_129, %c0_130] : memref<9x16x128xbf16, #tpu.memory_space<vmem>>, vector<1x16x128xbf16>
    %133 = vector.shape_cast %132 : vector<1x16x128xbf16> to vector<16x128xbf16>
    %cst_131 = arith.constant dense<0.000000e+00> : vector<256x128xf32>
    %134 = tpu.matmul %131, %133, %cst_131 {dimension_numbers = #tpu.dot_dimension_numbers<[1], [0], [0], [1], [0, 0, 1, 1], [], []>} : vector<256x16xbf16>, vector<16x128xbf16>, vector<256x128xf32> -> vector<256x128xf32>
    %135 = arith.addf %128, %134 : vector<256x128xf32>
    %c2_132 = arith.constant 2 : index
    %c2_133 = arith.constant 2 : index
    %c0_134 = arith.constant 0 : index
    %136 = vector.load %arg11[%c2_132, %c2_133, %c0_134] : memref<18x18x16xf32, #tpu.memory_space<vmem>>, vector<16x16x16xf32>
    %137 = vector.shape_cast %136 : vector<16x16x16xf32> to vector<256x16xf32>
    %138 = arith.truncf %137 : vector<256x16xf32> to vector<256x16xbf16>
    %c8_135 = arith.constant 8 : index
    %c0_136 = arith.constant 0 : index
    %c0_137 = arith.constant 0 : index
    %139 = vector.load %arg4[%c8_135, %c0_136, %c0_137] : memref<9x16x128xbf16, #tpu.memory_space<vmem>>, vector<1x16x128xbf16>
    %140 = vector.shape_cast %139 : vector<1x16x128xbf16> to vector<16x128xbf16>
    %cst_138 = arith.constant dense<0.000000e+00> : vector<256x128xf32>
    %141 = tpu.matmul %138, %140, %cst_138 {dimension_numbers = #tpu.dot_dimension_numbers<[1], [0], [0], [1], [0, 0, 1, 1], [], []>} : vector<256x16xbf16>, vector<16x128xbf16>, vector<256x128xf32> -> vector<256x128xf32>
    %142 = arith.addf %135, %141 : vector<256x128xf32>
    %c0_139 = arith.constant 0 : index
    %c0_140 = arith.constant 0 : index
    %143 = vector.load %arg5[%c0_139, %c0_140] : memref<1x128xf32, #tpu.memory_space<vmem>>, vector<1x128xf32>
    %144 = vector.broadcast %143 : vector<1x128xf32> to vector<256x128xf32>
    %145 = arith.addf %142, %144 : vector<256x128xf32>
    %cst_141 = arith.constant 0.000000e+00 : f32
    %146 = vector.broadcast %cst_141 : f32 to vector<256x128xf32>
    %147 = arith.maximumf %145, %146 : vector<256x128xf32>
    %cst_142 = arith.constant 9.99999997E-7 : f32
    %148 = vector.broadcast %cst_142 : f32 to vector<256x128xf32>
    %149 = arith.maximumf %147, %148 : vector<256x128xf32>
    %150 = arith.mulf %149, %149 : vector<256x128xf32>
    %151 = arith.mulf %150, %149 : vector<256x128xf32>
    %c0_143 = arith.constant 0 : index
    %c0_144 = arith.constant 0 : index
    %152 = vector.load %arg6[%c0_143, %c0_144] : memref<1x256xf32, #tpu.memory_space<vmem>>, vector<1x256xf32>
    %cst_145 = arith.constant dense<0.000000e+00> : vector<1x128xf32>
    %153 = tpu.matmul %152, %151, %cst_145 {dimension_numbers = #tpu.dot_dimension_numbers<[1], [0], [0], [1], [0, 0, 1, 1], [], []>} : vector<1x256xf32>, vector<256x128xf32>, vector<1x128xf32> -> vector<1x128xf32>
    %154 = math.log %153 : vector<1x128xf32>
    %cst_146 = arith.constant 0.333333343 : f32
    %155 = vector.broadcast %cst_146 : f32 to vector<1x128xf32>
    %156 = arith.mulf %154, %155 : vector<1x128xf32>
    %157 = math.exp %156 : vector<1x128xf32>
    %c0_147 = arith.constant 0 : index
    %c0_148 = arith.constant 0 : index
    %158 = vector.load %arg7[%c0_147, %c0_148] : memref<128x128xf32, #tpu.memory_space<vmem>>, vector<128x128xf32>
    %cst_149 = arith.constant dense<0.000000e+00> : vector<1x128xf32>
    %159 = tpu.matmul %157, %158, %cst_149 {dimension_numbers = #tpu.dot_dimension_numbers<[1], [0], [0], [1], [0, 0, 1, 1], [], []>} : vector<1x128xf32>, vector<128x128xf32>, vector<1x128xf32> -> vector<1x128xf32>
    %c0_150 = arith.constant 0 : index
    %c0_151 = arith.constant 0 : index
    %160 = vector.load %arg8[%c0_150, %c0_151] : memref<1x128xf32, #tpu.memory_space<vmem>>, vector<1x128xf32>
    %161 = arith.addf %159, %160 : vector<1x128xf32>
    %162 = arith.mulf %161, %161 : vector<1x128xf32>
    %cst_152 = arith.constant dense<0.000000e+00> : vector<1xf32>
    %163 = vector.multi_reduction <add>, %162, %cst_152 [1] : vector<1x128xf32> to vector<1xf32>
    %164 = vector.shape_cast %163 : vector<1xf32> to vector<1x1xf32>
    %cst_153 = arith.constant 9.99999996E-13 : f32
    %165 = vector.broadcast %cst_153 : f32 to vector<1x1xf32>
    %166 = arith.addf %164, %165 : vector<1x1xf32>
    %167 = math.rsqrt %166 : vector<1x1xf32>
    %168 = vector.broadcast %167 : vector<1x1xf32> to vector<1x128xf32>
    %169 = arith.mulf %161, %168 : vector<1x128xf32>
    %170 = vector.shape_cast %169 : vector<1x128xf32> to vector<1x1x128xf32>
    %c0_154 = arith.constant 0 : index
    %c0_155 = arith.constant 0 : index
    %c0_156 = arith.constant 0 : index
    %171 = vector.load %arg9[%c0_154, %c0_155, %c0_156] : memref<1x1x128xf32, #tpu.memory_space<vmem>>, vector<1x1x128xf32>
    tpu.vector_store %arg9[%c0_154, %c0_155, %c0_156], %170 {strides = array<i32>} : memref<1x1x128xf32, #tpu.memory_space<vmem>>, vector<1x1x128xf32>,
    return
  }
  func.func @transform_0(%arg0: i32) -> (i32, i32, i32, i32) {
    %c0_i32 = arith.constant 0 : i32
    %c0_i32_0 = arith.constant 0 : i32
    %c0_i32_1 = arith.constant 0 : i32
    %c0_i32_2 = arith.constant 0 : i32
    return %arg0, %c0_i32, %c0_i32_0, %c0_i32_1 : i32, i32, i32, i32
  }
  func.func @transform_1(%arg0: i32) -> (i32, i32, i32) {
    %c0_i32 = arith.constant 0 : i32
    %c0_i32_0 = arith.constant 0 : i32
    %c0_i32_1 = arith.constant 0 : i32
    %c0_i32_2 = arith.constant 0 : i32
    return %c0_i32, %c0_i32_0, %c0_i32_1 : i32, i32, i32
  }
  func.func @transform_2(%arg0: i32) -> (i32, i32) {
    %c0_i32 = arith.constant 0 : i32
    %c0_i32_0 = arith.constant 0 : i32
    %c0_i32_1 = arith.constant 0 : i32
    return %c0_i32, %c0_i32_0 : i32, i32
  }
  func.func @transform_3(%arg0: i32) -> (i32, i32, i32) {
    %c0_i32 = arith.constant 0 : i32
    %c0_i32_0 = arith.constant 0 : i32
    %c0_i32_1 = arith.constant 0 : i32
    %c0_i32_2 = arith.constant 0 : i32
    return %c0_i32, %c0_i32_0, %c0_i32_1 : i32, i32, i32
  }
  func.func @transform_4(%arg0: i32) -> (i32, i32) {
    %c0_i32 = arith.constant 0 : i32
    %c0_i32_0 = arith.constant 0 : i32
    %c0_i32_1 = arith.constant 0 : i32
    return %c0_i32, %c0_i32_0 : i32, i32
  }
  func.func @transform_5(%arg0: i32) -> (i32, i32) {
    %c0_i32 = arith.constant 0 : i32
    %c0_i32_0 = arith.constant 0 : i32
    %c0_i32_1 = arith.constant 0 : i32
    return %c0_i32, %c0_i32_0 : i32, i32
  }
  func.func @transform_6(%arg0: i32) -> (i32, i32) {
    %c0_i32 = arith.constant 0 : i32
    %c0_i32_0 = arith.constant 0 : i32
    %c0_i32_1 = arith.constant 0 : i32
    return %c0_i32, %c0_i32_0 : i32, i32
  }
  func.func @transform_7(%arg0: i32) -> (i32, i32) {
    %c0_i32 = arith.constant 0 : i32
    %c0_i32_0 = arith.constant 0 : i32
    %c0_i32_1 = arith.constant 0 : i32
    return %c0_i32, %c0_i32_0 : i32, i32
  }
  func.func @transform_8(%arg0: i32) -> (i32, i32, i32) {
    %c0_i32 = arith.constant 0 : i32
    %c0_i32_0 = arith.constant 0 : i32
    %c0_i32_1 = arith.constant 0 : i32
    return %arg0, %c0_i32, %c0_i32_0 : i32, i32, i32
  }
}

</mosaic_0001>

<llo_original>
// kernel: _forward_impl.1
$region0: #{_forward_impl.1}
  #allocation0 [shape = 'u32[]', space=smem, size = 0x4, offset = 0x4, fixed_abs, tag = 'smem constant byte address 0x4 - core index']
  #allocation1 [shape = 'u32[144,128]{1,0:T(1,128)}', space=vmem, size = 0x12000, scoped, tag = 'internal scratch']
  #allocation2 [shape = 'f32[18,18,4]{2,1,0:T(8,128)}', space=vmem, size = 0x36000, scoped, tag = 'scratch operand']
  #allocation3 [shape = 'f32[18,18,16]{2,1,0:T(8,128)}', space=vmem, size = 0x36000, scoped, tag = 'scratch operand']
  %s0 = inlined_call_operand.vmem [shape: f32[2,16,16,4], index: 0, kind: input, shape index: {}]
  %s1 = inlined_call_operand.vmem [shape: bf16[9,4,128], index: 1, kind: input, shape index: {}]
  %s2 = inlined_call_operand.vmem [shape: f32[1,128], index: 2, kind: input, shape index: {}]
  %s3 = inlined_call_operand.vmem [shape: bf16[9,16,128], index: 3, kind: input, shape index: {}]
  %s4 = inlined_call_operand.vmem [shape: f32[1,128], index: 4, kind: input, shape index: {}]
  %s5 = inlined_call_operand.vmem [shape: f32[1,256], index: 5, kind: input, shape index: {}]
  %s6 = inlined_call_operand.vmem [shape: f32[128,128], index: 6, kind: input, shape index: {}]
  %s7 = inlined_call_operand.vmem [shape: f32[1,128], index: 7, kind: input, shape index: {}]
  %s8 = inlined_call_operand.hbm [shape: f32[2,1,128], index: 8, kind: output, shape index: {}]
  %s9 = sld [smem:[#allocation0]]
  $region65: #{_forward_impl.1} parent=0
    _
  %s11 = ssub.s32 1, %s9
  %s12 = scalar_select 0, %s11, %s9
  $region1: #{_forward_impl.1} parent=0
    #allocation4 [shape = 'u8[1024]{0}', space=vmem, size = 0x400, scoped, tag = 'output window, operand 0']
    #allocation5 [shape = 's32[2]{0}', space=sflag, size = 0x8, scoped, tag = 'scoped memory for _forward_impl.1']
    %13 = vsyncpa [#allocation5], 0
    %s14 = scalar_lea.sflag [#allocation5], 1
    %15 = vsyncpa %s14, 0
    loop: start=0, step=1, limit=4
    $region2: #{_forward_impl.1} parent=1 // loop_pre_header
      _
    $region3: #{_forward_impl.1} parent=1 // loop_header
      %s17 = sphi 0, %s21
      %p18 = scmp.ge.s32.totalorder %s17, 4
      %s27 = sphi 0, %s29
      %s30 = sphi 0, %s27
      %s31 = sphi 0, %s30
      %s47 = sphi 0, %s31
      %s51 = sphi 0, %s51
      %s53 = sphi 0, %s51
      %s54 = sphi 0, %s53
      %s68 = sphi 0, %s54
      %s72 = sphi 0, %s72
      %s74 = sphi 0, %s72
      %s75 = sphi 0, %s74
      %s89 = sphi 0, %s75
      %s93 = sphi 0, %s93
      %s95 = sphi 0, %s93
      %s96 = sphi 0, %s95
      %s110 = sphi 0, %s96
      %s114 = sphi 0, %s114
      %s116 = sphi 0, %s114
      %s117 = sphi 0, %s116
      %s131 = sphi 0, %s117
      %s135 = sphi 0, %s135
      %s137 = sphi 0, %s135
      %s138 = sphi 0, %s137
      %s152 = sphi 0, %s138
      %s156 = sphi 0, %s156
      %s158 = sphi 0, %s156
      %s159 = sphi 0, %s158
      %s173 = sphi 0, %s159
      %s177 = sphi 0, %s177
      %s179 = sphi 0, %s177
      %s180 = sphi 0, %s179
      %s194 = sphi 0, %s180
      %s200 = sphi 0, %s202
      %s203 = sphi 0, %s200
      %s204 = sphi 0, %s203
      %s220 = sphi 0, %s204
    $region4: #{_forward_impl.1} parent=1 // loop_header_branch
      %20 = sbr.rel (%p18) target = $region8
    $region5: #{_forward_impl.1} parent=1 // loop_body
      %s22 = ssub.s32 %s17, 1
      %s23 = ssub.s32 %s17, 2
      %s24 = sadd.s32 %s17, 1
      %s25 = ssub.s32 %s17, %s24
      %p26 = scmp.eq.s32.totalorder %s25, 0
      %s28 = sadd.s32 %s27, 1
      %s29 = scalar_select %p26, %s27, %s28
      %p32 = pneg %p26
      %p33 = scmp.eq.s32.totalorder %s17, 1
      %p34 = por %p32, %p33
      %p35 = scmp.ne.s32.totalorder %s27, %s30
      %p36 = scmp.eq.s32.totalorder %s17, 0
      %p37 = por %p35, %p36
      %p38 = scmp.ne.s32.totalorder %s27, %s30
      %p39 = scmp.eq.s32.totalorder %s22, 1
      %p40 = por %p38, %p39
      %p41 = scmp.ne.s32.totalorder %s30, %s31
      %p42 = scmp.eq.s32.totalorder %s22, 0
      %p43 = por %p41, %p42
      %p44 = scmp.ne.s32.totalorder %s30, %s31
      %p45 = scmp.eq.s32.totalorder %s23, 1
      %p46 = por %p44, %p45
      %p48 = scmp.ne.s32.totalorder %s31, %s47
      %p49 = scmp.eq.s32.totalorder %s23, 0
      %p50 = por %p48, %p49
      %s52 = sadd.s32 %s51, 1
      %p55 = scmp.eq.s32.totalorder %s17, 1
      %p56 = scmp.ne.s32.totalorder %s51, %s53
      %p57 = scmp.eq.s32.totalorder %s17, 0
      %p58 = por %p56, %p57
      %p59 = scmp.ne.s32.totalorder %s51, %s53
      %p60 = scmp.eq.s32.totalorder %s22, 1
      %p61 = por %p59, %p60
      %p62 = scmp.ne.s32.totalorder %s53, %s54
      %p63 = scmp.eq.s32.totalorder %s22, 0
      %p64 = por %p62, %p63
      %p65 = scmp.ne.s32.totalorder %s53, %s54
      %p66 = scmp.eq.s32.totalorder %s23, 1
      %p67 = por %p65, %p66
      %p69 = scmp.ne.s32.totalorder %s54, %s68
      %p70 = scmp.eq.s32.totalorder %s23, 0
      %p71 = por %p69, %p70
      %s73 = sadd.s32 %s72, 1
      %p76 = scmp.eq.s32.totalorder %s17, 1
      %p77 = scmp.ne.s32.totalorder %s72, %s74
      %p78 = scmp.eq.s32.totalorder %s17, 0
      %p79 = por %p77, %p78
      %p80 = scmp.ne.s32.totalorder %s72, %s74
      %p81 = scmp.eq.s32.totalorder %s22, 1
      %p82 = por %p80, %p81
      %p83 = scmp.ne.s32.totalorder %s74, %s75
      %p84 = scmp.eq.s32.totalorder %s22, 0
      %p85 = por %p83, %p84
      %p86 = scmp.ne.s32.totalorder %s74, %s75
      %p87 = scmp.eq.s32.totalorder %s23, 1
      %p88 = por %p86, %p87
      %p90 = scmp.ne.s32.totalorder %s75, %s89
      %p91 = scmp.eq.s32.totalorder %s23, 0
      %p92 = por %p90, %p91
      %s94 = sadd.s32 %s93, 1
      %p97 = scmp.eq.s32.totalorder %s17, 1
      %p98 = scmp.ne.s32.totalorder %s93, %s95
      %p99 = scmp.eq.s32.totalorder %s17, 0
      %p100 = por %p98, %p99
      %p101 = scmp.ne.s32.totalorder %s93, %s95
      %p102 = scmp.eq.s32.totalorder %s22, 1
      %p103 = por %p101, %p102
      %p104 = scmp.ne.s32.totalorder %s95, %s96
      %p105 = scmp.eq.s32.totalorder %s22, 0
      %p106 = por %p104, %p105
      %p107 = scmp.ne.s32.totalorder %s95, %s96
      %p108 = scmp.eq.s32.totalorder %s23, 1
      %p109 = por %p107, %p108
      %p111 = scmp.ne.s32.totalorder %s96, %s110
      %p112 = scmp.eq.s32.totalorder %s23, 0
      %p113 = por %p111, %p112
      %s115 = sadd.s32 %s114, 1
      %p118 = scmp.eq.s32.totalorder %s17, 1
      %p119 = scmp.ne.s32.totalorder %s114, %s116
      %p120 = scmp.eq.s32.totalorder %s17, 0
      %p121 = por %p119, %p120
      %p122 = scmp.ne.s32.totalorder %s114, %s116
      %p123 = scmp.eq.s32.totalorder %s22, 1
      %p124 = por %p122, %p123
      %p125 = scmp.ne.s32.totalorder %s116, %s117
      %p126 = scmp.eq.s32.totalorder %s22, 0
      %p127 = por %p125, %p126
      %p128 = scmp.ne.s32.totalorder %s116, %s117
      %p129 = scmp.eq.s32.totalorder %s23, 1
      %p130 = por %p128, %p129
      %p132 = scmp.ne.s32.totalorder %s117, %s131
      %p133 = scmp.eq.s32.totalorder %s23, 0
      %p134 = por %p132, %p133
      %s136 = sadd.s32 %s135, 1
      %p139 = scmp.eq.s32.totalorder %s17, 1
      %p140 = scmp.ne.s32.totalorder %s135, %s137
      %p141 = scmp.eq.s32.totalorder %s17, 0
      %p142 = por %p140, %p141
      %p143 = scmp.ne.s32.totalorder %s135, %s137
      %p144 = scmp.eq.s32.totalorder %s22, 1
      %p145 = por %p143, %p144
      %p146 = scmp.ne.s32.totalorder %s137, %s138
      %p147 = scmp.eq.s32.totalorder %s22, 0
      %p148 = por %p146, %p147
      %p149 = scmp.ne.s32.totalorder %s137, %s138
      %p150 = scmp.eq.s32.totalorder %s23, 1
      %p151 = por %p149, %p150
      %p153 = scmp.ne.s32.totalorder %s138, %s152
      %p154 = scmp.eq.s32.totalorder %s23, 0
      %p155 = por %p153, %p154
      %s157 = sadd.s32 %s156, 1
      %p160 = scmp.eq.s32.totalorder %s17, 1
      %p161 = scmp.ne.s32.totalorder %s156, %s158
      %p162 = scmp.eq.s32.totalorder %s17, 0
      %p163 = por %p161, %p162
      %p164 = scmp.ne.s32.totalorder %s156, %s158
      %p165 = scmp.eq.s32.totalorder %s22, 1
      %p166 = por %p164, %p165
      %p167 = scmp.ne.s32.totalorder %s158, %s159
      %p168 = scmp.eq.s32.totalorder %s22, 0
      %p169 = por %p167, %p168
      %p170 = scmp.ne.s32.totalorder %s158, %s159
      %p171 = scmp.eq.s32.totalorder %s23, 1
      %p172 = por %p170, %p171
      %p174 = scmp.ne.s32.totalorder %s159, %s173
      %p175 = scmp.eq.s32.totalorder %s23, 0
      %p176 = por %p174, %p175
      %s178 = sadd.s32 %s177, 1
      %p181 = scmp.eq.s32.totalorder %s17, 1
      %p182 = scmp.ne.s32.totalorder %s177, %s179
      %p183 = scmp.eq.s32.totalorder %s17, 0
      %p184 = por %p182, %p183
      %p185 = scmp.ne.s32.totalorder %s177, %s179
      %p186 = scmp.eq.s32.totalorder %s22, 1
      %p187 = por %p185, %p186
      %p188 = scmp.ne.s32.totalorder %s179, %s180
      %p189 = scmp.eq.s32.totalorder %s22, 0
      %p190 = por %p188, %p189
      %p191 = scmp.ne.s32.totalorder %s179, %s180
      %p192 = scmp.eq.s32.totalorder %s23, 1
      %p193 = por %p191, %p192
      %p195 = scmp.ne.s32.totalorder %s180, %s194
      %p196 = scmp.eq.s32.totalorder %s23, 0
      %p197 = por %p195, %p196
      %s198 = ssub.s32 %s17, %s24
      %p199 = scmp.eq.s32.totalorder %s198, 0
      %s201 = sadd.s32 %s200, 1
      %s202 = scalar_select %p199, %s200, %s201
      %p205 = pneg %p199
      %p206 = scmp.eq.s32.totalorder %s17, 1
      %p207 = por %p205, %p206
      %p208 = scmp.ne.s32.totalorder %s200, %s203
      %p209 = scmp.eq.s32.totalorder %s17, 0
      %p210 = por %p208, %p209
      %p211 = scmp.ne.s32.totalorder %s200, %s203
      %p212 = scmp.eq.s32.totalorder %s22, 1
      %p213 = por %p211, %p212
      %p214 = scmp.ne.s32.totalorder %s203, %s204
      %p215 = scmp.eq.s32.totalorder %s22, 0
      %p216 = por %p214, %p215
      %p217 = scmp.ne.s32.totalorder %s203, %s204
      %p218 = scmp.eq.s32.totalorder %s23, 1
      %p219 = por %p217, %p218
      %p221 = scmp.ne.s32.totalorder %s204, %s220
      %p222 = scmp.eq.s32.totalorder %s23, 0
      %p223 = por %p221, %p222
      %p224 = scmp.le.s32.totalorder 1, %s17
      %p225 = scmp.lt.s32.totalorder %s17, 3
      %p226 = pnand %p224, %p225
      %p227 = pneg %p226
      // Predicated region
      $region9: #{_forward_impl.1} parent=5 // pred_check
        _
      $region10: #{_forward_impl.1} parent=5 // pred_check_branch
        %229 = sbr.rel (%p226) target = $region12
      $region11: #{_forward_impl.1} parent=5 // pred_region
        %s230 = ssub.s32 %s17, 1
        // Predicated region
        $region13: #{_forward_impl.1} parent=11 // pred_check
          %p231 = pneg %p64
        $region14: #{_forward_impl.1} parent=11 // pred_check_branch
          %233 = sbr.rel (%p231) target = $region16
        $region15: #{_forward_impl.1} parent=11 // pred_region
          _
        $region16: #{_forward_impl.1} parent=11 // pred_fallthru
          _
        // Predicated region
        $region17: #{_forward_impl.1} parent=11 // pred_check
          %p234 = pneg %p85
        $region18: #{_forward_impl.1} parent=11 // pred_check_branch
          %236 = sbr.rel (%p234) target = $region20
        $region19: #{_forward_impl.1} parent=11 // pred_region
          _
        $region20: #{_forward_impl.1} parent=11 // pred_fallthru
          _
        // Predicated region
        $region21: #{_forward_impl.1} parent=11 // pred_check
          %p237 = pneg %p106
        $region22: #{_forward_impl.1} parent=11 // pred_check_branch
          %239 = sbr.rel (%p237) target = $region24
        $region23: #{_forward_impl.1} parent=11 // pred_region
          _
        $region24: #{_forward_impl.1} parent=11 // pred_fallthru
          _
        // Predicated region
        $region25: #{_forward_impl.1} parent=11 // pred_check
          %p240 = pneg %p127
        $region26: #{_forward_impl.1} parent=11 // pred_check_branch
          %242 = sbr.rel (%p240) target = $region28
        $region27: #{_forward_impl.1} parent=11 // pred_region
          _
        $region28: #{_forward_impl.1} parent=11 // pred_fallthru
          _
        // Predicated region
        $region29: #{_forward_impl.1} parent=11 // pred_check
          %p243 = pneg %p148
        $region30: #{_forward_impl.1} parent=11 // pred_check_branch
          %245 = sbr.rel (%p243) target = $region32
        $region31: #{_forward_impl.1} parent=11 // pred_region
          _
        $region32: #{_forward_impl.1} parent=11 // pred_fallthru
          _
        // Predicated region
        $region33: #{_forward_impl.1} parent=11 // pred_check
          %p246 = pneg %p169
        $region34: #{_forward_impl.1} parent=11 // pred_check_branch
          %248 = sbr.rel (%p246) target = $region36
        $region35: #{_forward_impl.1} parent=11 // pred_region
          _
        $region36: #{_forward_impl.1} parent=11 // pred_fallthru
          _
        // Predicated region
        $region37: #{_forward_impl.1} parent=11 // pred_check
          %p249 = pneg %p190
        $region38: #{_forward_impl.1} parent=11 // pred_check_branch
          %251 = sbr.rel (%p249) target = $region40
        $region39: #{_forward_impl.1} parent=11 // pred_region
          _
        $region40: #{_forward_impl.1} parent=11 // pred_fallthru
          _
      $region12: #{_forward_impl.1} parent=5 // pred_fallthru
        _
      %p252 = scmp.lt.s32.totalorder %s17, 2
      // Predicated region
      $region41: #{_forward_impl.1} parent=5 // pred_check
        %p253 = pneg %p252
      $region42: #{_forward_impl.1} parent=5 // pred_check_branch
        %255 = sbr.rel (%p253) target = $region44
      $region43: #{_forward_impl.1} parent=5 // pred_region
        // Predicated region
        $region45: #{_forward_impl.1} parent=43 // pred_check
          %p256 = pneg %p37
        $region46: #{_forward_impl.1} parent=43 // pred_check_branch
          %258 = sbr.rel (%p256) target = $region48
        $region47: #{_forward_impl.1} parent=43 // pred_region
          %p259 = scmp.lt.s32.totalorder %s17, 1
          %s260 = scalar_select %p259, %s17, 1
          %s261 = smul.addr %s260, 32
          %s262 = smul.addr %s261, 8
          %s263 = scalar_lea.vmem %s0, %s262
        $region48: #{_forward_impl.1} parent=43 // pred_fallthru
          _
      $region44: #{_forward_impl.1} parent=5 // pred_fallthru
        _
      %p264 = scmp.le.s32.totalorder 1, %s17
      %p265 = scmp.lt.s32.totalorder %s17, 3
      %p266 = pnand %p264, %p265
      %p267 = pneg %p266
      // Predicated region
      $region49: #{_forward_impl.1} parent=5 // pred_check
        _
      $region50: #{_forward_impl.1} parent=5 // pred_check_branch
        %269 = sbr.rel (%p266) target = $region52
      $region51: #{_forward_impl.1} parent=5 // pred_region
        %s270 = ssub.s32 %s17, 1
        %p271 = scmp.lt.s32.totalorder %s22, 1
        %s272 = scalar_select %p271, %s22, 1
        %s273 = smul.addr %s272, 32
        %s274 = smul.addr %s273, 8
        %s275 = scalar_lea.vmem %s0, %s274
        %p276 = pneg %p43
        %p277 = pneg %p40
        %p278 = pneg %p64
        %p279 = pneg %p61
        %p280 = pneg %p85
        %p281 = pneg %p82
        %p282 = pneg %p106
        %p283 = pneg %p103
        %p284 = pneg %p127
        %p285 = pneg %p124
        %p286 = pneg %p148
        %p287 = pneg %p145
        %p288 = pneg %p169
        %p289 = pneg %p166
        %p290 = pneg %p190
        %p291 = pneg %p187
        %p292 = pneg %p216
        %p293 = pneg %p213
        %s294 = sand.u32 %s203, 1
        %s295 = scalar_lea.sflag [#allocation5], %s294
        %s296 = sand.u32 %s203, 1
        %s297 = scalar_lea.vmem [#allocation4], %s296
        %p298 = scmp.lt.s32.totalorder %s22, 1
        %s299 = scalar_select %p298, %s22, 1
        %s300 = smul.addr %s299, 32
        %s301 = smul.addr %s300, 8
        %s302 = scalar_lea.vmem %s0, %s301
        %vm304 = vcmask 31744
        %305 = vst.msk [vmem:[#allocation2] sm:$0xff] %vm304, 0.0
        %306 = vst.msk [vmem:[#allocation2 + $0x8] sm:$0xff] %vm304, 0.0
        %vm307 = vcmask 25600
        %308 = vst.msk [vmem:[#allocation2 + $0x10] sm:$0x3] %vm307, 0.0
        %309 = vst.msk [vmem:[#allocation2 + $0x18] sm:$0xff] %vm304, 0.0
        %310 = vst.msk [vmem:[#allocation2 + $0x20] sm:$0xff] %vm304, 0.0
        %311 = vst.msk [vmem:[#allocation2 + $0x28] sm:$0x3] %vm307, 0.0
        %312 = vst.msk [vmem:[#allocation2 + $0x30] sm:$0xff] %vm304, 0.0
        %313 = vst.msk [vmem:[#allocation2 + $0x38] sm:$0xff] %vm304, 0.0
        %314 = vst.msk [vmem:[#allocation2 + $0x40] sm:$0x3] %vm307, 0.0
        %315 = vst.msk [vmem:[#allocation2 + $0x48] sm:$0xff] %vm304, 0.0
        %316 = vst.msk [vmem:[#allocation2 + $0x50] sm:$0xff] %vm304, 0.0
        %317 = vst.msk [vmem:[#allocation2 + $0x58] sm:$0x3] %vm307, 0.0
        %318 = vst.msk [vmem:[#allocation2 + $0x60] sm:$0xff] %vm304, 0.0
        %319 = vst.msk [vmem:[#allocation2 + $0x68] sm:$0xff] %vm304, 0.0
        %320 = vst.msk [vmem:[#allocation2 + $0x70] sm:$0x3] %vm307, 0.0
        %321 = vst.msk [vmem:[#allocation2 + $0x78] sm:$0xff] %vm304, 0.0
        %322 = vst.msk [vmem:[#allocation2 + $0x80] sm:$0xff] %vm304, 0.0
        %323 = vst.msk [vmem:[#allocation2 + $0x88] sm:$0x3] %vm307, 0.0
        %324 = vst.msk [vmem:[#allocation2 + $0x90] sm:$0xff] %vm304, 0.0
        %325 = vst.msk [vmem:[#allocation2 + $0x98] sm:$0xff] %vm304, 0.0
        %326 = vst.msk [vmem:[#allocation2 + $0xa0] sm:$0x3] %vm307, 0.0
        %327 = vst.msk [vmem:[#allocation2 + $0xa8] sm:$0xff] %vm304, 0.0
        %328 = vst.msk [vmem:[#allocation2 + $0xb0] sm:$0xff] %vm304, 0.0
        %329 = vst.msk [vmem:[#allocation2 + $0xb8] sm:$0x3] %vm307, 0.0
        %330 = vst.msk [vmem:[#allocation2 + $0xc0] sm:$0xff] %vm304, 0.0
        %331 = vst.msk [vmem:[#allocation2 + $0xc8] sm:$0xff] %vm304, 0.0
        %332 = vst.msk [vmem:[#allocation2 + $0xd0] sm:$0x3] %vm307, 0.0
        %333 = vst.msk [vmem:[#allocation2 + $0xd8] sm:$0xff] %vm304, 0.0
        %334 = vst.msk [vmem:[#allocation2 + $0xe0] sm:$0xff] %vm304, 0.0
        %335 = vst.msk [vmem:[#allocation2 + $0xe8] sm:$0x3] %vm307, 0.0
        %336 = vst.msk [vmem:[#allocation2 + $0xf0] sm:$0xff] %vm304, 0.0
        %337 = vst.msk [vmem:[#allocation2 + $0xf8] sm:$0xff] %vm304, 0.0
        %338 = vst.msk [vmem:[#allocation2 + $0x100] sm:$0x3] %vm307, 0.0
        %339 = vst.msk [vmem:[#allocation2 + $0x108] sm:$0xff] %vm304, 0.0
        %340 = vst.msk [vmem:[#allocation2 + $0x110] sm:$0xff] %vm304, 0.0
        %341 = vst.msk [vmem:[#allocation2 + $0x118] sm:$0x3] %vm307, 0.0
        %342 = vst.msk [vmem:[#allocation2 + $0x120] sm:$0xff] %vm304, 0.0
        %343 = vst.msk [vmem:[#allocation2 + $0x128] sm:$0xff] %vm304, 0.0
        %344 = vst.msk [vmem:[#allocation2 + $0x130] sm:$0x3] %vm307, 0.0
        %345 = vst.msk [vmem:[#allocation2 + $0x138] sm:$0xff] %vm304, 0.0
        %346 = vst.msk [vmem:[#allocation2 + $0x140] sm:$0xff] %vm304, 0.0
        %347 = vst.msk [vmem:[#allocation2 + $0x148] sm:$0x3] %vm307, 0.0
        %348 = vst.msk [vmem:[#allocation2 + $0x150] sm:$0xff] %vm304, 0.0
        %349 = vst.msk [vmem:[#allocation2 + $0x158] sm:$0xff] %vm304, 0.0
        %350 = vst.msk [vmem:[#allocation2 + $0x160] sm:$0x3] %vm307, 0.0
        %351 = vst.msk [vmem:[#allocation2 + $0x168] sm:$0xff] %vm304, 0.0
        %352 = vst.msk [vmem:[#allocation2 + $0x170] sm:$0xff] %vm304, 0.0
        %353 = vst.msk [vmem:[#allocation2 + $0x178] sm:$0x3] %vm307, 0.0
        %354 = vst.msk [vmem:[#allocation2 + $0x180] sm:$0xff] %vm304, 0.0
        %355 = vst.msk [vmem:[#allocation2 + $0x188] sm:$0xff] %vm304, 0.0
        %356 = vst.msk [vmem:[#allocation2 + $0x190] sm:$0x3] %vm307, 0.0
        %357 = vst.msk [vmem:[#allocation2 + $0x198] sm:$0xff] %vm304, 0.0
        %358 = vst.msk [vmem:[#allocation2 + $0x1a0] sm:$0xff] %vm304, 0.0
        %359 = vst.msk [vmem:[#allocation2 + $0x1a8] sm:$0x3] %vm307, 0.0
        %v360 = vld [vmem:[%s302] sm:$0xff]
        %v361 = vld [vmem:[%s302 + $0x8] sm:$0xff]
        %v362 = vld [vmem:[%s302 + $0x10] sm:$0xff]
        %v363 = vld [vmem:[%s302 + $0x18] sm:$0xff]
        %v364 = vld [vmem:[%s302 + $0x20] sm:$0xff]
        %v365 = vld [vmem:[%s302 + $0x28] sm:$0xff]
        %v366 = vld [vmem:[%s302 + $0x30] sm:$0xff]
        %v367 = vld [vmem:[%s302 + $0x38] sm:$0xff]
        %v368 = vld [vmem:[%s302 + $0x40] sm:$0xff]
        %v369 = vld [vmem:[%s302 + $0x48] sm:$0xff]
        %v370 = vld [vmem:[%s302 + $0x50] sm:$0xff]
        %v371 = vld [vmem:[%s302 + $0x58] sm:$0xff]
        %v372 = vld [vmem:[%s302 + $0x60] sm:$0xff]
        %v373 = vld [vmem:[%s302 + $0x68] sm:$0xff]
        %v374 = vld [vmem:[%s302 + $0x70] sm:$0xff]
        %v375 = vld [vmem:[%s302 + $0x78] sm:$0xff]
        %v376 = vld [vmem:[%s302 + $0x80] sm:$0xff]
        %v377 = vld [vmem:[%s302 + $0x88] sm:$0xff]
        %v378 = vld [vmem:[%s302 + $0x90] sm:$0xff]
        %v379 = vld [vmem:[%s302 + $0x98] sm:$0xff]
        %v380 = vld [vmem:[%s302 + $0xa0] sm:$0xff]
        %v381 = vld [vmem:[%s302 + $0xa8] sm:$0xff]
        %v382 = vld [vmem:[%s302 + $0xb0] sm:$0xff]
        %v383 = vld [vmem:[%s302 + $0xb8] sm:$0xff]
        %v384 = vld [vmem:[%s302 + $0xc0] sm:$0xff]
        %v385 = vld [vmem:[%s302 + $0xc8] sm:$0xff]
        %v386 = vld [vmem:[%s302 + $0xd0] sm:$0xff]
        %v387 = vld [vmem:[%s302 + $0xd8] sm:$0xff]
        %v388 = vld [vmem:[%s302 + $0xe0] sm:$0xff]
        %v389 = vld [vmem:[%s302 + $0xe8] sm:$0xff]
        %v390 = vld [vmem:[%s302 + $0xf0] sm:$0xff]
        %v391 = vld [vmem:[%s302 + $0xf8] sm:$0xff]
        %s392 = scalar_lea.vmem [#allocation2], 24
        %393 = vst.msk [vmem:[%s392 + $0x1] sm:$0xff] %vm304, %v360
        %394 = vst.msk [vmem:[%s392 + $0x9] sm:$0xff] %vm304, %v361
        %395 = vst.msk [vmem:[%s392 + $0x19] sm:$0xff] %vm304, %v362
        %396 = vst.msk [vmem:[%s392 + $0x21] sm:$0xff] %vm304, %v363
        %397 = vst.msk [vmem:[%s392 + $0x31] sm:$0xff] %vm304, %v364
        %398 = vst.msk [vmem:[%s392 + $0x39] sm:$0xff] %vm304, %v365
        %399 = vst.msk [vmem:[%s392 + $0x49] sm:$0xff] %vm304, %v366
        %400 = vst.msk [vmem:[%s392 + $0x51] sm:$0xff] %vm304, %v367
        %401 = vst.msk [vmem:[%s392 + $0x61] sm:$0xff] %vm304, %v368
        %402 = vst.msk [vmem:[%s392 + $0x69] sm:$0xff] %vm304, %v369
        %403 = vst.msk [vmem:[%s392 + $0x79] sm:$0xff] %vm304, %v370
        %404 = vst.msk [vmem:[%s392 + $0x81] sm:$0xff] %vm304, %v371
        %405 = vst.msk [vmem:[%s392 + $0x91] sm:$0xff] %vm304, %v372
        %406 = vst.msk [vmem:[%s392 + $0x99] sm:$0xff] %vm304, %v373
        %407 = vst.msk [vmem:[%s392 + $0xa9] sm:$0xff] %vm304, %v374
        %408 = vst.msk [vmem:[%s392 + $0xb1] sm:$0xff] %vm304, %v375
        %409 = vst.msk [vmem:[%s392 + $0xc1] sm:$0xff] %vm304, %v376
        %410 = vst.msk [vmem:[%s392 + $0xc9] sm:$0xff] %vm304, %v377
        %411 = vst.msk [vmem:[%s392 + $0xd9] sm:$0xff] %vm304, %v378
        %412 = vst.msk [vmem:[%s392 + $0xe1] sm:$0xff] %vm304, %v379
        %413 = vst.msk [vmem:[%s392 + $0xf1] sm:$0xff] %vm304, %v380
        %414 = vst.msk [vmem:[%s392 + $0xf9] sm:$0xff] %vm304, %v381
        %415 = vst.msk [vmem:[%s392 + $0x109] sm:$0xff] %vm304, %v382
        %416 = vst.msk [vmem:[%s392 + $0x111] sm:$0xff] %vm304, %v383
        %417 = vst.msk [vmem:[%s392 + $0x121] sm:$0xff] %vm304, %v384
        %418 = vst.msk [vmem:[%s392 + $0x129] sm:$0xff] %vm304, %v385
        %419 = vst.msk [vmem:[%s392 + $0x139] sm:$0xff] %vm304, %v386
        %420 = vst.msk [vmem:[%s392 + $0x141] sm:$0xff] %vm304, %v387
        %421 = vst.msk [vmem:[%s392 + $0x151] sm:$0xff] %vm304, %v388
        %422 = vst.msk [vmem:[%s392 + $0x159] sm:$0xff] %vm304, %v389
        %423 = vst.msk [vmem:[%s392 + $0x169] sm:$0xff] %vm304, %v390
        %424 = vst.msk [vmem:[%s392 + $0x171] sm:$0xff] %vm304, %v391
        %v425 = vld [vmem:[#allocation2] sm:$0xff]
        %v426 = vld [vmem:[#allocation2 + $0x8] sm:$0xff]
        %v427 = vld [vmem:[#allocation2 + $0x18] sm:$0xff]
        %v428 = vld [vmem:[#allocation2 + $0x20] sm:$0xff]
        %v429 = vld [vmem:[#allocation2 + $0x30] sm:$0xff]
        %v430 = vld [vmem:[#allocation2 + $0x38] sm:$0xff]
        %v431 = vld [vmem:[#allocation2 + $0x48] sm:$0xff]
        %v432 = vld [vmem:[#allocation2 + $0x50] sm:$0xff]
        %v433 = vld [vmem:[#allocation2 + $0x60] sm:$0xff]
        %v434 = vld [vmem:[#allocation2 + $0x68] sm:$0xff]
        %v435 = vld [vmem:[#allocation2 + $0x78] sm:$0xff]
        %v436 = vld [vmem:[#allocation2 + $0x80] sm:$0xff]
        %v437 = vld [vmem:[#allocation2 + $0x90] sm:$0xff]
        %v438 = vld [vmem:[#allocation2 + $0x98] sm:$0xff]
        %v439 = vld [vmem:[#allocation2 + $0xa8] sm:$0xff]
        %v440 = vld [vmem:[#allocation2 + $0xb0] sm:$0xff]
        %v441 = vld [vmem:[#allocation2 + $0xc0] sm:$0xff]
        %v442 = vld [vmem:[#allocation2 + $0xc8] sm:$0xff]
        %v443 = vld [vmem:[#allocation2 + $0xd8] sm:$0xff]
        %v444 = vld [vmem:[#allocation2 + $0xe0] sm:$0xff]
        %v445 = vld [vmem:[#allocation2 + $0xf0] sm:$0xff]
        %v446 = vld [vmem:[#allocation2 + $0xf8] sm:$0xff]
        %v447 = vld [vmem:[#allocation2 + $0x108] sm:$0xff]
        %v448 = vld [vmem:[#allocation2 + $0x110] sm:$0xff]
        %v449 = vld [vmem:[#allocation2 + $0x120] sm:$0xff]
        %v450 = vld [vmem:[#allocation2 + $0x128] sm:$0xff]
        %v451 = vld [vmem:[#allocation2 + $0x138] sm:$0xff]
        %v452 = vld [vmem:[#allocation2 + $0x140] sm:$0xff]
        %v453 = vld [vmem:[#allocation2 + $0x150] sm:$0xff]
        %v454 = vld [vmem:[#allocation2 + $0x158] sm:$0xff]
        %v455 = vld [vmem:[#allocation2 + $0x168] sm:$0xff]
        %v456 = vld [vmem:[#allocation2 + $0x170] sm:$0xff]
        %v457 = vpack.c.bf16 %v426, %v425
        %v458 = vpack.c.bf16 %v428, %v427
        %v459 = vpack.c.bf16 %v430, %v429
        %v460 = vpack.c.bf16 %v432, %v431
        %v461 = vpack.c.bf16 %v434, %v433
        %v462 = vpack.c.bf16 %v436, %v435
        %v463 = vpack.c.bf16 %v438, %v437
        %v464 = vpack.c.bf16 %v440, %v439
        %v465 = vpack.c.bf16 %v442, %v441
        %v466 = vpack.c.bf16 %v444, %v443
        %v467 = vpack.c.bf16 %v446, %v445
        %v468 = vpack.c.bf16 %v448, %v447
        %v469 = vpack.c.bf16 %v450, %v449
        %v470 = vpack.c.bf16 %v452, %v451
        %v471 = vpack.c.bf16 %v454, %v453
        %v472 = vpack.c.bf16 %v456, %v455
        %v473 = vld [vmem:[%s1] sm:$0x3]
        %v474 = vld [vmem:[#allocation2 + $0x1] sm:$0xff]
        %v475 = vld [vmem:[#allocation2 + $0x9] sm:$0xff]
        %v476 = vld [vmem:[#allocation2 + $0x19] sm:$0xff]
        %v477 = vld [vmem:[#allocation2 + $0x21] sm:$0xff]
        %v478 = vld [vmem:[#allocation2 + $0x31] sm:$0xff]
        %v479 = vld [vmem:[#allocation2 + $0x39] sm:$0xff]
        %v480 = vld [vmem:[#allocation2 + $0x49] sm:$0xff]
        %v481 = vld [vmem:[#allocation2 + $0x51] sm:$0xff]
        %v482 = vld [vmem:[#allocation2 + $0x61] sm:$0xff]
        %v483 = vld [vmem:[#allocation2 + $0x69] sm:$0xff]
        %v484 = vld [vmem:[#allocation2 + $0x79] sm:$0xff]
        %v485 = vld [vmem:[#allocation2 + $0x81] sm:$0xff]
        %v486 = vld [vmem:[#allocation2 + $0x91] sm:$0xff]
        %v487 = vld [vmem:[#allocation2 + $0x99] sm:$0xff]
        %v488 = vld [vmem:[#allocation2 + $0xa9] sm:$0xff]
        %v489 = vld [vmem:[#allocation2 + $0xb1] sm:$0xff]
        %v490 = vld [vmem:[#allocation2 + $0xc1] sm:$0xff]
        %v491 = vld [vmem:[#allocation2 + $0xc9] sm:$0xff]
        %v492 = vld [vmem:[#allocation2 + $0xd9] sm:$0xff]
        %v493 = vld [vmem:[#allocation2 + $0xe1] sm:$0xff]
        %v494 = vld [vmem:[#allocation2 + $0xf1] sm:$0xff]
        %v495 = vld [vmem:[#allocation2 + $0xf9] sm:$0xff]
        %v496 = vld [vmem:[#allocation2 + $0x109] sm:$0xff]
        %v497 = vld [vmem:[#allocation2 + $0x111] sm:$0xff]
        %v498 = vld [vmem:[#allocation2 + $0x121] sm:$0xff]
        %v499 = vld [vmem:[#allocation2 + $0x129] sm:$0xff]
        %v500 = vld [vmem:[#allocation2 + $0x139] sm:$0xff]
        %v501 = vld [vmem:[#allocation2 + $0x141] sm:$0xff]
        %v502 = vld [vmem:[#allocation2 + $0x151] sm:$0xff]
        %v503 = vld [vmem:[#allocation2 + $0x159] sm:$0xff]
        %v504 = vld [vmem:[#allocation2 + $0x169] sm:$0xff]
        %v505 = vld [vmem:[#allocation2 + $0x171] sm:$0xff]
        %v506 = vpack.c.bf16 %v475, %v474
        %v507 = vpack.c.bf16 %v477, %v476
        %v508 = vpack.c.bf16 %v479, %v478
        %v509 = vpack.c.bf16 %v481, %v480
        %v510 = vpack.c.bf16 %v483, %v482
        %v511 = vpack.c.bf16 %v485, %v484
        %v512 = vpack.c.bf16 %v487, %v486
        %v513 = vpack.c.bf16 %v489, %v488
        %v514 = vpack.c.bf16 %v491, %v490
        %v515 = vpack.c.bf16 %v493, %v492
        %v516 = vpack.c.bf16 %v495, %v494
        %v517 = vpack.c.bf16 %v497, %v496
        %v518 = vpack.c.bf16 %v499, %v498
        %v519 = vpack.c.bf16 %v501, %v500
        %v520 = vpack.c.bf16 %v503, %v502
        %v521 = vpack.c.bf16 %v505, %v504
        %s522 = scalar_lea.vmem %s1, 2
        %v523 = vld [vmem:[%s522] sm:$0x3]
        %v525 = vsel %vm304, %v506, 0
        %v528 = vsel %vm304, %v507, 0
        %v531 = vsel %vm304, %v508, 0
        %v534 = vsel %vm304, %v509, 0
        %v537 = vsel %vm304, %v510, 0
        %v540 = vsel %vm304, %v511, 0
        %v543 = vsel %vm304, %v512, 0
        %v546 = vsel %vm304, %v513, 0
        %v549 = vsel %vm304, %v514, 0
        %v552 = vsel %vm304, %v515, 0
        %v555 = vsel %vm304, %v516, 0
        %v558 = vsel %vm304, %v517, 0
        %v561 = vsel %vm304, %v518, 0
        %v564 = vsel %vm304, %v519, 0
        %v567 = vsel %vm304, %v520, 0
        %v570 = vsel %vm304, %v521, 0
        %vm572 = vcmask 1041408
        %v574 = vsel %vm572, %v523, 0
        %576 = vmatprep.subr.bf16.mxu0 0
        %577 = vmatpush1.bf16.msra.mxu0 %v574
        %578 = vmatprep.subr.bf16.mxu0 0
        %579 = vmatpush1.bf16.msra.mxu0 0
        %580 = vmatprep.subr.bf16.mxu0 0
        %581 = vmatpush1.bf16.msra.mxu0 0
        %582 = vmatprep.subr.bf16.mxu0 0
        %583 = vmatpush1.bf16.msra.mxu0 0
        %584 = vmatprep.subr.bf16.mxu0 0
        %585 = vmatpush1.bf16.msra.mxu0 0
        %586 = vmatprep.subr.bf16.mxu0 0
        %587 = vmatpush1.bf16.msra.mxu0 0
        %588 = vmatprep.subr.bf16.mxu0 0
        %589 = vmatpush1.bf16.msra.mxu0 0
        %590 = vmatprep.subr.bf16.mxu0 0
        %591 = vmatpush1.bf16.msra.mxu0 0
        %592 = vmatprep.subr.bf16.mxu0 0
        %593 = vmatpush1.bf16.msra.mxu0 0
        %594 = vmatprep.subr.bf16.mxu0 0
        %595 = vmatpush1.bf16.msra.mxu0 0
        %596 = vmatprep.subr.bf16.mxu0 0
        %597 = vmatpush1.bf16.msra.mxu0 0
        %598 = vmatprep.subr.bf16.mxu0 0
        %599 = vmatpush1.bf16.msra.mxu0 0
        %600 = vmatprep.subr.bf16.mxu0 0
        %601 = vmatpush1.bf16.msra.mxu0 0
        %602 = vmatprep.subr.bf16.mxu0 0
        %603 = vmatpush1.bf16.msra.mxu0 0
        %604 = vmatprep.subr.bf16.mxu0 0
        %605 = vmatpush1.bf16.msra.mxu0 0
        %606 = vmatprep.subr.bf16.mxu0 0
        %607 = vmatpush1.bf16.msra.mxu0 0
        %608 = vmatprep.mubr.bf16.mxu0 0
        %609 = vmatmul.mubr.bf16.gmra.mrb[0].mxu0 %v525
        %v610 = vpop.f32.mrb[0].mxu0
        %v611 = vadd.f32 0.0, %v610
        %v612 = vpop.f32.mrb[0].mxu0
        %v613 = vpop.f32.mrb[0].mxu0
        %v614 = vadd.f32 0.0, %v613
        %v615 = vpop.f32.mrb[0].mxu0
        %616 = vmatprep.mubr.bf16.mxu0 0
        %617 = vmatmul.mubr.bf16.gmra.mrb[0].mxu0 %v528
        %v618 = vpop.f32.mrb[0].mxu0
        %v619 = vadd.f32 0.0, %v618
        %v620 = vpop.f32.mrb[0].mxu0
        %v621 = vpop.f32.mrb[0].mxu0
        %v622 = vadd.f32 0.0, %v621
        %v623 = vpop.f32.mrb[0].mxu0
        %624 = vmatprep.mubr.bf16.mxu0 0
        %625 = vmatmul.mubr.bf16.gmra.mrb[0].mxu0 %v531
        %v626 = vpop.f32.mrb[0].mxu0
        %v627 = vadd.f32 0.0, %v626
        %v628 = vpop.f32.mrb[0].mxu0
        %v629 = vpop.f32.mrb[0].mxu0
        %v630 = vadd.f32 0.0, %v629
        %v631 = vpop.f32.mrb[0].mxu0
        %632 = vmatprep.mubr.bf16.mxu0 0
        %633 = vmatmul.mubr.bf16.gmra.mrb[0].mxu0 %v534
        %v634 = vpop.f32.mrb[0].mxu0
        %v635 = vadd.f32 0.0, %v634
        %v636 = vpop.f32.mrb[0].mxu0
        %v637 = vpop.f32.mrb[0].mxu0
        %v638 = vadd.f32 0.0, %v637
        %v639 = vpop.f32.mrb[0].mxu0
        %640 = vmatprep.mubr.bf16.mxu0 0
        %641 = vmatmul.mubr.bf16.gmra.mrb[0].mxu0 %v537
        %v642 = vpop.f32.mrb[0].mxu0
        %v643 = vadd.f32 0.0, %v642
        %v644 = vpop.f32.mrb[0].mxu0
        %v645 = vpop.f32.mrb[0].mxu0
        %v646 = vadd.f32 0.0, %v645
        %v647 = vpop.f32.mrb[0].mxu0
        %648 = vmatprep.mubr.bf16.mxu0 0
        %649 = vmatmul.mubr.bf16.gmra.mrb[0].mxu0 %v540
        %v650 = vpop.f32.mrb[0].mxu0
        %v651 = vadd.f32 0.0, %v650
        %v652 = vpop.f32.mrb[0].mxu0
        %v653 = vpop.f32.mrb[0].mxu0
        %v654 = vadd.f32 0.0, %v653
        %v655 = vpop.f32.mrb[0].mxu0
        %656 = vmatprep.mubr.bf16.mxu0 0
        %657 = vmatmul.mubr.bf16.gmra.mrb[0].mxu0 %v543
        %v658 = vpop.f32.mrb[0].mxu0
        %v659 = vadd.f32 0.0, %v658
        %v660 = vpop.f32.mrb[0].mxu0
        %v661 = vpop.f32.mrb[0].mxu0
        %v662 = vadd.f32 0.0, %v661
        %v663 = vpop.f32.mrb[0].mxu0
        %664 = vmatprep.mubr.bf16.mxu0 0
        %665 = vmatmul.mubr.bf16.gmra.mrb[0].mxu0 %v546
        %v666 = vpop.f32.mrb[0].mxu0
        %v667 = vadd.f32 0.0, %v666
        %v668 = vpop.f32.mrb[0].mxu0
        %v669 = vpop.f32.mrb[0].mxu0
        %v670 = vadd.f32 0.0, %v669
        %v671 = vpop.f32.mrb[0].mxu0
        %672 = vmatprep.mubr.bf16.mxu0 0
        %673 = vmatmul.mubr.bf16.gmra.mrb[0].mxu0 %v549
        %v674 = vpop.f32.mrb[0].mxu0
        %v675 = vadd.f32 0.0, %v674
        %v676 = vpop.f32.mrb[0].mxu0
        %v677 = vpop.f32.mrb[0].mxu0
        %v678 = vadd.f32 0.0, %v677
        %v679 = vpop.f32.mrb[0].mxu0
        %680 = vmatprep.mubr.bf16.mxu0 0
        %681 = vmatmul.mubr.bf16.gmra.mrb[0].mxu0 %v552
        %v682 = vpop.f32.mrb[0].mxu0
        %v683 = vadd.f32 0.0, %v682
        %v684 = vpop.f32.mrb[0].mxu0
        %v685 = vpop.f32.mrb[0].mxu0
        %v686 = vadd.f32 0.0, %v685
        %v687 = vpop.f32.mrb[0].mxu0
        %688 = vmatprep.mubr.bf16.mxu0 0
        %689 = vmatmul.mubr.bf16.gmra.mrb[0].mxu0 %v555
        %v690 = vpop.f32.mrb[0].mxu0
        %v691 = vadd.f32 0.0, %v690
        %v692 = vpop.f32.mrb[0].mxu0
        %v693 = vpop.f32.mrb[0].mxu0
        %v694 = vadd.f32 0.0, %v693
        %v695 = vpop.f32.mrb[0].mxu0
        %696 = vmatprep.mubr.bf16.mxu0 0
        %697 = vmatmul.mubr.bf16.gmra.mrb[0].mxu0 %v558
        %v698 = vpop.f32.mrb[0].mxu0
        %v699 = vadd.f32 0.0, %v698
        %v700 = vpop.f32.mrb[0].mxu0
        %v701 = vpop.f32.mrb[0].mxu0
        %v702 = vadd.f32 0.0, %v701
        %v703 = vpop.f32.mrb[0].mxu0
        %704 = vmatprep.mubr.bf16.mxu0 0
        %705 = vmatmul.mubr.bf16.gmra.mrb[0].mxu0 %v561
        %v706 = vpop.f32.mrb[0].mxu0
        %v707 = vadd.f32 0.0, %v706
        %v708 = vpop.f32.mrb[0].mxu0
        %v709 = vpop.f32.mrb[0].mxu0
        %v710 = vadd.f32 0.0, %v709
        %v711 = vpop.f32.mrb[0].mxu0
        %712 = vmatprep.mubr.bf16.mxu0 0
        %713 = vmatmul.mubr.bf16.gmra.mrb[0].mxu0 %v564
        %v714 = vpop.f32.mrb[0].mxu0
        %v715 = vadd.f32 0.0, %v714
        %v716 = vpop.f32.mrb[0].mxu0
        %v717 = vpop.f32.mrb[0].mxu0
        %v718 = vadd.f32 0.0, %v717
        %v719 = vpop.f32.mrb[0].mxu0
        %720 = vmatprep.mubr.bf16.mxu0 0
        %721 = vmatmul.mubr.bf16.gmra.mrb[0].mxu0 %v567
        %v722 = vpop.f32.mrb[0].mxu0
        %v723 = vadd.f32 0.0, %v722
        %v724 = vpop.f32.mrb[0].mxu0
        %v725 = vpop.f32.mrb[0].mxu0
        %v726 = vadd.f32 0.0, %v725
        %v727 = vpop.f32.mrb[0].mxu0
        %728 = vmatprep.mubr.bf16.mxu0 0
        %729 = vmatmul.mubr.bf16.gmra.mrb[0].mxu0 %v570
        %v730 = vpop.f32.mrb[0].mxu0
        %v731 = vadd.f32 0.0, %v730
        %v732 = vpop.f32.mrb[0].mxu0
        %v733 = vpop.f32.mrb[0].mxu0
        %v734 = vadd.f32 0.0, %v733
        %v735 = vpop.f32.mrb[0].mxu0
        %736 = vdwg.mxu0
        %v738 = vsel %vm304, %v457, 0
        %v741 = vsel %vm304, %v458, 0
        %v744 = vsel %vm304, %v459, 0
        %v747 = vsel %vm304, %v460, 0
        %v750 = vsel %vm304, %v461, 0
        %v753 = vsel %vm304, %v462, 0
        %v756 = vsel %vm304, %v463, 0
        %v759 = vsel %vm304, %v464, 0
        %v762 = vsel %vm304, %v465, 0
        %v765 = vsel %vm304, %v466, 0
        %v768 = vsel %vm304, %v467, 0
        %v771 = vsel %vm304, %v468, 0
        %v774 = vsel %vm304, %v469, 0
        %v777 = vsel %vm304, %v470, 0
        %v780 = vsel %vm304, %v471, 0
        %v783 = vsel %vm304, %v472, 0
        %v786 = vsel %vm572, %v473, 0
        %788 = vmatprep.subr.bf16.mxu0 0
        %789 = vmatpush1.bf16.msra.mxu0 %v786
        %790 = vmatprep.subr.bf16.mxu0 0
        %791 = vmatpush1.bf16.msra.mxu0 0
        %792 = vmatprep.subr.bf16.mxu0 0
        %793 = vmatpush1.bf16.msra.mxu0 0
        %794 = vmatprep.subr.bf16.mxu0 0
        %795 = vmatpush1.bf16.msra.mxu0 0
        %796 = vmatprep.subr.bf16.mxu0 0
        %797 = vmatpush1.bf16.msra.mxu0 0
        %798 = vmatprep.subr.bf16.mxu0 0
        %799 = vmatpush1.bf16.msra.mxu0 0
        %800 = vmatprep.subr.bf16.mxu0 0
        %801 = vmatpush1.bf16.msra.mxu0 0
        %802 = vmatprep.subr.bf16.mxu0 0
        %803 = vmatpush1.bf16.msra.mxu0 0
        %804 = vmatprep.subr.bf16.mxu0 0
        %805 = vmatpush1.bf16.msra.mxu0 0
        %806 = vmatprep.subr.bf16.mxu0 0
        %807 = vmatpush1.bf16.msra.mxu0 0
        %808 = vmatprep.subr.bf16.mxu0 0
        %809 = vmatpush1.bf16.msra.mxu0 0
        %810 = vmatprep.subr.bf16.mxu0 0
        %811 = vmatpush1.bf16.msra.mxu0 0
        %812 = vmatprep.subr.bf16.mxu0 0
        %813 = vmatpush1.bf16.msra.mxu0 0
        %814 = vmatprep.subr.bf16.mxu0 0
        %815 = vmatpush1.bf16.msra.mxu0 0
        %816 = vmatprep.subr.bf16.mxu0 0
        %817 = vmatpush1.bf16.msra.mxu0 0
        %818 = vmatprep.subr.bf16.mxu0 0
        %819 = vmatpush1.bf16.msra.mxu0 0
        %820 = vmatprep.mubr.bf16.mxu0 0
        %821 = vmatmul.mubr.bf16.gmra.mrb[0].mxu0 %v738
        %v822 = vpop.f32.mrb[0].mxu0
        %v823 = vadd.f32 %v611, %v822
        %v824 = vpop.f32.mrb[0].mxu0
        %v825 = vpop.f32.mrb[0].mxu0
        %v826 = vadd.f32 %v614, %v825
        %v827 = vpop.f32.mrb[0].mxu0
        %828 = vmatprep.mubr.bf16.mxu0 0
        %829 = vmatmul.mubr.bf16.gmra.mrb[0].mxu0 %v741
        %v830 = vpop.f32.mrb[0].mxu0
        %v831 = vadd.f32 %v619, %v830
        %v832 = vpop.f32.mrb[0].mxu0
        %v833 = vpop.f32.mrb[0].mxu0
        %v834 = vadd.f32 %v622, %v833
        %v835 = vpop.f32.mrb[0].mxu0
        %836 = vmatprep.mubr.bf16.mxu0 0
        %837 = vmatmul.mubr.bf16.gmra.mrb[0].mxu0 %v744
        %v838 = vpop.f32.mrb[0].mxu0
        %v839 = vadd.f32 %v627, %v838
        %v840 = vpop.f32.mrb[0].mxu0
        %v841 = vpop.f32.mrb[0].mxu0
        %v842 = vadd.f32 %v630, %v841
        %v843 = vpop.f32.mrb[0].mxu0
        %844 = vmatprep.mubr.bf16.mxu0 0
        %845 = vmatmul.mubr.bf16.gmra.mrb[0].mxu0 %v747
        %v846 = vpop.f32.mrb[0].mxu0
        %v847 = vadd.f32 %v635, %v846
        %v848 = vpop.f32.mrb[0].mxu0
        %v849 = vpop.f32.mrb[0].mxu0
        %v850 = vadd.f32 %v638, %v849
        %v851 = vpop.f32.mrb[0].mxu0
        %852 = vmatprep.mubr.bf16.mxu0 0
        %853 = vmatmul.mubr.bf16.gmra.mrb[0].mxu0 %v750
        %v854 = vpop.f32.mrb[0].mxu0
        %v855 = vadd.f32 %v643, %v854
        %v856 = vpop.f32.mrb[0].mxu0
        %v857 = vpop.f32.mrb[0].mxu0
        %v858 = vadd.f32 %v646, %v857
        %v859 = vpop.f32.mrb[0].mxu0
        %860 = vmatprep.mubr.bf16.mxu0 0
        %861 = vmatmul.mubr.bf16.gmra.mrb[0].mxu0 %v753
        %v862 = vpop.f32.mrb[0].mxu0
        %v863 = vadd.f32 %v651, %v862
        %v864 = vpop.f32.mrb[0].mxu0
        %v865 = vpop.f32.mrb[0].mxu0
        %v866 = vadd.f32 %v654, %v865
        %v867 = vpop.f32.mrb[0].mxu0
        %868 = vmatprep.mubr.bf16.mxu0 0
        %869 = vmatmul.mubr.bf16.gmra.mrb[0].mxu0 %v756
        %v870 = vpop.f32.mrb[0].mxu0
        %v871 = vadd.f32 %v659, %v870
        %v872 = vpop.f32.mrb[0].mxu0
        %v873 = vpop.f32.mrb[0].mxu0
        %v874 = vadd.f32 %v662, %v873
        %v875 = vpop.f32.mrb[0].mxu0
        %876 = vmatprep.mubr.bf16.mxu0 0
        %877 = vmatmul.mubr.bf16.gmra.mrb[0].mxu0 %v759
        %v878 = vpop.f32.mrb[0].mxu0
        %v879 = vadd.f32 %v667, %v878
        %v880 = vpop.f32.mrb[0].mxu0
        %v881 = vpop.f32.mrb[0].mxu0
        %v882 = vadd.f32 %v670, %v881
        %v883 = vpop.f32.mrb[0].mxu0
        %884 = vmatprep.mubr.bf16.mxu0 0
        %885 = vmatmul.mubr.bf16.gmra.mrb[0].mxu0 %v762
        %v886 = vpop.f32.mrb[0].mxu0
        %v887 = vadd.f32 %v675, %v886
        %v888 = vpop.f32.mrb[0].mxu0
        %v889 = vpop.f32.mrb[0].mxu0
        %v890 = vadd.f32 %v678, %v889
        %v891 = vpop.f32.mrb[0].mxu0
        %892 = vmatprep.mubr.bf16.mxu0 0
        %893 = vmatmul.mubr.bf16.gmra.mrb[0].mxu0 %v765
        %v894 = vpop.f32.mrb[0].mxu0
        %v895 = vadd.f32 %v683, %v894
        %v896 = vpop.f32.mrb[0].mxu0
        %v897 = vpop.f32.mrb[0].mxu0
        %v898 = vadd.f32 %v686, %v897
        %v899 = vpop.f32.mrb[0].mxu0
        %900 = vmatprep.mubr.bf16.mxu0 0
        %901 = vmatmul.mubr.bf16.gmra.mrb[0].mxu0 %v768
        %v902 = vpop.f32.mrb[0].mxu0
        %v903 = vadd.f32 %v691, %v902
        %v904 = vpop.f32.mrb[0].mxu0
        %v905 = vpop.f32.mrb[0].mxu0
        %v906 = vadd.f32 %v694, %v905
        %v907 = vpop.f32.mrb[0].mxu0
        %908 = vmatprep.mubr.bf16.mxu0 0
        %909 = vmatmul.mubr.bf16.gmra.mrb[0].mxu0 %v771
        %v910 = vpop.f32.mrb[0].mxu0
        %v911 = vadd.f32 %v699, %v910
        %v912 = vpop.f32.mrb[0].mxu0
        %v913 = vpop.f32.mrb[0].mxu0
        %v914 = vadd.f32 %v702, %v913
        %v915 = vpop.f32.mrb[0].mxu0
        %916 = vmatprep.mubr.bf16.mxu0 0
        %917 = vmatmul.mubr.bf16.gmra.mrb[0].mxu0 %v774
        %v918 = vpop.f32.mrb[0].mxu0
        %v919 = vadd.f32 %v707, %v918
        %v920 = vpop.f32.mrb[0].mxu0
        %v921 = vpop.f32.mrb[0].mxu0
        %v922 = vadd.f32 %v710, %v921
        %v923 = vpop.f32.mrb[0].mxu0
        %924 = vmatprep.mubr.bf16.mxu0 0
        %925 = vmatmul.mubr.bf16.gmra.mrb[0].mxu0 %v777
        %v926 = vpop.f32.mrb[0].mxu0
        %v927 = vadd.f32 %v715, %v926
        %v928 = vpop.f32.mrb[0].mxu0
        %v929 = vpop.f32.mrb[0].mxu0
        %v930 = vadd.f32 %v718, %v929
        %v931 = vpop.f32.mrb[0].mxu0
        %932 = vmatprep.mubr.bf16.mxu0 0
        %933 = vmatmul.mubr.bf16.gmra.mrb[0].mxu0 %v780
        %v934 = vpop.f32.mrb[0].mxu0
        %v935 = vadd.f32 %v723, %v934
        %v936 = vpop.f32.mrb[0].mxu0
        %v937 = vpop.f32.mrb[0].mxu0
        %v938 = vadd.f32 %v726, %v937
        %v939 = vpop.f32.mrb[0].mxu0
        %940 = vmatprep.mubr.bf16.mxu0 0
        %941 = vmatmul.mubr.bf16.gmra.mrb[0].mxu0 %v783
        %v942 = vpop.f32.mrb[0].mxu0
        %v943 = vadd.f32 %v731, %v942
        %v944 = vpop.f32.mrb[0].mxu0
        %v945 = vpop.f32.mrb[0].mxu0
        %v946 = vadd.f32 %v734, %v945
        %v947 = vpop.f32.mrb[0].mxu0
        %948 = vdwg.mxu0
        %v949 = vld [vmem:[#allocation2 + $0x2] sm:$0xff]
        %v950 = vld [vmem:[#allocation2 + $0xa] sm:$0xff]
        %v951 = vld [vmem:[#allocation2 + $0x1a] sm:$0xff]
        %v952 = vld [vmem:[#allocation2 + $0x22] sm:$0xff]
        %v953 = vld [vmem:[#allocation2 + $0x32] sm:$0xff]
        %v954 = vld [vmem:[#allocation2 + $0x3a] sm:$0xff]
        %v955 = vld [vmem:[#allocation2 + $0x4a] sm:$0xff]
        %v956 = vld [vmem:[#allocation2 + $0x52] sm:$0xff]
        %v957 = vld [vmem:[#allocation2 + $0x62] sm:$0xff]
        %v958 = vld [vmem:[#allocation2 + $0x6a] sm:$0xff]
        %v959 = vld [vmem:[#allocation2 + $0x7a] sm:$0xff]
        %v960 = vld [vmem:[#allocation2 + $0x82] sm:$0xff]
        %v961 = vld [vmem:[#allocation2 + $0x92] sm:$0xff]
        %v962 = vld [vmem:[#allocation2 + $0x9a] sm:$0xff]
        %v963 = vld [vmem:[#allocation2 + $0xaa] sm:$0xff]
        %v964 = vld [vmem:[#allocation2 + $0xb2] sm:$0xff]
        %v965 = vld [vmem:[#allocation2 + $0xc2] sm:$0xff]
        %v966 = vld [vmem:[#allocation2 + $0xca] sm:$0xff]
        %v967 = vld [vmem:[#allocation2 + $0xda] sm:$0xff]
        %v968 = vld [vmem:[#allocation2 + $0xe2] sm:$0xff]
        %v969 = vld [vmem:[#allocation2 + $0xf2] sm:$0xff]
        %v970 = vld [vmem:[#allocation2 + $0xfa] sm:$0xff]
        %v971 = vld [vmem:[#allocation2 + $0x10a] sm:$0xff]
        %v972 = vld [vmem:[#allocation2 + $0x112] sm:$0xff]
        %v973 = vld [vmem:[#allocation2 + $0x122] sm:$0xff]
        %v974 = vld [vmem:[#allocation2 + $0x12a] sm:$0xff]
        %v975 = vld [vmem:[#allocation2 + $0x13a] sm:$0xff]
        %v976 = vld [vmem:[#allocation2 + $0x142] sm:$0xff]
        %v977 = vld [vmem:[#allocation2 + $0x152] sm:$0xff]
        %v978 = vld [vmem:[#allocation2 + $0x15a] sm:$0xff]
        %v979 = vld [vmem:[#allocation2 + $0x16a] sm:$0xff]
        %v980 = vld [vmem:[#allocation2 + $0x172] sm:$0xff]
        %v981 = vpack.c.bf16 %v950, %v949
        %v982 = vpack.c.bf16 %v952, %v951
        %v983 = vpack.c.bf16 %v954, %v953
        %v984 = vpack.c.bf16 %v956, %v955
        %v985 = vpack.c.bf16 %v958, %v957
        %v986 = vpack.c.bf16 %v960, %v959
        %v987 = vpack.c.bf16 %v962, %v961
        %v988 = vpack.c.bf16 %v964, %v963
        %v989 = vpack.c.bf16 %v966, %v965
        %v990 = vpack.c.bf16 %v968, %v967
        %v991 = vpack.c.bf16 %v970, %v969
        %v992 = vpack.c.bf16 %v972, %v971
        %v993 = vpack.c.bf16 %v974, %v973
        %v994 = vpack.c.bf16 %v976, %v975
        %v995 = vpack.c.bf16 %v978, %v977
        %v996 = vpack.c.bf16 %v980, %v979
        %s997 = scalar_lea.vmem %s1, 4
        %v998 = vld [vmem:[%s997] sm:$0x3]
        %v1000 = vsel %vm304, %v981, 0
        %v1003 = vsel %vm304, %v982, 0
        %v1006 = vsel %vm304, %v983, 0
        %v1009 = vsel %vm304, %v984, 0
        %v1012 = vsel %vm304, %v985, 0
        %v1015 = vsel %vm304, %v986, 0
        %v1018 = vsel %vm304, %v987, 0
        %v1021 = vsel %vm304, %v988, 0
        %v1024 = vsel %vm304, %v989, 0
        %v1027 = vsel %vm304, %v990, 0
        %v1030 = vsel %vm304, %v991, 0
        %v1033 = vsel %vm304, %v992, 0
        %v1036 = vsel %vm304, %v993, 0
        %v1039 = vsel %vm304, %v994, 0
        %v1042 = vsel %vm304, %v995, 0
        %v1045 = vsel %vm304, %v996, 0
        %v1048 = vsel %vm572, %v998, 0
        %1050 = vmatprep.subr.bf16.mxu0 0
        %1051 = vmatpush1.bf16.msra.mxu0 %v1048
        %1052 = vmatprep.subr.bf16.mxu0 0
        %1053 = vmatpush1.bf16.msra.mxu0 0
        %1054 = vmatprep.subr.bf16.mxu0 0
        %1055 = vmatpush1.bf16.msra.mxu0 0
        %1056 = vmatprep.subr.bf16.mxu0 0
        %1057 = vmatpush1.bf16.msra.mxu0 0
        %1058 = vmatprep.subr.bf16.mxu0 0
        %1059 = vmatpush1.bf16.msra.mxu0 0
        %1060 = vmatprep.subr.bf16.mxu0 0
        %1061 = vmatpush1.bf16.msra.mxu0 0
        %1062 = vmatprep.subr.bf16.mxu0 0
        %1063 = vmatpush1.bf16.msra.mxu0 0
        %1064 = vmatprep.subr.bf16.mxu0 0
        %1065 = vmatpush1.bf16.msra.mxu0 0
        %1066 = vmatprep.subr.bf16.mxu0 0
        %1067 = vmatpush1.bf16.msra.mxu0 0
        %1068 = vmatprep.subr.bf16.mxu0 0
        %1069 = vmatpush1.bf16.msra.mxu0 0
        %1070 = vmatprep.subr.bf16.mxu0 0
        %1071 = vmatpush1.bf16.msra.mxu0 0
        %1072 = vmatprep.subr.bf16.mxu0 0
        %1073 = vmatpush1.bf16.msra.mxu0 0
        %1074 = vmatprep.subr.bf16.mxu0 0
        %1075 = vmatpush1.bf16.msra.mxu0 0
        %1076 = vmatprep.subr.bf16.mxu0 0
        %1077 = vmatpush1.bf16.msra.mxu0 0
        %1078 = vmatprep.subr.bf16.mxu0 0
        %1079 = vmatpush1.bf16.msra.mxu0 0
        %1080 = vmatprep.subr.bf16.mxu0 0
        %1081 = vmatpush1.bf16.msra.mxu0 0
        %1082 = vmatprep.mubr.bf16.mxu0 0
        %1083 = vmatmul.mubr.bf16.gmra.mrb[0].mxu0 %v1000
        %v1084 = vpop.f32.mrb[0].mxu0
        %v1085 = vadd.f32 0.0, %v1084
        %v1086 = vpop.f32.mrb[0].mxu0
        %v1087 = vpop.f32.mrb[0].mxu0
        %v1088 = vadd.f32 0.0, %v1087
        %v1089 = vpop.f32.mrb[0].mxu0
        %1090 = vmatprep.mubr.bf16.mxu0 0
        %1091 = vmatmul.mubr.bf16.gmra.mrb[0].mxu0 %v1003
        %v1092 = vpop.f32.mrb[0].mxu0
        %v1093 = vadd.f32 0.0, %v1092
        %v1094 = vpop.f32.mrb[0].mxu0
        %v1095 = vpop.f32.mrb[0].mxu0
        %v1096 = vadd.f32 0.0, %v1095
        %v1097 = vpop.f32.mrb[0].mxu0
        %1098 = vmatprep.mubr.bf16.mxu0 0
        %1099 = vmatmul.mubr.bf16.gmra.mrb[0].mxu0 %v1006
        %v1100 = vpop.f32.mrb[0].mxu0
        %v1101 = vadd.f32 0.0, %v1100
        %v1102 = vpop.f32.mrb[0].mxu0
        %v1103 = vpop.f32.mrb[0].mxu0
        %v1104 = vadd.f32 0.0, %v1103
        %v1105 = vpop.f32.mrb[0].mxu0
        %1106 = vmatprep.mubr.bf16.mxu0 0
        %1107 = vmatmul.mubr.bf16.gmra.mrb[0].mxu0 %v1009
        %v1108 = vpop.f32.mrb[0].mxu0
        %v1109 = vadd.f32 0.0, %v1108
        %v1110 = vpop.f32.mrb[0].mxu0
        %v1111 = vpop.f32.mrb[0].mxu0
        %v1112 = vadd.f32 0.0, %v1111
        %v1113 = vpop.f32.mrb[0].mxu0
        %1114 = vmatprep.mubr.bf16.mxu0 0
        %1115 = vmatmul.mubr.bf16.gmra.mrb[0].mxu0 %v1012
        %v1116 = vpop.f32.mrb[0].mxu0
        %v1117 = vadd.f32 0.0, %v1116
        %v1118 = vpop.f32.mrb[0].mxu0
        %v1119 = vpop.f32.mrb[0].mxu0
        %v1120 = vadd.f32 0.0, %v1119
        %v1121 = vpop.f32.mrb[0].mxu0
        %1122 = vmatprep.mubr.bf16.mxu0 0
        %1123 = vmatmul.mubr.bf16.gmra.mrb[0].mxu0 %v1015
        %v1124 = vpop.f32.mrb[0].mxu0
        %v1125 = vadd.f32 0.0, %v1124
        %v1126 = vpop.f32.mrb[0].mxu0
        %v1127 = vpop.f32.mrb[0].mxu0
        %v1128 = vadd.f32 0.0, %v1127
        %v1129 = vpop.f32.mrb[0].mxu0
        %1130 = vmatprep.mubr.bf16.mxu0 0
        %1131 = vmatmul.mubr.bf16.gmra.mrb[0].mxu0 %v1018
        %v1132 = vpop.f32.mrb[0].mxu0
        %v1133 = vadd.f32 0.0, %v1132
        %v1134 = vpop.f32.mrb[0].mxu0
        %v1135 = vpop.f32.mrb[0].mxu0
        %v1136 = vadd.f32 0.0, %v1135
        %v1137 = vpop.f32.mrb[0].mxu0
        %1138 = vmatprep.mubr.bf16.mxu0 0
        %1139 = vmatmul.mubr.bf16.gmra.mrb[0].mxu0 %v1021
        %v1140 = vpop.f32.mrb[0].mxu0
        %v1141 = vadd.f32 0.0, %v1140
        %v1142 = vpop.f32.mrb[0].mxu0
        %v1143 = vpop.f32.mrb[0].mxu0
        %v1144 = vadd.f32 0.0, %v1143
        %v1145 = vpop.f32.mrb[0].mxu0
        %1146 = vmatprep.mubr.bf16.mxu0 0
        %1147 = vmatmul.mubr.bf16.gmra.mrb[0].mxu0 %v1024
        %v1148 = vpop.f32.mrb[0].mxu0
        %v1149 = vadd.f32 0.0, %v1148
        %v1150 = vpop.f32.mrb[0].mxu0
        %v1151 = vpop.f32.mrb[0].mxu0
        %v1152 = vadd.f32 0.0, %v1151
        %v1153 = vpop.f32.mrb[0].mxu0
        %1154 = vmatprep.mubr.bf16.mxu0 0
        %1155 = vmatmul.mubr.bf16.gmra.mrb[0].mxu0 %v1027
        %v1156 = vpop.f32.mrb[0].mxu0
        %v1157 = vadd.f32 0.0, %v1156
        %v1158 = vpop.f32.mrb[0].mxu0
        %v1159 = vpop.f32.mrb[0].mxu0
        %v1160 = vadd.f32 0.0, %v1159
        %v1161 = vpop.f32.mrb[0].mxu0
        %1162 = vmatprep.mubr.bf16.mxu0 0
        %1163 = vmatmul.mubr.bf16.gmra.mrb[0].mxu0 %v1030
        %v1164 = vpop.f32.mrb[0].mxu0
        %v1165 = vadd.f32 0.0, %v1164
        %v1166 = vpop.f32.mrb[0].mxu0
        %v1167 = vpop.f32.mrb[0].mxu0
        %v1168 = vadd.f32 0.0, %v1167
        %v1169 = vpop.f32.mrb[0].mxu0
        %1170 = vmatprep.mubr.bf16.mxu0 0
        %1171 = vmatmul.mubr.bf16.gmra.mrb[0].mxu0 %v1033
        %v1172 = vpop.f32.mrb[0].mxu0
        %v1173 = vadd.f32 0.0, %v1172
        %v1174 = vpop.f32.mrb[0].mxu0
        %v1175 = vpop.f32.mrb[0].mxu0
        %v1176 = vadd.f32 0.0, %v1175
        %v1177 = vpop.f32.mrb[0].mxu0
        %1178 = vmatprep.mubr.bf16.mxu0 0
        %1179 = vmatmul.mubr.bf16.gmra.mrb[0].mxu0 %v1036
        %v1180 = vpop.f32.mrb[0].mxu0
        %v1181 = vadd.f32 0.0, %v1180
        %v1182 = vpop.f32.mrb[0].mxu0
        %v1183 = vpop.f32.mrb[0].mxu0
        %v1184 = vadd.f32 0.0, %v1183
        %v1185 = vpop.f32.mrb[0].mxu0
        %1186 = vmatprep.mubr.bf16.mxu0 0
        %1187 = vmatmul.mubr.bf16.gmra.mrb[0].mxu0 %v1039
        %v1188 = vpop.f32.mrb[0].mxu0
        %v1189 = vadd.f32 0.0, %v1188
        %v1190 = vpop.f32.mrb[0].mxu0
        %v1191 = vpop.f32.mrb[0].mxu0
        %v1192 = vadd.f32 0.0, %v1191
        %v1193 = vpop.f32.mrb[0].mxu0
        %1194 = vmatprep.mubr.bf16.mxu0 0
        %1195 = vmatmul.mubr.bf16.gmra.mrb[0].mxu0 %v1042
        %v1196 = vpop.f32.mrb[0].mxu0
        %v1197 = vadd.f32 0.0, %v1196
        %v1198 = vpop.f32.mrb[0].mxu0
        %v1199 = vpop.f32.mrb[0].mxu0
        %v1200 = vadd.f32 0.0, %v1199
        %v1201 = vpop.f32.mrb[0].mxu0
        %1202 = vmatprep.mubr.bf16.mxu0 0
        %1203 = vmatmul.mubr.bf16.gmra.mrb[0].mxu0 %v1045
        %v1204 = vpop.f32.mrb[0].mxu0
        %v1205 = vadd.f32 0.0, %v1204
        %v1206 = vpop.f32.mrb[0].mxu0
        %v1207 = vpop.f32.mrb[0].mxu0
        %v1208 = vadd.f32 0.0, %v1207
        %v1209 = vpop.f32.mrb[0].mxu0
        %1210 = vdwg.mxu0
        %v1211 = vadd.f32 %v823, %v1085
        %v1212 = vadd.f32 %v826, %v1088
        %v1213 = vadd.f32 %v831, %v1093
        %v1214 = vadd.f32 %v834, %v1096
        %v1215 = vadd.f32 %v839, %v1101
        %v1216 = vadd.f32 %v842, %v1104
        %v1217 = vadd.f32 %v847, %v1109
        %v1218 = vadd.f32 %v850, %v1112
        %v1219 = vadd.f32 %v855, %v1117
        %v1220 = vadd.f32 %v858, %v1120
        %v1221 = vadd.f32 %v863, %v1125
        %v1222 = vadd.f32 %v866, %v1128
        %v1223 = vadd.f32 %v871, %v1133
        %v1224 = vadd.f32 %v874, %v1136
        %v1225 = vadd.f32 %v879, %v1141
        %v1226 = vadd.f32 %v882, %v1144
        %v1227 = vadd.f32 %v887, %v1149
        %v1228 = vadd.f32 %v890, %v1152
        %v1229 = vadd.f32 %v895, %v1157
        %v1230 = vadd.f32 %v898, %v1160
        %v1231 = vadd.f32 %v903, %v1165
        %v1232 = vadd.f32 %v906, %v1168
        %v1233 = vadd.f32 %v911, %v1173
        %v1234 = vadd.f32 %v914, %v1176
        %v1235 = vadd.f32 %v919, %v1181
        %v1236 = vadd.f32 %v922, %v1184
        %v1237 = vadd.f32 %v927, %v1189
        %v1238 = vadd.f32 %v930, %v1192
        %v1239 = vadd.f32 %v935, %v1197
        %v1240 = vadd.f32 %v938, %v1200
        %v1241 = vadd.f32 %v943, %v1205
        %v1242 = vadd.f32 %v946, %v1208
        %v1243 = vld [vmem:[%s392] sm:$0xff]
        %v1244 = vld [vmem:[%s392 + $0x8] sm:$0xff]
        %v1245 = vld [vmem:[%s392 + $0x18] sm:$0xff]
        %v1246 = vld [vmem:[%s392 + $0x20] sm:$0xff]
        %v1247 = vld [vmem:[%s392 + $0x30] sm:$0xff]
        %v1248 = vld [vmem:[%s392 + $0x38] sm:$0xff]
        %v1249 = vld [vmem:[%s392 + $0x48] sm:$0xff]
        %v1250 = vld [vmem:[%s392 + $0x50] sm:$0xff]
        %v1251 = vld [vmem:[%s392 + $0x60] sm:$0xff]
        %v1252 = vld [vmem:[%s392 + $0x68] sm:$0xff]
        %v1253 = vld [vmem:[%s392 + $0x78] sm:$0xff]
        %v1254 = vld [vmem:[%s392 + $0x80] sm:$0xff]
        %v1255 = vld [vmem:[%s392 + $0x90] sm:$0xff]
        %v1256 = vld [vmem:[%s392 + $0x98] sm:$0xff]
        %v1257 = vld [vmem:[%s392 + $0xa8] sm:$0xff]
        %v1258 = vld [vmem:[%s392 + $0xb0] sm:$0xff]
        %v1259 = vld [vmem:[%s392 + $0xc0] sm:$0xff]
        %v1260 = vld [vmem:[%s392 + $0xc8] sm:$0xff]
        %v1261 = vld [vmem:[%s392 + $0xd8] sm:$0xff]
        %v1262 = vld [vmem:[%s392 + $0xe0] sm:$0xff]
        %v1263 = vld [vmem:[%s392 + $0xf0] sm:$0xff]
        %v1264 = vld [vmem:[%s392 + $0xf8] sm:$0xff]
        %v1265 = vld [vmem:[%s392 + $0x108] sm:$0xff]
        %v1266 = vld [vmem:[%s392 + $0x110] sm:$0xff]
        %v1267 = vld [vmem:[%s392 + $0x120] sm:$0xff]
        %v1268 = vld [vmem:[%s392 + $0x128] sm:$0xff]
        %v1269 = vld [vmem:[%s392 + $0x138] sm:$0xff]
        %v1270 = vld [vmem:[%s392 + $0x140] sm:$0xff]
        %v1271 = vld [vmem:[%s392 + $0x150] sm:$0xff]
        %v1272 = vld [vmem:[%s392 + $0x158] sm:$0xff]
        %v1273 = vld [vmem:[%s392 + $0x168] sm:$0xff]
        %v1274 = vld [vmem:[%s392 + $0x170] sm:$0xff]
        %v1275 = vpack.c.bf16 %v1244, %v1243
        %v1276 = vpack.c.bf16 %v1246, %v1245
        %v1277 = vpack.c.bf16 %v1248, %v1247
        %v1278 = vpack.c.bf16 %v1250, %v1249
        %v1279 = vpack.c.bf16 %v1252, %v1251
        %v1280 = vpack.c.bf16 %v1254, %v1253
        %v1281 = vpack.c.bf16 %v1256, %v1255
        %v1282 = vpack.c.bf16 %v1258, %v1257
        %v1283 = vpack.c.bf16 %v1260, %v1259
        %v1284 = vpack.c.bf16 %v1262, %v1261
        %v1285 = vpack.c.bf16 %v1264, %v1263
        %v1286 = vpack.c.bf16 %v1266, %v1265
        %v1287 = vpack.c.bf16 %v1268, %v1267
        %v1288 = vpack.c.bf16 %v1270, %v1269
        %v1289 = vpack.c.bf16 %v1272, %v1271
        %v1290 = vpack.c.bf16 %v1274, %v1273
        %s1291 = scalar_lea.vmem %s1, 6
        %v1292 = vld [vmem:[%s1291] sm:$0x3]
        %v1294 = vsel %vm304, %v1275, 0
        %v1297 = vsel %vm304, %v1276, 0
        %v1300 = vsel %vm304, %v1277, 0
        %v1303 = vsel %vm304, %v1278, 0
        %v1306 = vsel %vm304, %v1279, 0
        %v1309 = vsel %vm304, %v1280, 0
        %v1312 = vsel %vm304, %v1281, 0
        %v1315 = vsel %vm304, %v1282, 0
        %v1318 = vsel %vm304, %v1283, 0
        %v1321 = vsel %vm304, %v1284, 0
        %v1324 = vsel %vm304, %v1285, 0
        %v1327 = vsel %vm304, %v1286, 0
        %v1330 = vsel %vm304, %v1287, 0
        %v1333 = vsel %vm304, %v1288, 0
        %v1336 = vsel %vm304, %v1289, 0
        %v1339 = vsel %vm304, %v1290, 0
        %v1342 = vsel %vm572, %v1292, 0
        %1344 = vmatprep.subr.bf16.mxu0 0
        %1345 = vmatpush1.bf16.msra.mxu0 %v1342
        %1346 = vmatprep.subr.bf16.mxu0 0
        %1347 = vmatpush1.bf16.msra.mxu0 0
        %1348 = vmatprep.subr.bf16.mxu0 0
        %1349 = vmatpush1.bf16.msra.mxu0 0
        %1350 = vmatprep.subr.bf16.mxu0 0
        %1351 = vmatpush1.bf16.msra.mxu0 0
        %1352 = vmatprep.subr.bf16.mxu0 0
        %1353 = vmatpush1.bf16.msra.mxu0 0
        %1354 = vmatprep.subr.bf16.mxu0 0
        %1355 = vmatpush1.bf16.msra.mxu0 0
        %1356 = vmatprep.subr.bf16.mxu0 0
        %1357 = vmatpush1.bf16.msra.mxu0 0
        %1358 = vmatprep.subr.bf16.mxu0 0
        %1359 = vmatpush1.bf16.msra.mxu0 0
        %1360 = vmatprep.subr.bf16.mxu0 0
        %1361 = vmatpush1.bf16.msra.mxu0 0
        %1362 = vmatprep.subr.bf16.mxu0 0
        %1363 = vmatpush1.bf16.msra.mxu0 0
        %1364 = vmatprep.subr.bf16.mxu0 0
        %1365 = vmatpush1.bf16.msra.mxu0 0
        %1366 = vmatprep.subr.bf16.mxu0 0
        %1367 = vmatpush1.bf16.msra.mxu0 0
        %1368 = vmatprep.subr.bf16.mxu0 0
        %1369 = vmatpush1.bf16.msra.mxu0 0
        %1370 = vmatprep.subr.bf16.mxu0 0
        %1371 = vmatpush1.bf16.msra.mxu0 0
        %1372 = vmatprep.subr.bf16.mxu0 0
        %1373 = vmatpush1.bf16.msra.mxu0 0
        %1374 = vmatprep.subr.bf16.mxu0 0
        %1375 = vmatpush1.bf16.msra.mxu0 0
        %1376 = vmatprep.mubr.bf16.mxu0 0
        %1377 = vmatmul.mubr.bf16.gmra.mrb[0].mxu0 %v1294
        %v1378 = vpop.f32.mrb[0].mxu0
        %v1379 = vadd.f32 0.0, %v1378
        %v1380 = vpop.f32.mrb[0].mxu0
        %v1381 = vpop.f32.mrb[0].mxu0
        %v1382 = vadd.f32 0.0, %v1381
        %v1383 = vpop.f32.mrb[0].mxu0
        %1384 = vmatprep.mubr.bf16.mxu0 0
        %1385 = vmatmul.mubr.bf16.gmra.mrb[0].mxu0 %v1297
        %v1386 = vpop.f32.mrb[0].mxu0
        %v1387 = vadd.f32 0.0, %v1386
        %v1388 = vpop.f32.mrb[0].mxu0
        %v1389 = vpop.f32.mrb[0].mxu0
        %v1390 = vadd.f32 0.0, %v1389
        %v1391 = vpop.f32.mrb[0].mxu0
        %1392 = vmatprep.mubr.bf16.mxu0 0
        %1393 = vmatmul.mubr.bf16.gmra.mrb[0].mxu0 %v1300
        %v1394 = vpop.f32.mrb[0].mxu0
        %v1395 = vadd.f32 0.0, %v1394
        %v1396 = vpop.f32.mrb[0].mxu0
        %v1397 = vpop.f32.mrb[0].mxu0
        %v1398 = vadd.f32 0.0, %v1397
        %v1399 = vpop.f32.mrb[0].mxu0
        %1400 = vmatprep.mubr.bf16.mxu0 0
        %1401 = vmatmul.mubr.bf16.gmra.mrb[0].mxu0 %v1303
        %v1402 = vpop.f32.mrb[0].mxu0
        %v1403 = vadd.f32 0.0, %v1402
        %v1404 = vpop.f32.mrb[0].mxu0
        %v1405 = vpop.f32.mrb[0].mxu0
        %v1406 = vadd.f32 0.0, %v1405
        %v1407 = vpop.f32.mrb[0].mxu0
        %1408 = vmatprep.mubr.bf16.mxu0 0
        %1409 = vmatmul.mubr.bf16.gmra.mrb[0].mxu0 %v1306
        %v1410 = vpop.f32.mrb[0].mxu0
        %v1411 = vadd.f32 0.0, %v1410
        %v1412 = vpop.f32.mrb[0].mxu0
        %v1413 = vpop.f32.mrb[0].mxu0
        %v1414 = vadd.f32 0.0, %v1413
        %v1415 = vpop.f32.mrb[0].mxu0
        %1416 = vmatprep.mubr.bf16.mxu0 0
        %1417 = vmatmul.mubr.bf16.gmra.mrb[0].mxu0 %v1309
        %v1418 = vpop.f32.mrb[0].mxu0
        %v1419 = vadd.f32 0.0, %v1418
        %v1420 = vpop.f32.mrb[0].mxu0
        %v1421 = vpop.f32.mrb[0].mxu0
        %v1422 = vadd.f32 0.0, %v1421
        %v1423 = vpop.f32.mrb[0].mxu0
        %1424 = vmatprep.mubr.bf16.mxu0 0
        %1425 = vmatmul.mubr.bf16.gmra.mrb[0].mxu0 %v1312
        %v1426 = vpop.f32.mrb[0].mxu0
        %v1427 = vadd.f32 0.0, %v1426
        %v1428 = vpop.f32.mrb[0].mxu0
        %v1429 = vpop.f32.mrb[0].mxu0
        %v1430 = vadd.f32 0.0, %v1429
        %v1431 = vpop.f32.mrb[0].mxu0
        %1432 = vmatprep.mubr.bf16.mxu0 0
        %1433 = vmatmul.mubr.bf16.gmra.mrb[0].mxu0 %v1315
        %v1434 = vpop.f32.mrb[0].mxu0
        %v1435 = vadd.f32 0.0, %v1434
        %v1436 = vpop.f32.mrb[0].mxu0
        %v1437 = vpop.f32.mrb[0].mxu0
        %v1438 = vadd.f32 0.0, %v1437
        %v1439 = vpop.f32.mrb[0].mxu0
        %1440 = vmatprep.mubr.bf16.mxu0 0
        %1441 = vmatmul.mubr.bf16.gmra.mrb[0].mxu0 %v1318
        %v1442 = vpop.f32.mrb[0].mxu0
        %v1443 = vadd.f32 0.0, %v1442
        %v1444 = vpop.f32.mrb[0].mxu0
        %v1445 = vpop.f32.mrb[0].mxu0
        %v1446 = vadd.f32 0.0, %v1445
        %v1447 = vpop.f32.mrb[0].mxu0
        %1448 = vmatprep.mubr.bf16.mxu0 0
        %1449 = vmatmul.mubr.bf16.gmra.mrb[0].mxu0 %v1321
        %v1450 = vpop.f32.mrb[0].mxu0
        %v1451 = vadd.f32 0.0, %v1450
        %v1452 = vpop.f32.mrb[0].mxu0
        %v1453 = vpop.f32.mrb[0].mxu0
        %v1454 = vadd.f32 0.0, %v1453
        %v1455 = vpop.f32.mrb[0].mxu0
        %1456 = vmatprep.mubr.bf16.mxu0 0
        %1457 = vmatmul.mubr.bf16.gmra.mrb[0].mxu0 %v1324
        %v1458 = vpop.f32.mrb[0].mxu0
        %v1459 = vadd.f32 0.0, %v1458
        %v1460 = vpop.f32.mrb[0].mxu0
        %v1461 = vpop.f32.mrb[0].mxu0
        %v1462 = vadd.f32 0.0, %v1461
        %v1463 = vpop.f32.mrb[0].mxu0
        %1464 = vmatprep.mubr.bf16.mxu0 0
        %1465 = vmatmul.mubr.bf16.gmra.mrb[0].mxu0 %v1327
        %v1466 = vpop.f32.mrb[0].mxu0
        %v1467 = vadd.f32 0.0, %v1466
        %v1468 = vpop.f32.mrb[0].mxu0
        %v1469 = vpop.f32.mrb[0].mxu0
        %v1470 = vadd.f32 0.0, %v1469
        %v1471 = vpop.f32.mrb[0].mxu0
        %1472 = vmatprep.mubr.bf16.mxu0 0
        %1473 = vmatmul.mubr.bf16.gmra.mrb[0].mxu0 %v1330
        %v1474 = vpop.f32.mrb[0].mxu0
        %v1475 = vadd.f32 0.0, %v1474
        %v1476 = vpop.f32.mrb[0].mxu0
        %v1477 = vpop.f32.mrb[0].mxu0
        %v1478 = vadd.f32 0.0, %v1477
        %v1479 = vpop.f32.mrb[0].mxu0
        %1480 = vmatprep.mubr.bf16.mxu0 0
        %1481 = vmatmul.mubr.bf16.gmra.mrb[0].mxu0 %v1333
        %v1482 = vpop.f32.mrb[0].mxu0
        %v1483 = vadd.f32 0.0, %v1482
        %v1484 = vpop.f32.mrb[0].mxu0
        %v1485 = vpop.f32.mrb[0].mxu0
        %v1486 = vadd.f32 0.0, %v1485
        %v1487 = vpop.f32.mrb[0].mxu0
        %1488 = vmatprep.mubr.bf16.mxu0 0
        %1489 = vmatmul.mubr.bf16.gmra.mrb[0].mxu0 %v1336
        %v1490 = vpop.f32.mrb[0].mxu0
        %v1491 = vadd.f32 0.0, %v1490
        %v1492 = vpop.f32.mrb[0].mxu0
        %v1493 = vpop.f32.mrb[0].mxu0
        %v1494 = vadd.f32 0.0, %v1493
        %v1495 = vpop.f32.mrb[0].mxu0
        %1496 = vmatprep.mubr.bf16.mxu0 0
        %1497 = vmatmul.mubr.bf16.gmra.mrb[0].mxu0 %v1339
        %v1498 = vpop.f32.mrb[0].mxu0
        %v1499 = vadd.f32 0.0, %v1498
        %v1500 = vpop.f32.mrb[0].mxu0
        %v1501 = vpop.f32.mrb[0].mxu0
        %v1502 = vadd.f32 0.0, %v1501
        %v1503 = vpop.f32.mrb[0].mxu0
        %1504 = vdwg.mxu0
        %v1505 = vadd.f32 %v1211, %v1379
        %v1506 = vadd.f32 %v1212, %v1382
        %v1507 = vadd.f32 %v1213, %v1387
        %v1508 = vadd.f32 %v1214, %v1390
        %v1509 = vadd.f32 %v1215, %v1395
        %v1510 = vadd.f32 %v1216, %v1398
        %v1511 = vadd.f32 %v1217, %v1403
        %v1512 = vadd.f32 %v1218, %v1406
        %v1513 = vadd.f32 %v1219, %v1411
        %v1514 = vadd.f32 %v1220, %v1414
        %v1515 = vadd.f32 %v1221, %v1419
        %v1516 = vadd.f32 %v1222, %v1422
        %v1517 = vadd.f32 %v1223, %v1427
        %v1518 = vadd.f32 %v1224, %v1430
        %v1519 = vadd.f32 %v1225, %v1435
        %v1520 = vadd.f32 %v1226, %v1438
        %v1521 = vadd.f32 %v1227, %v1443
        %v1522 = vadd.f32 %v1228, %v1446
        %v1523 = vadd.f32 %v1229, %v1451
        %v1524 = vadd.f32 %v1230, %v1454
        %v1525 = vadd.f32 %v1231, %v1459
        %v1526 = vadd.f32 %v1232, %v1462
        %v1527 = vadd.f32 %v1233, %v1467
        %v1528 = vadd.f32 %v1234, %v1470
        %v1529 = vadd.f32 %v1235, %v1475
        %v1530 = vadd.f32 %v1236, %v1478
        %v1531 = vadd.f32 %v1237, %v1483
        %v1532 = vadd.f32 %v1238, %v1486
        %v1533 = vadd.f32 %v1239, %v1491
        %v1534 = vadd.f32 %v1240, %v1494
        %v1535 = vadd.f32 %v1241, %v1499
        %v1536 = vadd.f32 %v1242, %v1502
        %v1537 = vld [vmem:[%s392 + $0x1] sm:$0xff]
        %v1538 = vld [vmem:[%s392 + $0x9] sm:$0xff]
        %v1539 = vld [vmem:[%s392 + $0x19] sm:$0xff]
        %v1540 = vld [vmem:[%s392 + $0x21] sm:$0xff]
        %v1541 = vld [vmem:[%s392 + $0x31] sm:$0xff]
        %v1542 = vld [vmem:[%s392 + $0x39] sm:$0xff]
        %v1543 = vld [vmem:[%s392 + $0x49] sm:$0xff]
        %v1544 = vld [vmem:[%s392 + $0x51] sm:$0xff]
        %v1545 = vld [vmem:[%s392 + $0x61] sm:$0xff]
        %v1546 = vld [vmem:[%s392 + $0x69] sm:$0xff]
        %v1547 = vld [vmem:[%s392 + $0x79] sm:$0xff]
        %v1548 = vld [vmem:[%s392 + $0x81] sm:$0xff]
        %v1549 = vld [vmem:[%s392 + $0x91] sm:$0xff]
        %v1550 = vld [vmem:[%s392 + $0x99] sm:$0xff]
        %v1551 = vld [vmem:[%s392 + $0xa9] sm:$0xff]
        %v1552 = vld [vmem:[%s392 + $0xb1] sm:$0xff]
        %v1553 = vld [vmem:[%s392 + $0xc1] sm:$0xff]
        %v1554 = vld [vmem:[%s392 + $0xc9] sm:$0xff]
        %v1555 = vld [vmem:[%s392 + $0xd9] sm:$0xff]
        %v1556 = vld [vmem:[%s392 + $0xe1] sm:$0xff]
        %v1557 = vld [vmem:[%s392 + $0xf1] sm:$0xff]
        %v1558 = vld [vmem:[%s392 + $0xf9] sm:$0xff]
        %v1559 = vld [vmem:[%s392 + $0x109] sm:$0xff]
        %v1560 = vld [vmem:[%s392 + $0x111] sm:$0xff]
        %v1561 = vld [vmem:[%s392 + $0x121] sm:$0xff]
        %v1562 = vld [vmem:[%s392 + $0x129] sm:$0xff]
        %v1563 = vld [vmem:[%s392 + $0x139] sm:$0xff]
        %v1564 = vld [vmem:[%s392 + $0x141] sm:$0xff]
        %v1565 = vld [vmem:[%s392 + $0x151] sm:$0xff]
        %v1566 = vld [vmem:[%s392 + $0x159] sm:$0xff]
        %v1567 = vld [vmem:[%s392 + $0x169] sm:$0xff]
        %v1568 = vld [vmem:[%s392 + $0x171] sm:$0xff]
        %v1569 = vpack.c.bf16 %v1538, %v1537
        %v1570 = vpack.c.bf16 %v1540, %v1539
        %v1571 = vpack.c.bf16 %v1542, %v1541
        %v1572 = vpack.c.bf16 %v1544, %v1543
        %v1573 = vpack.c.bf16 %v1546, %v1545
        %v1574 = vpack.c.bf16 %v1548, %v1547
        %v1575 = vpack.c.bf16 %v1550, %v1549
        %v1576 = vpack.c.bf16 %v1552, %v1551
        %v1577 = vpack.c.bf16 %v1554, %v1553
        %v1578 = vpack.c.bf16 %v1556, %v1555
        %v1579 = vpack.c.bf16 %v1558, %v1557
        %v1580 = vpack.c.bf16 %v1560, %v1559
        %v1581 = vpack.c.bf16 %v1562, %v1561
        %v1582 = vpack.c.bf16 %v1564, %v1563
        %v1583 = vpack.c.bf16 %v1566, %v1565
        %v1584 = vpack.c.bf16 %v1568, %v1567
        %s1585 = scalar_lea.vmem %s1, 8
        %v1586 = vld [vmem:[%s1585] sm:$0x3]
        %v1588 = vsel %vm304, %v1569, 0
        %v1591 = vsel %vm304, %v1570, 0
        %v1594 = vsel %vm304, %v1571, 0
        %v1597 = vsel %vm304, %v1572, 0
        %v1600 = vsel %vm304, %v1573, 0
        %v1603 = vsel %vm304, %v1574, 0
        %v1606 = vsel %vm304, %v1575, 0
        %v1609 = vsel %vm304, %v1576, 0
        %v1612 = vsel %vm304, %v1577, 0
        %v1615 = vsel %vm304, %v1578, 0
        %v1618 = vsel %vm304, %v1579, 0
        %v1621 = vsel %vm304, %v1580, 0
        %v1624 = vsel %vm304, %v1581, 0
        %v1627 = vsel %vm304, %v1582, 0
        %v1630 = vsel %vm304, %v1583, 0
        %v1633 = vsel %vm304, %v1584, 0
        %v1636 = vsel %vm572, %v1586, 0
        %1638 = vmatprep.subr.bf16.mxu0 0
        %1639 = vmatpush1.bf16.msra.mxu0 %v1636
        %1640 = vmatprep.subr.bf16.mxu0 0
        %1641 = vmatpush1.bf16.msra.mxu0 0
        %1642 = vmatprep.subr.bf16.mxu0 0
        %1643 = vmatpush1.bf16.msra.mxu0 0
        %1644 = vmatprep.subr.bf16.mxu0 0
        %1645 = vmatpush1.bf16.msra.mxu0 0
        %1646 = vmatprep.subr.bf16.mxu0 0
        %1647 = vmatpush1.bf16.msra.mxu0 0
        %1648 = vmatprep.subr.bf16.mxu0 0
        %1649 = vmatpush1.bf16.msra.mxu0 0
        %1650 = vmatprep.subr.bf16.mxu0 0
        %1651 = vmatpush1.bf16.msra.mxu0 0
        %1652 = vmatprep.subr.bf16.mxu0 0
        %1653 = vmatpush1.bf16.msra.mxu0 0
        %1654 = vmatprep.subr.bf16.mxu0 0
        %1655 = vmatpush1.bf16.msra.mxu0 0
        %1656 = vmatprep.subr.bf16.mxu0 0
        %1657 = vmatpush1.bf16.msra.mxu0 0
        %1658 = vmatprep.subr.bf16.mxu0 0
        %1659 = vmatpush1.bf16.msra.mxu0 0
        %1660 = vmatprep.subr.bf16.mxu0 0
        %1661 = vmatpush1.bf16.msra.mxu0 0
        %1662 = vmatprep.subr.bf16.mxu0 0
        %1663 = vmatpush1.bf16.msra.mxu0 0
        %1664 = vmatprep.subr.bf16.mxu0 0
        %1665 = vmatpush1.bf16.msra.mxu0 0
        %1666 = vmatprep.subr.bf16.mxu0 0
        %1667 = vmatpush1.bf16.msra.mxu0 0
        %1668 = vmatprep.subr.bf16.mxu0 0
        %1669 = vmatpush1.bf16.msra.mxu0 0
        %1670 = vmatprep.mubr.bf16.mxu0 0
        %1671 = vmatmul.mubr.bf16.gmra.mrb[0].mxu0 %v1588
        %v1672 = vpop.f32.mrb[0].mxu0
        %v1673 = vadd.f32 0.0, %v1672
        %v1674 = vpop.f32.mrb[0].mxu0
        %v1675 = vpop.f32.mrb[0].mxu0
        %v1676 = vadd.f32 0.0, %v1675
        %v1677 = vpop.f32.mrb[0].mxu0
        %1678 = vmatprep.mubr.bf16.mxu0 0
        %1679 = vmatmul.mubr.bf16.gmra.mrb[0].mxu0 %v1591
        %v1680 = vpop.f32.mrb[0].mxu0
        %v1681 = vadd.f32 0.0, %v1680
        %v1682 = vpop.f32.mrb[0].mxu0
        %v1683 = vpop.f32.mrb[0].mxu0
        %v1684 = vadd.f32 0.0, %v1683
        %v1685 = vpop.f32.mrb[0].mxu0
        %1686 = vmatprep.mubr.bf16.mxu0 0
        %1687 = vmatmul.mubr.bf16.gmra.mrb[0].mxu0 %v1594
        %v1688 = vpop.f32.mrb[0].mxu0
        %v1689 = vadd.f32 0.0, %v1688
        %v1690 = vpop.f32.mrb[0].mxu0
        %v1691 = vpop.f32.mrb[0].mxu0
        %v1692 = vadd.f32 0.0, %v1691
        %v1693 = vpop.f32.mrb[0].mxu0
        %1694 = vmatprep.mubr.bf16.mxu0 0
        %1695 = vmatmul.mubr.bf16.gmra.mrb[0].mxu0 %v1597
        %v1696 = vpop.f32.mrb[0].mxu0
        %v1697 = vadd.f32 0.0, %v1696
        %v1698 = vpop.f32.mrb[0].mxu0
        %v1699 = vpop.f32.mrb[0].mxu0
        %v1700 = vadd.f32 0.0, %v1699
        %v1701 = vpop.f32.mrb[0].mxu0
        %1702 = vmatprep.mubr.bf16.mxu0 0
        %1703 = vmatmul.mubr.bf16.gmra.mrb[0].mxu0 %v1600
        %v1704 = vpop.f32.mrb[0].mxu0
        %v1705 = vadd.f32 0.0, %v1704
        %v1706 = vpop.f32.mrb[0].mxu0
        %v1707 = vpop.f32.mrb[0].mxu0
        %v1708 = vadd.f32 0.0, %v1707
        %v1709 = vpop.f32.mrb[0].mxu0
        %1710 = vmatprep.mubr.bf16.mxu0 0
        %1711 = vmatmul.mubr.bf16.gmra.mrb[0].mxu0 %v1603
        %v1712 = vpop.f32.mrb[0].mxu0
        %v1713 = vadd.f32 0.0, %v1712
        %v1714 = vpop.f32.mrb[0].mxu0
        %v1715 = vpop.f32.mrb[0].mxu0
        %v1716 = vadd.f32 0.0, %v1715
        %v1717 = vpop.f32.mrb[0].mxu0
        %1718 = vmatprep.mubr.bf16.mxu0 0
        %1719 = vmatmul.mubr.bf16.gmra.mrb[0].mxu0 %v1606
        %v1720 = vpop.f32.mrb[0].mxu0
        %v1721 = vadd.f32 0.0, %v1720
        %v1722 = vpop.f32.mrb[0].mxu0
        %v1723 = vpop.f32.mrb[0].mxu0
        %v1724 = vadd.f32 0.0, %v1723
        %v1725 = vpop.f32.mrb[0].mxu0
        %1726 = vmatprep.mubr.bf16.mxu0 0
        %1727 = vmatmul.mubr.bf16.gmra.mrb[0].mxu0 %v1609
        %v1728 = vpop.f32.mrb[0].mxu0
        %v1729 = vadd.f32 0.0, %v1728
        %v1730 = vpop.f32.mrb[0].mxu0
        %v1731 = vpop.f32.mrb[0].mxu0
        %v1732 = vadd.f32 0.0, %v1731
        %v1733 = vpop.f32.mrb[0].mxu0
        %1734 = vmatprep.mubr.bf16.mxu0 0
        %1735 = vmatmul.mubr.bf16.gmra.mrb[0].mxu0 %v1612
        %v1736 = vpop.f32.mrb[0].mxu0
        %v1737 = vadd.f32 0.0, %v1736
        %v1738 = vpop.f32.mrb[0].mxu0
        %v1739 = vpop.f32.mrb[0].mxu0
        %v1740 = vadd.f32 0.0, %v1739
        %v1741 = vpop.f32.mrb[0].mxu0
        %1742 = vmatprep.mubr.bf16.mxu0 0
        %1743 = vmatmul.mubr.bf16.gmra.mrb[0].mxu0 %v1615
        %v1744 = vpop.f32.mrb[0].mxu0
        %v1745 = vadd.f32 0.0, %v1744
        %v1746 = vpop.f32.mrb[0].mxu0
        %v1747 = vpop.f32.mrb[0].mxu0
        %v1748 = vadd.f32 0.0, %v1747
        %v1749 = vpop.f32.mrb[0].mxu0
        %1750 = vmatprep.mubr.bf16.mxu0 0
        %1751 = vmatmul.mubr.bf16.gmra.mrb[0].mxu0 %v1618
        %v1752 = vpop.f32.mrb[0].mxu0
        %v1753 = vadd.f32 0.0, %v1752
        %v1754 = vpop.f32.mrb[0].mxu0
        %v1755 = vpop.f32.mrb[0].mxu0
        %v1756 = vadd.f32 0.0, %v1755
        %v1757 = vpop.f32.mrb[0].mxu0
        %1758 = vmatprep.mubr.bf16.mxu0 0
        %1759 = vmatmul.mubr.bf16.gmra.mrb[0].mxu0 %v1621
        %v1760 = vpop.f32.mrb[0].mxu0
        %v1761 = vadd.f32 0.0, %v1760
        %v1762 = vpop.f32.mrb[0].mxu0
        %v1763 = vpop.f32.mrb[0].mxu0
        %v1764 = vadd.f32 0.0, %v1763
        %v1765 = vpop.f32.mrb[0].mxu0
        %1766 = vmatprep.mubr.bf16.mxu0 0
        %1767 = vmatmul.mubr.bf16.gmra.mrb[0].mxu0 %v1624
        %v1768 = vpop.f32.mrb[0].mxu0
        %v1769 = vadd.f32 0.0, %v1768
        %v1770 = vpop.f32.mrb[0].mxu0
        %v1771 = vpop.f32.mrb[0].mxu0
        %v1772 = vadd.f32 0.0, %v1771
        %v1773 = vpop.f32.mrb[0].mxu0
        %1774 = vmatprep.mubr.bf16.mxu0 0
        %1775 = vmatmul.mubr.bf16.gmra.mrb[0].mxu0 %v1627
        %v1776 = vpop.f32.mrb[0].mxu0
        %v1777 = vadd.f32 0.0, %v1776
        %v1778 = vpop.f32.mrb[0].mxu0
        %v1779 = vpop.f32.mrb[0].mxu0
        %v1780 = vadd.f32 0.0, %v1779
        %v1781 = vpop.f32.mrb[0].mxu0
        %1782 = vmatprep.mubr.bf16.mxu0 0
        %1783 = vmatmul.mubr.bf16.gmra.mrb[0].mxu0 %v1630
        %v1784 = vpop.f32.mrb[0].mxu0
        %v1785 = vadd.f32 0.0, %v1784
        %v1786 = vpop.f32.mrb[0].mxu0
        %v1787 = vpop.f32.mrb[0].mxu0
        %v1788 = vadd.f32 0.0, %v1787
        %v1789 = vpop.f32.mrb[0].mxu0
        %1790 = vmatprep.mubr.bf16.mxu0 0
        %1791 = vmatmul.mubr.bf16.gmra.mrb[0].mxu0 %v1633
        %v1792 = vpop.f32.mrb[0].mxu0
        %v1793 = vadd.f32 0.0, %v1792
        %v1794 = vpop.f32.mrb[0].mxu0
        %v1795 = vpop.f32.mrb[0].mxu0
        %v1796 = vadd.f32 0.0, %v1795
        %v1797 = vpop.f32.mrb[0].mxu0
        %1798 = vdwg.mxu0
        %v1799 = vadd.f32 %v1505, %v1673
        %v1800 = vadd.f32 %v1506, %v1676
        %v1801 = vadd.f32 %v1507, %v1681
        %v1802 = vadd.f32 %v1508, %v1684
        %v1803 = vadd.f32 %v1509, %v1689
        %v1804 = vadd.f32 %v1510, %v1692
        %v1805 = vadd.f32 %v1511, %v1697
        %v1806 = vadd.f32 %v1512, %v1700
        %v1807 = vadd.f32 %v1513, %v1705
        %v1808 = vadd.f32 %v1514, %v1708
        %v1809 = vadd.f32 %v1515, %v1713
        %v1810 = vadd.f32 %v1516, %v1716
        %v1811 = vadd.f32 %v1517, %v1721
        %v1812 = vadd.f32 %v1518, %v1724
        %v1813 = vadd.f32 %v1519, %v1729
        %v1814 = vadd.f32 %v1520, %v1732
        %v1815 = vadd.f32 %v1521, %v1737
        %v1816 = vadd.f32 %v1522, %v1740
        %v1817 = vadd.f32 %v1523, %v1745
        %v1818 = vadd.f32 %v1524, %v1748
        %v1819 = vadd.f32 %v1525, %v1753
        %v1820 = vadd.f32 %v1526, %v1756
        %v1821 = vadd.f32 %v1527, %v1761
        %v1822 = vadd.f32 %v1528, %v1764
        %v1823 = vadd.f32 %v1529, %v1769
        %v1824 = vadd.f32 %v1530, %v1772
        %v1825 = vadd.f32 %v1531, %v1777
        %v1826 = vadd.f32 %v1532, %v1780
        %v1827 = vadd.f32 %v1533, %v1785
        %v1828 = vadd.f32 %v1534, %v1788
        %v1829 = vadd.f32 %v1535, %v1793
        %v1830 = vadd.f32 %v1536, %v1796
        %v1831 = vld [vmem:[%s392 + $0x2] sm:$0xff]
        %v1832 = vld [vmem:[%s392 + $0xa] sm:$0xff]
        %v1833 = vld [vmem:[%s392 + $0x1a] sm:$0xff]
        %v1834 = vld [vmem:[%s392 + $0x22] sm:$0xff]
        %v1835 = vld [vmem:[%s392 + $0x32] sm:$0xff]
        %v1836 = vld [vmem:[%s392 + $0x3a] sm:$0xff]
        %v1837 = vld [vmem:[%s392 + $0x4a] sm:$0xff]
        %v1838 = vld [vmem:[%s392 + $0x52] sm:$0xff]
        %v1839 = vld [vmem:[%s392 + $0x62] sm:$0xff]
        %v1840 = vld [vmem:[%s392 + $0x6a] sm:$0xff]
        %v1841 = vld [vmem:[%s392 + $0x7a] sm:$0xff]
        %v1842 = vld [vmem:[%s392 + $0x82] sm:$0xff]
        %v1843 = vld [vmem:[%s392 + $0x92] sm:$0xff]
        %v1844 = vld [vmem:[%s392 + $0x9a] sm:$0xff]
        %v1845 = vld [vmem:[%s392 + $0xaa] sm:$0xff]
        %v1846 = vld [vmem:[%s392 + $0xb2] sm:$0xff]
        %v1847 = vld [vmem:[%s392 + $0xc2] sm:$0xff]
        %v1848 = vld [vmem:[%s392 + $0xca] sm:$0xff]
        %v1849 = vld [vmem:[%s392 + $0xda] sm:$0xff]
        %v1850 = vld [vmem:[%s392 + $0xe2] sm:$0xff]
        %v1851 = vld [vmem:[%s392 + $0xf2] sm:$0xff]
        %v1852 = vld [vmem:[%s392 + $0xfa] sm:$0xff]
        %v1853 = vld [vmem:[%s392 + $0x10a] sm:$0xff]
        %v1854 = vld [vmem:[%s392 + $0x112] sm:$0xff]
        %v1855 = vld [vmem:[%s392 + $0x122] sm:$0xff]
        %v1856 = vld [vmem:[%s392 + $0x12a] sm:$0xff]
        %v1857 = vld [vmem:[%s392 + $0x13a] sm:$0xff]
        %v1858 = vld [vmem:[%s392 + $0x142] sm:$0xff]
        %v1859 = vld [vmem:[%s392 + $0x152] sm:$0xff]
        %v1860 = vld [vmem:[%s392 + $0x15a] sm:$0xff]
        %v1861 = vld [vmem:[%s392 + $0x16a] sm:$0xff]
        %v1862 = vld [vmem:[%s392 + $0x172] sm:$0xff]
        %v1863 = vpack.c.bf16 %v1832, %v1831
        %v1864 = vpack.c.bf16 %v1834, %v1833
        %v1865 = vpack.c.bf16 %v1836, %v1835
        %v1866 = vpack.c.bf16 %v1838, %v1837
        %v1867 = vpack.c.bf16 %v1840, %v1839
        %v1868 = vpack.c.bf16 %v1842, %v1841
        %v1869 = vpack.c.bf16 %v1844, %v1843
        %v1870 = vpack.c.bf16 %v1846, %v1845
        %v1871 = vpack.c.bf16 %v1848, %v1847
        %v1872 = vpack.c.bf16 %v1850, %v1849
        %v1873 = vpack.c.bf16 %v1852, %v1851
        %v1874 = vpack.c.bf16 %v1854, %v1853
        %v1875 = vpack.c.bf16 %v1856, %v1855
        %v1876 = vpack.c.bf16 %v1858, %v1857
        %v1877 = vpack.c.bf16 %v1860, %v1859
        %v1878 = vpack.c.bf16 %v1862, %v1861
        %s1879 = scalar_lea.vmem %s1, 10
        %v1880 = vld [vmem:[%s1879] sm:$0x3]
        %v1882 = vsel %vm304, %v1863, 0
        %v1885 = vsel %vm304, %v1864, 0
        %v1888 = vsel %vm304, %v1865, 0
        %v1891 = vsel %vm304, %v1866, 0
        %v1894 = vsel %vm304, %v1867, 0
        %v1897 = vsel %vm304, %v1868, 0
        %v1900 = vsel %vm304, %v1869, 0
        %v1903 = vsel %vm304, %v1870, 0
        %v1906 = vsel %vm304, %v1871, 0
        %v1909 = vsel %vm304, %v1872, 0
        %v1912 = vsel %vm304, %v1873, 0
        %v1915 = vsel %vm304, %v1874, 0
        %v1918 = vsel %vm304, %v1875, 0
        %v1921 = vsel %vm304, %v1876, 0
        %v1924 = vsel %vm304, %v1877, 0
        %v1927 = vsel %vm304, %v1878, 0
        %v1930 = vsel %vm572, %v1880, 0
        %1932 = vmatprep.subr.bf16.mxu0 0
        %1933 = vmatpush1.bf16.msra.mxu0 %v1930
        %1934 = vmatprep.subr.bf16.mxu0 0
        %1935 = vmatpush1.bf16.msra.mxu0 0
        %1936 = vmatprep.subr.bf16.mxu0 0
        %1937 = vmatpush1.bf16.msra.mxu0 0
        %1938 = vmatprep.subr.bf16.mxu0 0
        %1939 = vmatpush1.bf16.msra.mxu0 0
        %1940 = vmatprep.subr.bf16.mxu0 0
        %1941 = vmatpush1.bf16.msra.mxu0 0
        %1942 = vmatprep.subr.bf16.mxu0 0
        %1943 = vmatpush1.bf16.msra.mxu0 0
        %1944 = vmatprep.subr.bf16.mxu0 0
        %1945 = vmatpush1.bf16.msra.mxu0 0
        %1946 = vmatprep.subr.bf16.mxu0 0
        %1947 = vmatpush1.bf16.msra.mxu0 0
        %1948 = vmatprep.subr.bf16.mxu0 0
        %1949 = vmatpush1.bf16.msra.mxu0 0
        %1950 = vmatprep.subr.bf16.mxu0 0
        %1951 = vmatpush1.bf16.msra.mxu0 0
        %1952 = vmatprep.subr.bf16.mxu0 0
        %1953 = vmatpush1.bf16.msra.mxu0 0
        %1954 = vmatprep.subr.bf16.mxu0 0
        %1955 = vmatpush1.bf16.msra.mxu0 0
        %1956 = vmatprep.subr.bf16.mxu0 0
        %1957 = vmatpush1.bf16.msra.mxu0 0
        %1958 = vmatprep.subr.bf16.mxu0 0
        %1959 = vmatpush1.bf16.msra.mxu0 0
        %1960 = vmatprep.subr.bf16.mxu0 0
        %1961 = vmatpush1.bf16.msra.mxu0 0
        %1962 = vmatprep.subr.bf16.mxu0 0
        %1963 = vmatpush1.bf16.msra.mxu0 0
        %1964 = vmatprep.mubr.bf16.mxu0 0
        %1965 = vmatmul.mubr.bf16.gmra.mrb[0].mxu0 %v1882
        %v1966 = vpop.f32.mrb[0].mxu0
        %v1967 = vadd.f32 0.0, %v1966
        %v1968 = vpop.f32.mrb[0].mxu0
        %v1969 = vpop.f32.mrb[0].mxu0
        %v1970 = vadd.f32 0.0, %v1969
        %v1971 = vpop.f32.mrb[0].mxu0
        %1972 = vmatprep.mubr.bf16.mxu0 0
        %1973 = vmatmul.mubr.bf16.gmra.mrb[0].mxu0 %v1885
        %v1974 = vpop.f32.mrb[0].mxu0
        %v1975 = vadd.f32 0.0, %v1974
        %v1976 = vpop.f32.mrb[0].mxu0
        %v1977 = vpop.f32.mrb[0].mxu0
        %v1978 = vadd.f32 0.0, %v1977
        %v1979 = vpop.f32.mrb[0].mxu0
        %1980 = vmatprep.mubr.bf16.mxu0 0
        %1981 = vmatmul.mubr.bf16.gmra.mrb[0].mxu0 %v1888
        %v1982 = vpop.f32.mrb[0].mxu0
        %v1983 = vadd.f32 0.0, %v1982
        %v1984 = vpop.f32.mrb[0].mxu0
        %v1985 = vpop.f32.mrb[0].mxu0
        %v1986 = vadd.f32 0.0, %v1985
        %v1987 = vpop.f32.mrb[0].mxu0
        %1988 = vmatprep.mubr.bf16.mxu0 0
        %1989 = vmatmul.mubr.bf16.gmra.mrb[0].mxu0 %v1891
        %v1990 = vpop.f32.mrb[0].mxu0
        %v1991 = vadd.f32 0.0, %v1990
        %v1992 = vpop.f32.mrb[0].mxu0
        %v1993 = vpop.f32.mrb[0].mxu0
        %v1994 = vadd.f32 0.0, %v1993
        %v1995 = vpop.f32.mrb[0].mxu0
        %1996 = vmatprep.mubr.bf16.mxu0 0
        %1997 = vmatmul.mubr.bf16.gmra.mrb[0].mxu0 %v1894
        %v1998 = vpop.f32.mrb[0].mxu0
        %v1999 = vadd.f32 0.0, %v1998
        %v2000 = vpop.f32.mrb[0].mxu0
        %v2001 = vpop.f32.mrb[0].mxu0
        %v2002 = vadd.f32 0.0, %v2001
        %v2003 = vpop.f32.mrb[0].mxu0
        %2004 = vmatprep.mubr.bf16.mxu0 0
        %2005 = vmatmul.mubr.bf16.gmra.mrb[0].mxu0 %v1897
        %v2006 = vpop.f32.mrb[0].mxu0
        %v2007 = vadd.f32 0.0, %v2006
        %v2008 = vpop.f32.mrb[0].mxu0
        %v2009 = vpop.f32.mrb[0].mxu0
        %v2010 = vadd.f32 0.0, %v2009
        %v2011 = vpop.f32.mrb[0].mxu0
        %2012 = vmatprep.mubr.bf16.mxu0 0
        %2013 = vmatmul.mubr.bf16.gmra.mrb[0].mxu0 %v1900
        %v2014 = vpop.f32.mrb[0].mxu0
        %v2015 = vadd.f32 0.0, %v2014
        %v2016 = vpop.f32.mrb[0].mxu0
        %v2017 = vpop.f32.mrb[0].mxu0
        %v2018 = vadd.f32 0.0, %v2017
        %v2019 = vpop.f32.mrb[0].mxu0
        %2020 = vmatprep.mubr.bf16.mxu0 0
        %2021 = vmatmul.mubr.bf16.gmra.mrb[0].mxu0 %v1903
        %v2022 = vpop.f32.mrb[0].mxu0
        %v2023 = vadd.f32 0.0, %v2022
        %v2024 = vpop.f32.mrb[0].mxu0
        %v2025 = vpop.f32.mrb[0].mxu0
        %v2026 = vadd.f32 0.0, %v2025
        %v2027 = vpop.f32.mrb[0].mxu0
        %2028 = vmatprep.mubr.bf16.mxu0 0
        %2029 = vmatmul.mubr.bf16.gmra.mrb[0].mxu0 %v1906
        %v2030 = vpop.f32.mrb[0].mxu0
        %v2031 = vadd.f32 0.0, %v2030
        %v2032 = vpop.f32.mrb[0].mxu0
        %v2033 = vpop.f32.mrb[0].mxu0
        %v2034 = vadd.f32 0.0, %v2033
        %v2035 = vpop.f32.mrb[0].mxu0
        %2036 = vmatprep.mubr.bf16.mxu0 0
        %2037 = vmatmul.mubr.bf16.gmra.mrb[0].mxu0 %v1909
        %v2038 = vpop.f32.mrb[0].mxu0
        %v2039 = vadd.f32 0.0, %v2038
        %v2040 = vpop.f32.mrb[0].mxu0
        %v2041 = vpop.f32.mrb[0].mxu0
        %v2042 = vadd.f32 0.0, %v2041
        %v2043 = vpop.f32.mrb[0].mxu0
        %2044 = vmatprep.mubr.bf16.mxu0 0
        %2045 = vmatmul.mubr.bf16.gmra.mrb[0].mxu0 %v1912
        %v2046 = vpop.f32.mrb[0].mxu0
        %v2047 = vadd.f32 0.0, %v2046
        %v2048 = vpop.f32.mrb[0].mxu0
        %v2049 = vpop.f32.mrb[0].mxu0
        %v2050 = vadd.f32 0.0, %v2049
        %v2051 = vpop.f32.mrb[0].mxu0
        %2052 = vmatprep.mubr.bf16.mxu0 0
        %2053 = vmatmul.mubr.bf16.gmra.mrb[0].mxu0 %v1915
        %v2054 = vpop.f32.mrb[0].mxu0
        %v2055 = vadd.f32 0.0, %v2054
        %v2056 = vpop.f32.mrb[0].mxu0
        %v2057 = vpop.f32.mrb[0].mxu0
        %v2058 = vadd.f32 0.0, %v2057
        %v2059 = vpop.f32.mrb[0].mxu0
        %2060 = vmatprep.mubr.bf16.mxu0 0
        %2061 = vmatmul.mubr.bf16.gmra.mrb[0].mxu0 %v1918
        %v2062 = vpop.f32.mrb[0].mxu0
        %v2063 = vadd.f32 0.0, %v2062
        %v2064 = vpop.f32.mrb[0].mxu0
        %v2065 = vpop.f32.mrb[0].mxu0
        %v2066 = vadd.f32 0.0, %v2065
        %v2067 = vpop.f32.mrb[0].mxu0
        %2068 = vmatprep.mubr.bf16.mxu0 0
        %2069 = vmatmul.mubr.bf16.gmra.mrb[0].mxu0 %v1921
        %v2070 = vpop.f32.mrb[0].mxu0
        %v2071 = vadd.f32 0.0, %v2070
        %v2072 = vpop.f32.mrb[0].mxu0
        %v2073 = vpop.f32.mrb[0].mxu0
        %v2074 = vadd.f32 0.0, %v2073
        %v2075 = vpop.f32.mrb[0].mxu0
        %2076 = vmatprep.mubr.bf16.mxu0 0
        %2077 = vmatmul.mubr.bf16.gmra.mrb[0].mxu0 %v1924
        %v2078 = vpop.f32.mrb[0].mxu0
        %v2079 = vadd.f32 0.0, %v2078
        %v2080 = vpop.f32.mrb[0].mxu0
        %v2081 = vpop.f32.mrb[0].mxu0
        %v2082 = vadd.f32 0.0, %v2081
        %v2083 = vpop.f32.mrb[0].mxu0
        %2084 = vmatprep.mubr.bf16.mxu0 0
        %2085 = vmatmul.mubr.bf16.gmra.mrb[0].mxu0 %v1927
        %v2086 = vpop.f32.mrb[0].mxu0
        %v2087 = vadd.f32 0.0, %v2086
        %v2088 = vpop.f32.mrb[0].mxu0
        %v2089 = vpop.f32.mrb[0].mxu0
        %v2090 = vadd.f32 0.0, %v2089
        %v2091 = vpop.f32.mrb[0].mxu0
        %2092 = vdwg.mxu0
        %v2093 = vadd.f32 %v1799, %v1967
        %v2094 = vadd.f32 %v1800, %v1970
        %v2095 = vadd.f32 %v1801, %v1975
        %v2096 = vadd.f32 %v1802, %v1978
        %v2097 = vadd.f32 %v1803, %v1983
        %v2098 = vadd.f32 %v1804, %v1986
        %v2099 = vadd.f32 %v1805, %v1991
        %v2100 = vadd.f32 %v1806, %v1994
        %v2101 = vadd.f32 %v1807, %v1999
        %v2102 = vadd.f32 %v1808, %v2002
        %v2103 = vadd.f32 %v1809, %v2007
        %v2104 = vadd.f32 %v1810, %v2010
        %v2105 = vadd.f32 %v1811, %v2015
        %v2106 = vadd.f32 %v1812, %v2018
        %v2107 = vadd.f32 %v1813, %v2023
        %v2108 = vadd.f32 %v1814, %v2026
        %v2109 = vadd.f32 %v1815, %v2031
        %v2110 = vadd.f32 %v1816, %v2034
        %v2111 = vadd.f32 %v1817, %v2039
        %v2112 = vadd.f32 %v1818, %v2042
        %v2113 = vadd.f32 %v1819, %v2047
        %v2114 = vadd.f32 %v1820, %v2050
        %v2115 = vadd.f32 %v1821, %v2055
        %v2116 = vadd.f32 %v1822, %v2058
        %v2117 = vadd.f32 %v1823, %v2063
        %v2118 = vadd.f32 %v1824, %v2066
        %v2119 = vadd.f32 %v1825, %v2071
        %v2120 = vadd.f32 %v1826, %v2074
        %v2121 = vadd.f32 %v1827, %v2079
        %v2122 = vadd.f32 %v1828, %v2082
        %v2123 = vadd.f32 %v1829, %v2087
        %v2124 = vadd.f32 %v1830, %v2090
        %s2125 = scalar_lea.vmem [#allocation2], 48
        %v2126 = vld [vmem:[%s2125] sm:$0xff]
        %v2127 = vld [vmem:[%s2125 + $0x8] sm:$0xff]
        %v2128 = vld [vmem:[%s2125 + $0x18] sm:$0xff]
        %v2129 = vld [vmem:[%s2125 + $0x20] sm:$0xff]
        %v2130 = vld [vmem:[%s2125 + $0x30] sm:$0xff]
        %v2131 = vld [vmem:[%s2125 + $0x38] sm:$0xff]
        %v2132 = vld [vmem:[%s2125 + $0x48] sm:$0xff]
        %v2133 = vld [vmem:[%s2125 + $0x50] sm:$0xff]
        %v2134 = vld [vmem:[%s2125 + $0x60] sm:$0xff]
        %v2135 = vld [vmem:[%s2125 + $0x68] sm:$0xff]
        %v2136 = vld [vmem:[%s2125 + $0x78] sm:$0xff]
        %v2137 = vld [vmem:[%s2125 + $0x80] sm:$0xff]
        %v2138 = vld [vmem:[%s2125 + $0x90] sm:$0xff]
        %v2139 = vld [vmem:[%s2125 + $0x98] sm:$0xff]
        %v2140 = vld [vmem:[%s2125 + $0xa8] sm:$0xff]
        %v2141 = vld [vmem:[%s2125 + $0xb0] sm:$0xff]
        %v2142 = vld [vmem:[%s2125 + $0xc0] sm:$0xff]
        %v2143 = vld [vmem:[%s2125 + $0xc8] sm:$0xff]
        %v2144 = vld [vmem:[%s2125 + $0xd8] sm:$0xff]
        %v2145 = vld [vmem:[%s2125 + $0xe0] sm:$0xff]
        %v2146 = vld [vmem:[%s2125 + $0xf0] sm:$0xff]
        %v2147 = vld [vmem:[%s2125 + $0xf8] sm:$0xff]
        %v2148 = vld [vmem:[%s2125 + $0x108] sm:$0xff]
        %v2149 = vld [vmem:[%s2125 + $0x110] sm:$0xff]
        %v2150 = vld [vmem:[%s2125 + $0x120] sm:$0xff]
        %v2151 = vld [vmem:[%s2125 + $0x128] sm:$0xff]
        %v2152 = vld [vmem:[%s2125 + $0x138] sm:$0xff]
        %v2153 = vld [vmem:[%s2125 + $0x140] sm:$0xff]
        %v2154 = vld [vmem:[%s2125 + $0x150] sm:$0xff]
        %v2155 = vld [vmem:[%s2125 + $0x158] sm:$0xff]
        %v2156 = vld [vmem:[%s2125 + $0x168] sm:$0xff]
        %v2157 = vld [vmem:[%s2125 + $0x170] sm:$0xff]
        %v2158 = vpack.c.bf16 %v2127, %v2126
        %v2159 = vpack.c.bf16 %v2129, %v2128
        %v2160 = vpack.c.bf16 %v2131, %v2130
        %v2161 = vpack.c.bf16 %v2133, %v2132
        %v2162 = vpack.c.bf16 %v2135, %v2134
        %v2163 = vpack.c.bf16 %v2137, %v2136
        %v2164 = vpack.c.bf16 %v2139, %v2138
        %v2165 = vpack.c.bf16 %v2141, %v2140
        %v2166 = vpack.c.bf16 %v2143, %v2142
        %v2167 = vpack.c.bf16 %v2145, %v2144
        %v2168 = vpack.c.bf16 %v2147, %v2146
        %v2169 = vpack.c.bf16 %v2149, %v2148
        %v2170 = vpack.c.bf16 %v2151, %v2150
        %v2171 = vpack.c.bf16 %v2153, %v2152
        %v2172 = vpack.c.bf16 %v2155, %v2154
        %v2173 = vpack.c.bf16 %v2157, %v2156
        %s2174 = scalar_lea.vmem %s1, 12
        %v2175 = vld [vmem:[%s2174] sm:$0x3]
        %v2177 = vsel %vm304, %v2158, 0
        %v2180 = vsel %vm304, %v2159, 0
        %v2183 = vsel %vm304, %v2160, 0
        %v2186 = vsel %vm304, %v2161, 0
        %v2189 = vsel %vm304, %v2162, 0
        %v2192 = vsel %vm304, %v2163, 0
        %v2195 = vsel %vm304, %v2164, 0
        %v2198 = vsel %vm304, %v2165, 0
        %v2201 = vsel %vm304, %v2166, 0
        %v2204 = vsel %vm304, %v2167, 0
        %v2207 = vsel %vm304, %v2168, 0
        %v2210 = vsel %vm304, %v2169, 0
        %v2213 = vsel %vm304, %v2170, 0
        %v2216 = vsel %vm304, %v2171, 0
        %v2219 = vsel %vm304, %v2172, 0
        %v2222 = vsel %vm304, %v2173, 0
        %v2225 = vsel %vm572, %v2175, 0
        %2227 = vmatprep.subr.bf16.mxu0 0
        %2228 = vmatpush1.bf16.msra.mxu0 %v2225
        %2229 = vmatprep.subr.bf16.mxu0 0
        %2230 = vmatpush1.bf16.msra.mxu0 0
        %2231 = vmatprep.subr.bf16.mxu0 0
        %2232 = vmatpush1.bf16.msra.mxu0 0
        %2233 = vmatprep.subr.bf16.mxu0 0
        %2234 = vmatpush1.bf16.msra.mxu0 0
        %2235 = vmatprep.subr.bf16.mxu0 0
        %2236 = vmatpush1.bf16.msra.mxu0 0
        %2237 = vmatprep.subr.bf16.mxu0 0
        %2238 = vmatpush1.bf16.msra.mxu0 0
        %2239 = vmatprep.subr.bf16.mxu0 0
        %2240 = vmatpush1.bf16.msra.mxu0 0
        %2241 = vmatprep.subr.bf16.mxu0 0
        %2242 = vmatpush1.bf16.msra.mxu0 0
        %2243 = vmatprep.subr.bf16.mxu0 0
        %2244 = vmatpush1.bf16.msra.mxu0 0
        %2245 = vmatprep.subr.bf16.mxu0 0
        %2246 = vmatpush1.bf16.msra.mxu0 0
        %2247 = vmatprep.subr.bf16.mxu0 0
        %2248 = vmatpush1.bf16.msra.mxu0 0
        %2249 = vmatprep.subr.bf16.mxu0 0
        %2250 = vmatpush1.bf16.msra.mxu0 0
        %2251 = vmatprep.subr.bf16.mxu0 0
        %2252 = vmatpush1.bf16.msra.mxu0 0
        %2253 = vmatprep.subr.bf16.mxu0 0
        %2254 = vmatpush1.bf16.msra.mxu0 0
        %2255 = vmatprep.subr.bf16.mxu0 0
        %2256 = vmatpush1.bf16.msra.mxu0 0
        %2257 = vmatprep.subr.bf16.mxu0 0
        %2258 = vmatpush1.bf16.msra.mxu0 0
        %2259 = vmatprep.mubr.bf16.mxu0 0
        %2260 = vmatmul.mubr.bf16.gmra.mrb[0].mxu0 %v2177
        %v2261 = vpop.f32.mrb[0].mxu0
        %v2262 = vadd.f32 0.0, %v2261
        %v2263 = vpop.f32.mrb[0].mxu0
        %v2264 = vpop.f32.mrb[0].mxu0
        %v2265 = vadd.f32 0.0, %v2264
        %v2266 = vpop.f32.mrb[0].mxu0
        %2267 = vmatprep.mubr.bf16.mxu0 0
        %2268 = vmatmul.mubr.bf16.gmra.mrb[0].mxu0 %v2180
        %v2269 = vpop.f32.mrb[0].mxu0
        %v2270 = vadd.f32 0.0, %v2269
        %v2271 = vpop.f32.mrb[0].mxu0
        %v2272 = vpop.f32.mrb[0].mxu0
        %v2273 = vadd.f32 0.0, %v2272
        %v2274 = vpop.f32.mrb[0].mxu0
        %2275 = vmatprep.mubr.bf16.mxu0 0
        %2276 = vmatmul.mubr.bf16.gmra.mrb[0].mxu0 %v2183
        %v2277 = vpop.f32.mrb[0].mxu0
        %v2278 = vadd.f32 0.0, %v2277
        %v2279 = vpop.f32.mrb[0].mxu0
        %v2280 = vpop.f32.mrb[0].mxu0
        %v2281 = vadd.f32 0.0, %v2280
        %v2282 = vpop.f32.mrb[0].mxu0
        %2283 = vmatprep.mubr.bf16.mxu0 0
        %2284 = vmatmul.mubr.bf16.gmra.mrb[0].mxu0 %v2186
        %v2285 = vpop.f32.mrb[0].mxu0
        %v2286 = vadd.f32 0.0, %v2285
        %v2287 = vpop.f32.mrb[0].mxu0
        %v2288 = vpop.f32.mrb[0].mxu0
        %v2289 = vadd.f32 0.0, %v2288
        %v2290 = vpop.f32.mrb[0].mxu0
        %2291 = vmatprep.mubr.bf16.mxu0 0
        %2292 = vmatmul.mubr.bf16.gmra.mrb[0].mxu0 %v2189
        %v2293 = vpop.f32.mrb[0].mxu0
        %v2294 = vadd.f32 0.0, %v2293
        %v2295 = vpop.f32.mrb[0].mxu0
        %v2296 = vpop.f32.mrb[0].mxu0
        %v2297 = vadd.f32 0.0, %v2296
        %v2298 = vpop.f32.mrb[0].mxu0
        %2299 = vmatprep.mubr.bf16.mxu0 0
        %2300 = vmatmul.mubr.bf16.gmra.mrb[0].mxu0 %v2192
        %v2301 = vpop.f32.mrb[0].mxu0
        %v2302 = vadd.f32 0.0, %v2301
        %v2303 = vpop.f32.mrb[0].mxu0
        %v2304 = vpop.f32.mrb[0].mxu0
        %v2305 = vadd.f32 0.0, %v2304
        %v2306 = vpop.f32.mrb[0].mxu0
        %2307 = vmatprep.mubr.bf16.mxu0 0
        %2308 = vmatmul.mubr.bf16.gmra.mrb[0].mxu0 %v2195
        %v2309 = vpop.f32.mrb[0].mxu0
        %v2310 = vadd.f32 0.0, %v2309
        %v2311 = vpop.f32.mrb[0].mxu0
        %v2312 = vpop.f32.mrb[0].mxu0
        %v2313 = vadd.f32 0.0, %v2312
        %v2314 = vpop.f32.mrb[0].mxu0
        %2315 = vmatprep.mubr.bf16.mxu0 0
        %2316 = vmatmul.mubr.bf16.gmra.mrb[0].mxu0 %v2198
        %v2317 = vpop.f32.mrb[0].mxu0
        %v2318 = vadd.f32 0.0, %v2317
        %v2319 = vpop.f32.mrb[0].mxu0
        %v2320 = vpop.f32.mrb[0].mxu0
        %v2321 = vadd.f32 0.0, %v2320
        %v2322 = vpop.f32.mrb[0].mxu0
        %2323 = vmatprep.mubr.bf16.mxu0 0
        %2324 = vmatmul.mubr.bf16.gmra.mrb[0].mxu0 %v2201
        %v2325 = vpop.f32.mrb[0].mxu0
        %v2326 = vadd.f32 0.0, %v2325
        %v2327 = vpop.f32.mrb[0].mxu0
        %v2328 = vpop.f32.mrb[0].mxu0
        %v2329 = vadd.f32 0.0, %v2328
        %v2330 = vpop.f32.mrb[0].mxu0
        %2331 = vmatprep.mubr.bf16.mxu0 0
        %2332 = vmatmul.mubr.bf16.gmra.mrb[0].mxu0 %v2204
        %v2333 = vpop.f32.mrb[0].mxu0
        %v2334 = vadd.f32 0.0, %v2333
        %v2335 = vpop.f32.mrb[0].mxu0
        %v2336 = vpop.f32.mrb[0].mxu0
        %v2337 = vadd.f32 0.0, %v2336
        %v2338 = vpop.f32.mrb[0].mxu0
        %2339 = vmatprep.mubr.bf16.mxu0 0
        %2340 = vmatmul.mubr.bf16.gmra.mrb[0].mxu0 %v2207
        %v2341 = vpop.f32.mrb[0].mxu0
        %v2342 = vadd.f32 0.0, %v2341
        %v2343 = vpop.f32.mrb[0].mxu0
        %v2344 = vpop.f32.mrb[0].mxu0
        %v2345 = vadd.f32 0.0, %v2344
        %v2346 = vpop.f32.mrb[0].mxu0
        %2347 = vmatprep.mubr.bf16.mxu0 0
        %2348 = vmatmul.mubr.bf16.gmra.mrb[0].mxu0 %v2210
        %v2349 = vpop.f32.mrb[0].mxu0
        %v2350 = vadd.f32 0.0, %v2349
        %v2351 = vpop.f32.mrb[0].mxu0
        %v2352 = vpop.f32.mrb[0].mxu0
        %v2353 = vadd.f32 0.0, %v2352
        %v2354 = vpop.f32.mrb[0].mxu0
        %2355 = vmatprep.mubr.bf16.mxu0 0
        %2356 = vmatmul.mubr.bf16.gmra.mrb[0].mxu0 %v2213
        %v2357 = vpop.f32.mrb[0].mxu0
        %v2358 = vadd.f32 0.0, %v2357
        %v2359 = vpop.f32.mrb[0].mxu0
        %v2360 = vpop.f32.mrb[0].mxu0
        %v2361 = vadd.f32 0.0, %v2360
        %v2362 = vpop.f32.mrb[0].mxu0
        %2363 = vmatprep.mubr.bf16.mxu0 0
        %2364 = vmatmul.mubr.bf16.gmra.mrb[0].mxu0 %v2216
        %v2365 = vpop.f32.mrb[0].mxu0
        %v2366 = vadd.f32 0.0, %v2365
        %v2367 = vpop.f32.mrb[0].mxu0
        %v2368 = vpop.f32.mrb[0].mxu0
        %v2369 = vadd.f32 0.0, %v2368
        %v2370 = vpop.f32.mrb[0].mxu0
        %2371 = vmatprep.mubr.bf16.mxu0 0
        %2372 = vmatmul.mubr.bf16.gmra.mrb[0].mxu0 %v2219
        %v2373 = vpop.f32.mrb[0].mxu0
        %v2374 = vadd.f32 0.0, %v2373
        %v2375 = vpop.f32.mrb[0].mxu0
        %v2376 = vpop.f32.mrb[0].mxu0
        %v2377 = vadd.f32 0.0, %v2376
        %v2378 = vpop.f32.mrb[0].mxu0
        %2379 = vmatprep.mubr.bf16.mxu0 0
        %2380 = vmatmul.mubr.bf16.gmra.mrb[0].mxu0 %v2222
        %v2381 = vpop.f32.mrb[0].mxu0
        %v2382 = vadd.f32 0.0, %v2381
        %v2383 = vpop.f32.mrb[0].mxu0
        %v2384 = vpop.f32.mrb[0].mxu0
        %v2385 = vadd.f32 0.0, %v2384
        %v2386 = vpop.f32.mrb[0].mxu0
        %2387 = vdwg.mxu0
        %v2388 = vadd.f32 %v2093, %v2262
        %v2389 = vadd.f32 %v2094, %v2265
        %v2390 = vadd.f32 %v2095, %v2270
        %v2391 = vadd.f32 %v2096, %v2273
        %v2392 = vadd.f32 %v2097, %v2278
        %v2393 = vadd.f32 %v2098, %v2281
        %v2394 = vadd.f32 %v2099, %v2286
        %v2395 = vadd.f32 %v2100, %v2289
        %v2396 = vadd.f32 %v2101, %v2294
        %v2397 = vadd.f32 %v2102, %v2297
        %v2398 = vadd.f32 %v2103, %v2302
        %v2399 = vadd.f32 %v2104, %v2305
        %v2400 = vadd.f32 %v2105, %v2310
        %v2401 = vadd.f32 %v2106, %v2313
        %v2402 = vadd.f32 %v2107, %v2318
        %v2403 = vadd.f32 %v2108, %v2321
        %v2404 = vadd.f32 %v2109, %v2326
        %v2405 = vadd.f32 %v2110, %v2329
        %v2406 = vadd.f32 %v2111, %v2334
        %v2407 = vadd.f32 %v2112, %v2337
        %v2408 = vadd.f32 %v2113, %v2342
        %v2409 = vadd.f32 %v2114, %v2345
        %v2410 = vadd.f32 %v2115, %v2350
        %v2411 = vadd.f32 %v2116, %v2353
        %v2412 = vadd.f32 %v2117, %v2358
        %v2413 = vadd.f32 %v2118, %v2361
        %v2414 = vadd.f32 %v2119, %v2366
        %v2415 = vadd.f32 %v2120, %v2369
        %v2416 = vadd.f32 %v2121, %v2374
        %v2417 = vadd.f32 %v2122, %v2377
        %v2418 = vadd.f32 %v2123, %v2382
        %v2419 = vadd.f32 %v2124, %v2385
        %v2420 = vld [vmem:[%s2125 + $0x1] sm:$0xff]
        %v2421 = vld [vmem:[%s2125 + $0x9] sm:$0xff]
        %v2422 = vld [vmem:[%s2125 + $0x19] sm:$0xff]
        %v2423 = vld [vmem:[%s2125 + $0x21] sm:$0xff]
        %v2424 = vld [vmem:[%s2125 + $0x31] sm:$0xff]
        %v2425 = vld [vmem:[%s2125 + $0x39] sm:$0xff]
        %v2426 = vld [vmem:[%s2125 + $0x49] sm:$0xff]
        %v2427 = vld [vmem:[%s2125 + $0x51] sm:$0xff]
        %v2428 = vld [vmem:[%s2125 + $0x61] sm:$0xff]
        %v2429 = vld [vmem:[%s2125 + $0x69] sm:$0xff]
        %v2430 = vld [vmem:[%s2125 + $0x79] sm:$0xff]
        %v2431 = vld [vmem:[%s2125 + $0x81] sm:$0xff]
        %v2432 = vld [vmem:[%s2125 + $0x91] sm:$0xff]
        %v2433 = vld [vmem:[%s2125 + $0x99] sm:$0xff]
        %v2434 = vld [vmem:[%s2125 + $0xa9] sm:$0xff]
        %v2435 = vld [vmem:[%s2125 + $0xb1] sm:$0xff]
        %v2436 = vld [vmem:[%s2125 + $0xc1] sm:$0xff]
        %v2437 = vld [vmem:[%s2125 + $0xc9] sm:$0xff]
        %v2438 = vld [vmem:[%s2125 + $0xd9] sm:$0xff]
        %v2439 = vld [vmem:[%s2125 + $0xe1] sm:$0xff]
        %v2440 = vld [vmem:[%s2125 + $0xf1] sm:$0xff]
        %v2441 = vld [vmem:[%s2125 + $0xf9] sm:$0xff]
        %v2442 = vld [vmem:[%s2125 + $0x109] sm:$0xff]
        %v2443 = vld [vmem:[%s2125 + $0x111] sm:$0xff]
        %v2444 = vld [vmem:[%s2125 + $0x121] sm:$0xff]
        %v2445 = vld [vmem:[%s2125 + $0x129] sm:$0xff]
        %v2446 = vld [vmem:[%s2125 + $0x139] sm:$0xff]
        %v2447 = vld [vmem:[%s2125 + $0x141] sm:$0xff]
        %v2448 = vld [vmem:[%s2125 + $0x151] sm:$0xff]
        %v2449 = vld [vmem:[%s2125 + $0x159] sm:$0xff]
        %v2450 = vld [vmem:[%s2125 + $0x169] sm:$0xff]
        %v2451 = vld [vmem:[%s2125 + $0x171] sm:$0xff]
        %v2452 = vpack.c.bf16 %v2421, %v2420
        %v2453 = vpack.c.bf16 %v2423, %v2422
        %v2454 = vpack.c.bf16 %v2425, %v2424
        %v2455 = vpack.c.bf16 %v2427, %v2426
        %v2456 = vpack.c.bf16 %v2429, %v2428
        %v2457 = vpack.c.bf16 %v2431, %v2430
        %v2458 = vpack.c.bf16 %v2433, %v2432
        %v2459 = vpack.c.bf16 %v2435, %v2434
        %v2460 = vpack.c.bf16 %v2437, %v2436
        %v2461 = vpack.c.bf16 %v2439, %v2438
        %v2462 = vpack.c.bf16 %v2441, %v2440
        %v2463 = vpack.c.bf16 %v2443, %v2442
        %v2464 = vpack.c.bf16 %v2445, %v2444
        %v2465 = vpack.c.bf16 %v2447, %v2446
        %v2466 = vpack.c.bf16 %v2449, %v2448
        %v2467 = vpack.c.bf16 %v2451, %v2450
        %s2468 = scalar_lea.vmem %s1, 14
        %v2469 = vld [vmem:[%s2468] sm:$0x3]
        %v2471 = vsel %vm304, %v2452, 0
        %v2474 = vsel %vm304, %v2453, 0
        %v2477 = vsel %vm304, %v2454, 0
        %v2480 = vsel %vm304, %v2455, 0
        %v2483 = vsel %vm304, %v2456, 0
        %v2486 = vsel %vm304, %v2457, 0
        %v2489 = vsel %vm304, %v2458, 0
        %v2492 = vsel %vm304, %v2459, 0
        %v2495 = vsel %vm304, %v2460, 0
        %v2498 = vsel %vm304, %v2461, 0
        %v2501 = vsel %vm304, %v2462, 0
        %v2504 = vsel %vm304, %v2463, 0
        %v2507 = vsel %vm304, %v2464, 0
        %v2510 = vsel %vm304, %v2465, 0
        %v2513 = vsel %vm304, %v2466, 0
        %v2516 = vsel %vm304, %v2467, 0
        %v2519 = vsel %vm572, %v2469, 0
        %2521 = vmatprep.subr.bf16.mxu0 0
        %2522 = vmatpush1.bf16.msra.mxu0 %v2519
        %2523 = vmatprep.subr.bf16.mxu0 0
        %2524 = vmatpush1.bf16.msra.mxu0 0
        %2525 = vmatprep.subr.bf16.mxu0 0
        %2526 = vmatpush1.bf16.msra.mxu0 0
        %2527 = vmatprep.subr.bf16.mxu0 0
        %2528 = vmatpush1.bf16.msra.mxu0 0
        %2529 = vmatprep.subr.bf16.mxu0 0
        %2530 = vmatpush1.bf16.msra.mxu0 0
        %2531 = vmatprep.subr.bf16.mxu0 0
        %2532 = vmatpush1.bf16.msra.mxu0 0
        %2533 = vmatprep.subr.bf16.mxu0 0
        %2534 = vmatpush1.bf16.msra.mxu0 0
        %2535 = vmatprep.subr.bf16.mxu0 0
        %2536 = vmatpush1.bf16.msra.mxu0 0
        %2537 = vmatprep.subr.bf16.mxu0 0
        %2538 = vmatpush1.bf16.msra.mxu0 0
        %2539 = vmatprep.subr.bf16.mxu0 0
        %2540 = vmatpush1.bf16.msra.mxu0 0
        %2541 = vmatprep.subr.bf16.mxu0 0
        %2542 = vmatpush1.bf16.msra.mxu0 0
        %2543 = vmatprep.subr.bf16.mxu0 0
        %2544 = vmatpush1.bf16.msra.mxu0 0
        %2545 = vmatprep.subr.bf16.mxu0 0
        %2546 = vmatpush1.bf16.msra.mxu0 0
        %2547 = vmatprep.subr.bf16.mxu0 0
        %2548 = vmatpush1.bf16.msra.mxu0 0
        %2549 = vmatprep.subr.bf16.mxu0 0
        %2550 = vmatpush1.bf16.msra.mxu0 0
        %2551 = vmatprep.subr.bf16.mxu0 0
        %2552 = vmatpush1.bf16.msra.mxu0 0
        %2553 = vmatprep.mubr.bf16.mxu0 0
        %2554 = vmatmul.mubr.bf16.gmra.mrb[0].mxu0 %v2471
        %v2555 = vpop.f32.mrb[0].mxu0
        %v2556 = vadd.f32 0.0, %v2555
        %v2557 = vpop.f32.mrb[0].mxu0
        %v2558 = vpop.f32.mrb[0].mxu0
        %v2559 = vadd.f32 0.0, %v2558
        %v2560 = vpop.f32.mrb[0].mxu0
        %2561 = vmatprep.mubr.bf16.mxu0 0
        %2562 = vmatmul.mubr.bf16.gmra.mrb[0].mxu0 %v2474
        %v2563 = vpop.f32.mrb[0].mxu0
        %v2564 = vadd.f32 0.0, %v2563
        %v2565 = vpop.f32.mrb[0].mxu0
        %v2566 = vpop.f32.mrb[0].mxu0
        %v2567 = vadd.f32 0.0, %v2566
        %v2568 = vpop.f32.mrb[0].mxu0
        %2569 = vmatprep.mubr.bf16.mxu0 0
        %2570 = vmatmul.mubr.bf16.gmra.mrb[0].mxu0 %v2477
        %v2571 = vpop.f32.mrb[0].mxu0
        %v2572 = vadd.f32 0.0, %v2571
        %v2573 = vpop.f32.mrb[0].mxu0
        %v2574 = vpop.f32.mrb[0].mxu0
        %v2575 = vadd.f32 0.0, %v2574
        %v2576 = vpop.f32.mrb[0].mxu0
        %2577 = vmatprep.mubr.bf16.mxu0 0
        %2578 = vmatmul.mubr.bf16.gmra.mrb[0].mxu0 %v2480
        %v2579 = vpop.f32.mrb[0].mxu0
        %v2580 = vadd.f32 0.0, %v2579
        %v2581 = vpop.f32.mrb[0].mxu0
        %v2582 = vpop.f32.mrb[0].mxu0
        %v2583 = vadd.f32 0.0, %v2582
        %v2584 = vpop.f32.mrb[0].mxu0
        %2585 = vmatprep.mubr.bf16.mxu0 0
        %2586 = vmatmul.mubr.bf16.gmra.mrb[0].mxu0 %v2483
        %v2587 = vpop.f32.mrb[0].mxu0
        %v2588 = vadd.f32 0.0, %v2587
        %v2589 = vpop.f32.mrb[0].mxu0
        %v2590 = vpop.f32.mrb[0].mxu0
        %v2591 = vadd.f32 0.0, %v2590
        %v2592 = vpop.f32.mrb[0].mxu0
        %2593 = vmatprep.mubr.bf16.mxu0 0
        %2594 = vmatmul.mubr.bf16.gmra.mrb[0].mxu0 %v2486
        %v2595 = vpop.f32.mrb[0].mxu0
        %v2596 = vadd.f32 0.0, %v2595
        %v2597 = vpop.f32.mrb[0].mxu0
        %v2598 = vpop.f32.mrb[0].mxu0
        %v2599 = vadd.f32 0.0, %v2598
        %v2600 = vpop.f32.mrb[0].mxu0
        %2601 = vmatprep.mubr.bf16.mxu0 0
        %2602 = vmatmul.mubr.bf16.gmra.mrb[0].mxu0 %v2489
        %v2603 = vpop.f32.mrb[0].mxu0
        %v2604 = vadd.f32 0.0, %v2603
        %v2605 = vpop.f32.mrb[0].mxu0
        %v2606 = vpop.f32.mrb[0].mxu0
        %v2607 = vadd.f32 0.0, %v2606
        %v2608 = vpop.f32.mrb[0].mxu0
        %2609 = vmatprep.mubr.bf16.mxu0 0
        %2610 = vmatmul.mubr.bf16.gmra.mrb[0].mxu0 %v2492
        %v2611 = vpop.f32.mrb[0].mxu0
        %v2612 = vadd.f32 0.0, %v2611
        %v2613 = vpop.f32.mrb[0].mxu0
        %v2614 = vpop.f32.mrb[0].mxu0
        %v2615 = vadd.f32 0.0, %v2614
        %v2616 = vpop.f32.mrb[0].mxu0
        %2617 = vmatprep.mubr.bf16.mxu0 0
        %2618 = vmatmul.mubr.bf16.gmra.mrb[0].mxu0 %v2495
        %v2619 = vpop.f32.mrb[0].mxu0
        %v2620 = vadd.f32 0.0, %v2619
        %v2621 = vpop.f32.mrb[0].mxu0
        %v2622 = vpop.f32.mrb[0].mxu0
        %v2623 = vadd.f32 0.0, %v2622
        %v2624 = vpop.f32.mrb[0].mxu0
        %2625 = vmatprep.mubr.bf16.mxu0 0
        %2626 = vmatmul.mubr.bf16.gmra.mrb[0].mxu0 %v2498
        %v2627 = vpop.f32.mrb[0].mxu0
        %v2628 = vadd.f32 0.0, %v2627
        %v2629 = vpop.f32.mrb[0].mxu0
        %v2630 = vpop.f32.mrb[0].mxu0
        %v2631 = vadd.f32 0.0, %v2630
        %v2632 = vpop.f32.mrb[0].mxu0
        %2633 = vmatprep.mubr.bf16.mxu0 0
        %2634 = vmatmul.mubr.bf16.gmra.mrb[0].mxu0 %v2501
        %v2635 = vpop.f32.mrb[0].mxu0
        %v2636 = vadd.f32 0.0, %v2635
        %v2637 = vpop.f32.mrb[0].mxu0
        %v2638 = vpop.f32.mrb[0].mxu0
        %v2639 = vadd.f32 0.0, %v2638
        %v2640 = vpop.f32.mrb[0].mxu0
        %2641 = vmatprep.mubr.bf16.mxu0 0
        %2642 = vmatmul.mubr.bf16.gmra.mrb[0].mxu0 %v2504
        %v2643 = vpop.f32.mrb[0].mxu0
        %v2644 = vadd.f32 0.0, %v2643
        %v2645 = vpop.f32.mrb[0].mxu0
        %v2646 = vpop.f32.mrb[0].mxu0
        %v2647 = vadd.f32 0.0, %v2646
        %v2648 = vpop.f32.mrb[0].mxu0
        %2649 = vmatprep.mubr.bf16.mxu0 0
        %2650 = vmatmul.mubr.bf16.gmra.mrb[0].mxu0 %v2507
        %v2651 = vpop.f32.mrb[0].mxu0
        %v2652 = vadd.f32 0.0, %v2651
        %v2653 = vpop.f32.mrb[0].mxu0
        %v2654 = vpop.f32.mrb[0].mxu0
        %v2655 = vadd.f32 0.0, %v2654
        %v2656 = vpop.f32.mrb[0].mxu0
        %2657 = vmatprep.mubr.bf16.mxu0 0
        %2658 = vmatmul.mubr.bf16.gmra.mrb[0].mxu0 %v2510
        %v2659 = vpop.f32.mrb[0].mxu0
        %v2660 = vadd.f32 0.0, %v2659
        %v2661 = vpop.f32.mrb[0].mxu0
        %v2662 = vpop.f32.mrb[0].mxu0
        %v2663 = vadd.f32 0.0, %v2662
        %v2664 = vpop.f32.mrb[0].mxu0
        %2665 = vmatprep.mubr.bf16.mxu0 0
        %2666 = vmatmul.mubr.bf16.gmra.mrb[0].mxu0 %v2513
        %v2667 = vpop.f32.mrb[0].mxu0
        %v2668 = vadd.f32 0.0, %v2667
        %v2669 = vpop.f32.mrb[0].mxu0
        %v2670 = vpop.f32.mrb[0].mxu0
        %v2671 = vadd.f32 0.0, %v2670
        %v2672 = vpop.f32.mrb[0].mxu0
        %2673 = vmatprep.mubr.bf16.mxu0 0
        %2674 = vmatmul.mubr.bf16.gmra.mrb[0].mxu0 %v2516
        %v2675 = vpop.f32.mrb[0].mxu0
        %v2676 = vadd.f32 0.0, %v2675
        %v2677 = vpop.f32.mrb[0].mxu0
        %v2678 = vpop.f32.mrb[0].mxu0
        %v2679 = vadd.f32 0.0, %v2678
        %v2680 = vpop.f32.mrb[0].mxu0
        %2681 = vdwg.mxu0
        %v2682 = vadd.f32 %v2388, %v2556
        %v2683 = vadd.f32 %v2389, %v2559
        %v2684 = vadd.f32 %v2390, %v2564
        %v2685 = vadd.f32 %v2391, %v2567
        %v2686 = vadd.f32 %v2392, %v2572
        %v2687 = vadd.f32 %v2393, %v2575
        %v2688 = vadd.f32 %v2394, %v2580
        %v2689 = vadd.f32 %v2395, %v2583
        %v2690 = vadd.f32 %v2396, %v2588
        %v2691 = vadd.f32 %v2397, %v2591
        %v2692 = vadd.f32 %v2398, %v2596
        %v2693 = vadd.f32 %v2399, %v2599
        %v2694 = vadd.f32 %v2400, %v2604
        %v2695 = vadd.f32 %v2401, %v2607
        %v2696 = vadd.f32 %v2402, %v2612
        %v2697 = vadd.f32 %v2403, %v2615
        %v2698 = vadd.f32 %v2404, %v2620
        %v2699 = vadd.f32 %v2405, %v2623
        %v2700 = vadd.f32 %v2406, %v2628
        %v2701 = vadd.f32 %v2407, %v2631
        %v2702 = vadd.f32 %v2408, %v2636
        %v2703 = vadd.f32 %v2409, %v2639
        %v2704 = vadd.f32 %v2410, %v2644
        %v2705 = vadd.f32 %v2411, %v2647
        %v2706 = vadd.f32 %v2412, %v2652
        %v2707 = vadd.f32 %v2413, %v2655
        %v2708 = vadd.f32 %v2414, %v2660
        %v2709 = vadd.f32 %v2415, %v2663
        %v2710 = vadd.f32 %v2416, %v2668
        %v2711 = vadd.f32 %v2417, %v2671
        %v2712 = vadd.f32 %v2418, %v2676
        %v2713 = vadd.f32 %v2419, %v2679
        %v2714 = vld [vmem:[%s2125 + $0x2] sm:$0xff]
        %v2715 = vld [vmem:[%s2125 + $0xa] sm:$0xff]
        %v2716 = vld [vmem:[%s2125 + $0x1a] sm:$0xff]
        %v2717 = vld [vmem:[%s2125 + $0x22] sm:$0xff]
        %v2718 = vld [vmem:[%s2125 + $0x32] sm:$0xff]
        %v2719 = vld [vmem:[%s2125 + $0x3a] sm:$0xff]
        %v2720 = vld [vmem:[%s2125 + $0x4a] sm:$0xff]
        %v2721 = vld [vmem:[%s2125 + $0x52] sm:$0xff]
        %v2722 = vld [vmem:[%s2125 + $0x62] sm:$0xff]
        %v2723 = vld [vmem:[%s2125 + $0x6a] sm:$0xff]
        %v2724 = vld [vmem:[%s2125 + $0x7a] sm:$0xff]
        %v2725 = vld [vmem:[%s2125 + $0x82] sm:$0xff]
        %v2726 = vld [vmem:[%s2125 + $0x92] sm:$0xff]
        %v2727 = vld [vmem:[%s2125 + $0x9a] sm:$0xff]
        %v2728 = vld [vmem:[%s2125 + $0xaa] sm:$0xff]
        %v2729 = vld [vmem:[%s2125 + $0xb2] sm:$0xff]
        %v2730 = vld [vmem:[%s2125 + $0xc2] sm:$0xff]
        %v2731 = vld [vmem:[%s2125 + $0xca] sm:$0xff]
        %v2732 = vld [vmem:[%s2125 + $0xda] sm:$0xff]
        %v2733 = vld [vmem:[%s2125 + $0xe2] sm:$0xff]
        %v2734 = vld [vmem:[%s2125 + $0xf2] sm:$0xff]
        %v2735 = vld [vmem:[%s2125 + $0xfa] sm:$0xff]
        %v2736 = vld [vmem:[%s2125 + $0x10a] sm:$0xff]
        %v2737 = vld [vmem:[%s2125 + $0x112] sm:$0xff]
        %v2738 = vld [vmem:[%s2125 + $0x122] sm:$0xff]
        %v2739 = vld [vmem:[%s2125 + $0x12a] sm:$0xff]
        %v2740 = vld [vmem:[%s2125 + $0x13a] sm:$0xff]
        %v2741 = vld [vmem:[%s2125 + $0x142] sm:$0xff]
        %v2742 = vld [vmem:[%s2125 + $0x152] sm:$0xff]
        %v2743 = vld [vmem:[%s2125 + $0x15a] sm:$0xff]
        %v2744 = vld [vmem:[%s2125 + $0x16a] sm:$0xff]
        %v2745 = vld [vmem:[%s2125 + $0x172] sm:$0xff]
        %v2746 = vpack.c.bf16 %v2715, %v2714
        %v2747 = vpack.c.bf16 %v2717, %v2716
        %v2748 = vpack.c.bf16 %v2719, %v2718
        %v2749 = vpack.c.bf16 %v2721, %v2720
        %v2750 = vpack.c.bf16 %v2723, %v2722
        %v2751 = vpack.c.bf16 %v2725, %v2724
        %v2752 = vpack.c.bf16 %v2727, %v2726
        %v2753 = vpack.c.bf16 %v2729, %v2728
        %v2754 = vpack.c.bf16 %v2731, %v2730
        %v2755 = vpack.c.bf16 %v2733, %v2732
        %v2756 = vpack.c.bf16 %v2735, %v2734
        %v2757 = vpack.c.bf16 %v2737, %v2736
        %v2758 = vpack.c.bf16 %v2739, %v2738
        %v2759 = vpack.c.bf16 %v2741, %v2740
        %v2760 = vpack.c.bf16 %v2743, %v2742
        %v2761 = vpack.c.bf16 %v2745, %v2744
        %s2762 = scalar_lea.vmem %s1, 16
        %v2763 = vld [vmem:[%s2762] sm:$0x3]
        %v2765 = vsel %vm304, %v2746, 0
        %v2768 = vsel %vm304, %v2747, 0
        %v2771 = vsel %vm304, %v2748, 0
        %v2774 = vsel %vm304, %v2749, 0
        %v2777 = vsel %vm304, %v2750, 0
        %v2780 = vsel %vm304, %v2751, 0
        %v2783 = vsel %vm304, %v2752, 0
        %v2786 = vsel %vm304, %v2753, 0
        %v2789 = vsel %vm304, %v2754, 0
        %v2792 = vsel %vm304, %v2755, 0
        %v2795 = vsel %vm304, %v2756, 0
        %v2798 = vsel %vm304, %v2757, 0
        %v2801 = vsel %vm304, %v2758, 0
        %v2804 = vsel %vm304, %v2759, 0
        %v2807 = vsel %vm304, %v2760, 0
        %v2810 = vsel %vm304, %v2761, 0
        %v2813 = vsel %vm572, %v2763, 0
        %2815 = vmatprep.subr.bf16.mxu0 0
        %2816 = vmatpush1.bf16.msra.mxu0 %v2813
        %2817 = vmatprep.subr.bf16.mxu0 0
        %2818 = vmatpush1.bf16.msra.mxu0 0
        %2819 = vmatprep.subr.bf16.mxu0 0
        %2820 = vmatpush1.bf16.msra.mxu0 0
        %2821 = vmatprep.subr.bf16.mxu0 0
        %2822 = vmatpush1.bf16.msra.mxu0 0
        %2823 = vmatprep.subr.bf16.mxu0 0
        %2824 = vmatpush1.bf16.msra.mxu0 0
        %2825 = vmatprep.subr.bf16.mxu0 0
        %2826 = vmatpush1.bf16.msra.mxu0 0
        %2827 = vmatprep.subr.bf16.mxu0 0
        %2828 = vmatpush1.bf16.msra.mxu0 0
        %2829 = vmatprep.subr.bf16.mxu0 0
        %2830 = vmatpush1.bf16.msra.mxu0 0
        %2831 = vmatprep.subr.bf16.mxu0 0
        %2832 = vmatpush1.bf16.msra.mxu0 0
        %2833 = vmatprep.subr.bf16.mxu0 0
        %2834 = vmatpush1.bf16.msra.mxu0 0
        %2835 = vmatprep.subr.bf16.mxu0 0
        %2836 = vmatpush1.bf16.msra.mxu0 0
        %2837 = vmatprep.subr.bf16.mxu0 0
        %2838 = vmatpush1.bf16.msra.mxu0 0
        %2839 = vmatprep.subr.bf16.mxu0 0
        %2840 = vmatpush1.bf16.msra.mxu0 0
        %2841 = vmatprep.subr.bf16.mxu0 0
        %2842 = vmatpush1.bf16.msra.mxu0 0
        %2843 = vmatprep.subr.bf16.mxu0 0
        %2844 = vmatpush1.bf16.msra.mxu0 0
        %2845 = vmatprep.subr.bf16.mxu0 0
        %2846 = vmatpush1.bf16.msra.mxu0 0
        %2847 = vmatprep.mubr.bf16.mxu0 0
        %2848 = vmatmul.mubr.bf16.gmra.mrb[0].mxu0 %v2765
        %v2849 = vpop.f32.mrb[0].mxu0
        %v2850 = vadd.f32 0.0, %v2849
        %v2851 = vpop.f32.mrb[0].mxu0
        %v2852 = vpop.f32.mrb[0].mxu0
        %v2853 = vadd.f32 0.0, %v2852
        %v2854 = vpop.f32.mrb[0].mxu0
        %2855 = vmatprep.mubr.bf16.mxu0 0
        %2856 = vmatmul.mubr.bf16.gmra.mrb[0].mxu0 %v2768
        %v2857 = vpop.f32.mrb[0].mxu0
        %v2858 = vadd.f32 0.0, %v2857
        %v2859 = vpop.f32.mrb[0].mxu0
        %v2860 = vpop.f32.mrb[0].mxu0
        %v2861 = vadd.f32 0.0, %v2860
        %v2862 = vpop.f32.mrb[0].mxu0
        %2863 = vmatprep.mubr.bf16.mxu0 0
        %2864 = vmatmul.mubr.bf16.gmra.mrb[0].mxu0 %v2771
        %v2865 = vpop.f32.mrb[0].mxu0
        %v2866 = vadd.f32 0.0, %v2865
        %v2867 = vpop.f32.mrb[0].mxu0
        %v2868 = vpop.f32.mrb[0].mxu0
        %v2869 = vadd.f32 0.0, %v2868
        %v2870 = vpop.f32.mrb[0].mxu0
        %2871 = vmatprep.mubr.bf16.mxu0 0
        %2872 = vmatmul.mubr.bf16.gmra.mrb[0].mxu0 %v2774
        %v2873 = vpop.f32.mrb[0].mxu0
        %v2874 = vadd.f32 0.0, %v2873
        %v2875 = vpop.f32.mrb[0].mxu0
        %v2876 = vpop.f32.mrb[0].mxu0
        %v2877 = vadd.f32 0.0, %v2876
        %v2878 = vpop.f32.mrb[0].mxu0
        %2879 = vmatprep.mubr.bf16.mxu0 0
        %2880 = vmatmul.mubr.bf16.gmra.mrb[0].mxu0 %v2777
        %v2881 = vpop.f32.mrb[0].mxu0
        %v2882 = vadd.f32 0.0, %v2881
        %v2883 = vpop.f32.mrb[0].mxu0
        %v2884 = vpop.f32.mrb[0].mxu0
        %v2885 = vadd.f32 0.0, %v2884
        %v2886 = vpop.f32.mrb[0].mxu0
        %2887 = vmatprep.mubr.bf16.mxu0 0
        %2888 = vmatmul.mubr.bf16.gmra.mrb[0].mxu0 %v2780
        %v2889 = vpop.f32.mrb[0].mxu0
        %v2890 = vadd.f32 0.0, %v2889
        %v2891 = vpop.f32.mrb[0].mxu0
        %v2892 = vpop.f32.mrb[0].mxu0
        %v2893 = vadd.f32 0.0, %v2892
        %v2894 = vpop.f32.mrb[0].mxu0
        %2895 = vmatprep.mubr.bf16.mxu0 0
        %2896 = vmatmul.mubr.bf16.gmra.mrb[0].mxu0 %v2783
        %v2897 = vpop.f32.mrb[0].mxu0
        %v2898 = vadd.f32 0.0, %v2897
        %v2899 = vpop.f32.mrb[0].mxu0
        %v2900 = vpop.f32.mrb[0].mxu0
        %v2901 = vadd.f32 0.0, %v2900
        %v2902 = vpop.f32.mrb[0].mxu0
        %2903 = vmatprep.mubr.bf16.mxu0 0
        %2904 = vmatmul.mubr.bf16.gmra.mrb[0].mxu0 %v2786
        %v2905 = vpop.f32.mrb[0].mxu0
        %v2906 = vadd.f32 0.0, %v2905
        %v2907 = vpop.f32.mrb[0].mxu0
        %v2908 = vpop.f32.mrb[0].mxu0
        %v2909 = vadd.f32 0.0, %v2908
        %v2910 = vpop.f32.mrb[0].mxu0
        %2911 = vmatprep.mubr.bf16.mxu0 0
        %2912 = vmatmul.mubr.bf16.gmra.mrb[0].mxu0 %v2789
        %v2913 = vpop.f32.mrb[0].mxu0
        %v2914 = vadd.f32 0.0, %v2913
        %v2915 = vpop.f32.mrb[0].mxu0
        %v2916 = vpop.f32.mrb[0].mxu0
        %v2917 = vadd.f32 0.0, %v2916
        %v2918 = vpop.f32.mrb[0].mxu0
        %2919 = vmatprep.mubr.bf16.mxu0 0
        %2920 = vmatmul.mubr.bf16.gmra.mrb[0].mxu0 %v2792
        %v2921 = vpop.f32.mrb[0].mxu0
        %v2922 = vadd.f32 0.0, %v2921
        %v2923 = vpop.f32.mrb[0].mxu0
        %v2924 = vpop.f32.mrb[0].mxu0
        %v2925 = vadd.f32 0.0, %v2924
        %v2926 = vpop.f32.mrb[0].mxu0
        %2927 = vmatprep.mubr.bf16.mxu0 0
        %2928 = vmatmul.mubr.bf16.gmra.mrb[0].mxu0 %v2795
        %v2929 = vpop.f32.mrb[0].mxu0
        %v2930 = vadd.f32 0.0, %v2929
        %v2931 = vpop.f32.mrb[0].mxu0
        %v2932 = vpop.f32.mrb[0].mxu0
        %v2933 = vadd.f32 0.0, %v2932
        %v2934 = vpop.f32.mrb[0].mxu0
        %2935 = vmatprep.mubr.bf16.mxu0 0
        %2936 = vmatmul.mubr.bf16.gmra.mrb[0].mxu0 %v2798
        %v2937 = vpop.f32.mrb[0].mxu0
        %v2938 = vadd.f32 0.0, %v2937
        %v2939 = vpop.f32.mrb[0].mxu0
        %v2940 = vpop.f32.mrb[0].mxu0
        %v2941 = vadd.f32 0.0, %v2940
        %v2942 = vpop.f32.mrb[0].mxu0
        %2943 = vmatprep.mubr.bf16.mxu0 0
        %2944 = vmatmul.mubr.bf16.gmra.mrb[0].mxu0 %v2801
        %v2945 = vpop.f32.mrb[0].mxu0
        %v2946 = vadd.f32 0.0, %v2945
        %v2947 = vpop.f32.mrb[0].mxu0
        %v2948 = vpop.f32.mrb[0].mxu0
        %v2949 = vadd.f32 0.0, %v2948
        %v2950 = vpop.f32.mrb[0].mxu0
        %2951 = vmatprep.mubr.bf16.mxu0 0
        %2952 = vmatmul.mubr.bf16.gmra.mrb[0].mxu0 %v2804
        %v2953 = vpop.f32.mrb[0].mxu0
        %v2954 = vadd.f32 0.0, %v2953
        %v2955 = vpop.f32.mrb[0].mxu0
        %v2956 = vpop.f32.mrb[0].mxu0
        %v2957 = vadd.f32 0.0, %v2956
        %v2958 = vpop.f32.mrb[0].mxu0
        %2959 = vmatprep.mubr.bf16.mxu0 0
        %2960 = vmatmul.mubr.bf16.gmra.mrb[0].mxu0 %v2807
        %v2961 = vpop.f32.mrb[0].mxu0
        %v2962 = vadd.f32 0.0, %v2961
        %v2963 = vpop.f32.mrb[0].mxu0
        %v2964 = vpop.f32.mrb[0].mxu0
        %v2965 = vadd.f32 0.0, %v2964
        %v2966 = vpop.f32.mrb[0].mxu0
        %2967 = vmatprep.mubr.bf16.mxu0 0
        %2968 = vmatmul.mubr.bf16.gmra.mrb[0].mxu0 %v2810
        %v2969 = vpop.f32.mrb[0].mxu0
        %v2970 = vadd.f32 0.0, %v2969
        %v2971 = vpop.f32.mrb[0].mxu0
        %v2972 = vpop.f32.mrb[0].mxu0
        %v2973 = vadd.f32 0.0, %v2972
        %v2974 = vpop.f32.mrb[0].mxu0
        %2975 = vdwg.mxu0
        %v2976 = vadd.f32 %v2682, %v2850
        %v2977 = vadd.f32 %v2683, %v2853
        %v2978 = vadd.f32 %v2684, %v2858
        %v2979 = vadd.f32 %v2685, %v2861
        %v2980 = vadd.f32 %v2686, %v2866
        %v2981 = vadd.f32 %v2687, %v2869
        %v2982 = vadd.f32 %v2688, %v2874
        %v2983 = vadd.f32 %v2689, %v2877
        %v2984 = vadd.f32 %v2690, %v2882
        %v2985 = vadd.f32 %v2691, %v2885
        %v2986 = vadd.f32 %v2692, %v2890
        %v2987 = vadd.f32 %v2693, %v2893
        %v2988 = vadd.f32 %v2694, %v2898
        %v2989 = vadd.f32 %v2695, %v2901
        %v2990 = vadd.f32 %v2696, %v2906
        %v2991 = vadd.f32 %v2697, %v2909
        %v2992 = vadd.f32 %v2698, %v2914
        %v2993 = vadd.f32 %v2699, %v2917
        %v2994 = vadd.f32 %v2700, %v2922
        %v2995 = vadd.f32 %v2701, %v2925
        %v2996 = vadd.f32 %v2702, %v2930
        %v2997 = vadd.f32 %v2703, %v2933
        %v2998 = vadd.f32 %v2704, %v2938
        %v2999 = vadd.f32 %v2705, %v2941
        %v3000 = vadd.f32 %v2706, %v2946
        %v3001 = vadd.f32 %v2707, %v2949
        %v3002 = vadd.f32 %v2708, %v2954
        %v3003 = vadd.f32 %v2709, %v2957
        %v3004 = vadd.f32 %v2710, %v2962
        %v3005 = vadd.f32 %v2711, %v2965
        %v3006 = vadd.f32 %v2712, %v2970
        %v3007 = vadd.f32 %v2713, %v2973
        %v3008 = vld [vmem:[%s2] sm:$0x1]
        %v3010 = vlaneseq
        %v3011 = vshrl.u32 %v3010, 7
        %v3012 = vsub.s32 0, %v3011
        %v3013 = vrot.slane %v3008, %v3012
        %v3015 = vadd.f32 %v2976, %v3013
        %v3016 = vadd.f32 %v2977, %v3013
        %v3017 = vadd.f32 %v2978, %v3013
        %v3018 = vadd.f32 %v2979, %v3013
        %v3019 = vadd.f32 %v2980, %v3013
        %v3020 = vadd.f32 %v2981, %v3013
        %v3021 = vadd.f32 %v2982, %v3013
        %v3022 = vadd.f32 %v2983, %v3013
        %v3023 = vadd.f32 %v2984, %v3013
        %v3024 = vadd.f32 %v2985, %v3013
        %v3025 = vadd.f32 %v2986, %v3013
        %v3026 = vadd.f32 %v2987, %v3013
        %v3027 = vadd.f32 %v2988, %v3013
        %v3028 = vadd.f32 %v2989, %v3013
        %v3029 = vadd.f32 %v2990, %v3013
        %v3030 = vadd.f32 %v2991, %v3013
        %v3031 = vadd.f32 %v2992, %v3013
        %v3032 = vadd.f32 %v2993, %v3013
        %v3033 = vadd.f32 %v2994, %v3013
        %v3034 = vadd.f32 %v2995, %v3013
        %v3035 = vadd.f32 %v2996, %v3013
        %v3036 = vadd.f32 %v2997, %v3013
        %v3037 = vadd.f32 %v2998, %v3013
        %v3038 = vadd.f32 %v2999, %v3013
        %v3039 = vadd.f32 %v3000, %v3013
        %v3040 = vadd.f32 %v3001, %v3013
        %v3041 = vadd.f32 %v3002, %v3013
        %v3042 = vadd.f32 %v3003, %v3013
        %v3043 = vadd.f32 %v3004, %v3013
        %v3044 = vadd.f32 %v3005, %v3013
        %v3045 = vadd.f32 %v3006, %v3013
        %v3046 = vadd.f32 %v3007, %v3013
        %v3047 = vmax.f32 %v3015, 0.0
        %v3048 = vmax.f32 %v3016, 0.0
        %v3049 = vmax.f32 %v3017, 0.0
        %v3050 = vmax.f32 %v3018, 0.0
        %v3051 = vmax.f32 %v3019, 0.0
        %v3052 = vmax.f32 %v3020, 0.0
        %v3053 = vmax.f32 %v3021, 0.0
        %v3054 = vmax.f32 %v3022, 0.0
        %v3055 = vmax.f32 %v3023, 0.0
        %v3056 = vmax.f32 %v3024, 0.0
        %v3057 = vmax.f32 %v3025, 0.0
        %v3058 = vmax.f32 %v3026, 0.0
        %v3059 = vmax.f32 %v3027, 0.0
        %v3060 = vmax.f32 %v3028, 0.0
        %v3061 = vmax.f32 %v3029, 0.0
        %v3062 = vmax.f32 %v3030, 0.0
        %v3063 = vmax.f32 %v3031, 0.0
        %v3064 = vmax.f32 %v3032, 0.0
        %v3065 = vmax.f32 %v3033, 0.0
        %v3066 = vmax.f32 %v3034, 0.0
        %v3067 = vmax.f32 %v3035, 0.0
        %v3068 = vmax.f32 %v3036, 0.0
        %v3069 = vmax.f32 %v3037, 0.0
        %v3070 = vmax.f32 %v3038, 0.0
        %v3071 = vmax.f32 %v3039, 0.0
        %v3072 = vmax.f32 %v3040, 0.0
        %v3073 = vmax.f32 %v3041, 0.0
        %v3074 = vmax.f32 %v3042, 0.0
        %v3075 = vmax.f32 %v3043, 0.0
        %v3076 = vmax.f32 %v3044, 0.0
        %v3077 = vmax.f32 %v3045, 0.0
        %v3078 = vmax.f32 %v3046, 0.0
        %vm3079 = vcmask 130048
        %3080 = vst.msk [vmem:[#allocation3] sm:$0xff] %vm3079, 0.0
        %3081 = vst.msk [vmem:[#allocation3 + $0x8] sm:$0xff] %vm3079, 0.0
        %vm3082 = vcmask 123904
        %3083 = vst.msk [vmem:[#allocation3 + $0x10] sm:$0x3] %vm3082, 0.0
        %3084 = vst.msk [vmem:[#allocation3 + $0x18] sm:$0xff] %vm3079, 0.0
        %3085 = vst.msk [vmem:[#allocation3 + $0x20] sm:$0xff] %vm3079, 0.0
        %3086 = vst.msk [vmem:[#allocation3 + $0x28] sm:$0x3] %vm3082, 0.0
        %3087 = vst.msk [vmem:[#allocation3 + $0x30] sm:$0xff] %vm3079, 0.0
        %3088 = vst.msk [vmem:[#allocation3 + $0x38] sm:$0xff] %vm3079, 0.0
        %3089 = vst.msk [vmem:[#allocation3 + $0x40] sm:$0x3] %vm3082, 0.0
        %3090 = vst.msk [vmem:[#allocation3 + $0x48] sm:$0xff] %vm3079, 0.0
        %3091 = vst.msk [vmem:[#allocation3 + $0x50] sm:$0xff] %vm3079, 0.0
        %3092 = vst.msk [vmem:[#allocation3 + $0x58] sm:$0x3] %vm3082, 0.0
        %3093 = vst.msk [vmem:[#allocation3 + $0x60] sm:$0xff] %vm3079, 0.0
        %3094 = vst.msk [vmem:[#allocation3 + $0x68] sm:$0xff] %vm3079, 0.0
        %3095 = vst.msk [vmem:[#allocation3 + $0x70] sm:$0x3] %vm3082, 0.0
        %3096 = vst.msk [vmem:[#allocation3 + $0x78] sm:$0xff] %vm3079, 0.0
        %3097 = vst.msk [vmem:[#allocation3 + $0x80] sm:$0xff] %vm3079, 0.0
        %3098 = vst.msk [vmem:[#allocation3 + $0x88] sm:$0x3] %vm3082, 0.0
        %3099 = vst.msk [vmem:[#allocation3 + $0x90] sm:$0xff] %vm3079, 0.0
        %3100 = vst.msk [vmem:[#allocation3 + $0x98] sm:$0xff] %vm3079, 0.0
        %3101 = vst.msk [vmem:[#allocation3 + $0xa0] sm:$0x3] %vm3082, 0.0
        %3102 = vst.msk [vmem:[#allocation3 + $0xa8] sm:$0xff] %vm3079, 0.0
        %3103 = vst.msk [vmem:[#allocation3 + $0xb0] sm:$0xff] %vm3079, 0.0
        %3104 = vst.msk [vmem:[#allocation3 + $0xb8] sm:$0x3] %vm3082, 0.0
        %3105 = vst.msk [vmem:[#allocation3 + $0xc0] sm:$0xff] %vm3079, 0.0
        %3106 = vst.msk [vmem:[#allocation3 + $0xc8] sm:$0xff] %vm3079, 0.0
        %3107 = vst.msk [vmem:[#allocation3 + $0xd0] sm:$0x3] %vm3082, 0.0
        %3108 = vst.msk [vmem:[#allocation3 + $0xd8] sm:$0xff] %vm3079, 0.0
        %3109 = vst.msk [vmem:[#allocation3 + $0xe0] sm:$0xff] %vm3079, 0.0
        %3110 = vst.msk [vmem:[#allocation3 + $0xe8] sm:$0x3] %vm3082, 0.0
        %3111 = vst.msk [vmem:[#allocation3 + $0xf0] sm:$0xff] %vm3079, 0.0
        %3112 = vst.msk [vmem:[#allocation3 + $0xf8] sm:$0xff] %vm3079, 0.0
        %3113 = vst.msk [vmem:[#allocation3 + $0x100] sm:$0x3] %vm3082, 0.0
        %3114 = vst.msk [vmem:[#allocation3 + $0x108] sm:$0xff] %vm3079, 0.0
        %3115 = vst.msk [vmem:[#allocation3 + $0x110] sm:$0xff] %vm3079, 0.0
        %3116 = vst.msk [vmem:[#allocation3 + $0x118] sm:$0x3] %vm3082, 0.0
        %3117 = vst.msk [vmem:[#allocation3 + $0x120] sm:$0xff] %vm3079, 0.0
        %3118 = vst.msk [vmem:[#allocation3 + $0x128] sm:$0xff] %vm3079, 0.0
        %3119 = vst.msk [vmem:[#allocation3 + $0x130] sm:$0x3] %vm3082, 0.0
        %3120 = vst.msk [vmem:[#allocation3 + $0x138] sm:$0xff] %vm3079, 0.0
        %3121 = vst.msk [vmem:[#allocation3 + $0x140] sm:$0xff] %vm3079, 0.0
        %3122 = vst.msk [vmem:[#allocation3 + $0x148] sm:$0x3] %vm3082, 0.0
        %3123 = vst.msk [vmem:[#allocation3 + $0x150] sm:$0xff] %vm3079, 0.0
        %3124 = vst.msk [vmem:[#allocation3 + $0x158] sm:$0xff] %vm3079, 0.0
        %3125 = vst.msk [vmem:[#allocation3 + $0x160] sm:$0x3] %vm3082, 0.0
        %3126 = vst.msk [vmem:[#allocation3 + $0x168] sm:$0xff] %vm3079, 0.0
        %3127 = vst.msk [vmem:[#allocation3 + $0x170] sm:$0xff] %vm3079, 0.0
        %3128 = vst.msk [vmem:[#allocation3 + $0x178] sm:$0x3] %vm3082, 0.0
        %3129 = vst.msk [vmem:[#allocation3 + $0x180] sm:$0xff] %vm3079, 0.0
        %3130 = vst.msk [vmem:[#allocation3 + $0x188] sm:$0xff] %vm3079, 0.0
        %3131 = vst.msk [vmem:[#allocation3 + $0x190] sm:$0x3] %vm3082, 0.0
        %3132 = vst.msk [vmem:[#allocation3 + $0x198] sm:$0xff] %vm3079, 0.0
        %3133 = vst.msk [vmem:[#allocation3 + $0x1a0] sm:$0xff] %vm3079, 0.0
        %3134 = vst.msk [vmem:[#allocation3 + $0x1a8] sm:$0x3] %vm3082, 0.0
        %s3135 = scalar_lea.vmem [#allocation3], 24
        %3136 = vst.msk [vmem:[%s3135 + $0x1] sm:$0xff] %vm3079, %v3047
        %3137 = vst.msk [vmem:[%s3135 + $0x9] sm:$0xff] %vm3079, %v3048
        %3138 = vst.msk [vmem:[%s3135 + $0x19] sm:$0xff] %vm3079, %v3049
        %3139 = vst.msk [vmem:[%s3135 + $0x21] sm:$0xff] %vm3079, %v3050
        %3140 = vst.msk [vmem:[%s3135 + $0x31] sm:$0xff] %vm3079, %v3051
        %3141 = vst.msk [vmem:[%s3135 + $0x39] sm:$0xff] %vm3079, %v3052
        %3142 = vst.msk [vmem:[%s3135 + $0x49] sm:$0xff] %vm3079, %v3053
        %3143 = vst.msk [vmem:[%s3135 + $0x51] sm:$0xff] %vm3079, %v3054
        %3144 = vst.msk [vmem:[%s3135 + $0x61] sm:$0xff] %vm3079, %v3055
        %3145 = vst.msk [vmem:[%s3135 + $0x69] sm:$0xff] %vm3079, %v3056
        %3146 = vst.msk [vmem:[%s3135 + $0x79] sm:$0xff] %vm3079, %v3057
        %3147 = vst.msk [vmem:[%s3135 + $0x81] sm:$0xff] %vm3079, %v3058
        %3148 = vst.msk [vmem:[%s3135 + $0x91] sm:$0xff] %vm3079, %v3059
        %3149 = vst.msk [vmem:[%s3135 + $0x99] sm:$0xff] %vm3079, %v3060
        %3150 = vst.msk [vmem:[%s3135 + $0xa9] sm:$0xff] %vm3079, %v3061
        %3151 = vst.msk [vmem:[%s3135 + $0xb1] sm:$0xff] %vm3079, %v3062
        %3152 = vst.msk [vmem:[%s3135 + $0xc1] sm:$0xff] %vm3079, %v3063
        %3153 = vst.msk [vmem:[%s3135 + $0xc9] sm:$0xff] %vm3079, %v3064
        %3154 = vst.msk [vmem:[%s3135 + $0xd9] sm:$0xff] %vm3079, %v3065
        %3155 = vst.msk [vmem:[%s3135 + $0xe1] sm:$0xff] %vm3079, %v3066
        %3156 = vst.msk [vmem:[%s3135 + $0xf1] sm:$0xff] %vm3079, %v3067
        %3157 = vst.msk [vmem:[%s3135 + $0xf9] sm:$0xff] %vm3079, %v3068
        %3158 = vst.msk [vmem:[%s3135 + $0x109] sm:$0xff] %vm3079, %v3069
        %3159 = vst.msk [vmem:[%s3135 + $0x111] sm:$0xff] %vm3079, %v3070
        %3160 = vst.msk [vmem:[%s3135 + $0x121] sm:$0xff] %vm3079, %v3071
        %3161 = vst.msk [vmem:[%s3135 + $0x129] sm:$0xff] %vm3079, %v3072
        %3162 = vst.msk [vmem:[%s3135 + $0x139] sm:$0xff] %vm3079, %v3073
        %3163 = vst.msk [vmem:[%s3135 + $0x141] sm:$0xff] %vm3079, %v3074
        %3164 = vst.msk [vmem:[%s3135 + $0x151] sm:$0xff] %vm3079, %v3075
        %3165 = vst.msk [vmem:[%s3135 + $0x159] sm:$0xff] %vm3079, %v3076
        %3166 = vst.msk [vmem:[%s3135 + $0x169] sm:$0xff] %vm3079, %v3077
        %3167 = vst.msk [vmem:[%s3135 + $0x171] sm:$0xff] %vm3079, %v3078
        %v3168 = vld [vmem:[#allocation3] sm:$0xff]
        %v3169 = vld [vmem:[#allocation3 + $0x8] sm:$0xff]
        %v3170 = vld [vmem:[#allocation3 + $0x18] sm:$0xff]
        %v3171 = vld [vmem:[#allocation3 + $0x20] sm:$0xff]
        %v3172 = vld [vmem:[#allocation3 + $0x30] sm:$0xff]
        %v3173 = vld [vmem:[#allocation3 + $0x38] sm:$0xff]
        %v3174 = vld [vmem:[#allocation3 + $0x48] sm:$0xff]
        %v3175 = vld [vmem:[#allocation3 + $0x50] sm:$0xff]
        %v3176 = vld [vmem:[#allocation3 + $0x60] sm:$0xff]
        %v3177 = vld [vmem:[#allocation3 + $0x68] sm:$0xff]
        %v3178 = vld [vmem:[#allocation3 + $0x78] sm:$0xff]
        %v3179 = vld [vmem:[#allocation3 + $0x80] sm:$0xff]
        %v3180 = vld [vmem:[#allocation3 + $0x90] sm:$0xff]
        %v3181 = vld [vmem:[#allocation3 + $0x98] sm:$0xff]
        %v3182 = vld [vmem:[#allocation3 + $0xa8] sm:$0xff]
        %v3183 = vld [vmem:[#allocation3 + $0xb0] sm:$0xff]
        %v3184 = vld [vmem:[#allocation3 + $0xc0] sm:$0xff]
        %v3185 = vld [vmem:[#allocation3 + $0xc8] sm:$0xff]
        %v3186 = vld [vmem:[#allocation3 + $0xd8] sm:$0xff]
        %v3187 = vld [vmem:[#allocation3 + $0xe0] sm:$0xff]
        %v3188 = vld [vmem:[#allocation3 + $0xf0] sm:$0xff]
        %v3189 = vld [vmem:[#allocation3 + $0xf8] sm:$0xff]
        %v3190 = vld [vmem:[#allocation3 + $0x108] sm:$0xff]
        %v3191 = vld [vmem:[#allocation3 + $0x110] sm:$0xff]
        %v3192 = vld [vmem:[#allocation3 + $0x120] sm:$0xff]
        %v3193 = vld [vmem:[#allocation3 + $0x128] sm:$0xff]
        %v3194 = vld [vmem:[#allocation3 + $0x138] sm:$0xff]
        %v3195 = vld [vmem:[#allocation3 + $0x140] sm:$0xff]
        %v3196 = vld [vmem:[#allocation3 + $0x150] sm:$0xff]
        %v3197 = vld [vmem:[#allocation3 + $0x158] sm:$0xff]
        %v3198 = vld [vmem:[#allocation3 + $0x168] sm:$0xff]
        %v3199 = vld [vmem:[#allocation3 + $0x170] sm:$0xff]
        %v3200 = vpack.c.bf16 %v3169, %v3168
        %v3201 = vpack.c.bf16 %v3171, %v3170
        %v3202 = vpack.c.bf16 %v3173, %v3172
        %v3203 = vpack.c.bf16 %v3175, %v3174
        %v3204 = vpack.c.bf16 %v3177, %v3176
        %v3205 = vpack.c.bf16 %v3179, %v3178
        %v3206 = vpack.c.bf16 %v3181, %v3180
        %v3207 = vpack.c.bf16 %v3183, %v3182
        %v3208 = vpack.c.bf16 %v3185, %v3184
        %v3209 = vpack.c.bf16 %v3187, %v3186
        %v3210 = vpack.c.bf16 %v3189, %v3188
        %v3211 = vpack.c.bf16 %v3191, %v3190
        %v3212 = vpack.c.bf16 %v3193, %v3192
        %v3213 = vpack.c.bf16 %v3195, %v3194
        %v3214 = vpack.c.bf16 %v3197, %v3196
        %v3215 = vpack.c.bf16 %v3199, %v3198
        %v3216 = vld [vmem:[%s3] sm:$0xf]
        %v3217 = vld [vmem:[%s3 + $0x4] sm:$0xf]
        %v3218 = vld [vmem:[#allocation3 + $0x1] sm:$0xff]
        %v3219 = vld [vmem:[#allocation3 + $0x9] sm:$0xff]
        %v3220 = vld [vmem:[#allocation3 + $0x19] sm:$0xff]
        %v3221 = vld [vmem:[#allocation3 + $0x21] sm:$0xff]
        %v3222 = vld [vmem:[#allocation3 + $0x31] sm:$0xff]
        %v3223 = vld [vmem:[#allocation3 + $0x39] sm:$0xff]
        %v3224 = vld [vmem:[#allocation3 + $0x49] sm:$0xff]
        %v3225 = vld [vmem:[#allocation3 + $0x51] sm:$0xff]
        %v3226 = vld [vmem:[#allocation3 + $0x61] sm:$0xff]
        %v3227 = vld [vmem:[#allocation3 + $0x69] sm:$0xff]
        %v3228 = vld [vmem:[#allocation3 + $0x79] sm:$0xff]
        %v3229 = vld [vmem:[#allocation3 + $0x81] sm:$0xff]
        %v3230 = vld [vmem:[#allocation3 + $0x91] sm:$0xff]
        %v3231 = vld [vmem:[#allocation3 + $0x99] sm:$0xff]
        %v3232 = vld [vmem:[#allocation3 + $0xa9] sm:$0xff]
        %v3233 = vld [vmem:[#allocation3 + $0xb1] sm:$0xff]
        %v3234 = vld [vmem:[#allocation3 + $0xc1] sm:$0xff]
        %v3235 = vld [vmem:[#allocation3 + $0xc9] sm:$0xff]
        %v3236 = vld [vmem:[#allocation3 + $0xd9] sm:$0xff]
        %v3237 = vld [vmem:[#allocation3 + $0xe1] sm:$0xff]
        %v3238 = vld [vmem:[#allocation3 + $0xf1] sm:$0xff]
        %v3239 = vld [vmem:[#allocation3 + $0xf9] sm:$0xff]
        %v3240 = vld [vmem:[#allocation3 + $0x109] sm:$0xff]
        %v3241 = vld [vmem:[#allocation3 + $0x111] sm:$0xff]
        %v3242 = vld [vmem:[#allocation3 + $0x121] sm:$0xff]
        %v3243 = vld [vmem:[#allocation3 + $0x129] sm:$0xff]
        %v3244 = vld [vmem:[#allocation3 + $0x139] sm:$0xff]
        %v3245 = vld [vmem:[#allocation3 + $0x141] sm:$0xff]
        %v3246 = vld [vmem:[#allocation3 + $0x151] sm:$0xff]
        %v3247 = vld [vmem:[#allocation3 + $0x159] sm:$0xff]
        %v3248 = vld [vmem:[#allocation3 + $0x169] sm:$0xff]
        %v3249 = vld [vmem:[#allocation3 + $0x171] sm:$0xff]
        %v3250 = vpack.c.bf16 %v3219, %v3218
        %v3251 = vpack.c.bf16 %v3221, %v3220
        %v3252 = vpack.c.bf16 %v3223, %v3222
        %v3253 = vpack.c.bf16 %v3225, %v3224
        %v3254 = vpack.c.bf16 %v3227, %v3226
        %v3255 = vpack.c.bf16 %v3229, %v3228
        %v3256 = vpack.c.bf16 %v3231, %v3230
        %v3257 = vpack.c.bf16 %v3233, %v3232
        %v3258 = vpack.c.bf16 %v3235, %v3234
        %v3259 = vpack.c.bf16 %v3237, %v3236
        %v3260 = vpack.c.bf16 %v3239, %v3238
        %v3261 = vpack.c.bf16 %v3241, %v3240
        %v3262 = vpack.c.bf16 %v3243, %v3242
        %v3263 = vpack.c.bf16 %v3245, %v3244
        %v3264 = vpack.c.bf16 %v3247, %v3246
        %v3265 = vpack.c.bf16 %v3249, %v3248
        %s3266 = scalar_lea.vmem %s3, 8
        %v3267 = vld [vmem:[%s3266] sm:$0xf]
        %v3268 = vld [vmem:[%s3266 + $0x4] sm:$0xf]
        %v3271 = vunpack.c.l.b16 %v3267
        %v3272 = vunpack.c.l.b16 %v3268
        %v3273 = vpack.c.b16 %v3272, %v3271
        %v3276 = vsel %vm3079, %v3250, 0
        %v3279 = vsel %vm3079, %v3251, 0
        %v3282 = vsel %vm3079, %v3252, 0
        %v3285 = vsel %vm3079, %v3253, 0
        %v3288 = vsel %vm3079, %v3254, 0
        %v3291 = vsel %vm3079, %v3255, 0
        %v3294 = vsel %vm3079, %v3256, 0
        %v3297 = vsel %vm3079, %v3257, 0
        %v3300 = vsel %vm3079, %v3258, 0
        %v3303 = vsel %vm3079, %v3259, 0
        %v3306 = vsel %vm3079, %v3260, 0
        %v3309 = vsel %vm3079, %v3261, 0
        %v3312 = vsel %vm3079, %v3262, 0
        %v3315 = vsel %vm3079, %v3263, 0
        %v3318 = vsel %vm3079, %v3264, 0
        %v3321 = vsel %vm3079, %v3265, 0
        %3323 = vmatprep.subr.bf16.mxu0 0
        %3324 = vmatpush1.bf16.msra.mxu0 %v3273
        %3325 = vmatprep.subr.bf16.mxu0 0
        %3326 = vmatpush1.bf16.msra.mxu0 0
        %3327 = vmatprep.subr.bf16.mxu0 0
        %3328 = vmatpush1.bf16.msra.mxu0 0
        %3329 = vmatprep.subr.bf16.mxu0 0
        %3330 = vmatpush1.bf16.msra.mxu0 0
        %3331 = vmatprep.subr.bf16.mxu0 0
        %3332 = vmatpush1.bf16.msra.mxu0 0
        %3333 = vmatprep.subr.bf16.mxu0 0
        %3334 = vmatpush1.bf16.msra.mxu0 0
        %3335 = vmatprep.subr.bf16.mxu0 0
        %3336 = vmatpush1.bf16.msra.mxu0 0
        %3337 = vmatprep.subr.bf16.mxu0 0
        %3338 = vmatpush1.bf16.msra.mxu0 0
        %3339 = vmatprep.subr.bf16.mxu0 0
        %3340 = vmatpush1.bf16.msra.mxu0 0
        %3341 = vmatprep.subr.bf16.mxu0 0
        %3342 = vmatpush1.bf16.msra.mxu0 0
        %3343 = vmatprep.subr.bf16.mxu0 0
        %3344 = vmatpush1.bf16.msra.mxu0 0
        %3345 = vmatprep.subr.bf16.mxu0 0
        %3346 = vmatpush1.bf16.msra.mxu0 0
        %3347 = vmatprep.subr.bf16.mxu0 0
        %3348 = vmatpush1.bf16.msra.mxu0 0
        %3349 = vmatprep.subr.bf16.mxu0 0
        %3350 = vmatpush1.bf16.msra.mxu0 0
        %3351 = vmatprep.subr.bf16.mxu0 0
        %3352 = vmatpush1.bf16.msra.mxu0 0
        %3353 = vmatprep.subr.bf16.mxu0 0
        %3354 = vmatpush1.bf16.msra.mxu0 0
        %3355 = vmatprep.mubr.bf16.mxu0 0
        %3356 = vmatmul.mubr.bf16.gmra.mrb[0].mxu0 %v3276
        %v3357 = vpop.f32.mrb[0].mxu0
        %v3358 = vadd.f32 0.0, %v3357
        %v3359 = vpop.f32.mrb[0].mxu0
        %v3360 = vpop.f32.mrb[0].mxu0
        %v3361 = vadd.f32 0.0, %v3360
        %v3362 = vpop.f32.mrb[0].mxu0
        %3363 = vmatprep.mubr.bf16.mxu0 0
        %3364 = vmatmul.mubr.bf16.gmra.mrb[0].mxu0 %v3279
        %v3365 = vpop.f32.mrb[0].mxu0
        %v3366 = vadd.f32 0.0, %v3365
        %v3367 = vpop.f32.mrb[0].mxu0
        %v3368 = vpop.f32.mrb[0].mxu0
        %v3369 = vadd.f32 0.0, %v3368
        %v3370 = vpop.f32.mrb[0].mxu0
        %3371 = vmatprep.mubr.bf16.mxu0 0
        %3372 = vmatmul.mubr.bf16.gmra.mrb[0].mxu0 %v3282
        %v3373 = vpop.f32.mrb[0].mxu0
        %v3374 = vadd.f32 0.0, %v3373
        %v3375 = vpop.f32.mrb[0].mxu0
        %v3376 = vpop.f32.mrb[0].mxu0
        %v3377 = vadd.f32 0.0, %v3376
        %v3378 = vpop.f32.mrb[0].mxu0
        %3379 = vmatprep.mubr.bf16.mxu0 0
        %3380 = vmatmul.mubr.bf16.gmra.mrb[0].mxu0 %v3285
        %v3381 = vpop.f32.mrb[0].mxu0
        %v3382 = vadd.f32 0.0, %v3381
        %v3383 = vpop.f32.mrb[0].mxu0
        %v3384 = vpop.f32.mrb[0].mxu0
        %v3385 = vadd.f32 0.0, %v3384
        %v3386 = vpop.f32.mrb[0].mxu0
        %3387 = vmatprep.mubr.bf16.mxu0 0
        %3388 = vmatmul.mubr.bf16.gmra.mrb[0].mxu0 %v3288
        %v3389 = vpop.f32.mrb[0].mxu0
        %v3390 = vadd.f32 0.0, %v3389
        %v3391 = vpop.f32.mrb[0].mxu0
        %v3392 = vpop.f32.mrb[0].mxu0
        %v3393 = vadd.f32 0.0, %v3392
        %v3394 = vpop.f32.mrb[0].mxu0
        %3395 = vmatprep.mubr.bf16.mxu0 0
        %3396 = vmatmul.mubr.bf16.gmra.mrb[0].mxu0 %v3291
        %v3397 = vpop.f32.mrb[0].mxu0
        %v3398 = vadd.f32 0.0, %v3397
        %v3399 = vpop.f32.mrb[0].mxu0
        %v3400 = vpop.f32.mrb[0].mxu0
        %v3401 = vadd.f32 0.0, %v3400
        %v3402 = vpop.f32.mrb[0].mxu0
        %3403 = vmatprep.mubr.bf16.mxu0 0
        %3404 = vmatmul.mubr.bf16.gmra.mrb[0].mxu0 %v3294
        %v3405 = vpop.f32.mrb[0].mxu0
        %v3406 = vadd.f32 0.0, %v3405
        %v3407 = vpop.f32.mrb[0].mxu0
        %v3408 = vpop.f32.mrb[0].mxu0
        %v3409 = vadd.f32 0.0, %v3408
        %v3410 = vpop.f32.mrb[0].mxu0
        %3411 = vmatprep.mubr.bf16.mxu0 0
        %3412 = vmatmul.mubr.bf16.gmra.mrb[0].mxu0 %v3297
        %v3413 = vpop.f32.mrb[0].mxu0
        %v3414 = vadd.f32 0.0, %v3413
        %v3415 = vpop.f32.mrb[0].mxu0
        %v3416 = vpop.f32.mrb[0].mxu0
        %v3417 = vadd.f32 0.0, %v3416
        %v3418 = vpop.f32.mrb[0].mxu0
        %3419 = vmatprep.mubr.bf16.mxu0 0
        %3420 = vmatmul.mubr.bf16.gmra.mrb[0].mxu0 %v3300
        %v3421 = vpop.f32.mrb[0].mxu0
        %v3422 = vadd.f32 0.0, %v3421
        %v3423 = vpop.f32.mrb[0].mxu0
        %v3424 = vpop.f32.mrb[0].mxu0
        %v3425 = vadd.f32 0.0, %v3424
        %v3426 = vpop.f32.mrb[0].mxu0
        %3427 = vmatprep.mubr.bf16.mxu0 0
        %3428 = vmatmul.mubr.bf16.gmra.mrb[0].mxu0 %v3303
        %v3429 = vpop.f32.mrb[0].mxu0
        %v3430 = vadd.f32 0.0, %v3429
        %v3431 = vpop.f32.mrb[0].mxu0
        %v3432 = vpop.f32.mrb[0].mxu0
        %v3433 = vadd.f32 0.0, %v3432
        %v3434 = vpop.f32.mrb[0].mxu0
        %3435 = vmatprep.mubr.bf16.mxu0 0
        %3436 = vmatmul.mubr.bf16.gmra.mrb[0].mxu0 %v3306
        %v3437 = vpop.f32.mrb[0].mxu0
        %v3438 = vadd.f32 0.0, %v3437
        %v3439 = vpop.f32.mrb[0].mxu0
        %v3440 = vpop.f32.mrb[0].mxu0
        %v3441 = vadd.f32 0.0, %v3440
        %v3442 = vpop.f32.mrb[0].mxu0
        %3443 = vmatprep.mubr.bf16.mxu0 0
        %3444 = vmatmul.mubr.bf16.gmra.mrb[0].mxu0 %v3309
        %v3445 = vpop.f32.mrb[0].mxu0
        %v3446 = vadd.f32 0.0, %v3445
        %v3447 = vpop.f32.mrb[0].mxu0
        %v3448 = vpop.f32.mrb[0].mxu0
        %v3449 = vadd.f32 0.0, %v3448
        %v3450 = vpop.f32.mrb[0].mxu0
        %3451 = vmatprep.mubr.bf16.mxu0 0
        %3452 = vmatmul.mubr.bf16.gmra.mrb[0].mxu0 %v3312
        %v3453 = vpop.f32.mrb[0].mxu0
        %v3454 = vadd.f32 0.0, %v3453
        %v3455 = vpop.f32.mrb[0].mxu0
        %v3456 = vpop.f32.mrb[0].mxu0
        %v3457 = vadd.f32 0.0, %v3456
        %v3458 = vpop.f32.mrb[0].mxu0
        %3459 = vmatprep.mubr.bf16.mxu0 0
        %3460 = vmatmul.mubr.bf16.gmra.mrb[0].mxu0 %v3315
        %v3461 = vpop.f32.mrb[0].mxu0
        %v3462 = vadd.f32 0.0, %v3461
        %v3463 = vpop.f32.mrb[0].mxu0
        %v3464 = vpop.f32.mrb[0].mxu0
        %v3465 = vadd.f32 0.0, %v3464
        %v3466 = vpop.f32.mrb[0].mxu0
        %3467 = vmatprep.mubr.bf16.mxu0 0
        %3468 = vmatmul.mubr.bf16.gmra.mrb[0].mxu0 %v3318
        %v3469 = vpop.f32.mrb[0].mxu0
        %v3470 = vadd.f32 0.0, %v3469
        %v3471 = vpop.f32.mrb[0].mxu0
        %v3472 = vpop.f32.mrb[0].mxu0
        %v3473 = vadd.f32 0.0, %v3472
        %v3474 = vpop.f32.mrb[0].mxu0
        %3475 = vmatprep.mubr.bf16.mxu0 0
        %3476 = vmatmul.mubr.bf16.gmra.mrb[0].mxu0 %v3321
        %v3477 = vpop.f32.mrb[0].mxu0
        %v3478 = vadd.f32 0.0, %v3477
        %v3479 = vpop.f32.mrb[0].mxu0
        %v3480 = vpop.f32.mrb[0].mxu0
        %v3481 = vadd.f32 0.0, %v3480
        %v3482 = vpop.f32.mrb[0].mxu0
        %3483 = vdwg.mxu0
        %v3486 = vunpack.c.l.b16 %v3216
        %v3487 = vunpack.c.l.b16 %v3217
        %v3488 = vpack.c.b16 %v3487, %v3486
        %v3491 = vsel %vm3079, %v3200, 0
        %v3494 = vsel %vm3079, %v3201, 0
        %v3497 = vsel %vm3079, %v3202, 0
        %v3500 = vsel %vm3079, %v3203, 0
        %v3503 = vsel %vm3079, %v3204, 0
        %v3506 = vsel %vm3079, %v3205, 0
        %v3509 = vsel %vm3079, %v3206, 0
        %v3512 = vsel %vm3079, %v3207, 0
        %v3515 = vsel %vm3079, %v3208, 0
        %v3518 = vsel %vm3079, %v3209, 0
        %v3521 = vsel %vm3079, %v3210, 0
        %v3524 = vsel %vm3079, %v3211, 0
        %v3527 = vsel %vm3079, %v3212, 0
        %v3530 = vsel %vm3079, %v3213, 0
        %v3533 = vsel %vm3079, %v3214, 0
        %v3536 = vsel %vm3079, %v3215, 0
        %3538 = vmatprep.subr.bf16.mxu0 0
        %3539 = vmatpush1.bf16.msra.mxu0 %v3488
        %3540 = vmatprep.subr.bf16.mxu0 0
        %3541 = vmatpush1.bf16.msra.mxu0 0
        %3542 = vmatprep.subr.bf16.mxu0 0
        %3543 = vmatpush1.bf16.msra.mxu0 0
        %3544 = vmatprep.subr.bf16.mxu0 0
        %3545 = vmatpush1.bf16.msra.mxu0 0
        %3546 = vmatprep.subr.bf16.mxu0 0
        %3547 = vmatpush1.bf16.msra.mxu0 0
        %3548 = vmatprep.subr.bf16.mxu0 0
        %3549 = vmatpush1.bf16.msra.mxu0 0
        %3550 = vmatprep.subr.bf16.mxu0 0
        %3551 = vmatpush1.bf16.msra.mxu0 0
        %3552 = vmatprep.subr.bf16.mxu0 0
        %3553 = vmatpush1.bf16.msra.mxu0 0
        %3554 = vmatprep.subr.bf16.mxu0 0
        %3555 = vmatpush1.bf16.msra.mxu0 0
        %3556 = vmatprep.subr.bf16.mxu0 0
        %3557 = vmatpush1.bf16.msra.mxu0 0
        %3558 = vmatprep.subr.bf16.mxu0 0
        %3559 = vmatpush1.bf16.msra.mxu0 0
        %3560 = vmatprep.subr.bf16.mxu0 0
        %3561 = vmatpush1.bf16.msra.mxu0 0
        %3562 = vmatprep.subr.bf16.mxu0 0
        %3563 = vmatpush1.bf16.msra.mxu0 0
        %3564 = vmatprep.subr.bf16.mxu0 0
        %3565 = vmatpush1.bf16.msra.mxu0 0
        %3566 = vmatprep.subr.bf16.mxu0 0
        %3567 = vmatpush1.bf16.msra.mxu0 0
        %3568 = vmatprep.subr.bf16.mxu0 0
        %3569 = vmatpush1.bf16.msra.mxu0 0
        %3570 = vmatprep.mubr.bf16.mxu0 0
        %3571 = vmatmul.mubr.bf16.gmra.mrb[0].mxu0 %v3491
        %v3572 = vpop.f32.mrb[0].mxu0
        %v3573 = vadd.f32 %v3358, %v3572
        %v3574 = vpop.f32.mrb[0].mxu0
        %v3575 = vpop.f32.mrb[0].mxu0
        %v3576 = vadd.f32 %v3361, %v3575
        %v3577 = vpop.f32.mrb[0].mxu0
        %3578 = vmatprep.mubr.bf16.mxu0 0
        %3579 = vmatmul.mubr.bf16.gmra.mrb[0].mxu0 %v3494
        %v3580 = vpop.f32.mrb[0].mxu0
        %v3581 = vadd.f32 %v3366, %v3580
        %v3582 = vpop.f32.mrb[0].mxu0
        %v3583 = vpop.f32.mrb[0].mxu0
        %v3584 = vadd.f32 %v3369, %v3583
        %v3585 = vpop.f32.mrb[0].mxu0
        %3586 = vmatprep.mubr.bf16.mxu0 0
        %3587 = vmatmul.mubr.bf16.gmra.mrb[0].mxu0 %v3497
        %v3588 = vpop.f32.mrb[0].mxu0
        %v3589 = vadd.f32 %v3374, %v3588
        %v3590 = vpop.f32.mrb[0].mxu0
        %v3591 = vpop.f32.mrb[0].mxu0
        %v3592 = vadd.f32 %v3377, %v3591
        %v3593 = vpop.f32.mrb[0].mxu0
        %3594 = vmatprep.mubr.bf16.mxu0 0
        %3595 = vmatmul.mubr.bf16.gmra.mrb[0].mxu0 %v3500
        %v3596 = vpop.f32.mrb[0].mxu0
        %v3597 = vadd.f32 %v3382, %v3596
        %v3598 = vpop.f32.mrb[0].mxu0
        %v3599 = vpop.f32.mrb[0].mxu0
        %v3600 = vadd.f32 %v3385, %v3599
        %v3601 = vpop.f32.mrb[0].mxu0
        %3602 = vmatprep.mubr.bf16.mxu0 0
        %3603 = vmatmul.mubr.bf16.gmra.mrb[0].mxu0 %v3503
        %v3604 = vpop.f32.mrb[0].mxu0
        %v3605 = vadd.f32 %v3390, %v3604
        %v3606 = vpop.f32.mrb[0].mxu0
        %v3607 = vpop.f32.mrb[0].mxu0
        %v3608 = vadd.f32 %v3393, %v3607
        %v3609 = vpop.f32.mrb[0].mxu0
        %3610 = vmatprep.mubr.bf16.mxu0 0
        %3611 = vmatmul.mubr.bf16.gmra.mrb[0].mxu0 %v3506
        %v3612 = vpop.f32.mrb[0].mxu0
        %v3613 = vadd.f32 %v3398, %v3612
        %v3614 = vpop.f32.mrb[0].mxu0
        %v3615 = vpop.f32.mrb[0].mxu0
        %v3616 = vadd.f32 %v3401, %v3615
        %v3617 = vpop.f32.mrb[0].mxu0
        %3618 = vmatprep.mubr.bf16.mxu0 0
        %3619 = vmatmul.mubr.bf16.gmra.mrb[0].mxu0 %v3509
        %v3620 = vpop.f32.mrb[0].mxu0
        %v3621 = vadd.f32 %v3406, %v3620
        %v3622 = vpop.f32.mrb[0].mxu0
        %v3623 = vpop.f32.mrb[0].mxu0
        %v3624 = vadd.f32 %v3409, %v3623
        %v3625 = vpop.f32.mrb[0].mxu0
        %3626 = vmatprep.mubr.bf16.mxu0 0
        %3627 = vmatmul.mubr.bf16.gmra.mrb[0].mxu0 %v3512
        %v3628 = vpop.f32.mrb[0].mxu0
        %v3629 = vadd.f32 %v3414, %v3628
        %v3630 = vpop.f32.mrb[0].mxu0
        %v3631 = vpop.f32.mrb[0].mxu0
        %v3632 = vadd.f32 %v3417, %v3631
        %v3633 = vpop.f32.mrb[0].mxu0
        %3634 = vmatprep.mubr.bf16.mxu0 0
        %3635 = vmatmul.mubr.bf16.gmra.mrb[0].mxu0 %v3515
        %v3636 = vpop.f32.mrb[0].mxu0
        %v3637 = vadd.f32 %v3422, %v3636
        %v3638 = vpop.f32.mrb[0].mxu0
        %v3639 = vpop.f32.mrb[0].mxu0
        %v3640 = vadd.f32 %v3425, %v3639
        %v3641 = vpop.f32.mrb[0].mxu0
        %3642 = vmatprep.mubr.bf16.mxu0 0
        %3643 = vmatmul.mubr.bf16.gmra.mrb[0].mxu0 %v3518
        %v3644 = vpop.f32.mrb[0].mxu0
        %v3645 = vadd.f32 %v3430, %v3644
        %v3646 = vpop.f32.mrb[0].mxu0
        %v3647 = vpop.f32.mrb[0].mxu0
        %v3648 = vadd.f32 %v3433, %v3647
        %v3649 = vpop.f32.mrb[0].mxu0
        %3650 = vmatprep.mubr.bf16.mxu0 0
        %3651 = vmatmul.mubr.bf16.gmra.mrb[0].mxu0 %v3521
        %v3652 = vpop.f32.mrb[0].mxu0
        %v3653 = vadd.f32 %v3438, %v3652
        %v3654 = vpop.f32.mrb[0].mxu0
        %v3655 = vpop.f32.mrb[0].mxu0
        %v3656 = vadd.f32 %v3441, %v3655
        %v3657 = vpop.f32.mrb[0].mxu0
        %3658 = vmatprep.mubr.bf16.mxu0 0
        %3659 = vmatmul.mubr.bf16.gmra.mrb[0].mxu0 %v3524
        %v3660 = vpop.f32.mrb[0].mxu0
        %v3661 = vadd.f32 %v3446, %v3660
        %v3662 = vpop.f32.mrb[0].mxu0
        %v3663 = vpop.f32.mrb[0].mxu0
        %v3664 = vadd.f32 %v3449, %v3663
        %v3665 = vpop.f32.mrb[0].mxu0
        %3666 = vmatprep.mubr.bf16.mxu0 0
        %3667 = vmatmul.mubr.bf16.gmra.mrb[0].mxu0 %v3527
        %v3668 = vpop.f32.mrb[0].mxu0
        %v3669 = vadd.f32 %v3454, %v3668
        %v3670 = vpop.f32.mrb[0].mxu0
        %v3671 = vpop.f32.mrb[0].mxu0
        %v3672 = vadd.f32 %v3457, %v3671
        %v3673 = vpop.f32.mrb[0].mxu0
        %3674 = vmatprep.mubr.bf16.mxu0 0
        %3675 = vmatmul.mubr.bf16.gmra.mrb[0].mxu0 %v3530
        %v3676 = vpop.f32.mrb[0].mxu0
        %v3677 = vadd.f32 %v3462, %v3676
        %v3678 = vpop.f32.mrb[0].mxu0
        %v3679 = vpop.f32.mrb[0].mxu0
        %v3680 = vadd.f32 %v3465, %v3679
        %v3681 = vpop.f32.mrb[0].mxu0
        %3682 = vmatprep.mubr.bf16.mxu0 0
        %3683 = vmatmul.mubr.bf16.gmra.mrb[0].mxu0 %v3533
        %v3684 = vpop.f32.mrb[0].mxu0
        %v3685 = vadd.f32 %v3470, %v3684
        %v3686 = vpop.f32.mrb[0].mxu0
        %v3687 = vpop.f32.mrb[0].mxu0
        %v3688 = vadd.f32 %v3473, %v3687
        %v3689 = vpop.f32.mrb[0].mxu0
        %3690 = vmatprep.mubr.bf16.mxu0 0
        %3691 = vmatmul.mubr.bf16.gmra.mrb[0].mxu0 %v3536
        %v3692 = vpop.f32.mrb[0].mxu0
        %v3693 = vadd.f32 %v3478, %v3692
        %v3694 = vpop.f32.mrb[0].mxu0
        %v3695 = vpop.f32.mrb[0].mxu0
        %v3696 = vadd.f32 %v3481, %v3695
        %v3697 = vpop.f32.mrb[0].mxu0
        %3698 = vdwg.mxu0
        %v3699 = vld [vmem:[#allocation3 + $0x2] sm:$0xff]
        %v3700 = vld [vmem:[#allocation3 + $0xa] sm:$0xff]
        %v3701 = vld [vmem:[#allocation3 + $0x1a] sm:$0xff]
        %v3702 = vld [vmem:[#allocation3 + $0x22] sm:$0xff]
        %v3703 = vld [vmem:[#allocation3 + $0x32] sm:$0xff]
        %v3704 = vld [vmem:[#allocation3 + $0x3a] sm:$0xff]
        %v3705 = vld [vmem:[#allocation3 + $0x4a] sm:$0xff]
        %v3706 = vld [vmem:[#allocation3 + $0x52] sm:$0xff]
        %v3707 = vld [vmem:[#allocation3 + $0x62] sm:$0xff]
        %v3708 = vld [vmem:[#allocation3 + $0x6a] sm:$0xff]
        %v3709 = vld [vmem:[#allocation3 + $0x7a] sm:$0xff]
        %v3710 = vld [vmem:[#allocation3 + $0x82] sm:$0xff]
        %v3711 = vld [vmem:[#allocation3 + $0x92] sm:$0xff]
        %v3712 = vld [vmem:[#allocation3 + $0x9a] sm:$0xff]
        %v3713 = vld [vmem:[#allocation3 + $0xaa] sm:$0xff]
        %v3714 = vld [vmem:[#allocation3 + $0xb2] sm:$0xff]
        %v3715 = vld [vmem:[#allocation3 + $0xc2] sm:$0xff]
        %v3716 = vld [vmem:[#allocation3 + $0xca] sm:$0xff]
        %v3717 = vld [vmem:[#allocation3 + $0xda] sm:$0xff]
        %v3718 = vld [vmem:[#allocation3 + $0xe2] sm:$0xff]
        %v3719 = vld [vmem:[#allocation3 + $0xf2] sm:$0xff]
        %v3720 = vld [vmem:[#allocation3 + $0xfa] sm:$0xff]
        %v3721 = vld [vmem:[#allocation3 + $0x10a] sm:$0xff]
        %v3722 = vld [vmem:[#allocation3 + $0x112] sm:$0xff]
        %v3723 = vld [vmem:[#allocation3 + $0x122] sm:$0xff]
        %v3724 = vld [vmem:[#allocation3 + $0x12a] sm:$0xff]
        %v3725 = vld [vmem:[#allocation3 + $0x13a] sm:$0xff]
        %v3726 = vld [vmem:[#allocation3 + $0x142] sm:$0xff]
        %v3727 = vld [vmem:[#allocation3 + $0x152] sm:$0xff]
        %v3728 = vld [vmem:[#allocation3 + $0x15a] sm:$0xff]
        %v3729 = vld [vmem:[#allocation3 + $0x16a] sm:$0xff]
        %v3730 = vld [vmem:[#allocation3 + $0x172] sm:$0xff]
        %v3731 = vpack.c.bf16 %v3700, %v3699
        %v3732 = vpack.c.bf16 %v3702, %v3701
        %v3733 = vpack.c.bf16 %v3704, %v3703
        %v3734 = vpack.c.bf16 %v3706, %v3705
        %v3735 = vpack.c.bf16 %v3708, %v3707
        %v3736 = vpack.c.bf16 %v3710, %v3709
        %v3737 = vpack.c.bf16 %v3712, %v3711
        %v3738 = vpack.c.bf16 %v3714, %v3713
        %v3739 = vpack.c.bf16 %v3716, %v3715
        %v3740 = vpack.c.bf16 %v3718, %v3717
        %v3741 = vpack.c.bf16 %v3720, %v3719
        %v3742 = vpack.c.bf16 %v3722, %v3721
        %v3743 = vpack.c.bf16 %v3724, %v3723
        %v3744 = vpack.c.bf16 %v3726, %v3725
        %v3745 = vpack.c.bf16 %v3728, %v3727
        %v3746 = vpack.c.bf16 %v3730, %v3729
        %s3747 = scalar_lea.vmem %s3, 16
        %v3748 = vld [vmem:[%s3747] sm:$0xf]
        %v3749 = vld [vmem:[%s3747 + $0x4] sm:$0xf]
        %v3752 = vunpack.c.l.b16 %v3748
        %v3753 = vunpack.c.l.b16 %v3749
        %v3754 = vpack.c.b16 %v3753, %v3752
        %v3757 = vsel %vm3079, %v3731, 0
        %v3760 = vsel %vm3079, %v3732, 0
        %v3763 = vsel %vm3079, %v3733, 0
        %v3766 = vsel %vm3079, %v3734, 0
        %v3769 = vsel %vm3079, %v3735, 0
        %v3772 = vsel %vm3079, %v3736, 0
        %v3775 = vsel %vm3079, %v3737, 0
        %v3778 = vsel %vm3079, %v3738, 0
        %v3781 = vsel %vm3079, %v3739, 0
        %v3784 = vsel %vm3079, %v3740, 0
        %v3787 = vsel %vm3079, %v3741, 0
        %v3790 = vsel %vm3079, %v3742, 0
        %v3793 = vsel %vm3079, %v3743, 0
        %v3796 = vsel %vm3079, %v3744, 0
        %v3799 = vsel %vm3079, %v3745, 0
        %v3802 = vsel %vm3079, %v3746, 0
        %3804 = vmatprep.subr.bf16.mxu0 0
        %3805 = vmatpush1.bf16.msra.mxu0 %v3754
        %3806 = vmatprep.subr.bf16.mxu0 0
        %3807 = vmatpush1.bf16.msra.mxu0 0
        %3808 = vmatprep.subr.bf16.mxu0 0
        %3809 = vmatpush1.bf16.msra.mxu0 0
        %3810 = vmatprep.subr.bf16.mxu0 0
        %3811 = vmatpush1.bf16.msra.mxu0 0
        %3812 = vmatprep.subr.bf16.mxu0 0
        %3813 = vmatpush1.bf16.msra.mxu0 0
        %3814 = vmatprep.subr.bf16.mxu0 0
        %3815 = vmatpush1.bf16.msra.mxu0 0
        %3816 = vmatprep.subr.bf16.mxu0 0
        %3817 = vmatpush1.bf16.msra.mxu0 0
        %3818 = vmatprep.subr.bf16.mxu0 0
        %3819 = vmatpush1.bf16.msra.mxu0 0
        %3820 = vmatprep.subr.bf16.mxu0 0
        %3821 = vmatpush1.bf16.msra.mxu0 0
        %3822 = vmatprep.subr.bf16.mxu0 0
        %3823 = vmatpush1.bf16.msra.mxu0 0
        %3824 = vmatprep.subr.bf16.mxu0 0
        %3825 = vmatpush1.bf16.msra.mxu0 0
        %3826 = vmatprep.subr.bf16.mxu0 0
        %3827 = vmatpush1.bf16.msra.mxu0 0
        %3828 = vmatprep.subr.bf16.mxu0 0
        %3829 = vmatpush1.bf16.msra.mxu0 0
        %3830 = vmatprep.subr.bf16.mxu0 0
        %3831 = vmatpush1.bf16.msra.mxu0 0
        %3832 = vmatprep.subr.bf16.mxu0 0
        %3833 = vmatpush1.bf16.msra.mxu0 0
        %3834 = vmatprep.subr.bf16.mxu0 0
        %3835 = vmatpush1.bf16.msra.mxu0 0
        %3836 = vmatprep.mubr.bf16.mxu0 0
        %3837 = vmatmul.mubr.bf16.gmra.mrb[0].mxu0 %v3757
        %v3838 = vpop.f32.mrb[0].mxu0
        %v3839 = vadd.f32 0.0, %v3838
        %v3840 = vpop.f32.mrb[0].mxu0
        %v3841 = vpop.f32.mrb[0].mxu0
        %v3842 = vadd.f32 0.0, %v3841
        %v3843 = vpop.f32.mrb[0].mxu0
        %3844 = vmatprep.mubr.bf16.mxu0 0
        %3845 = vmatmul.mubr.bf16.gmra.mrb[0].mxu0 %v3760
        %v3846 = vpop.f32.mrb[0].mxu0
        %v3847 = vadd.f32 0.0, %v3846
        %v3848 = vpop.f32.mrb[0].mxu0
        %v3849 = vpop.f32.mrb[0].mxu0
        %v3850 = vadd.f32 0.0, %v3849
        %v3851 = vpop.f32.mrb[0].mxu0
        %3852 = vmatprep.mubr.bf16.mxu0 0
        %3853 = vmatmul.mubr.bf16.gmra.mrb[0].mxu0 %v3763
        %v3854 = vpop.f32.mrb[0].mxu0
        %v3855 = vadd.f32 0.0, %v3854
        %v3856 = vpop.f32.mrb[0].mxu0
        %v3857 = vpop.f32.mrb[0].mxu0
        %v3858 = vadd.f32 0.0, %v3857
        %v3859 = vpop.f32.mrb[0].mxu0
        %3860 = vmatprep.mubr.bf16.mxu0 0
        %3861 = vmatmul.mubr.bf16.gmra.mrb[0].mxu0 %v3766
        %v3862 = vpop.f32.mrb[0].mxu0
        %v3863 = vadd.f32 0.0, %v3862
        %v3864 = vpop.f32.mrb[0].mxu0
        %v3865 = vpop.f32.mrb[0].mxu0
        %v3866 = vadd.f32 0.0, %v3865
        %v3867 = vpop.f32.mrb[0].mxu0
        %3868 = vmatprep.mubr.bf16.mxu0 0
        %3869 = vmatmul.mubr.bf16.gmra.mrb[0].mxu0 %v3769
        %v3870 = vpop.f32.mrb[0].mxu0
        %v3871 = vadd.f32 0.0, %v3870
        %v3872 = vpop.f32.mrb[0].mxu0
        %v3873 = vpop.f32.mrb[0].mxu0
        %v3874 = vadd.f32 0.0, %v3873
        %v3875 = vpop.f32.mrb[0].mxu0
        %3876 = vmatprep.mubr.bf16.mxu0 0
        %3877 = vmatmul.mubr.bf16.gmra.mrb[0].mxu0 %v3772
        %v3878 = vpop.f32.mrb[0].mxu0
        %v3879 = vadd.f32 0.0, %v3878
        %v3880 = vpop.f32.mrb[0].mxu0
        %v3881 = vpop.f32.mrb[0].mxu0
        %v3882 = vadd.f32 0.0, %v3881
        %v3883 = vpop.f32.mrb[0].mxu0
        %3884 = vmatprep.mubr.bf16.mxu0 0
        %3885 = vmatmul.mubr.bf16.gmra.mrb[0].mxu0 %v3775
        %v3886 = vpop.f32.mrb[0].mxu0
        %v3887 = vadd.f32 0.0, %v3886
        %v3888 = vpop.f32.mrb[0].mxu0
        %v3889 = vpop.f32.mrb[0].mxu0
        %v3890 = vadd.f32 0.0, %v3889
        %v3891 = vpop.f32.mrb[0].mxu0
        %3892 = vmatprep.mubr.bf16.mxu0 0
        %3893 = vmatmul.mubr.bf16.gmra.mrb[0].mxu0 %v3778
        %v3894 = vpop.f32.mrb[0].mxu0
        %v3895 = vadd.f32 0.0, %v3894
        %v3896 = vpop.f32.mrb[0].mxu0
        %v3897 = vpop.f32.mrb[0].mxu0
        %v3898 = vadd.f32 0.0, %v3897
        %v3899 = vpop.f32.mrb[0].mxu0
        %3900 = vmatprep.mubr.bf16.mxu0 0
        %3901 = vmatmul.mubr.bf16.gmra.mrb[0].mxu0 %v3781
        %v3902 = vpop.f32.mrb[0].mxu0
        %v3903 = vadd.f32 0.0, %v3902
        %v3904 = vpop.f32.mrb[0].mxu0
        %v3905 = vpop.f32.mrb[0].mxu0
        %v3906 = vadd.f32 0.0, %v3905
        %v3907 = vpop.f32.mrb[0].mxu0
        %3908 = vmatprep.mubr.bf16.mxu0 0
        %3909 = vmatmul.mubr.bf16.gmra.mrb[0].mxu0 %v3784
        %v3910 = vpop.f32.mrb[0].mxu0
        %v3911 = vadd.f32 0.0, %v3910
        %v3912 = vpop.f32.mrb[0].mxu0
        %v3913 = vpop.f32.mrb[0].mxu0
        %v3914 = vadd.f32 0.0, %v3913
        %v3915 = vpop.f32.mrb[0].mxu0
        %3916 = vmatprep.mubr.bf16.mxu0 0
        %3917 = vmatmul.mubr.bf16.gmra.mrb[0].mxu0 %v3787
        %v3918 = vpop.f32.mrb[0].mxu0
        %v3919 = vadd.f32 0.0, %v3918
        %v3920 = vpop.f32.mrb[0].mxu0
        %v3921 = vpop.f32.mrb[0].mxu0
        %v3922 = vadd.f32 0.0, %v3921
        %v3923 = vpop.f32.mrb[0].mxu0
        %3924 = vmatprep.mubr.bf16.mxu0 0
        %3925 = vmatmul.mubr.bf16.gmra.mrb[0].mxu0 %v3790
        %v3926 = vpop.f32.mrb[0].mxu0
        %v3927 = vadd.f32 0.0, %v3926
        %v3928 = vpop.f32.mrb[0].mxu0
        %v3929 = vpop.f32.mrb[0].mxu0
        %v3930 = vadd.f32 0.0, %v3929
        %v3931 = vpop.f32.mrb[0].mxu0
        %3932 = vmatprep.mubr.bf16.mxu0 0
        %3933 = vmatmul.mubr.bf16.gmra.mrb[0].mxu0 %v3793
        %v3934 = vpop.f32.mrb[0].mxu0
        %v3935 = vadd.f32 0.0, %v3934
        %v3936 = vpop.f32.mrb[0].mxu0
        %v3937 = vpop.f32.mrb[0].mxu0
        %v3938 = vadd.f32 0.0, %v3937
        %v3939 = vpop.f32.mrb[0].mxu0
        %3940 = vmatprep.mubr.bf16.mxu0 0
        %3941 = vmatmul.mubr.bf16.gmra.mrb[0].mxu0 %v3796
        %v3942 = vpop.f32.mrb[0].mxu0
        %v3943 = vadd.f32 0.0, %v3942
        %v3944 = vpop.f32.mrb[0].mxu0
        %v3945 = vpop.f32.mrb[0].mxu0
        %v3946 = vadd.f32 0.0, %v3945
        %v3947 = vpop.f32.mrb[0].mxu0
        %3948 = vmatprep.mubr.bf16.mxu0 0
        %3949 = vmatmul.mubr.bf16.gmra.mrb[0].mxu0 %v3799
        %v3950 = vpop.f32.mrb[0].mxu0
        %v3951 = vadd.f32 0.0, %v3950
        %v3952 = vpop.f32.mrb[0].mxu0
        %v3953 = vpop.f32.mrb[0].mxu0
        %v3954 = vadd.f32 0.0, %v3953
        %v3955 = vpop.f32.mrb[0].mxu0
        %3956 = vmatprep.mubr.bf16.mxu0 0
        %3957 = vmatmul.mubr.bf16.gmra.mrb[0].mxu0 %v3802
        %v3958 = vpop.f32.mrb[0].mxu0
        %v3959 = vadd.f32 0.0, %v3958
        %v3960 = vpop.f32.mrb[0].mxu0
        %v3961 = vpop.f32.mrb[0].mxu0
        %v3962 = vadd.f32 0.0, %v3961
        %v3963 = vpop.f32.mrb[0].mxu0
        %3964 = vdwg.mxu0
        %v3965 = vadd.f32 %v3573, %v3839
        %v3966 = vadd.f32 %v3576, %v3842
        %v3967 = vadd.f32 %v3581, %v3847
        %v3968 = vadd.f32 %v3584, %v3850
        %v3969 = vadd.f32 %v3589, %v3855
        %v3970 = vadd.f32 %v3592, %v3858
        %v3971 = vadd.f32 %v3597, %v3863
        %v3972 = vadd.f32 %v3600, %v3866
        %v3973 = vadd.f32 %v3605, %v3871
        %v3974 = vadd.f32 %v3608, %v3874
        %v3975 = vadd.f32 %v3613, %v3879
        %v3976 = vadd.f32 %v3616, %v3882
        %v3977 = vadd.f32 %v3621, %v3887
        %v3978 = vadd.f32 %v3624, %v3890
        %v3979 = vadd.f32 %v3629, %v3895
        %v3980 = vadd.f32 %v3632, %v3898
        %v3981 = vadd.f32 %v3637, %v3903
        %v3982 = vadd.f32 %v3640, %v3906
        %v3983 = vadd.f32 %v3645, %v3911
        %v3984 = vadd.f32 %v3648, %v3914
        %v3985 = vadd.f32 %v3653, %v3919
        %v3986 = vadd.f32 %v3656, %v3922
        %v3987 = vadd.f32 %v3661, %v3927
        %v3988 = vadd.f32 %v3664, %v3930
        %v3989 = vadd.f32 %v3669, %v3935
        %v3990 = vadd.f32 %v3672, %v3938
        %v3991 = vadd.f32 %v3677, %v3943
        %v3992 = vadd.f32 %v3680, %v3946
        %v3993 = vadd.f32 %v3685, %v3951
        %v3994 = vadd.f32 %v3688, %v3954
        %v3995 = vadd.f32 %v3693, %v3959
        %v3996 = vadd.f32 %v3696, %v3962
        %v3997 = vld [vmem:[%s3135] sm:$0xff]
        %v3998 = vld [vmem:[%s3135 + $0x8] sm:$0xff]
        %v3999 = vld [vmem:[%s3135 + $0x18] sm:$0xff]
        %v4000 = vld [vmem:[%s3135 + $0x20] sm:$0xff]
        %v4001 = vld [vmem:[%s3135 + $0x30] sm:$0xff]
        %v4002 = vld [vmem:[%s3135 + $0x38] sm:$0xff]
        %v4003 = vld [vmem:[%s3135 + $0x48] sm:$0xff]
        %v4004 = vld [vmem:[%s3135 + $0x50] sm:$0xff]
        %v4005 = vld [vmem:[%s3135 + $0x60] sm:$0xff]
        %v4006 = vld [vmem:[%s3135 + $0x68] sm:$0xff]
        %v4007 = vld [vmem:[%s3135 + $0x78] sm:$0xff]
        %v4008 = vld [vmem:[%s3135 + $0x80] sm:$0xff]
        %v4009 = vld [vmem:[%s3135 + $0x90] sm:$0xff]
        %v4010 = vld [vmem:[%s3135 + $0x98] sm:$0xff]
        %v4011 = vld [vmem:[%s3135 + $0xa8] sm:$0xff]
        %v4012 = vld [vmem:[%s3135 + $0xb0] sm:$0xff]
        %v4013 = vld [vmem:[%s3135 + $0xc0] sm:$0xff]
        %v4014 = vld [vmem:[%s3135 + $0xc8] sm:$0xff]
        %v4015 = vld [vmem:[%s3135 + $0xd8] sm:$0xff]
        %v4016 = vld [vmem:[%s3135 + $0xe0] sm:$0xff]
        %v4017 = vld [vmem:[%s3135 + $0xf0] sm:$0xff]
        %v4018 = vld [vmem:[%s3135 + $0xf8] sm:$0xff]
        %v4019 = vld [vmem:[%s3135 + $0x108] sm:$0xff]
        %v4020 = vld [vmem:[%s3135 + $0x110] sm:$0xff]
        %v4021 = vld [vmem:[%s3135 + $0x120] sm:$0xff]
        %v4022 = vld [vmem:[%s3135 + $0x128] sm:$0xff]
        %v4023 = vld [vmem:[%s3135 + $0x138] sm:$0xff]
        %v4024 = vld [vmem:[%s3135 + $0x140] sm:$0xff]
        %v4025 = vld [vmem:[%s3135 + $0x150] sm:$0xff]
        %v4026 = vld [vmem:[%s3135 + $0x158] sm:$0xff]
        %v4027 = vld [vmem:[%s3135 + $0x168] sm:$0xff]
        %v4028 = vld [vmem:[%s3135 + $0x170] sm:$0xff]
        %v4029 = vpack.c.bf16 %v3998, %v3997
        %v4030 = vpack.c.bf16 %v4000, %v3999
        %v4031 = vpack.c.bf16 %v4002, %v4001
        %v4032 = vpack.c.bf16 %v4004, %v4003
        %v4033 = vpack.c.bf16 %v4006, %v4005
        %v4034 = vpack.c.bf16 %v4008, %v4007
        %v4035 = vpack.c.bf16 %v4010, %v4009
        %v4036 = vpack.c.bf16 %v4012, %v4011
        %v4037 = vpack.c.bf16 %v4014, %v4013
        %v4038 = vpack.c.bf16 %v4016, %v4015
        %v4039 = vpack.c.bf16 %v4018, %v4017
        %v4040 = vpack.c.bf16 %v4020, %v4019
        %v4041 = vpack.c.bf16 %v4022, %v4021
        %v4042 = vpack.c.bf16 %v4024, %v4023
        %v4043 = vpack.c.bf16 %v4026, %v4025
        %v4044 = vpack.c.bf16 %v4028, %v4027
        %s4045 = scalar_lea.vmem %s3, 24
        %v4046 = vld [vmem:[%s4045] sm:$0xf]
        %v4047 = vld [vmem:[%s4045 + $0x4] sm:$0xf]
        %v4050 = vunpack.c.l.b16 %v4046
        %v4051 = vunpack.c.l.b16 %v4047
        %v4052 = vpack.c.b16 %v4051, %v4050
        %v4055 = vsel %vm3079, %v4029, 0
        %v4058 = vsel %vm3079, %v4030, 0
        %v4061 = vsel %vm3079, %v4031, 0
        %v4064 = vsel %vm3079, %v4032, 0
        %v4067 = vsel %vm3079, %v4033, 0
        %v4070 = vsel %vm3079, %v4034, 0
        %v4073 = vsel %vm3079, %v4035, 0
        %v4076 = vsel %vm3079, %v4036, 0
        %v4079 = vsel %vm3079, %v4037, 0
        %v4082 = vsel %vm3079, %v4038, 0
        %v4085 = vsel %vm3079, %v4039, 0
        %v4088 = vsel %vm3079, %v4040, 0
        %v4091 = vsel %vm3079, %v4041, 0
        %v4094 = vsel %vm3079, %v4042, 0
        %v4097 = vsel %vm3079, %v4043, 0
        %v4100 = vsel %vm3079, %v4044, 0
        %4102 = vmatprep.subr.bf16.mxu0 0
        %4103 = vmatpush1.bf16.msra.mxu0 %v4052
        %4104 = vmatprep.subr.bf16.mxu0 0
        %4105 = vmatpush1.bf16.msra.mxu0 0
        %4106 = vmatprep.subr.bf16.mxu0 0
        %4107 = vmatpush1.bf16.msra.mxu0 0
        %4108 = vmatprep.subr.bf16.mxu0 0
        %4109 = vmatpush1.bf16.msra.mxu0 0
        %4110 = vmatprep.subr.bf16.mxu0 0
        %4111 = vmatpush1.bf16.msra.mxu0 0
        %4112 = vmatprep.subr.bf16.mxu0 0
        %4113 = vmatpush1.bf16.msra.mxu0 0
        %4114 = vmatprep.subr.bf16.mxu0 0
        %4115 = vmatpush1.bf16.msra.mxu0 0
        %4116 = vmatprep.subr.bf16.mxu0 0
        %4117 = vmatpush1.bf16.msra.mxu0 0
        %4118 = vmatprep.subr.bf16.mxu0 0
        %4119 = vmatpush1.bf16.msra.mxu0 0
        %4120 = vmatprep.subr.bf16.mxu0 0
        %4121 = vmatpush1.bf16.msra.mxu0 0
        %4122 = vmatprep.subr.bf16.mxu0 0
        %4123 = vmatpush1.bf16.msra.mxu0 0
        %4124 = vmatprep.subr.bf16.mxu0 0
        %4125 = vmatpush1.bf16.msra.mxu0 0
        %4126 = vmatprep.subr.bf16.mxu0 0
        %4127 = vmatpush1.bf16.msra.mxu0 0
        %4128 = vmatprep.subr.bf16.mxu0 0
        %4129 = vmatpush1.bf16.msra.mxu0 0
        %4130 = vmatprep.subr.bf16.mxu0 0
        %4131 = vmatpush1.bf16.msra.mxu0 0
        %4132 = vmatprep.subr.bf16.mxu0 0
        %4133 = vmatpush1.bf16.msra.mxu0 0
        %4134 = vmatprep.mubr.bf16.mxu0 0
        %4135 = vmatmul.mubr.bf16.gmra.mrb[0].mxu0 %v4055
        %v4136 = vpop.f32.mrb[0].mxu0
        %v4137 = vadd.f32 0.0, %v4136
        %v4138 = vpop.f32.mrb[0].mxu0
        %v4139 = vpop.f32.mrb[0].mxu0
        %v4140 = vadd.f32 0.0, %v4139
        %v4141 = vpop.f32.mrb[0].mxu0
        %4142 = vmatprep.mubr.bf16.mxu0 0
        %4143 = vmatmul.mubr.bf16.gmra.mrb[0].mxu0 %v4058
        %v4144 = vpop.f32.mrb[0].mxu0
        %v4145 = vadd.f32 0.0, %v4144
        %v4146 = vpop.f32.mrb[0].mxu0
        %v4147 = vpop.f32.mrb[0].mxu0
        %v4148 = vadd.f32 0.0, %v4147
        %v4149 = vpop.f32.mrb[0].mxu0
        %4150 = vmatprep.mubr.bf16.mxu0 0
        %4151 = vmatmul.mubr.bf16.gmra.mrb[0].mxu0 %v4061
        %v4152 = vpop.f32.mrb[0].mxu0
        %v4153 = vadd.f32 0.0, %v4152
        %v4154 = vpop.f32.mrb[0].mxu0
        %v4155 = vpop.f32.mrb[0].mxu0
        %v4156 = vadd.f32 0.0, %v4155
        %v4157 = vpop.f32.mrb[0].mxu0
        %4158 = vmatprep.mubr.bf16.mxu0 0
        %4159 = vmatmul.mubr.bf16.gmra.mrb[0].mxu0 %v4064
        %v4160 = vpop.f32.mrb[0].mxu0
        %v4161 = vadd.f32 0.0, %v4160
        %v4162 = vpop.f32.mrb[0].mxu0
        %v4163 = vpop.f32.mrb[0].mxu0
        %v4164 = vadd.f32 0.0, %v4163
        %v4165 = vpop.f32.mrb[0].mxu0
        %4166 = vmatprep.mubr.bf16.mxu0 0
        %4167 = vmatmul.mubr.bf16.gmra.mrb[0].mxu0 %v4067
        %v4168 = vpop.f32.mrb[0].mxu0
        %v4169 = vadd.f32 0.0, %v4168
        %v4170 = vpop.f32.mrb[0].mxu0
        %v4171 = vpop.f32.mrb[0].mxu0
        %v4172 = vadd.f32 0.0, %v4171
        %v4173 = vpop.f32.mrb[0].mxu0
        %4174 = vmatprep.mubr.bf16.mxu0 0
        %4175 = vmatmul.mubr.bf16.gmra.mrb[0].mxu0 %v4070
        %v4176 = vpop.f32.mrb[0].mxu0
        %v4177 = vadd.f32 0.0, %v4176
        %v4178 = vpop.f32.mrb[0].mxu0
        %v4179 = vpop.f32.mrb[0].mxu0
        %v4180 = vadd.f32 0.0, %v4179
        %v4181 = vpop.f32.mrb[0].mxu0
        %4182 = vmatprep.mubr.bf16.mxu0 0
        %4183 = vmatmul.mubr.bf16.gmra.mrb[0].mxu0 %v4073
        %v4184 = vpop.f32.mrb[0].mxu0
        %v4185 = vadd.f32 0.0, %v4184
        %v4186 = vpop.f32.mrb[0].mxu0
        %v4187 = vpop.f32.mrb[0].mxu0
        %v4188 = vadd.f32 0.0, %v4187
        %v4189 = vpop.f32.mrb[0].mxu0
        %4190 = vmatprep.mubr.bf16.mxu0 0
        %4191 = vmatmul.mubr.bf16.gmra.mrb[0].mxu0 %v4076
        %v4192 = vpop.f32.mrb[0].mxu0
        %v4193 = vadd.f32 0.0, %v4192
        %v4194 = vpop.f32.mrb[0].mxu0
        %v4195 = vpop.f32.mrb[0].mxu0
        %v4196 = vadd.f32 0.0, %v4195
        %v4197 = vpop.f32.mrb[0].mxu0
        %4198 = vmatprep.mubr.bf16.mxu0 0
        %4199 = vmatmul.mubr.bf16.gmra.mrb[0].mxu0 %v4079
        %v4200 = vpop.f32.mrb[0].mxu0
        %v4201 = vadd.f32 0.0, %v4200
        %v4202 = vpop.f32.mrb[0].mxu0
        %v4203 = vpop.f32.mrb[0].mxu0
        %v4204 = vadd.f32 0.0, %v4203
        %v4205 = vpop.f32.mrb[0].mxu0
        %4206 = vmatprep.mubr.bf16.mxu0 0
        %4207 = vmatmul.mubr.bf16.gmra.mrb[0].mxu0 %v4082
        %v4208 = vpop.f32.mrb[0].mxu0
        %v4209 = vadd.f32 0.0, %v4208
        %v4210 = vpop.f32.mrb[0].mxu0
        %v4211 = vpop.f32.mrb[0].mxu0
        %v4212 = vadd.f32 0.0, %v4211
        %v4213 = vpop.f32.mrb[0].mxu0
        %4214 = vmatprep.mubr.bf16.mxu0 0
        %4215 = vmatmul.mubr.bf16.gmra.mrb[0].mxu0 %v4085
        %v4216 = vpop.f32.mrb[0].mxu0
        %v4217 = vadd.f32 0.0, %v4216
        %v4218 = vpop.f32.mrb[0].mxu0
        %v4219 = vpop.f32.mrb[0].mxu0
        %v4220 = vadd.f32 0.0, %v4219
        %v4221 = vpop.f32.mrb[0].mxu0
        %4222 = vmatprep.mubr.bf16.mxu0 0
        %4223 = vmatmul.mubr.bf16.gmra.mrb[0].mxu0 %v4088
        %v4224 = vpop.f32.mrb[0].mxu0
        %v4225 = vadd.f32 0.0, %v4224
        %v4226 = vpop.f32.mrb[0].mxu0
        %v4227 = vpop.f32.mrb[0].mxu0
        %v4228 = vadd.f32 0.0, %v4227
        %v4229 = vpop.f32.mrb[0].mxu0
        %4230 = vmatprep.mubr.bf16.mxu0 0
        %4231 = vmatmul.mubr.bf16.gmra.mrb[0].mxu0 %v4091
        %v4232 = vpop.f32.mrb[0].mxu0
        %v4233 = vadd.f32 0.0, %v4232
        %v4234 = vpop.f32.mrb[0].mxu0
        %v4235 = vpop.f32.mrb[0].mxu0
        %v4236 = vadd.f32 0.0, %v4235
        %v4237 = vpop.f32.mrb[0].mxu0
        %4238 = vmatprep.mubr.bf16.mxu0 0
        %4239 = vmatmul.mubr.bf16.gmra.mrb[0].mxu0 %v4094
        %v4240 = vpop.f32.mrb[0].mxu0
        %v4241 = vadd.f32 0.0, %v4240
        %v4242 = vpop.f32.mrb[0].mxu0
        %v4243 = vpop.f32.mrb[0].mxu0
        %v4244 = vadd.f32 0.0, %v4243
        %v4245 = vpop.f32.mrb[0].mxu0
        %4246 = vmatprep.mubr.bf16.mxu0 0
        %4247 = vmatmul.mubr.bf16.gmra.mrb[0].mxu0 %v4097
        %v4248 = vpop.f32.mrb[0].mxu0
        %v4249 = vadd.f32 0.0, %v4248
        %v4250 = vpop.f32.mrb[0].mxu0
        %v4251 = vpop.f32.mrb[0].mxu0
        %v4252 = vadd.f32 0.0, %v4251
        %v4253 = vpop.f32.mrb[0].mxu0
        %4254 = vmatprep.mubr.bf16.mxu0 0
        %4255 = vmatmul.mubr.bf16.gmra.mrb[0].mxu0 %v4100
        %v4256 = vpop.f32.mrb[0].mxu0
        %v4257 = vadd.f32 0.0, %v4256
        %v4258 = vpop.f32.mrb[0].mxu0
        %v4259 = vpop.f32.mrb[0].mxu0
        %v4260 = vadd.f32 0.0, %v4259
        %v4261 = vpop.f32.mrb[0].mxu0
        %4262 = vdwg.mxu0
        %v4263 = vadd.f32 %v3965, %v4137
        %v4264 = vadd.f32 %v3966, %v4140
        %v4265 = vadd.f32 %v3967, %v4145
        %v4266 = vadd.f32 %v3968, %v4148
        %v4267 = vadd.f32 %v3969, %v4153
        %v4268 = vadd.f32 %v3970, %v4156
        %v4269 = vadd.f32 %v3971, %v4161
        %v4270 = vadd.f32 %v3972, %v4164
        %v4271 = vadd.f32 %v3973, %v4169
        %v4272 = vadd.f32 %v3974, %v4172
        %v4273 = vadd.f32 %v3975, %v4177
        %v4274 = vadd.f32 %v3976, %v4180
        %v4275 = vadd.f32 %v3977, %v4185
        %v4276 = vadd.f32 %v3978, %v4188
        %v4277 = vadd.f32 %v3979, %v4193
        %v4278 = vadd.f32 %v3980, %v4196
        %v4279 = vadd.f32 %v3981, %v4201
        %v4280 = vadd.f32 %v3982, %v4204
        %v4281 = vadd.f32 %v3983, %v4209
        %v4282 = vadd.f32 %v3984, %v4212
        %v4283 = vadd.f32 %v3985, %v4217
        %v4284 = vadd.f32 %v3986, %v4220
        %v4285 = vadd.f32 %v3987, %v4225
        %v4286 = vadd.f32 %v3988, %v4228
        %v4287 = vadd.f32 %v3989, %v4233
        %v4288 = vadd.f32 %v3990, %v4236
        %v4289 = vadd.f32 %v3991, %v4241
        %v4290 = vadd.f32 %v3992, %v4244
        %v4291 = vadd.f32 %v3993, %v4249
        %v4292 = vadd.f32 %v3994, %v4252
        %v4293 = vadd.f32 %v3995, %v4257
        %v4294 = vadd.f32 %v3996, %v4260
        %v4295 = vld [vmem:[%s3135 + $0x1] sm:$0xff]
        %v4296 = vld [vmem:[%s3135 + $0x9] sm:$0xff]
        %v4297 = vld [vmem:[%s3135 + $0x19] sm:$0xff]
        %v4298 = vld [vmem:[%s3135 + $0x21] sm:$0xff]
        %v4299 = vld [vmem:[%s3135 + $0x31] sm:$0xff]
        %v4300 = vld [vmem:[%s3135 + $0x39] sm:$0xff]
        %v4301 = vld [vmem:[%s3135 + $0x49] sm:$0xff]
        %v4302 = vld [vmem:[%s3135 + $0x51] sm:$0xff]
        %v4303 = vld [vmem:[%s3135 + $0x61] sm:$0xff]
        %v4304 = vld [vmem:[%s3135 + $0x69] sm:$0xff]
        %v4305 = vld [vmem:[%s3135 + $0x79] sm:$0xff]
        %v4306 = vld [vmem:[%s3135 + $0x81] sm:$0xff]
        %v4307 = vld [vmem:[%s3135 + $0x91] sm:$0xff]
        %v4308 = vld [vmem:[%s3135 + $0x99] sm:$0xff]
        %v4309 = vld [vmem:[%s3135 + $0xa9] sm:$0xff]
        %v4310 = vld [vmem:[%s3135 + $0xb1] sm:$0xff]
        %v4311 = vld [vmem:[%s3135 + $0xc1] sm:$0xff]
        %v4312 = vld [vmem:[%s3135 + $0xc9] sm:$0xff]
        %v4313 = vld [vmem:[%s3135 + $0xd9] sm:$0xff]
        %v4314 = vld [vmem:[%s3135 + $0xe1] sm:$0xff]
        %v4315 = vld [vmem:[%s3135 + $0xf1] sm:$0xff]
        %v4316 = vld [vmem:[%s3135 + $0xf9] sm:$0xff]
        %v4317 = vld [vmem:[%s3135 + $0x109] sm:$0xff]
        %v4318 = vld [vmem:[%s3135 + $0x111] sm:$0xff]
        %v4319 = vld [vmem:[%s3135 + $0x121] sm:$0xff]
        %v4320 = vld [vmem:[%s3135 + $0x129] sm:$0xff]
        %v4321 = vld [vmem:[%s3135 + $0x139] sm:$0xff]
        %v4322 = vld [vmem:[%s3135 + $0x141] sm:$0xff]
        %v4323 = vld [vmem:[%s3135 + $0x151] sm:$0xff]
        %v4324 = vld [vmem:[%s3135 + $0x159] sm:$0xff]
        %v4325 = vld [vmem:[%s3135 + $0x169] sm:$0xff]
        %v4326 = vld [vmem:[%s3135 + $0x171] sm:$0xff]
        %v4327 = vpack.c.bf16 %v4296, %v4295
        %v4328 = vpack.c.bf16 %v4298, %v4297
        %v4329 = vpack.c.bf16 %v4300, %v4299
        %v4330 = vpack.c.bf16 %v4302, %v4301
        %v4331 = vpack.c.bf16 %v4304, %v4303
        %v4332 = vpack.c.bf16 %v4306, %v4305
        %v4333 = vpack.c.bf16 %v4308, %v4307
        %v4334 = vpack.c.bf16 %v4310, %v4309
        %v4335 = vpack.c.bf16 %v4312, %v4311
        %v4336 = vpack.c.bf16 %v4314, %v4313
        %v4337 = vpack.c.bf16 %v4316, %v4315
        %v4338 = vpack.c.bf16 %v4318, %v4317
        %v4339 = vpack.c.bf16 %v4320, %v4319
        %v4340 = vpack.c.bf16 %v4322, %v4321
        %v4341 = vpack.c.bf16 %v4324, %v4323
        %v4342 = vpack.c.bf16 %v4326, %v4325
        %s4343 = scalar_lea.vmem %s3, 32
        %v4344 = vld [vmem:[%s4343] sm:$0xf]
        %v4345 = vld [vmem:[%s4343 + $0x4] sm:$0xf]
        %v4348 = vunpack.c.l.b16 %v4344
        %v4349 = vunpack.c.l.b16 %v4345
        %v4350 = vpack.c.b16 %v4349, %v4348
        %v4353 = vsel %vm3079, %v4327, 0
        %v4356 = vsel %vm3079, %v4328, 0
        %v4359 = vsel %vm3079, %v4329, 0
        %v4362 = vsel %vm3079, %v4330, 0
        %v4365 = vsel %vm3079, %v4331, 0
        %v4368 = vsel %vm3079, %v4332, 0
        %v4371 = vsel %vm3079, %v4333, 0
        %v4374 = vsel %vm3079, %v4334, 0
        %v4377 = vsel %vm3079, %v4335, 0
        %v4380 = vsel %vm3079, %v4336, 0
        %v4383 = vsel %vm3079, %v4337, 0
        %v4386 = vsel %vm3079, %v4338, 0
        %v4389 = vsel %vm3079, %v4339, 0
        %v4392 = vsel %vm3079, %v4340, 0
        %v4395 = vsel %vm3079, %v4341, 0
        %v4398 = vsel %vm3079, %v4342, 0
        %4400 = vmatprep.subr.bf16.mxu0 0
        %4401 = vmatpush1.bf16.msra.mxu0 %v4350
        %4402 = vmatprep.subr.bf16.mxu0 0
        %4403 = vmatpush1.bf16.msra.mxu0 0
        %4404 = vmatprep.subr.bf16.mxu0 0
        %4405 = vmatpush1.bf16.msra.mxu0 0
        %4406 = vmatprep.subr.bf16.mxu0 0
        %4407 = vmatpush1.bf16.msra.mxu0 0
        %4408 = vmatprep.subr.bf16.mxu0 0
        %4409 = vmatpush1.bf16.msra.mxu0 0
        %4410 = vmatprep.subr.bf16.mxu0 0
        %4411 = vmatpush1.bf16.msra.mxu0 0
        %4412 = vmatprep.subr.bf16.mxu0 0
        %4413 = vmatpush1.bf16.msra.mxu0 0
        %4414 = vmatprep.subr.bf16.mxu0 0
        %4415 = vmatpush1.bf16.msra.mxu0 0
        %4416 = vmatprep.subr.bf16.mxu0 0
        %4417 = vmatpush1.bf16.msra.mxu0 0
        %4418 = vmatprep.subr.bf16.mxu0 0
        %4419 = vmatpush1.bf16.msra.mxu0 0
        %4420 = vmatprep.subr.bf16.mxu0 0
        %4421 = vmatpush1.bf16.msra.mxu0 0
        %4422 = vmatprep.subr.bf16.mxu0 0
        %4423 = vmatpush1.bf16.msra.mxu0 0
        %4424 = vmatprep.subr.bf16.mxu0 0
        %4425 = vmatpush1.bf16.msra.mxu0 0
        %4426 = vmatprep.subr.bf16.mxu0 0
        %4427 = vmatpush1.bf16.msra.mxu0 0
        %4428 = vmatprep.subr.bf16.mxu0 0
        %4429 = vmatpush1.bf16.msra.mxu0 0
        %4430 = vmatprep.subr.bf16.mxu0 0
        %4431 = vmatpush1.bf16.msra.mxu0 0
        %4432 = vmatprep.mubr.bf16.mxu0 0
        %4433 = vmatmul.mubr.bf16.gmra.mrb[0].mxu0 %v4353
        %v4434 = vpop.f32.mrb[0].mxu0
        %v4435 = vadd.f32 0.0, %v4434
        %v4436 = vpop.f32.mrb[0].mxu0
        %v4437 = vpop.f32.mrb[0].mxu0
        %v4438 = vadd.f32 0.0, %v4437
        %v4439 = vpop.f32.mrb[0].mxu0
        %4440 = vmatprep.mubr.bf16.mxu0 0
        %4441 = vmatmul.mubr.bf16.gmra.mrb[0].mxu0 %v4356
        %v4442 = vpop.f32.mrb[0].mxu0
        %v4443 = vadd.f32 0.0, %v4442
        %v4444 = vpop.f32.mrb[0].mxu0
        %v4445 = vpop.f32.mrb[0].mxu0
        %v4446 = vadd.f32 0.0, %v4445
        %v4447 = vpop.f32.mrb[0].mxu0
        %4448 = vmatprep.mubr.bf16.mxu0 0
        %4449 = vmatmul.mubr.bf16.gmra.mrb[0].mxu0 %v4359
        %v4450 = vpop.f32.mrb[0].mxu0
        %v4451 = vadd.f32 0.0, %v4450
        %v4452 = vpop.f32.mrb[0].mxu0
        %v4453 = vpop.f32.mrb[0].mxu0
        %v4454 = vadd.f32 0.0, %v4453
        %v4455 = vpop.f32.mrb[0].mxu0
        %4456 = vmatprep.mubr.bf16.mxu0 0
        %4457 = vmatmul.mubr.bf16.gmra.mrb[0].mxu0 %v4362
        %v4458 = vpop.f32.mrb[0].mxu0
        %v4459 = vadd.f32 0.0, %v4458
        %v4460 = vpop.f32.mrb[0].mxu0
        %v4461 = vpop.f32.mrb[0].mxu0
        %v4462 = vadd.f32 0.0, %v4461
        %v4463 = vpop.f32.mrb[0].mxu0
        %4464 = vmatprep.mubr.bf16.mxu0 0
        %4465 = vmatmul.mubr.bf16.gmra.mrb[0].mxu0 %v4365
        %v4466 = vpop.f32.mrb[0].mxu0
        %v4467 = vadd.f32 0.0, %v4466
        %v4468 = vpop.f32.mrb[0].mxu0
        %v4469 = vpop.f32.mrb[0].mxu0
        %v4470 = vadd.f32 0.0, %v4469
        %v4471 = vpop.f32.mrb[0].mxu0
        %4472 = vmatprep.mubr.bf16.mxu0 0
        %4473 = vmatmul.mubr.bf16.gmra.mrb[0].mxu0 %v4368
        %v4474 = vpop.f32.mrb[0].mxu0
        %v4475 = vadd.f32 0.0, %v4474
        %v4476 = vpop.f32.mrb[0].mxu0
        %v4477 = vpop.f32.mrb[0].mxu0
        %v4478 = vadd.f32 0.0, %v4477
        %v4479 = vpop.f32.mrb[0].mxu0
        %4480 = vmatprep.mubr.bf16.mxu0 0
        %4481 = vmatmul.mubr.bf16.gmra.mrb[0].mxu0 %v4371
        %v4482 = vpop.f32.mrb[0].mxu0
        %v4483 = vadd.f32 0.0, %v4482
        %v4484 = vpop.f32.mrb[0].mxu0
        %v4485 = vpop.f32.mrb[0].mxu0
        %v4486 = vadd.f32 0.0, %v4485
        %v4487 = vpop.f32.mrb[0].mxu0
        %4488 = vmatprep.mubr.bf16.mxu0 0
        %4489 = vmatmul.mubr.bf16.gmra.mrb[0].mxu0 %v4374
        %v4490 = vpop.f32.mrb[0].mxu0
        %v4491 = vadd.f32 0.0, %v4490
        %v4492 = vpop.f32.mrb[0].mxu0
        %v4493 = vpop.f32.mrb[0].mxu0
        %v4494 = vadd.f32 0.0, %v4493
        %v4495 = vpop.f32.mrb[0].mxu0
        %4496 = vmatprep.mubr.bf16.mxu0 0
        %4497 = vmatmul.mubr.bf16.gmra.mrb[0].mxu0 %v4377
        %v4498 = vpop.f32.mrb[0].mxu0
        %v4499 = vadd.f32 0.0, %v4498
        %v4500 = vpop.f32.mrb[0].mxu0
        %v4501 = vpop.f32.mrb[0].mxu0
        %v4502 = vadd.f32 0.0, %v4501
        %v4503 = vpop.f32.mrb[0].mxu0
        %4504 = vmatprep.mubr.bf16.mxu0 0
        %4505 = vmatmul.mubr.bf16.gmra.mrb[0].mxu0 %v4380
        %v4506 = vpop.f32.mrb[0].mxu0
        %v4507 = vadd.f32 0.0, %v4506
        %v4508 = vpop.f32.mrb[0].mxu0
        %v4509 = vpop.f32.mrb[0].mxu0
        %v4510 = vadd.f32 0.0, %v4509
        %v4511 = vpop.f32.mrb[0].mxu0
        %4512 = vmatprep.mubr.bf16.mxu0 0
        %4513 = vmatmul.mubr.bf16.gmra.mrb[0].mxu0 %v4383
        %v4514 = vpop.f32.mrb[0].mxu0
        %v4515 = vadd.f32 0.0, %v4514
        %v4516 = vpop.f32.mrb[0].mxu0
        %v4517 = vpop.f32.mrb[0].mxu0
        %v4518 = vadd.f32 0.0, %v4517
        %v4519 = vpop.f32.mrb[0].mxu0
        %4520 = vmatprep.mubr.bf16.mxu0 0
        %4521 = vmatmul.mubr.bf16.gmra.mrb[0].mxu0 %v4386
        %v4522 = vpop.f32.mrb[0].mxu0
        %v4523 = vadd.f32 0.0, %v4522
        %v4524 = vpop.f32.mrb[0].mxu0
        %v4525 = vpop.f32.mrb[0].mxu0
        %v4526 = vadd.f32 0.0, %v4525
        %v4527 = vpop.f32.mrb[0].mxu0
        %4528 = vmatprep.mubr.bf16.mxu0 0
        %4529 = vmatmul.mubr.bf16.gmra.mrb[0].mxu0 %v4389
        %v4530 = vpop.f32.mrb[0].mxu0
        %v4531 = vadd.f32 0.0, %v4530
        %v4532 = vpop.f32.mrb[0].mxu0
        %v4533 = vpop.f32.mrb[0].mxu0
        %v4534 = vadd.f32 0.0, %v4533
        %v4535 = vpop.f32.mrb[0].mxu0
        %4536 = vmatprep.mubr.bf16.mxu0 0
        %4537 = vmatmul.mubr.bf16.gmra.mrb[0].mxu0 %v4392
        %v4538 = vpop.f32.mrb[0].mxu0
        %v4539 = vadd.f32 0.0, %v4538
        %v4540 = vpop.f32.mrb[0].mxu0
        %v4541 = vpop.f32.mrb[0].mxu0
        %v4542 = vadd.f32 0.0, %v4541
        %v4543 = vpop.f32.mrb[0].mxu0
        %4544 = vmatprep.mubr.bf16.mxu0 0
        %4545 = vmatmul.mubr.bf16.gmra.mrb[0].mxu0 %v4395
        %v4546 = vpop.f32.mrb[0].mxu0
        %v4547 = vadd.f32 0.0, %v4546
        %v4548 = vpop.f32.mrb[0].mxu0
        %v4549 = vpop.f32.mrb[0].mxu0
        %v4550 = vadd.f32 0.0, %v4549
        %v4551 = vpop.f32.mrb[0].mxu0
        %4552 = vmatprep.mubr.bf16.mxu0 0
        %4553 = vmatmul.mubr.bf16.gmra.mrb[0].mxu0 %v4398
        %v4554 = vpop.f32.mrb[0].mxu0
        %v4555 = vadd.f32 0.0, %v4554
        %v4556 = vpop.f32.mrb[0].mxu0
        %v4557 = vpop.f32.mrb[0].mxu0
        %v4558 = vadd.f32 0.0, %v4557
        %v4559 = vpop.f32.mrb[0].mxu0
        %4560 = vdwg.mxu0
        %v4561 = vadd.f32 %v4263, %v4435
        %v4562 = vadd.f32 %v4264, %v4438
        %v4563 = vadd.f32 %v4265, %v4443
        %v4564 = vadd.f32 %v4266, %v4446
        %v4565 = vadd.f32 %v4267, %v4451
        %v4566 = vadd.f32 %v4268, %v4454
        %v4567 = vadd.f32 %v4269, %v4459
        %v4568 = vadd.f32 %v4270, %v4462
        %v4569 = vadd.f32 %v4271, %v4467
        %v4570 = vadd.f32 %v4272, %v4470
        %v4571 = vadd.f32 %v4273, %v4475
        %v4572 = vadd.f32 %v4274, %v4478
        %v4573 = vadd.f32 %v4275, %v4483
        %v4574 = vadd.f32 %v4276, %v4486
        %v4575 = vadd.f32 %v4277, %v4491
        %v4576 = vadd.f32 %v4278, %v4494
        %v4577 = vadd.f32 %v4279, %v4499
        %v4578 = vadd.f32 %v4280, %v4502
        %v4579 = vadd.f32 %v4281, %v4507
        %v4580 = vadd.f32 %v4282, %v4510
        %v4581 = vadd.f32 %v4283, %v4515
        %v4582 = vadd.f32 %v4284, %v4518
        %v4583 = vadd.f32 %v4285, %v4523
        %v4584 = vadd.f32 %v4286, %v4526
        %v4585 = vadd.f32 %v4287, %v4531
        %v4586 = vadd.f32 %v4288, %v4534
        %v4587 = vadd.f32 %v4289, %v4539
        %v4588 = vadd.f32 %v4290, %v4542
        %v4589 = vadd.f32 %v4291, %v4547
        %v4590 = vadd.f32 %v4292, %v4550
        %v4591 = vadd.f32 %v4293, %v4555
        %v4592 = vadd.f32 %v4294, %v4558
        %v4593 = vld [vmem:[%s3135 + $0x2] sm:$0xff]
        %v4594 = vld [vmem:[%s3135 + $0xa] sm:$0xff]
        %v4595 = vld [vmem:[%s3135 + $0x1a] sm:$0xff]
        %v4596 = vld [vmem:[%s3135 + $0x22] sm:$0xff]
        %v4597 = vld [vmem:[%s3135 + $0x32] sm:$0xff]
        %v4598 = vld [vmem:[%s3135 + $0x3a] sm:$0xff]
        %v4599 = vld [vmem:[%s3135 + $0x4a] sm:$0xff]
        %v4600 = vld [vmem:[%s3135 + $0x52] sm:$0xff]
        %v4601 = vld [vmem:[%s3135 + $0x62] sm:$0xff]
        %v4602 = vld [vmem:[%s3135 + $0x6a] sm:$0xff]
        %v4603 = vld [vmem:[%s3135 + $0x7a] sm:$0xff]
        %v4604 = vld [vmem:[%s3135 + $0x82] sm:$0xff]
        %v4605 = vld [vmem:[%s3135 + $0x92] sm:$0xff]
        %v4606 = vld [vmem:[%s3135 + $0x9a] sm:$0xff]
        %v4607 = vld [vmem:[%s3135 + $0xaa] sm:$0xff]
        %v4608 = vld [vmem:[%s3135 + $0xb2] sm:$0xff]
        %v4609 = vld [vmem:[%s3135 + $0xc2] sm:$0xff]
        %v4610 = vld [vmem:[%s3135 + $0xca] sm:$0xff]
        %v4611 = vld [vmem:[%s3135 + $0xda] sm:$0xff]
        %v4612 = vld [vmem:[%s3135 + $0xe2] sm:$0xff]
        %v4613 = vld [vmem:[%s3135 + $0xf2] sm:$0xff]
        %v4614 = vld [vmem:[%s3135 + $0xfa] sm:$0xff]
        %v4615 = vld [vmem:[%s3135 + $0x10a] sm:$0xff]
        %v4616 = vld [vmem:[%s3135 + $0x112] sm:$0xff]
        %v4617 = vld [vmem:[%s3135 + $0x122] sm:$0xff]
        %v4618 = vld [vmem:[%s3135 + $0x12a] sm:$0xff]
        %v4619 = vld [vmem:[%s3135 + $0x13a] sm:$0xff]
        %v4620 = vld [vmem:[%s3135 + $0x142] sm:$0xff]
        %v4621 = vld [vmem:[%s3135 + $0x152] sm:$0xff]
        %v4622 = vld [vmem:[%s3135 + $0x15a] sm:$0xff]
        %v4623 = vld [vmem:[%s3135 + $0x16a] sm:$0xff]
        %v4624 = vld [vmem:[%s3135 + $0x172] sm:$0xff]
        %v4625 = vpack.c.bf16 %v4594, %v4593
        %v4626 = vpack.c.bf16 %v4596, %v4595
        %v4627 = vpack.c.bf16 %v4598, %v4597
        %v4628 = vpack.c.bf16 %v4600, %v4599
        %v4629 = vpack.c.bf16 %v4602, %v4601
        %v4630 = vpack.c.bf16 %v4604, %v4603
        %v4631 = vpack.c.bf16 %v4606, %v4605
        %v4632 = vpack.c.bf16 %v4608, %v4607
        %v4633 = vpack.c.bf16 %v4610, %v4609
        %v4634 = vpack.c.bf16 %v4612, %v4611
        %v4635 = vpack.c.bf16 %v4614, %v4613
        %v4636 = vpack.c.bf16 %v4616, %v4615
        %v4637 = vpack.c.bf16 %v4618, %v4617
        %v4638 = vpack.c.bf16 %v4620, %v4619
        %v4639 = vpack.c.bf16 %v4622, %v4621
        %v4640 = vpack.c.bf16 %v4624, %v4623
        %s4641 = scalar_lea.vmem %s3, 40
        %v4642 = vld [vmem:[%s4641] sm:$0xf]
        %v4643 = vld [vmem:[%s4641 + $0x4] sm:$0xf]
        %v4646 = vunpack.c.l.b16 %v4642
        %v4647 = vunpack.c.l.b16 %v4643
        %v4648 = vpack.c.b16 %v4647, %v4646
        %v4651 = vsel %vm3079, %v4625, 0
        %v4654 = vsel %vm3079, %v4626, 0
        %v4657 = vsel %vm3079, %v4627, 0
        %v4660 = vsel %vm3079, %v4628, 0
        %v4663 = vsel %vm3079, %v4629, 0
        %v4666 = vsel %vm3079, %v4630, 0
        %v4669 = vsel %vm3079, %v4631, 0
        %v4672 = vsel %vm3079, %v4632, 0
        %v4675 = vsel %vm3079, %v4633, 0
        %v4678 = vsel %vm3079, %v4634, 0
        %v4681 = vsel %vm3079, %v4635, 0
        %v4684 = vsel %vm3079, %v4636, 0
        %v4687 = vsel %vm3079, %v4637, 0
        %v4690 = vsel %vm3079, %v4638, 0
        %v4693 = vsel %vm3079, %v4639, 0
        %v4696 = vsel %vm3079, %v4640, 0
        %4698 = vmatprep.subr.bf16.mxu0 0
        %4699 = vmatpush1.bf16.msra.mxu0 %v4648
        %4700 = vmatprep.subr.bf16.mxu0 0
        %4701 = vmatpush1.bf16.msra.mxu0 0
        %4702 = vmatprep.subr.bf16.mxu0 0
        %4703 = vmatpush1.bf16.msra.mxu0 0
        %4704 = vmatprep.subr.bf16.mxu0 0
        %4705 = vmatpush1.bf16.msra.mxu0 0
        %4706 = vmatprep.subr.bf16.mxu0 0
        %4707 = vmatpush1.bf16.msra.mxu0 0
        %4708 = vmatprep.subr.bf16.mxu0 0
        %4709 = vmatpush1.bf16.msra.mxu0 0
        %4710 = vmatprep.subr.bf16.mxu0 0
        %4711 = vmatpush1.bf16.msra.mxu0 0
        %4712 = vmatprep.subr.bf16.mxu0 0
        %4713 = vmatpush1.bf16.msra.mxu0 0
        %4714 = vmatprep.subr.bf16.mxu0 0
        %4715 = vmatpush1.bf16.msra.mxu0 0
        %4716 = vmatprep.subr.bf16.mxu0 0
        %4717 = vmatpush1.bf16.msra.mxu0 0
        %4718 = vmatprep.subr.bf16.mxu0 0
        %4719 = vmatpush1.bf16.msra.mxu0 0
        %4720 = vmatprep.subr.bf16.mxu0 0
        %4721 = vmatpush1.bf16.msra.mxu0 0
        %4722 = vmatprep.subr.bf16.mxu0 0
        %4723 = vmatpush1.bf16.msra.mxu0 0
        %4724 = vmatprep.subr.bf16.mxu0 0
        %4725 = vmatpush1.bf16.msra.mxu0 0
        %4726 = vmatprep.subr.bf16.mxu0 0
        %4727 = vmatpush1.bf16.msra.mxu0 0
        %4728 = vmatprep.subr.bf16.mxu0 0
        %4729 = vmatpush1.bf16.msra.mxu0 0
        %4730 = vmatprep.mubr.bf16.mxu0 0
        %4731 = vmatmul.mubr.bf16.gmra.mrb[0].mxu0 %v4651
        %v4732 = vpop.f32.mrb[0].mxu0
        %v4733 = vadd.f32 0.0, %v4732
        %v4734 = vpop.f32.mrb[0].mxu0
        %v4735 = vpop.f32.mrb[0].mxu0
        %v4736 = vadd.f32 0.0, %v4735
        %v4737 = vpop.f32.mrb[0].mxu0
        %4738 = vmatprep.mubr.bf16.mxu0 0
        %4739 = vmatmul.mubr.bf16.gmra.mrb[0].mxu0 %v4654
        %v4740 = vpop.f32.mrb[0].mxu0
        %v4741 = vadd.f32 0.0, %v4740
        %v4742 = vpop.f32.mrb[0].mxu0
        %v4743 = vpop.f32.mrb[0].mxu0
        %v4744 = vadd.f32 0.0, %v4743
        %v4745 = vpop.f32.mrb[0].mxu0
        %4746 = vmatprep.mubr.bf16.mxu0 0
        %4747 = vmatmul.mubr.bf16.gmra.mrb[0].mxu0 %v4657
        %v4748 = vpop.f32.mrb[0].mxu0
        %v4749 = vadd.f32 0.0, %v4748
        %v4750 = vpop.f32.mrb[0].mxu0
        %v4751 = vpop.f32.mrb[0].mxu0
        %v4752 = vadd.f32 0.0, %v4751
        %v4753 = vpop.f32.mrb[0].mxu0
        %4754 = vmatprep.mubr.bf16.mxu0 0
        %4755 = vmatmul.mubr.bf16.gmra.mrb[0].mxu0 %v4660
        %v4756 = vpop.f32.mrb[0].mxu0
        %v4757 = vadd.f32 0.0, %v4756
        %v4758 = vpop.f32.mrb[0].mxu0
        %v4759 = vpop.f32.mrb[0].mxu0
        %v4760 = vadd.f32 0.0, %v4759
        %v4761 = vpop.f32.mrb[0].mxu0
        %4762 = vmatprep.mubr.bf16.mxu0 0
        %4763 = vmatmul.mubr.bf16.gmra.mrb[0].mxu0 %v4663
        %v4764 = vpop.f32.mrb[0].mxu0
        %v4765 = vadd.f32 0.0, %v4764
        %v4766 = vpop.f32.mrb[0].mxu0
        %v4767 = vpop.f32.mrb[0].mxu0
        %v4768 = vadd.f32 0.0, %v4767
        %v4769 = vpop.f32.mrb[0].mxu0
        %4770 = vmatprep.mubr.bf16.mxu0 0
        %4771 = vmatmul.mubr.bf16.gmra.mrb[0].mxu0 %v4666
        %v4772 = vpop.f32.mrb[0].mxu0
        %v4773 = vadd.f32 0.0, %v4772
        %v4774 = vpop.f32.mrb[0].mxu0
        %v4775 = vpop.f32.mrb[0].mxu0
        %v4776 = vadd.f32 0.0, %v4775
        %v4777 = vpop.f32.mrb[0].mxu0
        %4778 = vmatprep.mubr.bf16.mxu0 0
        %4779 = vmatmul.mubr.bf16.gmra.mrb[0].mxu0 %v4669
        %v4780 = vpop.f32.mrb[0].mxu0
        %v4781 = vadd.f32 0.0, %v4780
        %v4782 = vpop.f32.mrb[0].mxu0
        %v4783 = vpop.f32.mrb[0].mxu0
        %v4784 = vadd.f32 0.0, %v4783
        %v4785 = vpop.f32.mrb[0].mxu0
        %4786 = vmatprep.mubr.bf16.mxu0 0
        %4787 = vmatmul.mubr.bf16.gmra.mrb[0].mxu0 %v4672
        %v4788 = vpop.f32.mrb[0].mxu0
        %v4789 = vadd.f32 0.0, %v4788
        %v4790 = vpop.f32.mrb[0].mxu0
        %v4791 = vpop.f32.mrb[0].mxu0
        %v4792 = vadd.f32 0.0, %v4791
        %v4793 = vpop.f32.mrb[0].mxu0
        %4794 = vmatprep.mubr.bf16.mxu0 0
        %4795 = vmatmul.mubr.bf16.gmra.mrb[0].mxu0 %v4675
        %v4796 = vpop.f32.mrb[0].mxu0
        %v4797 = vadd.f32 0.0, %v4796
        %v4798 = vpop.f32.mrb[0].mxu0
        %v4799 = vpop.f32.mrb[0].mxu0
        %v4800 = vadd.f32 0.0, %v4799
        %v4801 = vpop.f32.mrb[0].mxu0
        %4802 = vmatprep.mubr.bf16.mxu0 0
        %4803 = vmatmul.mubr.bf16.gmra.mrb[0].mxu0 %v4678
        %v4804 = vpop.f32.mrb[0].mxu0
        %v4805 = vadd.f32 0.0, %v4804
        %v4806 = vpop.f32.mrb[0].mxu0
        %v4807 = vpop.f32.mrb[0].mxu0
        %v4808 = vadd.f32 0.0, %v4807
        %v4809 = vpop.f32.mrb[0].mxu0
        %4810 = vmatprep.mubr.bf16.mxu0 0
        %4811 = vmatmul.mubr.bf16.gmra.mrb[0].mxu0 %v4681
        %v4812 = vpop.f32.mrb[0].mxu0
        %v4813 = vadd.f32 0.0, %v4812
        %v4814 = vpop.f32.mrb[0].mxu0
        %v4815 = vpop.f32.mrb[0].mxu0
        %v4816 = vadd.f32 0.0, %v4815
        %v4817 = vpop.f32.mrb[0].mxu0
        %4818 = vmatprep.mubr.bf16.mxu0 0
        %4819 = vmatmul.mubr.bf16.gmra.mrb[0].mxu0 %v4684
        %v4820 = vpop.f32.mrb[0].mxu0
        %v4821 = vadd.f32 0.0, %v4820
        %v4822 = vpop.f32.mrb[0].mxu0
        %v4823 = vpop.f32.mrb[0].mxu0
        %v4824 = vadd.f32 0.0, %v4823
        %v4825 = vpop.f32.mrb[0].mxu0
        %4826 = vmatprep.mubr.bf16.mxu0 0
        %4827 = vmatmul.mubr.bf16.gmra.mrb[0].mxu0 %v4687
        %v4828 = vpop.f32.mrb[0].mxu0
        %v4829 = vadd.f32 0.0, %v4828
        %v4830 = vpop.f32.mrb[0].mxu0
        %v4831 = vpop.f32.mrb[0].mxu0
        %v4832 = vadd.f32 0.0, %v4831
        %v4833 = vpop.f32.mrb[0].mxu0
        %4834 = vmatprep.mubr.bf16.mxu0 0
        %4835 = vmatmul.mubr.bf16.gmra.mrb[0].mxu0 %v4690
        %v4836 = vpop.f32.mrb[0].mxu0
        %v4837 = vadd.f32 0.0, %v4836
        %v4838 = vpop.f32.mrb[0].mxu0
        %v4839 = vpop.f32.mrb[0].mxu0
        %v4840 = vadd.f32 0.0, %v4839
        %v4841 = vpop.f32.mrb[0].mxu0
        %4842 = vmatprep.mubr.bf16.mxu0 0
        %4843 = vmatmul.mubr.bf16.gmra.mrb[0].mxu0 %v4693
        %v4844 = vpop.f32.mrb[0].mxu0
        %v4845 = vadd.f32 0.0, %v4844
        %v4846 = vpop.f32.mrb[0].mxu0
        %v4847 = vpop.f32.mrb[0].mxu0
        %v4848 = vadd.f32 0.0, %v4847
        %v4849 = vpop.f32.mrb[0].mxu0
        %4850 = vmatprep.mubr.bf16.mxu0 0
        %4851 = vmatmul.mubr.bf16.gmra.mrb[0].mxu0 %v4696
        %v4852 = vpop.f32.mrb[0].mxu0
        %v4853 = vadd.f32 0.0, %v4852
        %v4854 = vpop.f32.mrb[0].mxu0
        %v4855 = vpop.f32.mrb[0].mxu0
        %v4856 = vadd.f32 0.0, %v4855
        %v4857 = vpop.f32.mrb[0].mxu0
        %4858 = vdwg.mxu0
        %v4859 = vadd.f32 %v4561, %v4733
        %v4860 = vadd.f32 %v4562, %v4736
        %v4861 = vadd.f32 %v4563, %v4741
        %v4862 = vadd.f32 %v4564, %v4744
        %v4863 = vadd.f32 %v4565, %v4749
        %v4864 = vadd.f32 %v4566, %v4752
        %v4865 = vadd.f32 %v4567, %v4757
        %v4866 = vadd.f32 %v4568, %v4760
        %v4867 = vadd.f32 %v4569, %v4765
        %v4868 = vadd.f32 %v4570, %v4768
        %v4869 = vadd.f32 %v4571, %v4773
        %v4870 = vadd.f32 %v4572, %v4776
        %v4871 = vadd.f32 %v4573, %v4781
        %v4872 = vadd.f32 %v4574, %v4784
        %v4873 = vadd.f32 %v4575, %v4789
        %v4874 = vadd.f32 %v4576, %v4792
        %v4875 = vadd.f32 %v4577, %v4797
        %v4876 = vadd.f32 %v4578, %v4800
        %v4877 = vadd.f32 %v4579, %v4805
        %v4878 = vadd.f32 %v4580, %v4808
        %v4879 = vadd.f32 %v4581, %v4813
        %v4880 = vadd.f32 %v4582, %v4816
        %v4881 = vadd.f32 %v4583, %v4821
        %v4882 = vadd.f32 %v4584, %v4824
        %v4883 = vadd.f32 %v4585, %v4829
        %v4884 = vadd.f32 %v4586, %v4832
        %v4885 = vadd.f32 %v4587, %v4837
        %v4886 = vadd.f32 %v4588, %v4840
        %v4887 = vadd.f32 %v4589, %v4845
        %v4888 = vadd.f32 %v4590, %v4848
        %v4889 = vadd.f32 %v4591, %v4853
        %v4890 = vadd.f32 %v4592, %v4856
        %s4891 = scalar_lea.vmem [#allocation3], 48
        %v4892 = vld [vmem:[%s4891] sm:$0xff]
        %v4893 = vld [vmem:[%s4891 + $0x8] sm:$0xff]
        %v4894 = vld [vmem:[%s4891 + $0x18] sm:$0xff]
        %v4895 = vld [vmem:[%s4891 + $0x20] sm:$0xff]
        %v4896 = vld [vmem:[%s4891 + $0x30] sm:$0xff]
        %v4897 = vld [vmem:[%s4891 + $0x38] sm:$0xff]
        %v4898 = vld [vmem:[%s4891 + $0x48] sm:$0xff]
        %v4899 = vld [vmem:[%s4891 + $0x50] sm:$0xff]
        %v4900 = vld [vmem:[%s4891 + $0x60] sm:$0xff]
        %v4901 = vld [vmem:[%s4891 + $0x68] sm:$0xff]
        %v4902 = vld [vmem:[%s4891 + $0x78] sm:$0xff]
        %v4903 = vld [vmem:[%s4891 + $0x80] sm:$0xff]
        %v4904 = vld [vmem:[%s4891 + $0x90] sm:$0xff]
        %v4905 = vld [vmem:[%s4891 + $0x98] sm:$0xff]
        %v4906 = vld [vmem:[%s4891 + $0xa8] sm:$0xff]
        %v4907 = vld [vmem:[%s4891 + $0xb0] sm:$0xff]
        %v4908 = vld [vmem:[%s4891 + $0xc0] sm:$0xff]
        %v4909 = vld [vmem:[%s4891 + $0xc8] sm:$0xff]
        %v4910 = vld [vmem:[%s4891 + $0xd8] sm:$0xff]
        %v4911 = vld [vmem:[%s4891 + $0xe0] sm:$0xff]
        %v4912 = vld [vmem:[%s4891 + $0xf0] sm:$0xff]
        %v4913 = vld [vmem:[%s4891 + $0xf8] sm:$0xff]
        %v4914 = vld [vmem:[%s4891 + $0x108] sm:$0xff]
        %v4915 = vld [vmem:[%s4891 + $0x110] sm:$0xff]
        %v4916 = vld [vmem:[%s4891 + $0x120] sm:$0xff]
        %v4917 = vld [vmem:[%s4891 + $0x128] sm:$0xff]
        %v4918 = vld [vmem:[%s4891 + $0x138] sm:$0xff]
        %v4919 = vld [vmem:[%s4891 + $0x140] sm:$0xff]
        %v4920 = vld [vmem:[%s4891 + $0x150] sm:$0xff]
        %v4921 = vld [vmem:[%s4891 + $0x158] sm:$0xff]
        %v4922 = vld [vmem:[%s4891 + $0x168] sm:$0xff]
        %v4923 = vld [vmem:[%s4891 + $0x170] sm:$0xff]
        %v4924 = vpack.c.bf16 %v4893, %v4892
        %v4925 = vpack.c.bf16 %v4895, %v4894
        %v4926 = vpack.c.bf16 %v4897, %v4896
        %v4927 = vpack.c.bf16 %v4899, %v4898
        %v4928 = vpack.c.bf16 %v4901, %v4900
        %v4929 = vpack.c.bf16 %v4903, %v4902
        %v4930 = vpack.c.bf16 %v4905, %v4904
        %v4931 = vpack.c.bf16 %v4907, %v4906
        %v4932 = vpack.c.bf16 %v4909, %v4908
        %v4933 = vpack.c.bf16 %v4911, %v4910
        %v4934 = vpack.c.bf16 %v4913, %v4912
        %v4935 = vpack.c.bf16 %v4915, %v4914
        %v4936 = vpack.c.bf16 %v4917, %v4916
        %v4937 = vpack.c.bf16 %v4919, %v4918
        %v4938 = vpack.c.bf16 %v4921, %v4920
        %v4939 = vpack.c.bf16 %v4923, %v4922
        %s4940 = scalar_lea.vmem %s3, 48
        %v4941 = vld [vmem:[%s4940] sm:$0xf]
        %v4942 = vld [vmem:[%s4940 + $0x4] sm:$0xf]
        %v4945 = vunpack.c.l.b16 %v4941
        %v4946 = vunpack.c.l.b16 %v4942
        %v4947 = vpack.c.b16 %v4946, %v4945
        %v4950 = vsel %vm3079, %v4924, 0
        %v4953 = vsel %vm3079, %v4925, 0
        %v4956 = vsel %vm3079, %v4926, 0
        %v4959 = vsel %vm3079, %v4927, 0
        %v4962 = vsel %vm3079, %v4928, 0
        %v4965 = vsel %vm3079, %v4929, 0
        %v4968 = vsel %vm3079, %v4930, 0
        %v4971 = vsel %vm3079, %v4931, 0
        %v4974 = vsel %vm3079, %v4932, 0
        %v4977 = vsel %vm3079, %v4933, 0
        %v4980 = vsel %vm3079, %v4934, 0
        %v4983 = vsel %vm3079, %v4935, 0
        %v4986 = vsel %vm3079, %v4936, 0
        %v4989 = vsel %vm3079, %v4937, 0
        %v4992 = vsel %vm3079, %v4938, 0
        %v4995 = vsel %vm3079, %v4939, 0
        %4997 = vmatprep.subr.bf16.mxu0 0
        %4998 = vmatpush1.bf16.msra.mxu0 %v4947
        %4999 = vmatprep.subr.bf16.mxu0 0
        %5000 = vmatpush1.bf16.msra.mxu0 0
        %5001 = vmatprep.subr.bf16.mxu0 0
        %5002 = vmatpush1.bf16.msra.mxu0 0
        %5003 = vmatprep.subr.bf16.mxu0 0
        %5004 = vmatpush1.bf16.msra.mxu0 0
        %5005 = vmatprep.subr.bf16.mxu0 0
        %5006 = vmatpush1.bf16.msra.mxu0 0
        %5007 = vmatprep.subr.bf16.mxu0 0
        %5008 = vmatpush1.bf16.msra.mxu0 0
        %5009 = vmatprep.subr.bf16.mxu0 0
        %5010 = vmatpush1.bf16.msra.mxu0 0
        %5011 = vmatprep.subr.bf16.mxu0 0
        %5012 = vmatpush1.bf16.msra.mxu0 0
        %5013 = vmatprep.subr.bf16.mxu0 0
        %5014 = vmatpush1.bf16.msra.mxu0 0
        %5015 = vmatprep.subr.bf16.mxu0 0
        %5016 = vmatpush1.bf16.msra.mxu0 0
        %5017 = vmatprep.subr.bf16.mxu0 0
        %5018 = vmatpush1.bf16.msra.mxu0 0
        %5019 = vmatprep.subr.bf16.mxu0 0
        %5020 = vmatpush1.bf16.msra.mxu0 0
        %5021 = vmatprep.subr.bf16.mxu0 0
        %5022 = vmatpush1.bf16.msra.mxu0 0
        %5023 = vmatprep.subr.bf16.mxu0 0
        %5024 = vmatpush1.bf16.msra.mxu0 0
        %5025 = vmatprep.subr.bf16.mxu0 0
        %5026 = vmatpush1.bf16.msra.mxu0 0
        %5027 = vmatprep.subr.bf16.mxu0 0
        %5028 = vmatpush1.bf16.msra.mxu0 0
        %5029 = vmatprep.mubr.bf16.mxu0 0
        %5030 = vmatmul.mubr.bf16.gmra.mrb[0].mxu0 %v4950
        %v5031 = vpop.f32.mrb[0].mxu0
        %v5032 = vadd.f32 0.0, %v5031
        %v5033 = vpop.f32.mrb[0].mxu0
        %v5034 = vpop.f32.mrb[0].mxu0
        %v5035 = vadd.f32 0.0, %v5034
        %v5036 = vpop.f32.mrb[0].mxu0
        %5037 = vmatprep.mubr.bf16.mxu0 0
        %5038 = vmatmul.mubr.bf16.gmra.mrb[0].mxu0 %v4953
        %v5039 = vpop.f32.mrb[0].mxu0
        %v5040 = vadd.f32 0.0, %v5039
        %v5041 = vpop.f32.mrb[0].mxu0
        %v5042 = vpop.f32.mrb[0].mxu0
        %v5043 = vadd.f32 0.0, %v5042
        %v5044 = vpop.f32.mrb[0].mxu0
        %5045 = vmatprep.mubr.bf16.mxu0 0
        %5046 = vmatmul.mubr.bf16.gmra.mrb[0].mxu0 %v4956
        %v5047 = vpop.f32.mrb[0].mxu0
        %v5048 = vadd.f32 0.0, %v5047
        %v5049 = vpop.f32.mrb[0].mxu0
        %v5050 = vpop.f32.mrb[0].mxu0
        %v5051 = vadd.f32 0.0, %v5050
        %v5052 = vpop.f32.mrb[0].mxu0
        %5053 = vmatprep.mubr.bf16.mxu0 0
        %5054 = vmatmul.mubr.bf16.gmra.mrb[0].mxu0 %v4959
        %v5055 = vpop.f32.mrb[0].mxu0
        %v5056 = vadd.f32 0.0, %v5055
        %v5057 = vpop.f32.mrb[0].mxu0
        %v5058 = vpop.f32.mrb[0].mxu0
        %v5059 = vadd.f32 0.0, %v5058
        %v5060 = vpop.f32.mrb[0].mxu0
        %5061 = vmatprep.mubr.bf16.mxu0 0
        %5062 = vmatmul.mubr.bf16.gmra.mrb[0].mxu0 %v4962
        %v5063 = vpop.f32.mrb[0].mxu0
        %v5064 = vadd.f32 0.0, %v5063
        %v5065 = vpop.f32.mrb[0].mxu0
        %v5066 = vpop.f32.mrb[0].mxu0
        %v5067 = vadd.f32 0.0, %v5066
        %v5068 = vpop.f32.mrb[0].mxu0
        %5069 = vmatprep.mubr.bf16.mxu0 0
        %5070 = vmatmul.mubr.bf16.gmra.mrb[0].mxu0 %v4965
        %v5071 = vpop.f32.mrb[0].mxu0
        %v5072 = vadd.f32 0.0, %v5071
        %v5073 = vpop.f32.mrb[0].mxu0
        %v5074 = vpop.f32.mrb[0].mxu0
        %v5075 = vadd.f32 0.0, %v5074
        %v5076 = vpop.f32.mrb[0].mxu0
        %5077 = vmatprep.mubr.bf16.mxu0 0
        %5078 = vmatmul.mubr.bf16.gmra.mrb[0].mxu0 %v4968
        %v5079 = vpop.f32.mrb[0].mxu0
        %v5080 = vadd.f32 0.0, %v5079
        %v5081 = vpop.f32.mrb[0].mxu0
        %v5082 = vpop.f32.mrb[0].mxu0
        %v5083 = vadd.f32 0.0, %v5082
        %v5084 = vpop.f32.mrb[0].mxu0
        %5085 = vmatprep.mubr.bf16.mxu0 0
        %5086 = vmatmul.mubr.bf16.gmra.mrb[0].mxu0 %v4971
        %v5087 = vpop.f32.mrb[0].mxu0
        %v5088 = vadd.f32 0.0, %v5087
        %v5089 = vpop.f32.mrb[0].mxu0
        %v5090 = vpop.f32.mrb[0].mxu0
        %v5091 = vadd.f32 0.0, %v5090
        %v5092 = vpop.f32.mrb[0].mxu0
        %5093 = vmatprep.mubr.bf16.mxu0 0
        %5094 = vmatmul.mubr.bf16.gmra.mrb[0].mxu0 %v4974
        %v5095 = vpop.f32.mrb[0].mxu0
        %v5096 = vadd.f32 0.0, %v5095
        %v5097 = vpop.f32.mrb[0].mxu0
        %v5098 = vpop.f32.mrb[0].mxu0
        %v5099 = vadd.f32 0.0, %v5098
        %v5100 = vpop.f32.mrb[0].mxu0
        %5101 = vmatprep.mubr.bf16.mxu0 0
        %5102 = vmatmul.mubr.bf16.gmra.mrb[0].mxu0 %v4977
        %v5103 = vpop.f32.mrb[0].mxu0
        %v5104 = vadd.f32 0.0, %v5103
        %v5105 = vpop.f32.mrb[0].mxu0
        %v5106 = vpop.f32.mrb[0].mxu0
        %v5107 = vadd.f32 0.0, %v5106
        %v5108 = vpop.f32.mrb[0].mxu0
        %5109 = vmatprep.mubr.bf16.mxu0 0
        %5110 = vmatmul.mubr.bf16.gmra.mrb[0].mxu0 %v4980
        %v5111 = vpop.f32.mrb[0].mxu0
        %v5112 = vadd.f32 0.0, %v5111
        %v5113 = vpop.f32.mrb[0].mxu0
        %v5114 = vpop.f32.mrb[0].mxu0
        %v5115 = vadd.f32 0.0, %v5114
        %v5116 = vpop.f32.mrb[0].mxu0
        %5117 = vmatprep.mubr.bf16.mxu0 0
        %5118 = vmatmul.mubr.bf16.gmra.mrb[0].mxu0 %v4983
        %v5119 = vpop.f32.mrb[0].mxu0
        %v5120 = vadd.f32 0.0, %v5119
        %v5121 = vpop.f32.mrb[0].mxu0
        %v5122 = vpop.f32.mrb[0].mxu0
        %v5123 = vadd.f32 0.0, %v5122
        %v5124 = vpop.f32.mrb[0].mxu0
        %5125 = vmatprep.mubr.bf16.mxu0 0
        %5126 = vmatmul.mubr.bf16.gmra.mrb[0].mxu0 %v4986
        %v5127 = vpop.f32.mrb[0].mxu0
        %v5128 = vadd.f32 0.0, %v5127
        %v5129 = vpop.f32.mrb[0].mxu0
        %v5130 = vpop.f32.mrb[0].mxu0
        %v5131 = vadd.f32 0.0, %v5130
        %v5132 = vpop.f32.mrb[0].mxu0
        %5133 = vmatprep.mubr.bf16.mxu0 0
        %5134 = vmatmul.mubr.bf16.gmra.mrb[0].mxu0 %v4989
        %v5135 = vpop.f32.mrb[0].mxu0
        %v5136 = vadd.f32 0.0, %v5135
        %v5137 = vpop.f32.mrb[0].mxu0
        %v5138 = vpop.f32.mrb[0].mxu0
        %v5139 = vadd.f32 0.0, %v5138
        %v5140 = vpop.f32.mrb[0].mxu0
        %5141 = vmatprep.mubr.bf16.mxu0 0
        %5142 = vmatmul.mubr.bf16.gmra.mrb[0].mxu0 %v4992
        %v5143 = vpop.f32.mrb[0].mxu0
        %v5144 = vadd.f32 0.0, %v5143
        %v5145 = vpop.f32.mrb[0].mxu0
        %v5146 = vpop.f32.mrb[0].mxu0
        %v5147 = vadd.f32 0.0, %v5146
        %v5148 = vpop.f32.mrb[0].mxu0
        %5149 = vmatprep.mubr.bf16.mxu0 0
        %5150 = vmatmul.mubr.bf16.gmra.mrb[0].mxu0 %v4995
        %v5151 = vpop.f32.mrb[0].mxu0
        %v5152 = vadd.f32 0.0, %v5151
        %v5153 = vpop.f32.mrb[0].mxu0
        %v5154 = vpop.f32.mrb[0].mxu0
        %v5155 = vadd.f32 0.0, %v5154
        %v5156 = vpop.f32.mrb[0].mxu0
        %5157 = vdwg.mxu0
        %v5158 = vadd.f32 %v4859, %v5032
        %v5159 = vadd.f32 %v4860, %v5035
        %v5160 = vadd.f32 %v4861, %v5040
        %v5161 = vadd.f32 %v4862, %v5043
        %v5162 = vadd.f32 %v4863, %v5048
        %v5163 = vadd.f32 %v4864, %v5051
        %v5164 = vadd.f32 %v4865, %v5056
        %v5165 = vadd.f32 %v4866, %v5059
        %v5166 = vadd.f32 %v4867, %v5064
        %v5167 = vadd.f32 %v4868, %v5067
        %v5168 = vadd.f32 %v4869, %v5072
        %v5169 = vadd.f32 %v4870, %v5075
        %v5170 = vadd.f32 %v4871, %v5080
        %v5171 = vadd.f32 %v4872, %v5083
        %v5172 = vadd.f32 %v4873, %v5088
        %v5173 = vadd.f32 %v4874, %v5091
        %v5174 = vadd.f32 %v4875, %v5096
        %v5175 = vadd.f32 %v4876, %v5099
        %v5176 = vadd.f32 %v4877, %v5104
        %v5177 = vadd.f32 %v4878, %v5107
        %v5178 = vadd.f32 %v4879, %v5112
        %v5179 = vadd.f32 %v4880, %v5115
        %v5180 = vadd.f32 %v4881, %v5120
        %v5181 = vadd.f32 %v4882, %v5123
        %v5182 = vadd.f32 %v4883, %v5128
        %v5183 = vadd.f32 %v4884, %v5131
        %v5184 = vadd.f32 %v4885, %v5136
        %v5185 = vadd.f32 %v4886, %v5139
        %v5186 = vadd.f32 %v4887, %v5144
        %v5187 = vadd.f32 %v4888, %v5147
        %v5188 = vadd.f32 %v4889, %v5152
        %v5189 = vadd.f32 %v4890, %v5155
        %v5190 = vld [vmem:[%s4891 + $0x1] sm:$0xff]
        %v5191 = vld [vmem:[%s4891 + $0x9] sm:$0xff]
        %v5192 = vld [vmem:[%s4891 + $0x19] sm:$0xff]
        %v5193 = vld [vmem:[%s4891 + $0x21] sm:$0xff]
        %v5194 = vld [vmem:[%s4891 + $0x31] sm:$0xff]
        %v5195 = vld [vmem:[%s4891 + $0x39] sm:$0xff]
        %v5196 = vld [vmem:[%s4891 + $0x49] sm:$0xff]
        %v5197 = vld [vmem:[%s4891 + $0x51] sm:$0xff]
        %v5198 = vld [vmem:[%s4891 + $0x61] sm:$0xff]
        %v5199 = vld [vmem:[%s4891 + $0x69] sm:$0xff]
        %v5200 = vld [vmem:[%s4891 + $0x79] sm:$0xff]
        %v5201 = vld [vmem:[%s4891 + $0x81] sm:$0xff]
        %v5202 = vld [vmem:[%s4891 + $0x91] sm:$0xff]
        %v5203 = vld [vmem:[%s4891 + $0x99] sm:$0xff]
        %v5204 = vld [vmem:[%s4891 + $0xa9] sm:$0xff]
        %v5205 = vld [vmem:[%s4891 + $0xb1] sm:$0xff]
        %v5206 = vld [vmem:[%s4891 + $0xc1] sm:$0xff]
        %v5207 = vld [vmem:[%s4891 + $0xc9] sm:$0xff]
        %v5208 = vld [vmem:[%s4891 + $0xd9] sm:$0xff]
        %v5209 = vld [vmem:[%s4891 + $0xe1] sm:$0xff]
        %v5210 = vld [vmem:[%s4891 + $0xf1] sm:$0xff]
        %v5211 = vld [vmem:[%s4891 + $0xf9] sm:$0xff]
        %v5212 = vld [vmem:[%s4891 + $0x109] sm:$0xff]
        %v5213 = vld [vmem:[%s4891 + $0x111] sm:$0xff]
        %v5214 = vld [vmem:[%s4891 + $0x121] sm:$0xff]
        %v5215 = vld [vmem:[%s4891 + $0x129] sm:$0xff]
        %v5216 = vld [vmem:[%s4891 + $0x139] sm:$0xff]
        %v5217 = vld [vmem:[%s4891 + $0x141] sm:$0xff]
        %v5218 = vld [vmem:[%s4891 + $0x151] sm:$0xff]
        %v5219 = vld [vmem:[%s4891 + $0x159] sm:$0xff]
        %v5220 = vld [vmem:[%s4891 + $0x169] sm:$0xff]
        %v5221 = vld [vmem:[%s4891 + $0x171] sm:$0xff]
        %v5222 = vpack.c.bf16 %v5191, %v5190
        %v5223 = vpack.c.bf16 %v5193, %v5192
        %v5224 = vpack.c.bf16 %v5195, %v5194
        %v5225 = vpack.c.bf16 %v5197, %v5196
        %v5226 = vpack.c.bf16 %v5199, %v5198
        %v5227 = vpack.c.bf16 %v5201, %v5200
        %v5228 = vpack.c.bf16 %v5203, %v5202
        %v5229 = vpack.c.bf16 %v5205, %v5204
        %v5230 = vpack.c.bf16 %v5207, %v5206
        %v5231 = vpack.c.bf16 %v5209, %v5208
        %v5232 = vpack.c.bf16 %v5211, %v5210
        %v5233 = vpack.c.bf16 %v5213, %v5212
        %v5234 = vpack.c.bf16 %v5215, %v5214
        %v5235 = vpack.c.bf16 %v5217, %v5216
        %v5236 = vpack.c.bf16 %v5219, %v5218
        %v5237 = vpack.c.bf16 %v5221, %v5220
        %s5238 = scalar_lea.vmem %s3, 56
        %v5239 = vld [vmem:[%s5238] sm:$0xf]
        %v5240 = vld [vmem:[%s5238 + $0x4] sm:$0xf]
        %v5243 = vunpack.c.l.b16 %v5239
        %v5244 = vunpack.c.l.b16 %v5240
        %v5245 = vpack.c.b16 %v5244, %v5243
        %v5248 = vsel %vm3079, %v5222, 0
        %v5251 = vsel %vm3079, %v5223, 0
        %v5254 = vsel %vm3079, %v5224, 0
        %v5257 = vsel %vm3079, %v5225, 0
        %v5260 = vsel %vm3079, %v5226, 0
        %v5263 = vsel %vm3079, %v5227, 0
        %v5266 = vsel %vm3079, %v5228, 0
        %v5269 = vsel %vm3079, %v5229, 0
        %v5272 = vsel %vm3079, %v5230, 0
        %v5275 = vsel %vm3079, %v5231, 0
        %v5278 = vsel %vm3079, %v5232, 0
        %v5281 = vsel %vm3079, %v5233, 0
        %v5284 = vsel %vm3079, %v5234, 0
        %v5287 = vsel %vm3079, %v5235, 0
        %v5290 = vsel %vm3079, %v5236, 0
        %v5293 = vsel %vm3079, %v5237, 0
        %5295 = vmatprep.subr.bf16.mxu0 0
        %5296 = vmatpush1.bf16.msra.mxu0 %v5245
        %5297 = vmatprep.subr.bf16.mxu0 0
        %5298 = vmatpush1.bf16.msra.mxu0 0
        %5299 = vmatprep.subr.bf16.mxu0 0
        %5300 = vmatpush1.bf16.msra.mxu0 0
        %5301 = vmatprep.subr.bf16.mxu0 0
        %5302 = vmatpush1.bf16.msra.mxu0 0
        %5303 = vmatprep.subr.bf16.mxu0 0
        %5304 = vmatpush1.bf16.msra.mxu0 0
        %5305 = vmatprep.subr.bf16.mxu0 0
        %5306 = vmatpush1.bf16.msra.mxu0 0
        %5307 = vmatprep.subr.bf16.mxu0 0
        %5308 = vmatpush1.bf16.msra.mxu0 0
        %5309 = vmatprep.subr.bf16.mxu0 0
        %5310 = vmatpush1.bf16.msra.mxu0 0
        %5311 = vmatprep.subr.bf16.mxu0 0
        %5312 = vmatpush1.bf16.msra.mxu0 0
        %5313 = vmatprep.subr.bf16.mxu0 0
        %5314 = vmatpush1.bf16.msra.mxu0 0
        %5315 = vmatprep.subr.bf16.mxu0 0
        %5316 = vmatpush1.bf16.msra.mxu0 0
        %5317 = vmatprep.subr.bf16.mxu0 0
        %5318 = vmatpush1.bf16.msra.mxu0 0
        %5319 = vmatprep.subr.bf16.mxu0 0
        %5320 = vmatpush1.bf16.msra.mxu0 0
        %5321 = vmatprep.subr.bf16.mxu0 0
        %5322 = vmatpush1.bf16.msra.mxu0 0
        %5323 = vmatprep.subr.bf16.mxu0 0
        %5324 = vmatpush1.bf16.msra.mxu0 0
        %5325 = vmatprep.subr.bf16.mxu0 0
        %5326 = vmatpush1.bf16.msra.mxu0 0
        %5327 = vmatprep.mubr.bf16.mxu0 0
        %5328 = vmatmul.mubr.bf16.gmra.mrb[0].mxu0 %v5248
        %v5329 = vpop.f32.mrb[0].mxu0
        %v5330 = vadd.f32 0.0, %v5329
        %v5331 = vpop.f32.mrb[0].mxu0
        %v5332 = vpop.f32.mrb[0].mxu0
        %v5333 = vadd.f32 0.0, %v5332
        %v5334 = vpop.f32.mrb[0].mxu0
        %5335 = vmatprep.mubr.bf16.mxu0 0
        %5336 = vmatmul.mubr.bf16.gmra.mrb[0].mxu0 %v5251
        %v5337 = vpop.f32.mrb[0].mxu0
        %v5338 = vadd.f32 0.0, %v5337
        %v5339 = vpop.f32.mrb[0].mxu0
        %v5340 = vpop.f32.mrb[0].mxu0
        %v5341 = vadd.f32 0.0, %v5340
        %v5342 = vpop.f32.mrb[0].mxu0
        %5343 = vmatprep.mubr.bf16.mxu0 0
        %5344 = vmatmul.mubr.bf16.gmra.mrb[0].mxu0 %v5254
        %v5345 = vpop.f32.mrb[0].mxu0
        %v5346 = vadd.f32 0.0, %v5345
        %v5347 = vpop.f32.mrb[0].mxu0
        %v5348 = vpop.f32.mrb[0].mxu0
        %v5349 = vadd.f32 0.0, %v5348
        %v5350 = vpop.f32.mrb[0].mxu0
        %5351 = vmatprep.mubr.bf16.mxu0 0
        %5352 = vmatmul.mubr.bf16.gmra.mrb[0].mxu0 %v5257
        %v5353 = vpop.f32.mrb[0].mxu0
        %v5354 = vadd.f32 0.0, %v5353
        %v5355 = vpop.f32.mrb[0].mxu0
        %v5356 = vpop.f32.mrb[0].mxu0
        %v5357 = vadd.f32 0.0, %v5356
        %v5358 = vpop.f32.mrb[0].mxu0
        %5359 = vmatprep.mubr.bf16.mxu0 0
        %5360 = vmatmul.mubr.bf16.gmra.mrb[0].mxu0 %v5260
        %v5361 = vpop.f32.mrb[0].mxu0
        %v5362 = vadd.f32 0.0, %v5361
        %v5363 = vpop.f32.mrb[0].mxu0
        %v5364 = vpop.f32.mrb[0].mxu0
        %v5365 = vadd.f32 0.0, %v5364
        %v5366 = vpop.f32.mrb[0].mxu0
        %5367 = vmatprep.mubr.bf16.mxu0 0
        %5368 = vmatmul.mubr.bf16.gmra.mrb[0].mxu0 %v5263
        %v5369 = vpop.f32.mrb[0].mxu0
        %v5370 = vadd.f32 0.0, %v5369
        %v5371 = vpop.f32.mrb[0].mxu0
        %v5372 = vpop.f32.mrb[0].mxu0
        %v5373 = vadd.f32 0.0, %v5372
        %v5374 = vpop.f32.mrb[0].mxu0
        %5375 = vmatprep.mubr.bf16.mxu0 0
        %5376 = vmatmul.mubr.bf16.gmra.mrb[0].mxu0 %v5266
        %v5377 = vpop.f32.mrb[0].mxu0
        %v5378 = vadd.f32 0.0, %v5377
        %v5379 = vpop.f32.mrb[0].mxu0
        %v5380 = vpop.f32.mrb[0].mxu0
        %v5381 = vadd.f32 0.0, %v5380
        %v5382 = vpop.f32.mrb[0].mxu0
        %5383 = vmatprep.mubr.bf16.mxu0 0
        %5384 = vmatmul.mubr.bf16.gmra.mrb[0].mxu0 %v5269
        %v5385 = vpop.f32.mrb[0].mxu0
        %v5386 = vadd.f32 0.0, %v5385
        %v5387 = vpop.f32.mrb[0].mxu0
        %v5388 = vpop.f32.mrb[0].mxu0
        %v5389 = vadd.f32 0.0, %v5388
        %v5390 = vpop.f32.mrb[0].mxu0
        %5391 = vmatprep.mubr.bf16.mxu0 0
        %5392 = vmatmul.mubr.bf16.gmra.mrb[0].mxu0 %v5272
        %v5393 = vpop.f32.mrb[0].mxu0
        %v5394 = vadd.f32 0.0, %v5393
        %v5395 = vpop.f32.mrb[0].mxu0
        %v5396 = vpop.f32.mrb[0].mxu0
        %v5397 = vadd.f32 0.0, %v5396
        %v5398 = vpop.f32.mrb[0].mxu0
        %5399 = vmatprep.mubr.bf16.mxu0 0
        %5400 = vmatmul.mubr.bf16.gmra.mrb[0].mxu0 %v5275
        %v5401 = vpop.f32.mrb[0].mxu0
        %v5402 = vadd.f32 0.0, %v5401
        %v5403 = vpop.f32.mrb[0].mxu0
        %v5404 = vpop.f32.mrb[0].mxu0
        %v5405 = vadd.f32 0.0, %v5404
        %v5406 = vpop.f32.mrb[0].mxu0
        %5407 = vmatprep.mubr.bf16.mxu0 0
        %5408 = vmatmul.mubr.bf16.gmra.mrb[0].mxu0 %v5278
        %v5409 = vpop.f32.mrb[0].mxu0
        %v5410 = vadd.f32 0.0, %v5409
        %v5411 = vpop.f32.mrb[0].mxu0
        %v5412 = vpop.f32.mrb[0].mxu0
        %v5413 = vadd.f32 0.0, %v5412
        %v5414 = vpop.f32.mrb[0].mxu0
        %5415 = vmatprep.mubr.bf16.mxu0 0
        %5416 = vmatmul.mubr.bf16.gmra.mrb[0].mxu0 %v5281
        %v5417 = vpop.f32.mrb[0].mxu0
        %v5418 = vadd.f32 0.0, %v5417
        %v5419 = vpop.f32.mrb[0].mxu0
        %v5420 = vpop.f32.mrb[0].mxu0
        %v5421 = vadd.f32 0.0, %v5420
        %v5422 = vpop.f32.mrb[0].mxu0
        %5423 = vmatprep.mubr.bf16.mxu0 0
        %5424 = vmatmul.mubr.bf16.gmra.mrb[0].mxu0 %v5284
        %v5425 = vpop.f32.mrb[0].mxu0
        %v5426 = vadd.f32 0.0, %v5425
        %v5427 = vpop.f32.mrb[0].mxu0
        %v5428 = vpop.f32.mrb[0].mxu0
        %v5429 = vadd.f32 0.0, %v5428
        %v5430 = vpop.f32.mrb[0].mxu0
        %5431 = vmatprep.mubr.bf16.mxu0 0
        %5432 = vmatmul.mubr.bf16.gmra.mrb[0].mxu0 %v5287
        %v5433 = vpop.f32.mrb[0].mxu0
        %v5434 = vadd.f32 0.0, %v5433
        %v5435 = vpop.f32.mrb[0].mxu0
        %v5436 = vpop.f32.mrb[0].mxu0
        %v5437 = vadd.f32 0.0, %v5436
        %v5438 = vpop.f32.mrb[0].mxu0
        %5439 = vmatprep.mubr.bf16.mxu0 0
        %5440 = vmatmul.mubr.bf16.gmra.mrb[0].mxu0 %v5290
        %v5441 = vpop.f32.mrb[0].mxu0
        %v5442 = vadd.f32 0.0, %v5441
        %v5443 = vpop.f32.mrb[0].mxu0
        %v5444 = vpop.f32.mrb[0].mxu0
        %v5445 = vadd.f32 0.0, %v5444
        %v5446 = vpop.f32.mrb[0].mxu0
        %5447 = vmatprep.mubr.bf16.mxu0 0
        %5448 = vmatmul.mubr.bf16.gmra.mrb[0].mxu0 %v5293
        %v5449 = vpop.f32.mrb[0].mxu0
        %v5450 = vadd.f32 0.0, %v5449
        %v5451 = vpop.f32.mrb[0].mxu0
        %v5452 = vpop.f32.mrb[0].mxu0
        %v5453 = vadd.f32 0.0, %v5452
        %v5454 = vpop.f32.mrb[0].mxu0
        %5455 = vdwg.mxu0
        %v5456 = vadd.f32 %v5158, %v5330
        %v5457 = vadd.f32 %v5159, %v5333
        %v5458 = vadd.f32 %v5160, %v5338
        %v5459 = vadd.f32 %v5161, %v5341
        %v5460 = vadd.f32 %v5162, %v5346
        %v5461 = vadd.f32 %v5163, %v5349
        %v5462 = vadd.f32 %v5164, %v5354
        %v5463 = vadd.f32 %v5165, %v5357
        %v5464 = vadd.f32 %v5166, %v5362
        %v5465 = vadd.f32 %v5167, %v5365
        %v5466 = vadd.f32 %v5168, %v5370
        %v5467 = vadd.f32 %v5169, %v5373
        %v5468 = vadd.f32 %v5170, %v5378
        %v5469 = vadd.f32 %v5171, %v5381
        %v5470 = vadd.f32 %v5172, %v5386
        %v5471 = vadd.f32 %v5173, %v5389
        %v5472 = vadd.f32 %v5174, %v5394
        %v5473 = vadd.f32 %v5175, %v5397
        %v5474 = vadd.f32 %v5176, %v5402
        %v5475 = vadd.f32 %v5177, %v5405
        %v5476 = vadd.f32 %v5178, %v5410
        %v5477 = vadd.f32 %v5179, %v5413
        %v5478 = vadd.f32 %v5180, %v5418
        %v5479 = vadd.f32 %v5181, %v5421
        %v5480 = vadd.f32 %v5182, %v5426
        %v5481 = vadd.f32 %v5183, %v5429
        %v5482 = vadd.f32 %v5184, %v5434
        %v5483 = vadd.f32 %v5185, %v5437
        %v5484 = vadd.f32 %v5186, %v5442
        %v5485 = vadd.f32 %v5187, %v5445
        %v5486 = vadd.f32 %v5188, %v5450
        %v5487 = vadd.f32 %v5189, %v5453
        %v5488 = vld [vmem:[%s4891 + $0x2] sm:$0xff]
        %v5489 = vld [vmem:[%s4891 + $0xa] sm:$0xff]
        %v5490 = vld [vmem:[%s4891 + $0x1a] sm:$0xff]
        %v5491 = vld [vmem:[%s4891 + $0x22] sm:$0xff]
        %v5492 = vld [vmem:[%s4891 + $0x32] sm:$0xff]
        %v5493 = vld [vmem:[%s4891 + $0x3a] sm:$0xff]
        %v5494 = vld [vmem:[%s4891 + $0x4a] sm:$0xff]
        %v5495 = vld [vmem:[%s4891 + $0x52] sm:$0xff]
        %v5496 = vld [vmem:[%s4891 + $0x62] sm:$0xff]
        %v5497 = vld [vmem:[%s4891 + $0x6a] sm:$0xff]
        %v5498 = vld [vmem:[%s4891 + $0x7a] sm:$0xff]
        %v5499 = vld [vmem:[%s4891 + $0x82] sm:$0xff]
        %v5500 = vld [vmem:[%s4891 + $0x92] sm:$0xff]
        %v5501 = vld [vmem:[%s4891 + $0x9a] sm:$0xff]
        %v5502 = vld [vmem:[%s4891 + $0xaa] sm:$0xff]
        %v5503 = vld [vmem:[%s4891 + $0xb2] sm:$0xff]
        %v5504 = vld [vmem:[%s4891 + $0xc2] sm:$0xff]
        %v5505 = vld [vmem:[%s4891 + $0xca] sm:$0xff]
        %v5506 = vld [vmem:[%s4891 + $0xda] sm:$0xff]
        %v5507 = vld [vmem:[%s4891 + $0xe2] sm:$0xff]
        %v5508 = vld [vmem:[%s4891 + $0xf2] sm:$0xff]
        %v5509 = vld [vmem:[%s4891 + $0xfa] sm:$0xff]
        %v5510 = vld [vmem:[%s4891 + $0x10a] sm:$0xff]
        %v5511 = vld [vmem:[%s4891 + $0x112] sm:$0xff]
        %v5512 = vld [vmem:[%s4891 + $0x122] sm:$0xff]
        %v5513 = vld [vmem:[%s4891 + $0x12a] sm:$0xff]
        %v5514 = vld [vmem:[%s4891 + $0x13a] sm:$0xff]
        %v5515 = vld [vmem:[%s4891 + $0x142] sm:$0xff]
        %v5516 = vld [vmem:[%s4891 + $0x152] sm:$0xff]
        %v5517 = vld [vmem:[%s4891 + $0x15a] sm:$0xff]
        %v5518 = vld [vmem:[%s4891 + $0x16a] sm:$0xff]
        %v5519 = vld [vmem:[%s4891 + $0x172] sm:$0xff]
        %v5520 = vpack.c.bf16 %v5489, %v5488
        %v5521 = vpack.c.bf16 %v5491, %v5490
        %v5522 = vpack.c.bf16 %v5493, %v5492
        %v5523 = vpack.c.bf16 %v5495, %v5494
        %v5524 = vpack.c.bf16 %v5497, %v5496
        %v5525 = vpack.c.bf16 %v5499, %v5498
        %v5526 = vpack.c.bf16 %v5501, %v5500
        %v5527 = vpack.c.bf16 %v5503, %v5502
        %v5528 = vpack.c.bf16 %v5505, %v5504
        %v5529 = vpack.c.bf16 %v5507, %v5506
        %v5530 = vpack.c.bf16 %v5509, %v5508
        %v5531 = vpack.c.bf16 %v5511, %v5510
        %v5532 = vpack.c.bf16 %v5513, %v5512
        %v5533 = vpack.c.bf16 %v5515, %v5514
        %v5534 = vpack.c.bf16 %v5517, %v5516
        %v5535 = vpack.c.bf16 %v5519, %v5518
        %s5536 = scalar_lea.vmem %s3, 64
        %v5537 = vld [vmem:[%s5536] sm:$0xf]
        %v5538 = vld [vmem:[%s5536 + $0x4] sm:$0xf]
        %v5541 = vunpack.c.l.b16 %v5537
        %v5542 = vunpack.c.l.b16 %v5538
        %v5543 = vpack.c.b16 %v5542, %v5541
        %v5546 = vsel %vm3079, %v5520, 0
        %v5549 = vsel %vm3079, %v5521, 0
        %v5552 = vsel %vm3079, %v5522, 0
        %v5555 = vsel %vm3079, %v5523, 0
        %v5558 = vsel %vm3079, %v5524, 0
        %v5561 = vsel %vm3079, %v5525, 0
        %v5564 = vsel %vm3079, %v5526, 0
        %v5567 = vsel %vm3079, %v5527, 0
        %v5570 = vsel %vm3079, %v5528, 0
        %v5573 = vsel %vm3079, %v5529, 0
        %v5576 = vsel %vm3079, %v5530, 0
        %v5579 = vsel %vm3079, %v5531, 0
        %v5582 = vsel %vm3079, %v5532, 0
        %v5585 = vsel %vm3079, %v5533, 0
        %v5588 = vsel %vm3079, %v5534, 0
        %v5591 = vsel %vm3079, %v5535, 0
        %5593 = vmatprep.subr.bf16.mxu0 0
        %5594 = vmatpush1.bf16.msra.mxu0 %v5543
        %5595 = vmatprep.subr.bf16.mxu0 0
        %5596 = vmatpush1.bf16.msra.mxu0 0
        %5597 = vmatprep.subr.bf16.mxu0 0
        %5598 = vmatpush1.bf16.msra.mxu0 0
        %5599 = vmatprep.subr.bf16.mxu0 0
        %5600 = vmatpush1.bf16.msra.mxu0 0
        %5601 = vmatprep.subr.bf16.mxu0 0
        %5602 = vmatpush1.bf16.msra.mxu0 0
        %5603 = vmatprep.subr.bf16.mxu0 0
        %5604 = vmatpush1.bf16.msra.mxu0 0
        %5605 = vmatprep.subr.bf16.mxu0 0
        %5606 = vmatpush1.bf16.msra.mxu0 0
        %5607 = vmatprep.subr.bf16.mxu0 0
        %5608 = vmatpush1.bf16.msra.mxu0 0
        %5609 = vmatprep.subr.bf16.mxu0 0
        %5610 = vmatpush1.bf16.msra.mxu0 0
        %5611 = vmatprep.subr.bf16.mxu0 0
        %5612 = vmatpush1.bf16.msra.mxu0 0
        %5613 = vmatprep.subr.bf16.mxu0 0
        %5614 = vmatpush1.bf16.msra.mxu0 0
        %5615 = vmatprep.subr.bf16.mxu0 0
        %5616 = vmatpush1.bf16.msra.mxu0 0
        %5617 = vmatprep.subr.bf16.mxu0 0
        %5618 = vmatpush1.bf16.msra.mxu0 0
        %5619 = vmatprep.subr.bf16.mxu0 0
        %5620 = vmatpush1.bf16.msra.mxu0 0
        %5621 = vmatprep.subr.bf16.mxu0 0
        %5622 = vmatpush1.bf16.msra.mxu0 0
        %5623 = vmatprep.subr.bf16.mxu0 0
        %5624 = vmatpush1.bf16.msra.mxu0 0
        %5625 = vmatprep.mubr.bf16.mxu0 0
        %5626 = vmatmul.mubr.bf16.gmra.mrb[0].mxu0 %v5546
        %v5627 = vpop.f32.mrb[0].mxu0
        %v5628 = vadd.f32 0.0, %v5627
        %v5629 = vpop.f32.mrb[0].mxu0
        %v5630 = vpop.f32.mrb[0].mxu0
        %v5631 = vadd.f32 0.0, %v5630
        %v5632 = vpop.f32.mrb[0].mxu0
        %5633 = vmatprep.mubr.bf16.mxu0 0
        %5634 = vmatmul.mubr.bf16.gmra.mrb[0].mxu0 %v5549
        %v5635 = vpop.f32.mrb[0].mxu0
        %v5636 = vadd.f32 0.0, %v5635
        %v5637 = vpop.f32.mrb[0].mxu0
        %v5638 = vpop.f32.mrb[0].mxu0
        %v5639 = vadd.f32 0.0, %v5638
        %v5640 = vpop.f32.mrb[0].mxu0
        %5641 = vmatprep.mubr.bf16.mxu0 0
        %5642 = vmatmul.mubr.bf16.gmra.mrb[0].mxu0 %v5552
        %v5643 = vpop.f32.mrb[0].mxu0
        %v5644 = vadd.f32 0.0, %v5643
        %v5645 = vpop.f32.mrb[0].mxu0
        %v5646 = vpop.f32.mrb[0].mxu0
        %v5647 = vadd.f32 0.0, %v5646
        %v5648 = vpop.f32.mrb[0].mxu0
        %5649 = vmatprep.mubr.bf16.mxu0 0
        %5650 = vmatmul.mubr.bf16.gmra.mrb[0].mxu0 %v5555
        %v5651 = vpop.f32.mrb[0].mxu0
        %v5652 = vadd.f32 0.0, %v5651
        %v5653 = vpop.f32.mrb[0].mxu0
        %v5654 = vpop.f32.mrb[0].mxu0
        %v5655 = vadd.f32 0.0, %v5654
        %v5656 = vpop.f32.mrb[0].mxu0
        %5657 = vmatprep.mubr.bf16.mxu0 0
        %5658 = vmatmul.mubr.bf16.gmra.mrb[0].mxu0 %v5558
        %v5659 = vpop.f32.mrb[0].mxu0
        %v5660 = vadd.f32 0.0, %v5659
        %v5661 = vpop.f32.mrb[0].mxu0
        %v5662 = vpop.f32.mrb[0].mxu0
        %v5663 = vadd.f32 0.0, %v5662
        %v5664 = vpop.f32.mrb[0].mxu0
        %5665 = vmatprep.mubr.bf16.mxu0 0
        %5666 = vmatmul.mubr.bf16.gmra.mrb[0].mxu0 %v5561
        %v5667 = vpop.f32.mrb[0].mxu0
        %v5668 = vadd.f32 0.0, %v5667
        %v5669 = vpop.f32.mrb[0].mxu0
        %v5670 = vpop.f32.mrb[0].mxu0
        %v5671 = vadd.f32 0.0, %v5670
        %v5672 = vpop.f32.mrb[0].mxu0
        %5673 = vmatprep.mubr.bf16.mxu0 0
        %5674 = vmatmul.mubr.bf16.gmra.mrb[0].mxu0 %v5564
        %v5675 = vpop.f32.mrb[0].mxu0
        %v5676 = vadd.f32 0.0, %v5675
        %v5677 = vpop.f32.mrb[0].mxu0
        %v5678 = vpop.f32.mrb[0].mxu0
        %v5679 = vadd.f32 0.0, %v5678
        %v5680 = vpop.f32.mrb[0].mxu0
        %5681 = vmatprep.mubr.bf16.mxu0 0
        %5682 = vmatmul.mubr.bf16.gmra.mrb[0].mxu0 %v5567
        %v5683 = vpop.f32.mrb[0].mxu0
        %v5684 = vadd.f32 0.0, %v5683
        %v5685 = vpop.f32.mrb[0].mxu0
        %v5686 = vpop.f32.mrb[0].mxu0
        %v5687 = vadd.f32 0.0, %v5686
        %v5688 = vpop.f32.mrb[0].mxu0
        %5689 = vmatprep.mubr.bf16.mxu0 0
        %5690 = vmatmul.mubr.bf16.gmra.mrb[0].mxu0 %v5570
        %v5691 = vpop.f32.mrb[0].mxu0
        %v5692 = vadd.f32 0.0, %v5691
        %v5693 = vpop.f32.mrb[0].mxu0
        %v5694 = vpop.f32.mrb[0].mxu0
        %v5695 = vadd.f32 0.0, %v5694
        %v5696 = vpop.f32.mrb[0].mxu0
        %5697 = vmatprep.mubr.bf16.mxu0 0
        %5698 = vmatmul.mubr.bf16.gmra.mrb[0].mxu0 %v5573
        %v5699 = vpop.f32.mrb[0].mxu0
        %v5700 = vadd.f32 0.0, %v5699
        %v5701 = vpop.f32.mrb[0].mxu0
        %v5702 = vpop.f32.mrb[0].mxu0
        %v5703 = vadd.f32 0.0, %v5702
        %v5704 = vpop.f32.mrb[0].mxu0
        %5705 = vmatprep.mubr.bf16.mxu0 0
        %5706 = vmatmul.mubr.bf16.gmra.mrb[0].mxu0 %v5576
        %v5707 = vpop.f32.mrb[0].mxu0
        %v5708 = vadd.f32 0.0, %v5707
        %v5709 = vpop.f32.mrb[0].mxu0
        %v5710 = vpop.f32.mrb[0].mxu0
        %v5711 = vadd.f32 0.0, %v5710
        %v5712 = vpop.f32.mrb[0].mxu0
        %5713 = vmatprep.mubr.bf16.mxu0 0
        %5714 = vmatmul.mubr.bf16.gmra.mrb[0].mxu0 %v5579
        %v5715 = vpop.f32.mrb[0].mxu0
        %v5716 = vadd.f32 0.0, %v5715
        %v5717 = vpop.f32.mrb[0].mxu0
        %v5718 = vpop.f32.mrb[0].mxu0
        %v5719 = vadd.f32 0.0, %v5718
        %v5720 = vpop.f32.mrb[0].mxu0
        %5721 = vmatprep.mubr.bf16.mxu0 0
        %5722 = vmatmul.mubr.bf16.gmra.mrb[0].mxu0 %v5582
        %v5723 = vpop.f32.mrb[0].mxu0
        %v5724 = vadd.f32 0.0, %v5723
        %v5725 = vpop.f32.mrb[0].mxu0
        %v5726 = vpop.f32.mrb[0].mxu0
        %v5727 = vadd.f32 0.0, %v5726
        %v5728 = vpop.f32.mrb[0].mxu0
        %5729 = vmatprep.mubr.bf16.mxu0 0
        %5730 = vmatmul.mubr.bf16.gmra.mrb[0].mxu0 %v5585
        %v5731 = vpop.f32.mrb[0].mxu0
        %v5732 = vadd.f32 0.0, %v5731
        %v5733 = vpop.f32.mrb[0].mxu0
        %v5734 = vpop.f32.mrb[0].mxu0
        %v5735 = vadd.f32 0.0, %v5734
        %v5736 = vpop.f32.mrb[0].mxu0
        %5737 = vmatprep.mubr.bf16.mxu0 0
        %5738 = vmatmul.mubr.bf16.gmra.mrb[0].mxu0 %v5588
        %v5739 = vpop.f32.mrb[0].mxu0
        %v5740 = vadd.f32 0.0, %v5739
        %v5741 = vpop.f32.mrb[0].mxu0
        %v5742 = vpop.f32.mrb[0].mxu0
        %v5743 = vadd.f32 0.0, %v5742
        %v5744 = vpop.f32.mrb[0].mxu0
        %5745 = vmatprep.mubr.bf16.mxu0 0
        %5746 = vmatmul.mubr.bf16.gmra.mrb[0].mxu0 %v5591
        %v5747 = vpop.f32.mrb[0].mxu0
        %v5748 = vadd.f32 0.0, %v5747
        %v5749 = vpop.f32.mrb[0].mxu0
        %v5750 = vpop.f32.mrb[0].mxu0
        %v5751 = vadd.f32 0.0, %v5750
        %v5752 = vpop.f32.mrb[0].mxu0
        %5753 = vdwg.mxu0
        %v5754 = vadd.f32 %v5456, %v5628
        %v5755 = vadd.f32 %v5457, %v5631
        %v5756 = vadd.f32 %v5458, %v5636
        %v5757 = vadd.f32 %v5459, %v5639
        %v5758 = vadd.f32 %v5460, %v5644
        %v5759 = vadd.f32 %v5461, %v5647
        %v5760 = vadd.f32 %v5462, %v5652
        %v5761 = vadd.f32 %v5463, %v5655
        %v5762 = vadd.f32 %v5464, %v5660
        %v5763 = vadd.f32 %v5465, %v5663
        %v5764 = vadd.f32 %v5466, %v5668
        %v5765 = vadd.f32 %v5467, %v5671
        %v5766 = vadd.f32 %v5468, %v5676
        %v5767 = vadd.f32 %v5469, %v5679
        %v5768 = vadd.f32 %v5470, %v5684
        %v5769 = vadd.f32 %v5471, %v5687
        %v5770 = vadd.f32 %v5472, %v5692
        %v5771 = vadd.f32 %v5473, %v5695
        %v5772 = vadd.f32 %v5474, %v5700
        %v5773 = vadd.f32 %v5475, %v5703
        %v5774 = vadd.f32 %v5476, %v5708
        %v5775 = vadd.f32 %v5477, %v5711
        %v5776 = vadd.f32 %v5478, %v5716
        %v5777 = vadd.f32 %v5479, %v5719
        %v5778 = vadd.f32 %v5480, %v5724
        %v5779 = vadd.f32 %v5481, %v5727
        %v5780 = vadd.f32 %v5482, %v5732
        %v5781 = vadd.f32 %v5483, %v5735
        %v5782 = vadd.f32 %v5484, %v5740
        %v5783 = vadd.f32 %v5485, %v5743
        %v5784 = vadd.f32 %v5486, %v5748
        %v5785 = vadd.f32 %v5487, %v5751
        %v5786 = vld [vmem:[%s4] sm:$0x1]
        %v5788 = vlaneseq
        %v5789 = vshrl.u32 %v5788, 7
        %v5790 = vsub.s32 0, %v5789
        %v5791 = vrot.slane %v5786, %v5790
        %v5793 = vadd.f32 %v5754, %v5791
        %v5794 = vadd.f32 %v5755, %v5791
        %v5795 = vadd.f32 %v5756, %v5791
        %v5796 = vadd.f32 %v5757, %v5791
        %v5797 = vadd.f32 %v5758, %v5791
        %v5798 = vadd.f32 %v5759, %v5791
        %v5799 = vadd.f32 %v5760, %v5791
        %v5800 = vadd.f32 %v5761, %v5791
        %v5801 = vadd.f32 %v5762, %v5791
        %v5802 = vadd.f32 %v5763, %v5791
        %v5803 = vadd.f32 %v5764, %v5791
        %v5804 = vadd.f32 %v5765, %v5791
        %v5805 = vadd.f32 %v5766, %v5791
        %v5806 = vadd.f32 %v5767, %v5791
        %v5807 = vadd.f32 %v5768, %v5791
        %v5808 = vadd.f32 %v5769, %v5791
        %v5809 = vadd.f32 %v5770, %v5791
        %v5810 = vadd.f32 %v5771, %v5791
        %v5811 = vadd.f32 %v5772, %v5791
        %v5812 = vadd.f32 %v5773, %v5791
        %v5813 = vadd.f32 %v5774, %v5791
        %v5814 = vadd.f32 %v5775, %v5791
        %v5815 = vadd.f32 %v5776, %v5791
        %v5816 = vadd.f32 %v5777, %v5791
        %v5817 = vadd.f32 %v5778, %v5791
        %v5818 = vadd.f32 %v5779, %v5791
        %v5819 = vadd.f32 %v5780, %v5791
        %v5820 = vadd.f32 %v5781, %v5791
        %v5821 = vadd.f32 %v5782, %v5791
        %v5822 = vadd.f32 %v5783, %v5791
        %v5823 = vadd.f32 %v5784, %v5791
        %v5824 = vadd.f32 %v5785, %v5791
        %v5825 = vmax.f32 %v5793, 0.0
        %v5826 = vmax.f32 %v5794, 0.0
        %v5827 = vmax.f32 %v5795, 0.0
        %v5828 = vmax.f32 %v5796, 0.0
        %v5829 = vmax.f32 %v5797, 0.0
        %v5830 = vmax.f32 %v5798, 0.0
        %v5831 = vmax.f32 %v5799, 0.0
        %v5832 = vmax.f32 %v5800, 0.0
        %v5833 = vmax.f32 %v5801, 0.0
        %v5834 = vmax.f32 %v5802, 0.0
        %v5835 = vmax.f32 %v5803, 0.0
        %v5836 = vmax.f32 %v5804, 0.0
        %v5837 = vmax.f32 %v5805, 0.0
        %v5838 = vmax.f32 %v5806, 0.0
        %v5839 = vmax.f32 %v5807, 0.0
        %v5840 = vmax.f32 %v5808, 0.0
        %v5841 = vmax.f32 %v5809, 0.0
        %v5842 = vmax.f32 %v5810, 0.0
        %v5843 = vmax.f32 %v5811, 0.0
        %v5844 = vmax.f32 %v5812, 0.0
        %v5845 = vmax.f32 %v5813, 0.0
        %v5846 = vmax.f32 %v5814, 0.0
        %v5847 = vmax.f32 %v5815, 0.0
        %v5848 = vmax.f32 %v5816, 0.0
        %v5849 = vmax.f32 %v5817, 0.0
        %v5850 = vmax.f32 %v5818, 0.0
        %v5851 = vmax.f32 %v5819, 0.0
        %v5852 = vmax.f32 %v5820, 0.0
        %v5853 = vmax.f32 %v5821, 0.0
        %v5854 = vmax.f32 %v5822, 0.0
        %v5855 = vmax.f32 %v5823, 0.0
        %v5856 = vmax.f32 %v5824, 0.0
        %v5857 = vmax.f32 %v5825, 1e-06
        %v5858 = vmax.f32 %v5826, 1e-06
        %v5859 = vmax.f32 %v5827, 1e-06
        %v5860 = vmax.f32 %v5828, 1e-06
        %v5861 = vmax.f32 %v5829, 1e-06
        %v5862 = vmax.f32 %v5830, 1e-06
        %v5863 = vmax.f32 %v5831, 1e-06
        %v5864 = vmax.f32 %v5832, 1e-06
        %v5865 = vmax.f32 %v5833, 1e-06
        %v5866 = vmax.f32 %v5834, 1e-06
        %v5867 = vmax.f32 %v5835, 1e-06
        %v5868 = vmax.f32 %v5836, 1e-06
        %v5869 = vmax.f32 %v5837, 1e-06
        %v5870 = vmax.f32 %v5838, 1e-06
        %v5871 = vmax.f32 %v5839, 1e-06
        %v5872 = vmax.f32 %v5840, 1e-06
        %v5873 = vmax.f32 %v5841, 1e-06
        %v5874 = vmax.f32 %v5842, 1e-06
        %v5875 = vmax.f32 %v5843, 1e-06
        %v5876 = vmax.f32 %v5844, 1e-06
        %v5877 = vmax.f32 %v5845, 1e-06
        %v5878 = vmax.f32 %v5846, 1e-06
        %v5879 = vmax.f32 %v5847, 1e-06
        %v5880 = vmax.f32 %v5848, 1e-06
        %v5881 = vmax.f32 %v5849, 1e-06
        %v5882 = vmax.f32 %v5850, 1e-06
        %v5883 = vmax.f32 %v5851, 1e-06
        %v5884 = vmax.f32 %v5852, 1e-06
        %v5885 = vmax.f32 %v5853, 1e-06
        %v5886 = vmax.f32 %v5854, 1e-06
        %v5887 = vmax.f32 %v5855, 1e-06
        %v5888 = vmax.f32 %v5856, 1e-06
        %v5889 = vmul.f32 %v5857, %v5857
        %v5890 = vmul.f32 %v5858, %v5858
        %v5891 = vmul.f32 %v5859, %v5859
        %v5892 = vmul.f32 %v5860, %v5860
        %v5893 = vmul.f32 %v5861, %v5861
        %v5894 = vmul.f32 %v5862, %v5862
        %v5895 = vmul.f32 %v5863, %v5863
        %v5896 = vmul.f32 %v5864, %v5864
        %v5897 = vmul.f32 %v5865, %v5865
        %v5898 = vmul.f32 %v5866, %v5866
        %v5899 = vmul.f32 %v5867, %v5867
        %v5900 = vmul.f32 %v5868, %v5868
        %v5901 = vmul.f32 %v5869, %v5869
        %v5902 = vmul.f32 %v5870, %v5870
        %v5903 = vmul.f32 %v5871, %v5871
        %v5904 = vmul.f32 %v5872, %v5872
        %v5905 = vmul.f32 %v5873, %v5873
        %v5906 = vmul.f32 %v5874, %v5874
        %v5907 = vmul.f32 %v5875, %v5875
        %v5908 = vmul.f32 %v5876, %v5876
        %v5909 = vmul.f32 %v5877, %v5877
        %v5910 = vmul.f32 %v5878, %v5878
        %v5911 = vmul.f32 %v5879, %v5879
        %v5912 = vmul.f32 %v5880, %v5880
        %v5913 = vmul.f32 %v5881, %v5881
        %v5914 = vmul.f32 %v5882, %v5882
        %v5915 = vmul.f32 %v5883, %v5883
        %v5916 = vmul.f32 %v5884, %v5884
        %v5917 = vmul.f32 %v5885, %v5885
        %v5918 = vmul.f32 %v5886, %v5886
        %v5919 = vmul.f32 %v5887, %v5887
        %v5920 = vmul.f32 %v5888, %v5888
        %v5921 = vmul.f32 %v5889, %v5857
        %v5922 = vmul.f32 %v5890, %v5858
        %v5923 = vmul.f32 %v5891, %v5859
        %v5924 = vmul.f32 %v5892, %v5860
        %v5925 = vmul.f32 %v5893, %v5861
        %v5926 = vmul.f32 %v5894, %v5862
        %v5927 = vmul.f32 %v5895, %v5863
        %v5928 = vmul.f32 %v5896, %v5864
        %v5929 = vmul.f32 %v5897, %v5865
        %v5930 = vmul.f32 %v5898, %v5866
        %v5931 = vmul.f32 %v5899, %v5867
        %v5932 = vmul.f32 %v5900, %v5868
        %v5933 = vmul.f32 %v5901, %v5869
        %v5934 = vmul.f32 %v5902, %v5870
        %v5935 = vmul.f32 %v5903, %v5871
        %v5936 = vmul.f32 %v5904, %v5872
        %v5937 = vmul.f32 %v5905, %v5873
        %v5938 = vmul.f32 %v5906, %v5874
        %v5939 = vmul.f32 %v5907, %v5875
        %v5940 = vmul.f32 %v5908, %v5876
        %v5941 = vmul.f32 %v5909, %v5877
        %v5942 = vmul.f32 %v5910, %v5878
        %v5943 = vmul.f32 %v5911, %v5879
        %v5944 = vmul.f32 %v5912, %v5880
        %v5945 = vmul.f32 %v5913, %v5881
        %v5946 = vmul.f32 %v5914, %v5882
        %v5947 = vmul.f32 %v5915, %v5883
        %v5948 = vmul.f32 %v5916, %v5884
        %v5949 = vmul.f32 %v5917, %v5885
        %v5950 = vmul.f32 %v5918, %v5886
        %v5951 = vmul.f32 %v5919, %v5887
        %v5952 = vmul.f32 %v5920, %v5888
        %v5953 = vld [vmem:[%s5] sm:$0x3]
        %v5955 = vlaneseq
        %v5956 = vshrl.u32 %v5955, 7
        %v5957 = vsub.s32 0, %v5956
        %v5958 = vrot.slane %v5953, %v5957
        %v5959 = vlaneseq
        %v5960 = vshrl.u32 %v5959, 7
        %v5961 = vsub.s32 1, %v5960
        %v5962 = vrot.slane %v5953, %v5961
        %5965 = vmatprep.subr.mxu0 0.0
        %5966 = vmatpush1.msra.mxu0 %v5921
        %5967 = vmatprep.subr.mxu0 0.0
        %5968 = vmatpush1.msra.mxu0 %v5922
        %5969 = vmatprep.subr.mxu0 0.0
        %5970 = vmatpush1.msra.mxu0 %v5923
        %5971 = vmatprep.subr.mxu0 0.0
        %5972 = vmatpush1.msra.mxu0 %v5924
        %5973 = vmatprep.subr.mxu0 0.0
        %5974 = vmatpush1.msra.mxu0 %v5925
        %5975 = vmatprep.subr.mxu0 0.0
        %5976 = vmatpush1.msra.mxu0 %v5926
        %5977 = vmatprep.subr.mxu0 0.0
        %5978 = vmatpush1.msra.mxu0 %v5927
        %5979 = vmatprep.subr.mxu0 0.0
        %5980 = vmatpush1.msra.mxu0 %v5928
        %5981 = vmatprep.subr.mxu0 0.0
        %5982 = vmatpush1.msra.mxu0 %v5929
        %5983 = vmatprep.subr.mxu0 0.0
        %5984 = vmatpush1.msra.mxu0 %v5930
        %5985 = vmatprep.subr.mxu0 0.0
        %5986 = vmatpush1.msra.mxu0 %v5931
        %5987 = vmatprep.subr.mxu0 0.0
        %5988 = vmatpush1.msra.mxu0 %v5932
        %5989 = vmatprep.subr.mxu0 0.0
        %5990 = vmatpush1.msra.mxu0 %v5933
        %5991 = vmatprep.subr.mxu0 0.0
        %5992 = vmatpush1.msra.mxu0 %v5934
        %5993 = vmatprep.subr.mxu0 0.0
        %5994 = vmatpush1.msra.mxu0 %v5935
        %5995 = vmatprep.subr.mxu0 0.0
        %5996 = vmatpush1.msra.mxu0 %v5936
        %5997 = vmatprep.subr.mxu0 0.0
        %5998 = vmatpush1.msra.mxu0 %v5937
        %5999 = vmatprep.subr.mxu0 0.0
        %6000 = vmatpush1.msra.mxu0 %v5938
        %6001 = vmatprep.subr.mxu0 0.0
        %6002 = vmatpush1.msra.mxu0 %v5939
        %6003 = vmatprep.subr.mxu0 0.0
        %6004 = vmatpush1.msra.mxu0 %v5940
        %6005 = vmatprep.subr.mxu0 0.0
        %6006 = vmatpush1.msra.mxu0 %v5941
        %6007 = vmatprep.subr.mxu0 0.0
        %6008 = vmatpush1.msra.mxu0 %v5942
        %6009 = vmatprep.subr.mxu0 0.0
        %6010 = vmatpush1.msra.mxu0 %v5943
        %6011 = vmatprep.subr.mxu0 0.0
        %6012 = vmatpush1.msra.mxu0 %v5944
        %6013 = vmatprep.subr.mxu0 0.0
        %6014 = vmatpush1.msra.mxu0 %v5945
        %6015 = vmatprep.subr.mxu0 0.0
        %6016 = vmatpush1.msra.mxu0 %v5946
        %6017 = vmatprep.subr.mxu0 0.0
        %6018 = vmatpush1.msra.mxu0 %v5947
        %6019 = vmatprep.subr.mxu0 0.0
        %6020 = vmatpush1.msra.mxu0 %v5948
        %6021 = vmatprep.subr.mxu0 0.0
        %6022 = vmatpush1.msra.mxu0 %v5949
        %6023 = vmatprep.subr.mxu0 0.0
        %6024 = vmatpush1.msra.mxu0 %v5950
        %6025 = vmatprep.subr.mxu0 0.0
        %6026 = vmatpush1.msra.mxu0 %v5951
        %6027 = vmatprep.subr.mxu0 0.0
        %6028 = vmatpush1.msra.mxu0 %v5952
        %6029 = vmatprep.mubr.f32.mxu0 %v5962
        %6030 = vmatmul.mubr.f32.gmra.mrb[0].mxu0 %v5958
        %v6031 = vpop.f32.mrb[0].mxu0
        %v6032 = vadd.f32 0.0, %v6031
        %v6033 = vpop.f32.mrb[0].mxu0
        %6034 = vdwg.mxu0
        %v6035 = vlog2.pop %v6032
        %v6036 = vmul.f32 %v6035, 0.6931472
        %v6037 = vmul.f32 %v6036, 0.33333334
        %v6038 = vmul.f32 %v6037, 1.442695
        %v6039 = vpow.pop %v6038
        %v6040 = vld [vmem:[%s6] sm:$0xff]
        %v6041 = vld [vmem:[%s6 + $0x8] sm:$0xff]
        %v6042 = vld [vmem:[%s6 + $0x10] sm:$0xff]
        %v6043 = vld [vmem:[%s6 + $0x18] sm:$0xff]
        %v6044 = vld [vmem:[%s6 + $0x20] sm:$0xff]
        %v6045 = vld [vmem:[%s6 + $0x28] sm:$0xff]
        %v6046 = vld [vmem:[%s6 + $0x30] sm:$0xff]
        %v6047 = vld [vmem:[%s6 + $0x38] sm:$0xff]
        %v6048 = vld [vmem:[%s6 + $0x40] sm:$0xff]
        %v6049 = vld [vmem:[%s6 + $0x48] sm:$0xff]
        %v6050 = vld [vmem:[%s6 + $0x50] sm:$0xff]
        %v6051 = vld [vmem:[%s6 + $0x58] sm:$0xff]
        %v6052 = vld [vmem:[%s6 + $0x60] sm:$0xff]
        %v6053 = vld [vmem:[%s6 + $0x68] sm:$0xff]
        %v6054 = vld [vmem:[%s6 + $0x70] sm:$0xff]
        %v6055 = vld [vmem:[%s6 + $0x78] sm:$0xff]
        %v6056 = vld [vmem:[%s7] sm:$0x1]
        %6057 = vmatprep.subr.mxu0 0.0
        %6058 = vmatpush1.msra.mxu0 %v6040
        %6059 = vmatprep.subr.mxu0 0.0
        %6060 = vmatpush1.msra.mxu0 %v6041
        %6061 = vmatprep.subr.mxu0 0.0
        %6062 = vmatpush1.msra.mxu0 %v6042
        %6063 = vmatprep.subr.mxu0 0.0
        %6064 = vmatpush1.msra.mxu0 %v6043
        %6065 = vmatprep.subr.mxu0 0.0
        %6066 = vmatpush1.msra.mxu0 %v6044
        %6067 = vmatprep.subr.mxu0 0.0
        %6068 = vmatpush1.msra.mxu0 %v6045
        %6069 = vmatprep.subr.mxu0 0.0
        %6070 = vmatpush1.msra.mxu0 %v6046
        %6071 = vmatprep.subr.mxu0 0.0
        %6072 = vmatpush1.msra.mxu0 %v6047
        %6073 = vmatprep.subr.mxu0 0.0
        %6074 = vmatpush1.msra.mxu0 %v6048
        %6075 = vmatprep.subr.mxu0 0.0
        %6076 = vmatpush1.msra.mxu0 %v6049
        %6077 = vmatprep.subr.mxu0 0.0
        %6078 = vmatpush1.msra.mxu0 %v6050
        %6079 = vmatprep.subr.mxu0 0.0
        %6080 = vmatpush1.msra.mxu0 %v6051
        %6081 = vmatprep.subr.mxu0 0.0
        %6082 = vmatpush1.msra.mxu0 %v6052
        %6083 = vmatprep.subr.mxu0 0.0
        %6084 = vmatpush1.msra.mxu0 %v6053
        %6085 = vmatprep.subr.mxu0 0.0
        %6086 = vmatpush1.msra.mxu0 %v6054
        %6087 = vmatprep.subr.mxu0 0.0
        %6088 = vmatpush1.msra.mxu0 %v6055
        %6089 = vmatprep.subr.mxu0 0.0
        %6090 = vmatpush1.msra.mxu0 0.0
        %6091 = vmatprep.subr.mxu0 0.0
        %6092 = vmatpush1.msra.mxu0 0.0
        %6093 = vmatprep.subr.mxu0 0.0
        %6094 = vmatpush1.msra.mxu0 0.0
        %6095 = vmatprep.subr.mxu0 0.0
        %6096 = vmatpush1.msra.mxu0 0.0
        %6097 = vmatprep.subr.mxu0 0.0
        %6098 = vmatpush1.msra.mxu0 0.0
        %6099 = vmatprep.subr.mxu0 0.0
        %6100 = vmatpush1.msra.mxu0 0.0
        %6101 = vmatprep.subr.mxu0 0.0
        %6102 = vmatpush1.msra.mxu0 0.0
        %6103 = vmatprep.subr.mxu0 0.0
        %6104 = vmatpush1.msra.mxu0 0.0
        %6105 = vmatprep.subr.mxu0 0.0
        %6106 = vmatpush1.msra.mxu0 0.0
        %6107 = vmatprep.subr.mxu0 0.0
        %6108 = vmatpush1.msra.mxu0 0.0
        %6109 = vmatprep.subr.mxu0 0.0
        %6110 = vmatpush1.msra.mxu0 0.0
        %6111 = vmatprep.subr.mxu0 0.0
        %6112 = vmatpush1.msra.mxu0 0.0
        %6113 = vmatprep.subr.mxu0 0.0
        %6114 = vmatpush1.msra.mxu0 0.0
        %6115 = vmatprep.subr.mxu0 0.0
        %6116 = vmatpush1.msra.mxu0 0.0
        %6117 = vmatprep.subr.mxu0 0.0
        %6118 = vmatpush1.msra.mxu0 0.0
        %6119 = vmatprep.subr.mxu0 0.0
        %6120 = vmatpush1.msra.mxu0 0.0
        %6121 = vmatprep.mubr.f32.mxu0 0.0
        %6122 = vmatmul.mubr.f32.gmra.mrb[0].mxu0 %v6039
        %v6123 = vpop.f32.mrb[0].mxu0
        %v6124 = vadd.f32 %v6056, %v6123
        %v6125 = vpop.f32.mrb[0].mxu0
        %6126 = vdwg.mxu0
        %v6127 = vmul.f32 %v6124, %v6124
        %vm6128 = vcmask 1040384
        %v6129 = vsel %vm6128, %v6127, 0.0
        %6130 = vadd.xlane.f32.xlu0 %v6129
        %v6131 = vpop.xlane.xlu0 %6130
        %v6132 = vadd.f32 %v6131, 1e-12
        %v6133 = vrsqrt.pop %v6132
        %v6134 = vmul.f32 %v6124, %v6133
        %6135 = vst [vmem:[%s297] sm:$0x1] %v6134
        %s6136 = sand.u32 %s203, 1
        %s6137 = scalar_lea.sflag [#allocation5], %s6136
        %s6138 = sand.u32 %s203, 1
        %s6139 = scalar_lea.vmem [#allocation4], %s6138
        // Predicated region
        $region53: #{_forward_impl.1} parent=51 // pred_check
          %p6140 = pneg %p213
        $region54: #{_forward_impl.1} parent=51 // pred_check_branch
          %6142 = sbr.rel (%p6140) target = $region56
        $region55: #{_forward_impl.1} parent=51 // pred_region
          %s6144 = ssub.s32 16, 16
          %6145 = vsyncadd %s6137, %s6144
          %s6146 = smul.addr %s22, 16
          %s6147 = scalar_lea.hbm %s8, %s6146
          %s6149 = sshll.u32 %s6139, 4
          %s6150 = int_to_ptr.vmem [resolvable:$true] %s6149
          %6152 = dma.vmem_to_hbm [thread:$0]  %s6150, 16, %s6147, %s6137
        $region56: #{_forward_impl.1} parent=51 // pred_fallthru
          _
      $region52: #{_forward_impl.1} parent=5 // pred_fallthru
        _
      %p6153 = scmp.le.s32.totalorder 2, %s17
      // Predicated region
      $region57: #{_forward_impl.1} parent=5 // pred_check
        %p6154 = pneg %p6153
      $region58: #{_forward_impl.1} parent=5 // pred_check_branch
        %6156 = sbr.rel (%p6154) target = $region60
      $region59: #{_forward_impl.1} parent=5 // pred_region
        %s6157 = ssub.s32 %s17, 2
        // Predicated region
        $region61: #{_forward_impl.1} parent=59 // pred_check
          %p6158 = pneg %p219
        $region62: #{_forward_impl.1} parent=59 // pred_check_branch
          %6160 = sbr.rel (%p6158) target = $region64
        $region63: #{_forward_impl.1} parent=59 // pred_region
          %s6161 = sand.u32 %s204, 1
          %s6162 = scalar_lea.sflag [#allocation5], %s6161
          %s6163 = sand.u32 %s204, 1
          %s6164 = scalar_lea.vmem [#allocation4], %s6163
          %6165 = dma.done %s6162, 16
        $region64: #{_forward_impl.1} parent=59 // pred_fallthru
          _
      $region60: #{_forward_impl.1} parent=5 // pred_fallthru
        _
    $region6: #{_forward_impl.1} parent=1 // loop_footer
      %s21 = sadd.s32 1, %s17
    $region7: #{_forward_impl.1} parent=1 // loop_footer_branch
      %16 = sbr.rel target = $region3
    $region8: #{_forward_impl.1} parent=1 // loop_exit
      _
    %6166 = vsyncpa [#allocation5], 1
    %s6167 = scalar_lea.sflag [#allocation5], 1
    %6168 = vsyncpa %s6167, 1

</llo_original>
